<compile_context>
chip_gen: v5e
topology: v5e:2x2
jax: 0.10.0
libtpu: 0.0.40
codegen_flags: <defaults>
</compile_context>

<pallas_src>
import functools

import jax
import jax.numpy as jnp
from jax.experimental import pallas as pl
from jax.experimental.pallas import tpu as pltpu


NUM_INPUTS = 4
HIDDEN = 512
CONV3_H, CONV3_W, CONV3_C = 19, 13, 32       # conv3 output expected by fc4
FC_K = CONV3_H * CONV3_W * CONV3_C           # 7904
FC_KP = 8192                                 # fc4 K padded (4 K-steps)
FC_TK = 2048                                 # fc4 K tile (bf16 w tile = 1 MiB / col tile)
FC_TN = 256                                  # fc4 column tile (2 parallel tiles)
CRITIC_NP = 128                              # critic output padded to one lane tile
CONV_TM = 256                                # conv matmul row tile (fixed)


def _round_up(x, m):
    return ((x + m - 1) // m) * m


# ----------------------------------------------------------------------------
# Pallas kernel 1: matmul + bias + ReLU (conv layers; full K, full real N,
# fixed-size M tiles -> pipelined + megacore-parallel M axis)
# ----------------------------------------------------------------------------
def _mm_bias_relu_kernel(x_ref, w_ref, b_ref, o_ref, *, relu):
    y = jnp.dot(x_ref[...], w_ref[...], preferred_element_type=jnp.float32)
    y = y + b_ref[...]
    if relu:
        y = jnp.maximum(y, 0.0)
    o_ref[...] = y.astype(o_ref.dtype)


def matmul_bias_act(x, w, b, *, relu=True, tm=CONV_TM, out_dtype=jnp.bfloat16):
    """act(x @ w + b).  x:[Mp,K] bf16 (Mp % tm == 0), w:[K,Nout] bf16,
    b:[1,Nout] f32.  Whole K and the real Nout live in a single tile; the
    grid splits M into fixed tm-row tiles (pipelining + parallel axis)."""
    Mp, K = x.shape
    K2, Nout = w.shape
    assert K == K2 and Mp % tm == 0
    return pl.pallas_call(
        functools.partial(_mm_bias_relu_kernel, relu=relu),
        out_shape=jax.ShapeDtypeStruct((Mp, Nout), out_dtype),
        grid_spec=pltpu.PrefetchScalarGridSpec(
            num_scalar_prefetch=0,
            grid=(Mp // tm,),
            in_specs=[
                pl.BlockSpec((tm, K), lambda i: (i, 0)),
                pl.BlockSpec((K, Nout), lambda i: (0, 0)),
                pl.BlockSpec((1, Nout), lambda i: (0, 0)),
            ],
            out_specs=pl.BlockSpec((tm, Nout), lambda i: (i, 0)),
        ),
        compiler_params=pltpu.CompilerParams(
            dimension_semantics=("parallel",),
            vmem_limit_bytes=32 * 1024 * 1024,
        ),
    )(x, w, b)


# ----------------------------------------------------------------------------
# Pallas kernel 2: fused  feat = relu(x @ W4 + b4);  partial critic values
# Grid = (column tiles of W4 [parallel], K steps [arbitrary]).
# ----------------------------------------------------------------------------
def _fc_head_kernel(x_ref, w_ref, b_ref, wc_ref, feat_ref, valp_ref, acc_ref):
    k = pl.program_id(1)

    @pl.when(k == 0)
    def _():
        acc_ref[...] = jnp.zeros_like(acc_ref)

    acc_ref[...] += jnp.dot(x_ref[...], w_ref[...],
                            preferred_element_type=jnp.float32)

    @pl.when(k == pl.num_programs(1) - 1)
    def _():
        feat = jnp.maximum(acc_ref[...] + b_ref[...], 0.0)          # f32 epilogue
        feat_ref[...] = feat.astype(feat_ref.dtype)
        # partial critic product for this column tile (bias added outside)
        valp_ref[...] = jnp.dot(feat.astype(wc_ref.dtype), wc_ref[...],
                                preferred_element_type=jnp.float32)


def fc_relu_plus_linear(x, w, b, wc, *, tk=FC_TK, tn=FC_TN):
    """x:[Mp,Kp] bf16, w:[Kp,512] bf16, b:[1,512] f32, wc:[512,128] bf16.

    Returns feat:[Mp,512] f32 and valp:[Mp, n_col_tiles*128] f32 whose column
    tiles are partial critic products (caller sums column 0 of each tile and
    adds the critic bias)."""
    Mp, Kp = x.shape
    _, Nf = w.shape
    _, Nv = wc.shape
    assert Kp % tk == 0 and Nf % tn == 0
    ksteps = Kp // tk
    ntiles = Nf // tn
    feat, valp = pl.pallas_call(
        _fc_head_kernel,
        out_shape=(jax.ShapeDtypeStruct((Mp, Nf), jnp.float32),
                   jax.ShapeDtypeStruct((Mp, ntiles * Nv), jnp.float32)),
        grid_spec=pltpu.PrefetchScalarGridSpec(
            num_scalar_prefetch=0,
            grid=(ntiles, ksteps),
            in_specs=[
                pl.BlockSpec((Mp, tk), lambda j, k: (0, k)),
                pl.BlockSpec((tk, tn), lambda j, k: (k, j)),
                pl.BlockSpec((1, tn), lambda j, k: (0, j)),
                pl.BlockSpec((tn, Nv), lambda j, k: (j, 0)),
            ],
            out_specs=[
                pl.BlockSpec((Mp, tn), lambda j, k: (0, j)),
                pl.BlockSpec((Mp, Nv), lambda j, k: (0, j)),
            ],
            scratch_shapes=[pltpu.VMEM((Mp, tn), jnp.float32)],
        ),
        compiler_params=pltpu.CompilerParams(
            dimension_semantics=("parallel", "arbitrary"),
            vmem_limit_bytes=32 * 1024 * 1024,
        ),
    )(x, w, b, wc)
    return feat, valp


# ----------------------------------------------------------------------------
# im2col glue (NHWC, feature order (kh, kw, C) to match the prepped weights)
# TODO(synk): fuse the im2col gather + next layer's matmul into one Pallas
# pipeline (row-gather index_map / emit_pipeline) to cut the remaining
# per-layer HBM round trip of the im2col matrix.
# ----------------------------------------------------------------------------
def _im2col_nhwc(x, kh, kw, stride):
    N, H, W, C = x.shape
    Ho = (H - kh) // stride + 1
    Wo = (W - kw) // stride + 1
    patches = []
    for i in range(kh):
        for j in range(kw):
            patches.append(x[:, i:i + stride * Ho:stride,
                             j:j + stride * Wo:stride, :])
    col = jnp.stack(patches, axis=3)                 # [N, Ho, Wo, kh*kw, C]
    col = col.reshape(N * Ho * Wo, kh * kw * C)      # col = (i*kw+j)*C + c
    return col, Ho, Wo


def _pad_rows(col, multiple):
    M = col.shape[0]
    Mp = _round_up(M, multiple)
    if Mp != M:
        col = jnp.pad(col, ((0, Mp - M), (0, 0)))
    return col, M


# ----------------------------------------------------------------------------
# Parameters (PyTorch layouts) and one-time prep into kernel-ready layouts
# ----------------------------------------------------------------------------
def make_params(key, num_inputs=NUM_INPUTS, hidden=HIDDEN):
    ks = jax.random.split(key, 6)

    def w(k, shape, scale=0.05):
        return scale * jax.random.normal(k, shape, jnp.float32)

    return {
        "conv1_w": w(ks[0], (32, num_inputs, 8, 8)),
        "conv1_b": jnp.zeros((32,), jnp.float32),
        "conv2_w": w(ks[1], (64, 32, 4, 4)),
        "conv2_b": jnp.zeros((64,), jnp.float32),
        "conv3_w": w(ks[2], (32, 64, 3, 3)),
        "conv3_b": jnp.zeros((32,), jnp.float32),
        "fc4_w":   w(ks[3], (hidden, FC_K), 0.01),     # torch Linear: [out, in]
        "fc4_b":   jnp.zeros((hidden,), jnp.float32),
        "critic_w": w(ks[4], (1, hidden), 0.01),
        "critic_b": jnp.zeros((1,), jnp.float32),
    }


def prep_params(p):
    """One-time weight-side prep: permute to matmul layout, fold /255 into
    conv1, pad fc4 K / critic N, cast MXU operands to bf16."""
    def conv_w(w, scale=1.0):
        O, C, kh, kw = w.shape
        wt = jnp.transpose(w, (2, 3, 1, 0)).reshape(kh * kw * C, O) * scale
        return wt.astype(jnp.bfloat16)               # [K, O_real] (no lane pad)

    def conv_b(b):
        return b.reshape(1, -1).astype(jnp.float32)

    hidden = p["fc4_w"].shape[0]
    # torch flattens conv3 output in NCHW order; our activations are
    # NHWC-flat, so permute fc4's input columns (c,h,w) -> (h,w,c) once here.
    fc4 = (p["fc4_w"].reshape(hidden, CONV3_C, CONV3_H, CONV3_W)
           .transpose(0, 2, 3, 1).reshape(hidden, FC_K).T)          # [FC_K, 512]
    fc4 = jnp.zeros((FC_KP, hidden), jnp.float32).at[:FC_K, :].set(fc4)
    critic_w = (jnp.zeros((hidden, CRITIC_NP), jnp.float32)
                .at[:, :1].set(p["critic_w"].T)).astype(jnp.bfloat16)

    return {
        "conv1_w": conv_w(p["conv1_w"], scale=1.0 / 255.0),  # /255 folded in
        "conv1_b": conv_b(p["conv1_b"]),
        "conv2_w": conv_w(p["conv2_w"]),
        "conv2_b": conv_b(p["conv2_b"]),
        "conv3_w": conv_w(p["conv3_w"]),
        "conv3_b": conv_b(p["conv3_b"]),
        "fc4_w": fc4.astype(jnp.bfloat16),
        "fc4_b": p["fc4_b"].reshape(1, hidden).astype(jnp.float32),
        "critic_w": critic_w,
        "critic_b": p["critic_b"].astype(jnp.float32),       # (1,)
    }


# ----------------------------------------------------------------------------
# CNNBase.forward  (recurrent=False): returns (value, features, rnn_hxs)
# ----------------------------------------------------------------------------
@jax.jit
def cnn_base_forward(prepped, inputs, rnn_hxs, masks):
    del masks  # only used by the recurrent (GRU) branch
    N = inputs.shape[0]

    # torch: inputs.transpose(1, 3) => conv runs over spatial (W, H); we work
    # NHWC, so swap the two spatial axes once (tiny, fused under jit).
    x = jnp.transpose(inputs, (0, 2, 1, 3)).astype(jnp.bfloat16)  # [N,94,70,4]

    # conv1: 8x8 /2  (K=256; /255 already folded into the weights)
    col, H1, W1 = _im2col_nhwc(x, 8, 8, 2)
    col, M1 = _pad_rows(col, CONV_TM)
    y1 = matmul_bias_act(col, prepped["conv1_w"], prepped["conv1_b"])  # [M1p,32]

    # conv2: 4x4 /2  (K=512)
    x2 = y1[:M1].reshape(N, H1, W1, 32)
    col, H2, W2 = _im2col_nhwc(x2, 4, 4, 2)
    col, M2 = _pad_rows(col, CONV_TM)
    y2 = matmul_bias_act(col, prepped["conv2_w"], prepped["conv2_b"])  # [M2p,64]

    # conv3: 3x3 /1  (K=576)
    x3 = y2[:M2].reshape(N, H2, W2, 64)
    col, H3, W3 = _im2col_nhwc(x3, 3, 3, 1)
    col, M3 = _pad_rows(col, CONV_TM)
    y3 = matmul_bias_act(col, prepped["conv3_w"], prepped["conv3_b"])  # [M3p,32]

    # flatten (NHWC order; fc4 columns were permuted to match at prep time)
    flat = y3[:M3].reshape(N, H3 * W3 * CONV3_C)
    Mp = _round_up(N, 16)                             # bf16 sublane tile = 16
    xf = jnp.zeros((Mp, FC_KP), jnp.bfloat16).at[:N, :FC_K].set(flat)

    # fused fc4(+ReLU) and critic_linear (partial values per column tile)
    feat, valp = fc_relu_plus_linear(
        xf, prepped["fc4_w"], prepped["fc4_b"], prepped["critic_w"])

    ntiles = HIDDEN // FC_TN
    value = (valp[:N].reshape(N, ntiles, CRITIC_NP)[:, :, 0]
             .sum(axis=1, keepdims=True) + prepped["critic_b"])

    # TODO(synk): recurrent GRU branch (NNBase._forward_gru) not implemented;
    # recurrent=False path only, rnn_hxs is passed through unchanged.
    return value, feat[:N], rnn_hxs


if __name__ == "__main__":
    key = jax.random.PRNGKey(0)
    k_obs, k_par = jax.random.split(key)

    N = 2
    # Spatial dims must give the 19x13 conv3 output that fc4 (32*19*13) needs:
    # [N,70,94,4] --transpose(1,3)--> [N,4,94,70] -> 44x32 -> 21x15 -> 19x13.
    obs = jax.random.uniform(k_obs, (N, 70, 94, NUM_INPUTS),
                             jnp.float32, 0.0, 255.0)
    rnn_hxs = jnp.zeros((N, 1), jnp.float32)   # non-recurrent hidden size = 1
    masks = jnp.ones((N, 1), jnp.float32)

    params = make_params(k_par)
    prepped = prep_params(params)              # one-time weight prep

    value, feat, hxs_out = cnn_base_forward(prepped, obs, rnn_hxs, masks)
    jax.block_until_ready((value, feat, hxs_out))

    assert value.shape == (N, 1)
    assert feat.shape == (N, HIDDEN)
    assert hxs_out.shape == rnn_hxs.shape
    assert bool(jnp.all(jnp.isfinite(value))) and bool(jnp.all(jnp.isfinite(feat)))
    print("KERNEL_OK")
</pallas_src>

<mosaic_0001>
module attributes {stable_mosaic.version = 11 : i64} {
  func.func @_mm_bias_relu_kernel(%arg0: i32, %arg1: memref<256x256xbf16, #tpu.memory_space<vmem>>, %arg2: memref<256x32xbf16, #tpu.memory_space<vmem>>, %arg3: memref<1x32xf32, #tpu.memory_space<vmem>>, %arg4: memref<256x32xbf16, #tpu.memory_space<vmem>>) attributes {dimension_semantics = [#tpu.dimension_semantics<parallel>], iteration_bounds = array<i64: 11>, scalar_prefetch = 0 : i64, scratch_operands = 0 : i64, tpu.core_type = #tpu.core_type<tc>, window_params = [{transform_indices = @transform_0, window_bounds = array<i64: 256, 256>}, {pipeline_mode = #tpu.pipeline_mode<synchronous>, transform_indices = @transform_1, window_bounds = array<i64: 256, 32>}, {pipeline_mode = #tpu.pipeline_mode<synchronous>, transform_indices = @transform_2, window_bounds = array<i64: 1, 32>}, {transform_indices = @transform_3, window_bounds = array<i64: 256, 32>}]} {
    %c0 = arith.constant 0 : index
    %c0_0 = arith.constant 0 : index
    %0 = vector.load %arg1[%c0, %c0_0] : memref<256x256xbf16, #tpu.memory_space<vmem>>, vector<256x256xbf16>
    %c0_1 = arith.constant 0 : index
    %c0_2 = arith.constant 0 : index
    %1 = vector.load %arg2[%c0_1, %c0_2] : memref<256x32xbf16, #tpu.memory_space<vmem>>, vector<256x32xbf16>
    %cst = arith.constant dense<0.000000e+00> : vector<256x32xf32>
    %2 = tpu.matmul %0, %1, %cst {dimension_numbers = #tpu.dot_dimension_numbers<[1], [0], [0], [1], [0, 0, 1, 1], [], []>} : vector<256x256xbf16>, vector<256x32xbf16>, vector<256x32xf32> -> vector<256x32xf32>
    %c0_3 = arith.constant 0 : index
    %c0_4 = arith.constant 0 : index
    %3 = vector.load %arg3[%c0_3, %c0_4] : memref<1x32xf32, #tpu.memory_space<vmem>>, vector<1x32xf32>
    %4 = vector.broadcast %3 : vector<1x32xf32> to vector<256x32xf32>
    %5 = arith.addf %2, %4 : vector<256x32xf32>
    %cst_5 = arith.constant 0.000000e+00 : f32
    %6 = vector.broadcast %cst_5 : f32 to vector<256x32xf32>
    %7 = arith.maximumf %5, %6 : vector<256x32xf32>
    %8 = arith.truncf %7 : vector<256x32xf32> to vector<256x32xbf16>
    %c0_6 = arith.constant 0 : index
    %c0_7 = arith.constant 0 : index
    %9 = vector.load %arg4[%c0_6, %c0_7] : memref<256x32xbf16, #tpu.memory_space<vmem>>, vector<256x32xbf16>
    tpu.vector_store %arg4[%c0_6, %c0_7], %8 {strides = array<i32>} : memref<256x32xbf16, #tpu.memory_space<vmem>>, vector<256x32xbf16>,
    return
  }
  func.func @transform_0(%arg0: i32) -> (i32, i32) {
    %c0_i32 = arith.constant 0 : i32
    %c0_i32_0 = arith.constant 0 : i32
    return %arg0, %c0_i32 : i32, i32
  }
  func.func @transform_1(%arg0: i32) -> (i32, i32) {
    %c0_i32 = arith.constant 0 : i32
    %c0_i32_0 = arith.constant 0 : i32
    %c0_i32_1 = arith.constant 0 : i32
    return %c0_i32, %c0_i32_0 : i32, i32
  }
  func.func @transform_2(%arg0: i32) -> (i32, i32) {
    %c0_i32 = arith.constant 0 : i32
    %c0_i32_0 = arith.constant 0 : i32
    %c0_i32_1 = arith.constant 0 : i32
    return %c0_i32, %c0_i32_0 : i32, i32
  }
  func.func @transform_3(%arg0: i32) -> (i32, i32) {
    %c0_i32 = arith.constant 0 : i32
    %c0_i32_0 = arith.constant 0 : i32
    return %arg0, %c0_i32 : i32, i32
  }
}

module attributes {stable_mosaic.version = 11 : i64} {
  func.func @_mm_bias_relu_kernel(%arg0: i32, %arg1: memref<256x512xbf16, #tpu.memory_space<vmem>>, %arg2: memref<512x64xbf16, #tpu.memory_space<vmem>>, %arg3: memref<1x64xf32, #tpu.memory_space<vmem>>, %arg4: memref<256x64xbf16, #tpu.memory_space<vmem>>) attributes {dimension_semantics = [#tpu.dimension_semantics<parallel>], iteration_bounds = array<i64: 3>, scalar_prefetch = 0 : i64, scratch_operands = 0 : i64, tpu.core_type = #tpu.core_type<tc>, window_params = [{transform_indices = @transform_0, window_bounds = array<i64: 256, 512>}, {pipeline_mode = #tpu.pipeline_mode<synchronous>, transform_indices = @transform_1, window_bounds = array<i64: 512, 64>}, {pipeline_mode = #tpu.pipeline_mode<synchronous>, transform_indices = @transform_2, window_bounds = array<i64: 1, 64>}, {transform_indices = @transform_3, window_bounds = array<i64: 256, 64>}]} {
    %c0 = arith.constant 0 : index
    %c0_0 = arith.constant 0 : index
    %0 = vector.load %arg1[%c0, %c0_0] : memref<256x512xbf16, #tpu.memory_space<vmem>>, vector<256x512xbf16>
    %c0_1 = arith.constant 0 : index
    %c0_2 = arith.constant 0 : index
    %1 = vector.load %arg2[%c0_1, %c0_2] : memref<512x64xbf16, #tpu.memory_space<vmem>>, vector<512x64xbf16>
    %cst = arith.constant dense<0.000000e+00> : vector<256x64xf32>
    %2 = tpu.matmul %0, %1, %cst {dimension_numbers = #tpu.dot_dimension_numbers<[1], [0], [0], [1], [0, 0, 1, 1], [], []>} : vector<256x512xbf16>, vector<512x64xbf16>, vector<256x64xf32> -> vector<256x64xf32>
    %c0_3 = arith.constant 0 : index
    %c0_4 = arith.constant 0 : index
    %3 = vector.load %arg3[%c0_3, %c0_4] : memref<1x64xf32, #tpu.memory_space<vmem>>, vector<1x64xf32>
    %4 = vector.broadcast %3 : vector<1x64xf32> to vector<256x64xf32>
    %5 = arith.addf %2, %4 : vector<256x64xf32>
    %cst_5 = arith.constant 0.000000e+00 : f32
    %6 = vector.broadcast %cst_5 : f32 to vector<256x64xf32>
    %7 = arith.maximumf %5, %6 : vector<256x64xf32>
    %8 = arith.truncf %7 : vector<256x64xf32> to vector<256x64xbf16>
    %c0_6 = arith.constant 0 : index
    %c0_7 = arith.constant 0 : index
    %9 = vector.load %arg4[%c0_6, %c0_7] : memref<256x64xbf16, #tpu.memory_space<vmem>>, vector<256x64xbf16>
    tpu.vector_store %arg4[%c0_6, %c0_7], %8 {strides = array<i32>} : memref<256x64xbf16, #tpu.memory_space<vmem>>, vector<256x64xbf16>,
    return
  }
  func.func @transform_0(%arg0: i32) -> (i32, i32) {
    %c0_i32 = arith.constant 0 : i32
    %c0_i32_0 = arith.constant 0 : i32
    return %arg0, %c0_i32 : i32, i32
  }
  func.func @transform_1(%arg0: i32) -> (i32, i32) {
    %c0_i32 = arith.constant 0 : i32
    %c0_i32_0 = arith.constant 0 : i32
    %c0_i32_1 = arith.constant 0 : i32
    return %c0_i32, %c0_i32_0 : i32, i32
  }
  func.func @transform_2(%arg0: i32) -> (i32, i32) {
    %c0_i32 = arith.constant 0 : i32
    %c0_i32_0 = arith.constant 0 : i32
    %c0_i32_1 = arith.constant 0 : i32
    return %c0_i32, %c0_i32_0 : i32, i32
  }
  func.func @transform_3(%arg0: i32) -> (i32, i32) {
    %c0_i32 = arith.constant 0 : i32
    %c0_i32_0 = arith.constant 0 : i32
    return %arg0, %c0_i32 : i32, i32
  }
}

module attributes {stable_mosaic.version = 11 : i64} {
  func.func @_mm_bias_relu_kernel(%arg0: i32, %arg1: memref<256x576xbf16, #tpu.memory_space<vmem>>, %arg2: memref<576x32xbf16, #tpu.memory_space<vmem>>, %arg3: memref<1x32xf32, #tpu.memory_space<vmem>>, %arg4: memref<256x32xbf16, #tpu.memory_space<vmem>>) attributes {dimension_semantics = [#tpu.dimension_semantics<parallel>], iteration_bounds = array<i64: 2>, scalar_prefetch = 0 : i64, scratch_operands = 0 : i64, tpu.core_type = #tpu.core_type<tc>, window_params = [{transform_indices = @transform_0, window_bounds = array<i64: 256, 576>}, {pipeline_mode = #tpu.pipeline_mode<synchronous>, transform_indices = @transform_1, window_bounds = array<i64: 576, 32>}, {pipeline_mode = #tpu.pipeline_mode<synchronous>, transform_indices = @transform_2, window_bounds = array<i64: 1, 32>}, {transform_indices = @transform_3, window_bounds = array<i64: 256, 32>}]} {
    %c0 = arith.constant 0 : index
    %c0_0 = arith.constant 0 : index
    %0 = vector.load %arg1[%c0, %c0_0] : memref<256x576xbf16, #tpu.memory_space<vmem>>, vector<256x576xbf16>
    %c0_1 = arith.constant 0 : index
    %c0_2 = arith.constant 0 : index
    %1 = vector.load %arg2[%c0_1, %c0_2] : memref<576x32xbf16, #tpu.memory_space<vmem>>, vector<576x32xbf16>
    %cst = arith.constant dense<0.000000e+00> : vector<256x32xf32>
    %2 = tpu.matmul %0, %1, %cst {dimension_numbers = #tpu.dot_dimension_numbers<[1], [0], [0], [1], [0, 0, 1, 1], [], []>} : vector<256x576xbf16>, vector<576x32xbf16>, vector<256x32xf32> -> vector<256x32xf32>
    %c0_3 = arith.constant 0 : index
    %c0_4 = arith.constant 0 : index
    %3 = vector.load %arg3[%c0_3, %c0_4] : memref<1x32xf32, #tpu.memory_space<vmem>>, vector<1x32xf32>
    %4 = vector.broadcast %3 : vector<1x32xf32> to vector<256x32xf32>
    %5 = arith.addf %2, %4 : vector<256x32xf32>
    %cst_5 = arith.constant 0.000000e+00 : f32
    %6 = vector.broadcast %cst_5 : f32 to vector<256x32xf32>
    %7 = arith.maximumf %5, %6 : vector<256x32xf32>
    %8 = arith.truncf %7 : vector<256x32xf32> to vector<256x32xbf16>
    %c0_6 = arith.constant 0 : index
    %c0_7 = arith.constant 0 : index
    %9 = vector.load %arg4[%c0_6, %c0_7] : memref<256x32xbf16, #tpu.memory_space<vmem>>, vector<256x32xbf16>
    tpu.vector_store %arg4[%c0_6, %c0_7], %8 {strides = array<i32>} : memref<256x32xbf16, #tpu.memory_space<vmem>>, vector<256x32xbf16>,
    return
  }
  func.func @transform_0(%arg0: i32) -> (i32, i32) {
    %c0_i32 = arith.constant 0 : i32
    %c0_i32_0 = arith.constant 0 : i32
    return %arg0, %c0_i32 : i32, i32
  }
  func.func @transform_1(%arg0: i32) -> (i32, i32) {
    %c0_i32 = arith.constant 0 : i32
    %c0_i32_0 = arith.constant 0 : i32
    %c0_i32_1 = arith.constant 0 : i32
    return %c0_i32, %c0_i32_0 : i32, i32
  }
  func.func @transform_2(%arg0: i32) -> (i32, i32) {
    %c0_i32 = arith.constant 0 : i32
    %c0_i32_0 = arith.constant 0 : i32
    %c0_i32_1 = arith.constant 0 : i32
    return %c0_i32, %c0_i32_0 : i32, i32
  }
  func.func @transform_3(%arg0: i32) -> (i32, i32) {
    %c0_i32 = arith.constant 0 : i32
    %c0_i32_0 = arith.constant 0 : i32
    return %arg0, %c0_i32 : i32, i32
  }
}

module attributes {stable_mosaic.version = 11 : i64} {
  func.func @_fc_head_kernel(%arg0: i32, %arg1: i32, %arg2: memref<16x2048xbf16, #tpu.memory_space<vmem>>, %arg3: memref<2048x256xbf16, #tpu.memory_space<vmem>>, %arg4: memref<1x256xf32, #tpu.memory_space<vmem>>, %arg5: memref<256x128xbf16, #tpu.memory_space<vmem>>, %arg6: memref<16x256xf32, #tpu.memory_space<vmem>>, %arg7: memref<16x128xf32, #tpu.memory_space<vmem>>, %arg8: memref<16x256xf32, #tpu.memory_space<vmem>>) attributes {dimension_semantics = [#tpu.dimension_semantics<parallel>, #tpu.dimension_semantics<arbitrary>], iteration_bounds = array<i64: 2, 4>, scalar_prefetch = 0 : i64, scratch_operands = 1 : i64, tpu.core_type = #tpu.core_type<tc>, window_params = [{transform_indices = @transform_0, window_bounds = array<i64: 16, 2048>}, {transform_indices = @transform_1, window_bounds = array<i64: 2048, 256>}, {transform_indices = @transform_2, window_bounds = array<i64: 1, 256>}, {transform_indices = @transform_3, window_bounds = array<i64: 256, 128>}, {transform_indices = @transform_4, window_bounds = array<i64: 16, 256>}, {transform_indices = @transform_5, window_bounds = array<i64: 16, 128>}]} {
    %c0_i32 = arith.constant 0 : i32
    %0 = arith.cmpi eq, %arg1, %c0_i32 : i32
    %1 = arith.extui %0 : i1 to i32
    %c0_i32_0 = arith.constant 0 : i32
    %2 = arith.cmpi ne, %1, %c0_i32_0 : i32
    scf.if %2 {
      %cst_9 = arith.constant 0.000000e+00 : f32
      %12 = vector.broadcast %cst_9 : f32 to vector<16x256xf32>
      %c0_10 = arith.constant 0 : index
      %c0_11 = arith.constant 0 : index
      %13 = vector.load %arg8[%c0_10, %c0_11] : memref<16x256xf32, #tpu.memory_space<vmem>>, vector<16x256xf32>
      tpu.vector_store %arg8[%c0_10, %c0_11], %12 {strides = array<i32>} : memref<16x256xf32, #tpu.memory_space<vmem>>, vector<16x256xf32>,
    } else {
    }
    %c0 = arith.constant 0 : index
    %c0_1 = arith.constant 0 : index
    %3 = vector.load %arg8[%c0, %c0_1] : memref<16x256xf32, #tpu.memory_space<vmem>>, vector<16x256xf32>
    %c0_2 = arith.constant 0 : index
    %c0_3 = arith.constant 0 : index
    %4 = vector.load %arg2[%c0_2, %c0_3] : memref<16x2048xbf16, #tpu.memory_space<vmem>>, vector<16x2048xbf16>
    %c0_4 = arith.constant 0 : index
    %c0_5 = arith.constant 0 : index
    %5 = vector.load %arg3[%c0_4, %c0_5] : memref<2048x256xbf16, #tpu.memory_space<vmem>>, vector<2048x256xbf16>
    %cst = arith.constant dense<0.000000e+00> : vector<16x256xf32>
    %6 = tpu.matmul %4, %5, %cst {dimension_numbers = #tpu.dot_dimension_numbers<[1], [0], [0], [1], [0, 0, 1, 1], [], []>} : vector<16x2048xbf16>, vector<2048x256xbf16>, vector<16x256xf32> -> vector<16x256xf32>
    %7 = arith.addf %3, %6 : vector<16x256xf32>
    %c0_6 = arith.constant 0 : index
    %c0_7 = arith.constant 0 : index
    %8 = vector.load %arg8[%c0_6, %c0_7] : memref<16x256xf32, #tpu.memory_space<vmem>>, vector<16x256xf32>
    tpu.vector_store %arg8[%c0_6, %c0_7], %7 {strides = array<i32>} : memref<16x256xf32, #tpu.memory_space<vmem>>, vector<16x256xf32>,
    %c3_i32 = arith.constant 3 : i32
    %9 = arith.cmpi eq, %arg1, %c3_i32 : i32
    %10 = arith.extui %9 : i1 to i32
    %c0_i32_8 = arith.constant 0 : i32
    %11 = arith.cmpi ne, %10, %c0_i32_8 : i32
    scf.if %11 {
      %c0_9 = arith.constant 0 : index
      %c0_10 = arith.constant 0 : index
      %12 = vector.load %arg8[%c0_9, %c0_10] : memref<16x256xf32, #tpu.memory_space<vmem>>, vector<16x256xf32>
      %c0_11 = arith.constant 0 : index
      %c0_12 = arith.constant 0 : index
      %13 = vector.load %arg4[%c0_11, %c0_12] : memref<1x256xf32, #tpu.memory_space<vmem>>, vector<1x256xf32>
      %14 = vector.broadcast %13 : vector<1x256xf32> to vector<16x256xf32>
      %15 = arith.addf %12, %14 : vector<16x256xf32>
      %cst_13 = arith.constant 0.000000e+00 : f32
      %16 = vector.broadcast %cst_13 : f32 to vector<16x256xf32>
      %17 = arith.maximumf %15, %16 : vector<16x256xf32>
      %c0_14 = arith.constant 0 : index
      %c0_15 = arith.constant 0 : index
      %18 = vector.load %arg6[%c0_14, %c0_15] : memref<16x256xf32, #tpu.memory_space<vmem>>, vector<16x256xf32>
      tpu.vector_store %arg6[%c0_14, %c0_15], %17 {strides = array<i32>} : memref<16x256xf32, #tpu.memory_space<vmem>>, vector<16x256xf32>,
      %19 = arith.truncf %17 : vector<16x256xf32> to vector<16x256xbf16>
      %c0_16 = arith.constant 0 : index
      %c0_17 = arith.constant 0 : index
      %20 = vector.load %arg5[%c0_16, %c0_17] : memref<256x128xbf16, #tpu.memory_space<vmem>>, vector<256x128xbf16>
      %cst_18 = arith.constant dense<0.000000e+00> : vector<16x128xf32>
      %21 = tpu.matmul %19, %20, %cst_18 {dimension_numbers = #tpu.dot_dimension_numbers<[1], [0], [0], [1], [0, 0, 1, 1], [], []>} : vector<16x256xbf16>, vector<256x128xbf16>, vector<16x128xf32> -> vector<16x128xf32>
      %c0_19 = arith.constant 0 : index
      %c0_20 = arith.constant 0 : index
      %22 = vector.load %arg7[%c0_19, %c0_20] : memref<16x128xf32, #tpu.memory_space<vmem>>, vector<16x128xf32>
      tpu.vector_store %arg7[%c0_19, %c0_20], %21 {strides = array<i32>} : memref<16x128xf32, #tpu.memory_space<vmem>>, vector<16x128xf32>,
    } else {
    }
    return
  }
  func.func @transform_0(%arg0: i32, %arg1: i32) -> (i32, i32) {
    %c0_i32 = arith.constant 0 : i32
    %c0_i32_0 = arith.constant 0 : i32
    return %c0_i32, %arg1 : i32, i32
  }
  func.func @transform_1(%arg0: i32, %arg1: i32) -> (i32, i32) {
    %c0_i32 = arith.constant 0 : i32
    return %arg1, %arg0 : i32, i32
  }
  func.func @transform_2(%arg0: i32, %arg1: i32) -> (i32, i32) {
    %c0_i32 = arith.constant 0 : i32
    %c0_i32_0 = arith.constant 0 : i32
    return %c0_i32, %arg0 : i32, i32
  }
  func.func @transform_3(%arg0: i32, %arg1: i32) -> (i32, i32) {
    %c0_i32 = arith.constant 0 : i32
    %c0_i32_0 = arith.constant 0 : i32
    return %arg0, %c0_i32 : i32, i32
  }
  func.func @transform_4(%arg0: i32, %arg1: i32) -> (i32, i32) {
    %c0_i32 = arith.constant 0 : i32
    %c0_i32_0 = arith.constant 0 : i32
    return %c0_i32, %arg0 : i32, i32
  }
  func.func @transform_5(%arg0: i32, %arg1: i32) -> (i32, i32) {
    %c0_i32 = arith.constant 0 : i32
    %c0_i32_0 = arith.constant 0 : i32
    return %c0_i32, %arg0 : i32, i32
  }
}

</mosaic_0001>

<llo_original>
// kernel: cnn_base_forward.4
$region0: #{cnn_base_forward.4}
  #allocation0 [shape = 'u32[]', space=smem, size = 0x4, offset = 0x4, fixed_abs, tag = 'smem constant byte address 0x4 - core index']
  #allocation1 [shape = 'u32[72,128]{1,0:T(1,128)}', space=vmem, size = 0x9000, scoped, tag = 'internal scratch']
  %s0 = inlined_call_operand.vmem [shape: bf16[2816,256], index: 0, kind: input, shape index: {}]
  %s1 = inlined_call_operand.vmem [shape: bf16[256,32], index: 1, kind: input, shape index: {}]
  %s2 = inlined_call_operand.vmem [shape: f32[1,32], index: 2, kind: input, shape index: {}]
  %s3 = inlined_call_operand.vmem [shape: bf16[2816,32], index: 3, kind: output, shape index: {}]
  %s4 = sld [smem:[#allocation0]]
  $region45: #{cnn_base_forward.4} parent=0
    _
  %s6 = ssub.s32 1, %s4
  %s7 = scalar_select 0, %s6, %s4
  loop: start=0, step=1, limit=13
  $region2: #{cnn_base_forward.4} parent=0 // loop_pre_header
    _
  $region3: #{cnn_base_forward.4} parent=0 // loop_header
    %s9 = sphi 0, %s13
    %p10 = scmp.ge.s32.totalorder %s9, 13
    %s19 = sphi 0, %s21
    %s22 = sphi 0, %s19
    %s23 = sphi 0, %s22
    %s39 = sphi 0, %s23
    %s43 = sphi 0, %s43
    %s45 = sphi 0, %s43
    %s46 = sphi 0, %s45
    %s60 = sphi 0, %s46
    %s64 = sphi 0, %s64
    %s66 = sphi 0, %s64
    %s67 = sphi 0, %s66
    %s81 = sphi 0, %s67
    %s87 = sphi 0, %s89
    %s90 = sphi 0, %s87
    %s91 = sphi 0, %s90
    %s107 = sphi 0, %s91
  $region4: #{cnn_base_forward.4} parent=0 // loop_header_branch
    %12 = sbr.rel (%p10) target = $region8
  $region5: #{cnn_base_forward.4} parent=0 // loop_body
    %s14 = ssub.s32 %s9, 1
    %s15 = ssub.s32 %s9, 2
    %s16 = sadd.s32 %s9, 1
    %s17 = ssub.s32 %s9, %s16
    %p18 = scmp.eq.s32.totalorder %s17, 0
    %s20 = sadd.s32 %s19, 1
    %s21 = scalar_select %p18, %s19, %s20
    %p24 = pneg %p18
    %p25 = scmp.eq.s32.totalorder %s9, 10
    %p26 = por %p24, %p25
    %p27 = scmp.ne.s32.totalorder %s19, %s22
    %p28 = scmp.eq.s32.totalorder %s9, 0
    %p29 = por %p27, %p28
    %p30 = scmp.ne.s32.totalorder %s19, %s22
    %p31 = scmp.eq.s32.totalorder %s14, 10
    %p32 = por %p30, %p31
    %p33 = scmp.ne.s32.totalorder %s22, %s23
    %p34 = scmp.eq.s32.totalorder %s14, 0
    %p35 = por %p33, %p34
    %p36 = scmp.ne.s32.totalorder %s22, %s23
    %p37 = scmp.eq.s32.totalorder %s15, 10
    %p38 = por %p36, %p37
    %p40 = scmp.ne.s32.totalorder %s23, %s39
    %p41 = scmp.eq.s32.totalorder %s15, 0
    %p42 = por %p40, %p41
    %s44 = sadd.s32 %s43, 1
    %p47 = scmp.eq.s32.totalorder %s9, 10
    %p48 = scmp.ne.s32.totalorder %s43, %s45
    %p49 = scmp.eq.s32.totalorder %s9, 0
    %p50 = por %p48, %p49
    %p51 = scmp.ne.s32.totalorder %s43, %s45
    %p52 = scmp.eq.s32.totalorder %s14, 10
    %p53 = por %p51, %p52
    %p54 = scmp.ne.s32.totalorder %s45, %s46
    %p55 = scmp.eq.s32.totalorder %s14, 0
    %p56 = por %p54, %p55
    %p57 = scmp.ne.s32.totalorder %s45, %s46
    %p58 = scmp.eq.s32.totalorder %s15, 10
    %p59 = por %p57, %p58
    %p61 = scmp.ne.s32.totalorder %s46, %s60
    %p62 = scmp.eq.s32.totalorder %s15, 0
    %p63 = por %p61, %p62
    %s65 = sadd.s32 %s64, 1
    %p68 = scmp.eq.s32.totalorder %s9, 10
    %p69 = scmp.ne.s32.totalorder %s64, %s66
    %p70 = scmp.eq.s32.totalorder %s9, 0
    %p71 = por %p69, %p70
    %p72 = scmp.ne.s32.totalorder %s64, %s66
    %p73 = scmp.eq.s32.totalorder %s14, 10
    %p74 = por %p72, %p73
    %p75 = scmp.ne.s32.totalorder %s66, %s67
    %p76 = scmp.eq.s32.totalorder %s14, 0
    %p77 = por %p75, %p76
    %p78 = scmp.ne.s32.totalorder %s66, %s67
    %p79 = scmp.eq.s32.totalorder %s15, 10
    %p80 = por %p78, %p79
    %p82 = scmp.ne.s32.totalorder %s67, %s81
    %p83 = scmp.eq.s32.totalorder %s15, 0
    %p84 = por %p82, %p83
    %s85 = ssub.s32 %s9, %s16
    %p86 = scmp.eq.s32.totalorder %s85, 0
    %s88 = sadd.s32 %s87, 1
    %s89 = scalar_select %p86, %s87, %s88
    %p92 = pneg %p86
    %p93 = scmp.eq.s32.totalorder %s9, 10
    %p94 = por %p92, %p93
    %p95 = scmp.ne.s32.totalorder %s87, %s90
    %p96 = scmp.eq.s32.totalorder %s9, 0
    %p97 = por %p95, %p96
    %p98 = scmp.ne.s32.totalorder %s87, %s90
    %p99 = scmp.eq.s32.totalorder %s14, 10
    %p100 = por %p98, %p99
    %p101 = scmp.ne.s32.totalorder %s90, %s91
    %p102 = scmp.eq.s32.totalorder %s14, 0
    %p103 = por %p101, %p102
    %p104 = scmp.ne.s32.totalorder %s90, %s91
    %p105 = scmp.eq.s32.totalorder %s15, 10
    %p106 = por %p104, %p105
    %p108 = scmp.ne.s32.totalorder %s91, %s107
    %p109 = scmp.eq.s32.totalorder %s15, 0
    %p110 = por %p108, %p109
    %p111 = scmp.le.s32.totalorder 1, %s9
    %p112 = scmp.lt.s32.totalorder %s9, 12
    %p113 = pnand %p111, %p112
    %p114 = pneg %p113
    // Predicated region
    $region9: #{cnn_base_forward.4} parent=5 // pred_check
      _
    $region10: #{cnn_base_forward.4} parent=5 // pred_check_branch
      %116 = sbr.rel (%p113) target = $region12
    $region11: #{cnn_base_forward.4} parent=5 // pred_region
      %s117 = ssub.s32 %s9, 1
      // Predicated region
      $region13: #{cnn_base_forward.4} parent=11 // pred_check
        %p118 = pneg %p56
      $region14: #{cnn_base_forward.4} parent=11 // pred_check_branch
        %120 = sbr.rel (%p118) target = $region16
      $region15: #{cnn_base_forward.4} parent=11 // pred_region
        _
      $region16: #{cnn_base_forward.4} parent=11 // pred_fallthru
        _
      // Predicated region
      $region17: #{cnn_base_forward.4} parent=11 // pred_check
        %p121 = pneg %p77
      $region18: #{cnn_base_forward.4} parent=11 // pred_check_branch
        %123 = sbr.rel (%p121) target = $region20
      $region19: #{cnn_base_forward.4} parent=11 // pred_region
        _
      $region20: #{cnn_base_forward.4} parent=11 // pred_fallthru
        _
    $region12: #{cnn_base_forward.4} parent=5 // pred_fallthru
      _
    %p124 = scmp.lt.s32.totalorder %s9, 11
    // Predicated region
    $region21: #{cnn_base_forward.4} parent=5 // pred_check
      %p125 = pneg %p124
    $region22: #{cnn_base_forward.4} parent=5 // pred_check_branch
      %127 = sbr.rel (%p125) target = $region24
    $region23: #{cnn_base_forward.4} parent=5 // pred_region
      // Predicated region
      $region25: #{cnn_base_forward.4} parent=23 // pred_check
        %p128 = pneg %p29
      $region26: #{cnn_base_forward.4} parent=23 // pred_check_branch
        %130 = sbr.rel (%p128) target = $region28
      $region27: #{cnn_base_forward.4} parent=23 // pred_region
        %s131 = smul.u32 32, %s9
        %p132 = scmp.lt.s32.totalorder %s131, 351
        %s133 = scalar_select %p132, %s131, 351
        %s134 = smul.addr %s133, 2
        %s135 = smul.addr %s134, 4
        %s136 = scalar_lea.vmem %s0, %s135
        %s137 = smul.u32 32, %s9
      $region28: #{cnn_base_forward.4} parent=23 // pred_fallthru
        _
    $region24: #{cnn_base_forward.4} parent=5 // pred_fallthru
      _
    %p138 = scmp.le.s32.totalorder 1, %s9
    %p139 = scmp.lt.s32.totalorder %s9, 12
    %p140 = pnand %p138, %p139
    %p141 = pneg %p140
    // Predicated region
    $region29: #{cnn_base_forward.4} parent=5 // pred_check
      _
    $region30: #{cnn_base_forward.4} parent=5 // pred_check_branch
      %143 = sbr.rel (%p140) target = $region32
    $region31: #{cnn_base_forward.4} parent=5 // pred_region
      %s144 = ssub.s32 %s9, 1
      %s145 = smul.u32 32, %s14
      %p146 = scmp.lt.s32.totalorder %s145, 351
      %s147 = scalar_select %p146, %s145, 351
      %s148 = smul.addr %s147, 2
      %s149 = smul.addr %s148, 4
      %s150 = scalar_lea.vmem %s0, %s149
      %p151 = pneg %p35
      %p152 = pneg %p32
      %p153 = pneg %p56
      %p154 = pneg %p53
      %p155 = pneg %p77
      %p156 = pneg %p74
      %p157 = pneg %p103
      %p158 = pneg %p100
      %s159 = smul.u32 32, %s14
      %p160 = scmp.lt.s32.totalorder %s159, 351
      %s161 = scalar_select %p160, %s159, 351
      %s162 = smul.addr %s161, 4
      %s163 = scalar_lea.vmem %s3, %s162
      %s164 = smul.u32 32, %s14
      %p165 = scmp.lt.s32.totalorder %s164, 351
      %s166 = scalar_select %p165, %s164, 351
      %s167 = smul.addr %s166, 2
      %s168 = smul.addr %s167, 4
      %s169 = scalar_lea.vmem %s0, %s168
      %s170 = smul.u32 32, %s14
      %s171 = smul.u32 32, %s14
      %p172 = scmp.lt.s32.totalorder %s171, 351
      %s173 = scalar_select %p172, %s171, 351
      %s174 = smul.addr %s173, 4
      %s175 = scalar_lea.vmem %s3, %s174
      %s176 = smul.u32 32, %s14
      %v177 = vld [vmem:[%s169] sm:$0xff]
      %v178 = vld [vmem:[%s169 + $0x8] sm:$0xff]
      %v179 = vld [vmem:[%s169 + $0x10] sm:$0xff]
      %v180 = vld [vmem:[%s169 + $0x18] sm:$0xff]
      %v181 = vld [vmem:[%s169 + $0x20] sm:$0xff]
      %v182 = vld [vmem:[%s169 + $0x28] sm:$0xff]
      %v183 = vld [vmem:[%s169 + $0x30] sm:$0xff]
      %v184 = vld [vmem:[%s169 + $0x38] sm:$0xff]
      %v185 = vld [vmem:[%s169 + $0x40] sm:$0xff]
      %v186 = vld [vmem:[%s169 + $0x48] sm:$0xff]
      %v187 = vld [vmem:[%s169 + $0x50] sm:$0xff]
      %v188 = vld [vmem:[%s169 + $0x58] sm:$0xff]
      %v189 = vld [vmem:[%s169 + $0x60] sm:$0xff]
      %v190 = vld [vmem:[%s169 + $0x68] sm:$0xff]
      %v191 = vld [vmem:[%s169 + $0x70] sm:$0xff]
      %v192 = vld [vmem:[%s169 + $0x78] sm:$0xff]
      %v193 = vld [vmem:[%s169 + $0x80] sm:$0xff]
      %v194 = vld [vmem:[%s169 + $0x88] sm:$0xff]
      %v195 = vld [vmem:[%s169 + $0x90] sm:$0xff]
      %v196 = vld [vmem:[%s169 + $0x98] sm:$0xff]
      %v197 = vld [vmem:[%s169 + $0xa0] sm:$0xff]
      %v198 = vld [vmem:[%s169 + $0xa8] sm:$0xff]
      %v199 = vld [vmem:[%s169 + $0xb0] sm:$0xff]
      %v200 = vld [vmem:[%s169 + $0xb8] sm:$0xff]
      %v201 = vld [vmem:[%s169 + $0xc0] sm:$0xff]
      %v202 = vld [vmem:[%s169 + $0xc8] sm:$0xff]
      %v203 = vld [vmem:[%s169 + $0xd0] sm:$0xff]
      %v204 = vld [vmem:[%s169 + $0xd8] sm:$0xff]
      %v205 = vld [vmem:[%s169 + $0xe0] sm:$0xff]
      %v206 = vld [vmem:[%s169 + $0xe8] sm:$0xff]
      %v207 = vld [vmem:[%s169 + $0xf0] sm:$0xff]
      %v208 = vld [vmem:[%s169 + $0xf8] sm:$0xff]
      %v209 = vld [vmem:[%s1] sm:$0xf]
      %v210 = vld [vmem:[%s1 + $0x4] sm:$0xf]
      %v211 = vld [vmem:[%s1 + $0x8] sm:$0xf]
      %v212 = vld [vmem:[%s1 + $0xc] sm:$0xf]
      %v213 = vld [vmem:[%s1 + $0x10] sm:$0xf]
      %v214 = vld [vmem:[%s1 + $0x14] sm:$0xf]
      %v215 = vld [vmem:[%s1 + $0x18] sm:$0xf]
      %v216 = vld [vmem:[%s1 + $0x1c] sm:$0xf]
      %v217 = vld [vmem:[%s1 + $0x20] sm:$0xf]
      %v218 = vld [vmem:[%s1 + $0x24] sm:$0xf]
      %v219 = vld [vmem:[%s1 + $0x28] sm:$0xf]
      %v220 = vld [vmem:[%s1 + $0x2c] sm:$0xf]
      %v221 = vld [vmem:[%s1 + $0x30] sm:$0xf]
      %v222 = vld [vmem:[%s1 + $0x34] sm:$0xf]
      %v223 = vld [vmem:[%s1 + $0x38] sm:$0xf]
      %v224 = vld [vmem:[%s1 + $0x3c] sm:$0xf]
      %v225 = vld [vmem:[%s1 + $0x40] sm:$0xf]
      %v226 = vld [vmem:[%s1 + $0x44] sm:$0xf]
      %v227 = vld [vmem:[%s1 + $0x48] sm:$0xf]
      %v228 = vld [vmem:[%s1 + $0x4c] sm:$0xf]
      %v229 = vld [vmem:[%s1 + $0x50] sm:$0xf]
      %v230 = vld [vmem:[%s1 + $0x54] sm:$0xf]
      %v231 = vld [vmem:[%s1 + $0x58] sm:$0xf]
      %v232 = vld [vmem:[%s1 + $0x5c] sm:$0xf]
      %v233 = vld [vmem:[%s1 + $0x60] sm:$0xf]
      %v234 = vld [vmem:[%s1 + $0x64] sm:$0xf]
      %v235 = vld [vmem:[%s1 + $0x68] sm:$0xf]
      %v236 = vld [vmem:[%s1 + $0x6c] sm:$0xf]
      %v237 = vld [vmem:[%s1 + $0x70] sm:$0xf]
      %v238 = vld [vmem:[%s1 + $0x74] sm:$0xf]
      %v239 = vld [vmem:[%s1 + $0x78] sm:$0xf]
      %v240 = vld [vmem:[%s1 + $0x7c] sm:$0xf]
      %v241 = vld [vmem:[%s2] sm:$0x1]
      %v243 = vperm.slane %v241, 0
      %v277 = vunpack.c.l.b16 %v177
      %v278 = vunpack.c.h.b16 %v177
      %v279 = vunpack.c.l.b16 %v178
      %v280 = vunpack.c.h.b16 %v178
      %v281 = vunpack.c.l.b16 %v179
      %v282 = vunpack.c.h.b16 %v179
      %v283 = vunpack.c.l.b16 %v180
      %v284 = vunpack.c.h.b16 %v180
      %v285 = vunpack.c.l.b16 %v181
      %v286 = vunpack.c.h.b16 %v181
      %v287 = vunpack.c.l.b16 %v182
      %v288 = vunpack.c.h.b16 %v182
      %v289 = vunpack.c.l.b16 %v183
      %v290 = vunpack.c.h.b16 %v183
      %v291 = vunpack.c.l.b16 %v184
      %v292 = vunpack.c.h.b16 %v184
      %v293 = vunpack.c.l.b16 %v185
      %v294 = vunpack.c.h.b16 %v185
      %v295 = vunpack.c.l.b16 %v186
      %v296 = vunpack.c.h.b16 %v186
      %v297 = vunpack.c.l.b16 %v187
      %v298 = vunpack.c.h.b16 %v187
      %v299 = vunpack.c.l.b16 %v188
      %v300 = vunpack.c.h.b16 %v188
      %v301 = vunpack.c.l.b16 %v189
      %v302 = vunpack.c.h.b16 %v189
      %v303 = vunpack.c.l.b16 %v190
      %v304 = vunpack.c.h.b16 %v190
      %v305 = vunpack.c.l.b16 %v191
      %v306 = vunpack.c.h.b16 %v191
      %v307 = vunpack.c.l.b16 %v192
      %v308 = vunpack.c.h.b16 %v192
      %v309 = vunpack.c.l.b16 %v193
      %v310 = vunpack.c.h.b16 %v193
      %v311 = vunpack.c.l.b16 %v194
      %v312 = vunpack.c.h.b16 %v194
      %v313 = vunpack.c.l.b16 %v195
      %v314 = vunpack.c.h.b16 %v195
      %v315 = vunpack.c.l.b16 %v196
      %v316 = vunpack.c.h.b16 %v196
      %v317 = vunpack.c.l.b16 %v197
      %v318 = vunpack.c.h.b16 %v197
      %v319 = vunpack.c.l.b16 %v198
      %v320 = vunpack.c.h.b16 %v198
      %v321 = vunpack.c.l.b16 %v199
      %v322 = vunpack.c.h.b16 %v199
      %v323 = vunpack.c.l.b16 %v200
      %v324 = vunpack.c.h.b16 %v200
      %v325 = vunpack.c.l.b16 %v201
      %v326 = vunpack.c.h.b16 %v201
      %v327 = vunpack.c.l.b16 %v202
      %v328 = vunpack.c.h.b16 %v202
      %v329 = vunpack.c.l.b16 %v203
      %v330 = vunpack.c.h.b16 %v203
      %v331 = vunpack.c.l.b16 %v204
      %v332 = vunpack.c.h.b16 %v204
      %v333 = vunpack.c.l.b16 %v205
      %v334 = vunpack.c.h.b16 %v205
      %v335 = vunpack.c.l.b16 %v206
      %v336 = vunpack.c.h.b16 %v206
      %v337 = vunpack.c.l.b16 %v207
      %v338 = vunpack.c.h.b16 %v207
      %v339 = vunpack.c.l.b16 %v208
      %v340 = vunpack.c.h.b16 %v208
      %v341 = vpack.c.b16 %v279, %v277
      %v342 = vpack.c.b16 %v280, %v278
      %v343 = vpack.c.b16 %v283, %v281
      %v344 = vpack.c.b16 %v284, %v282
      %v345 = vpack.c.b16 %v287, %v285
      %v346 = vpack.c.b16 %v288, %v286
      %v347 = vpack.c.b16 %v291, %v289
      %v348 = vpack.c.b16 %v292, %v290
      %v349 = vpack.c.b16 %v295, %v293
      %v350 = vpack.c.b16 %v296, %v294
      %v351 = vpack.c.b16 %v299, %v297
      %v352 = vpack.c.b16 %v300, %v298
      %v353 = vpack.c.b16 %v303, %v301
      %v354 = vpack.c.b16 %v304, %v302
      %v355 = vpack.c.b16 %v307, %v305
      %v356 = vpack.c.b16 %v308, %v306
      %v357 = vpack.c.b16 %v311, %v309
      %v358 = vpack.c.b16 %v312, %v310
      %v359 = vpack.c.b16 %v315, %v313
      %v360 = vpack.c.b16 %v316, %v314
      %v361 = vpack.c.b16 %v319, %v317
      %v362 = vpack.c.b16 %v320, %v318
      %v363 = vpack.c.b16 %v323, %v321
      %v364 = vpack.c.b16 %v324, %v322
      %v365 = vpack.c.b16 %v327, %v325
      %v366 = vpack.c.b16 %v328, %v326
      %v367 = vpack.c.b16 %v331, %v329
      %v368 = vpack.c.b16 %v332, %v330
      %v369 = vpack.c.b16 %v335, %v333
      %v370 = vpack.c.b16 %v336, %v334
      %v371 = vpack.c.b16 %v339, %v337
      %v372 = vpack.c.b16 %v340, %v338
      %v437 = vunpack.c.l.b16 %v209
      %v438 = vunpack.c.l.b16 %v210
      %v439 = vunpack.c.l.b16 %v211
      %v440 = vunpack.c.l.b16 %v212
      %v441 = vunpack.c.l.b16 %v213
      %v442 = vunpack.c.l.b16 %v214
      %v443 = vunpack.c.l.b16 %v215
      %v444 = vunpack.c.l.b16 %v216
      %v445 = vunpack.c.l.b16 %v217
      %v446 = vunpack.c.l.b16 %v218
      %v447 = vunpack.c.l.b16 %v219
      %v448 = vunpack.c.l.b16 %v220
      %v449 = vunpack.c.l.b16 %v221
      %v450 = vunpack.c.l.b16 %v222
      %v451 = vunpack.c.l.b16 %v223
      %v452 = vunpack.c.l.b16 %v224
      %v453 = vunpack.c.l.b16 %v225
      %v454 = vunpack.c.l.b16 %v226
      %v455 = vunpack.c.l.b16 %v227
      %v456 = vunpack.c.l.b16 %v228
      %v457 = vunpack.c.l.b16 %v229
      %v458 = vunpack.c.l.b16 %v230
      %v459 = vunpack.c.l.b16 %v231
      %v460 = vunpack.c.l.b16 %v232
      %v461 = vunpack.c.l.b16 %v233
      %v462 = vunpack.c.l.b16 %v234
      %v463 = vunpack.c.l.b16 %v235
      %v464 = vunpack.c.l.b16 %v236
      %v465 = vunpack.c.l.b16 %v237
      %v466 = vunpack.c.l.b16 %v238
      %v467 = vunpack.c.l.b16 %v239
      %v468 = vunpack.c.l.b16 %v240
      %v469 = vpack.c.b16 %v438, %v437
      %v470 = vpack.c.b16 %v440, %v439
      %v471 = vpack.c.b16 %v442, %v441
      %v472 = vpack.c.b16 %v444, %v443
      %v473 = vpack.c.b16 %v446, %v445
      %v474 = vpack.c.b16 %v448, %v447
      %v475 = vpack.c.b16 %v450, %v449
      %v476 = vpack.c.b16 %v452, %v451
      %v477 = vpack.c.b16 %v454, %v453
      %v478 = vpack.c.b16 %v456, %v455
      %v479 = vpack.c.b16 %v458, %v457
      %v480 = vpack.c.b16 %v460, %v459
      %v481 = vpack.c.b16 %v462, %v461
      %v482 = vpack.c.b16 %v464, %v463
      %v483 = vpack.c.b16 %v466, %v465
      %v484 = vpack.c.b16 %v468, %v467
      %501 = vmatpush.bf16.msra.mxu0 %v476
      %502 = vmatpush.bf16.msra.mxu0 %v475
      %503 = vmatpush.bf16.msra.mxu0 %v474
      %504 = vmatpush.bf16.msra.mxu0 %v473
      %505 = vmatpush.bf16.msra.mxu0 %v472
      %506 = vmatpush.bf16.msra.mxu0 %v471
      %507 = vmatpush.bf16.msra.mxu0 %v470
      %508 = vmatpush.bf16.msra.mxu0 %v469
      %509 = vmatmul.bf16.gmra.mxu0 %v341
      %v510 = vpop.f32.mrf.mxu0
      %v511 = vadd.f32 %v243, %v510
      %v512 = vpop.f32.mrf.mxu0
      %v513 = vadd.f32 %v243, %v512
      %514 = vmatmul.bf16.gmra.mxu0 %v343
      %v515 = vpop.f32.mrf.mxu0
      %v516 = vadd.f32 %v243, %v515
      %v517 = vpop.f32.mrf.mxu0
      %v518 = vadd.f32 %v243, %v517
      %519 = vmatmul.bf16.gmra.mxu0 %v345
      %v520 = vpop.f32.mrf.mxu0
      %v521 = vadd.f32 %v243, %v520
      %v522 = vpop.f32.mrf.mxu0
      %v523 = vadd.f32 %v243, %v522
      %524 = vmatmul.bf16.gmra.mxu0 %v347
      %v525 = vpop.f32.mrf.mxu0
      %v526 = vadd.f32 %v243, %v525
      %v527 = vpop.f32.mrf.mxu0
      %v528 = vadd.f32 %v243, %v527
      %529 = vmatmul.bf16.gmra.mxu0 %v349
      %v530 = vpop.f32.mrf.mxu0
      %v531 = vadd.f32 %v243, %v530
      %v532 = vpop.f32.mrf.mxu0
      %v533 = vadd.f32 %v243, %v532
      %534 = vmatmul.bf16.gmra.mxu0 %v351
      %v535 = vpop.f32.mrf.mxu0
      %v536 = vadd.f32 %v243, %v535
      %v537 = vpop.f32.mrf.mxu0
      %v538 = vadd.f32 %v243, %v537
      %539 = vmatmul.bf16.gmra.mxu0 %v353
      %v540 = vpop.f32.mrf.mxu0
      %v541 = vadd.f32 %v243, %v540
      %v542 = vpop.f32.mrf.mxu0
      %v543 = vadd.f32 %v243, %v542
      %544 = vmatmul.bf16.gmra.mxu0 %v355
      %v545 = vpop.f32.mrf.mxu0
      %v546 = vadd.f32 %v243, %v545
      %v547 = vpop.f32.mrf.mxu0
      %v548 = vadd.f32 %v243, %v547
      %549 = vmatmul.bf16.gmra.mxu0 %v357
      %v550 = vpop.f32.mrf.mxu0
      %v551 = vadd.f32 %v243, %v550
      %v552 = vpop.f32.mrf.mxu0
      %v553 = vadd.f32 %v243, %v552
      %554 = vmatmul.bf16.gmra.mxu0 %v359
      %v555 = vpop.f32.mrf.mxu0
      %v556 = vadd.f32 %v243, %v555
      %v557 = vpop.f32.mrf.mxu0
      %v558 = vadd.f32 %v243, %v557
      %559 = vmatmul.bf16.gmra.mxu0 %v361
      %v560 = vpop.f32.mrf.mxu0
      %v561 = vadd.f32 %v243, %v560
      %v562 = vpop.f32.mrf.mxu0
      %v563 = vadd.f32 %v243, %v562
      %564 = vmatmul.bf16.gmra.mxu0 %v363
      %v565 = vpop.f32.mrf.mxu0
      %v566 = vadd.f32 %v243, %v565
      %v567 = vpop.f32.mrf.mxu0
      %v568 = vadd.f32 %v243, %v567
      %569 = vmatmul.bf16.gmra.mxu0 %v365
      %v570 = vpop.f32.mrf.mxu0
      %v571 = vadd.f32 %v243, %v570
      %v572 = vpop.f32.mrf.mxu0
      %v573 = vadd.f32 %v243, %v572
      %574 = vmatmul.bf16.gmra.mxu0 %v367
      %v575 = vpop.f32.mrf.mxu0
      %v576 = vadd.f32 %v243, %v575
      %v577 = vpop.f32.mrf.mxu0
      %v578 = vadd.f32 %v243, %v577
      %579 = vmatmul.bf16.gmra.mxu0 %v369
      %v580 = vpop.f32.mrf.mxu0
      %v581 = vadd.f32 %v243, %v580
      %v582 = vpop.f32.mrf.mxu0
      %v583 = vadd.f32 %v243, %v582
      %584 = vmatmul.bf16.gmra.mxu0 %v371
      %v585 = vpop.f32.mrf.mxu0
      %v586 = vadd.f32 %v243, %v585
      %v587 = vpop.f32.mrf.mxu0
      %v588 = vadd.f32 %v243, %v587
      %589 = vdwg.mxu0
      %590 = vmatpush.bf16.msra.mxu0 %v484
      %591 = vmatpush.bf16.msra.mxu0 %v483
      %592 = vmatpush.bf16.msra.mxu0 %v482
      %593 = vmatpush.bf16.msra.mxu0 %v481
      %594 = vmatpush.bf16.msra.mxu0 %v480
      %595 = vmatpush.bf16.msra.mxu0 %v479
      %596 = vmatpush.bf16.msra.mxu0 %v478
      %597 = vmatpush.bf16.msra.mxu0 %v477
      %598 = vmatmul.bf16.gmra.mxu0 %v342
      %v599 = vpop.f32.mrf.mxu0
      %v600 = vadd.f32 %v511, %v599
      %v601 = vpop.f32.mrf.mxu0
      %v602 = vadd.f32 %v513, %v601
      %603 = vmatmul.bf16.gmra.mxu0 %v344
      %v604 = vpop.f32.mrf.mxu0
      %v605 = vadd.f32 %v516, %v604
      %v606 = vpop.f32.mrf.mxu0
      %v607 = vadd.f32 %v518, %v606
      %608 = vmatmul.bf16.gmra.mxu0 %v346
      %v609 = vpop.f32.mrf.mxu0
      %v610 = vadd.f32 %v521, %v609
      %v611 = vpop.f32.mrf.mxu0
      %v612 = vadd.f32 %v523, %v611
      %613 = vmatmul.bf16.gmra.mxu0 %v348
      %v614 = vpop.f32.mrf.mxu0
      %v615 = vadd.f32 %v526, %v614
      %v616 = vpop.f32.mrf.mxu0
      %v617 = vadd.f32 %v528, %v616
      %618 = vmatmul.bf16.gmra.mxu0 %v350
      %v619 = vpop.f32.mrf.mxu0
      %v620 = vadd.f32 %v531, %v619
      %v621 = vpop.f32.mrf.mxu0
      %v622 = vadd.f32 %v533, %v621
      %623 = vmatmul.bf16.gmra.mxu0 %v352
      %v624 = vpop.f32.mrf.mxu0
      %v625 = vadd.f32 %v536, %v624
      %v626 = vpop.f32.mrf.mxu0
      %v627 = vadd.f32 %v538, %v626
      %628 = vmatmul.bf16.gmra.mxu0 %v354
      %v629 = vpop.f32.mrf.mxu0
      %v630 = vadd.f32 %v541, %v629
      %v631 = vpop.f32.mrf.mxu0
      %v632 = vadd.f32 %v543, %v631
      %633 = vmatmul.bf16.gmra.mxu0 %v356
      %v634 = vpop.f32.mrf.mxu0
      %v635 = vadd.f32 %v546, %v634
      %v636 = vpop.f32.mrf.mxu0
      %v637 = vadd.f32 %v548, %v636
      %638 = vmatmul.bf16.gmra.mxu0 %v358
      %v639 = vpop.f32.mrf.mxu0
      %v640 = vadd.f32 %v551, %v639
      %v641 = vpop.f32.mrf.mxu0
      %v642 = vadd.f32 %v553, %v641
      %643 = vmatmul.bf16.gmra.mxu0 %v360
      %v644 = vpop.f32.mrf.mxu0
      %v645 = vadd.f32 %v556, %v644
      %v646 = vpop.f32.mrf.mxu0
      %v647 = vadd.f32 %v558, %v646
      %648 = vmatmul.bf16.gmra.mxu0 %v362
      %v649 = vpop.f32.mrf.mxu0
      %v650 = vadd.f32 %v561, %v649
      %v651 = vpop.f32.mrf.mxu0
      %v652 = vadd.f32 %v563, %v651
      %653 = vmatmul.bf16.gmra.mxu0 %v364
      %v654 = vpop.f32.mrf.mxu0
      %v655 = vadd.f32 %v566, %v654
      %v656 = vpop.f32.mrf.mxu0
      %v657 = vadd.f32 %v568, %v656
      %658 = vmatmul.bf16.gmra.mxu0 %v366
      %v659 = vpop.f32.mrf.mxu0
      %v660 = vadd.f32 %v571, %v659
      %v661 = vpop.f32.mrf.mxu0
      %v662 = vadd.f32 %v573, %v661
      %663 = vmatmul.bf16.gmra.mxu0 %v368
      %v664 = vpop.f32.mrf.mxu0
      %v665 = vadd.f32 %v576, %v664
      %v666 = vpop.f32.mrf.mxu0
      %v667 = vadd.f32 %v578, %v666
      %668 = vmatmul.bf16.gmra.mxu0 %v370
      %v669 = vpop.f32.mrf.mxu0
      %v670 = vadd.f32 %v581, %v669
      %v671 = vpop.f32.mrf.mxu0
      %v672 = vadd.f32 %v583, %v671
      %673 = vmatmul.bf16.gmra.mxu0 %v372
      %v674 = vpop.f32.mrf.mxu0
      %v675 = vadd.f32 %v586, %v674
      %v676 = vpop.f32.mrf.mxu0
      %v677 = vadd.f32 %v588, %v676
      %678 = vdwg.mxu0
      %v679 = vmax.f32 %v600, 0.0
      %v680 = vmax.f32 %v602, 0.0
      %v681 = vmax.f32 %v605, 0.0
      %v682 = vmax.f32 %v607, 0.0
      %v683 = vmax.f32 %v610, 0.0
      %v684 = vmax.f32 %v612, 0.0
      %v685 = vmax.f32 %v615, 0.0
      %v686 = vmax.f32 %v617, 0.0
      %v687 = vmax.f32 %v620, 0.0
      %v688 = vmax.f32 %v622, 0.0
      %v689 = vmax.f32 %v625, 0.0
      %v690 = vmax.f32 %v627, 0.0
      %v691 = vmax.f32 %v630, 0.0
      %v692 = vmax.f32 %v632, 0.0
      %v693 = vmax.f32 %v635, 0.0
      %v694 = vmax.f32 %v637, 0.0
      %v695 = vmax.f32 %v640, 0.0
      %v696 = vmax.f32 %v642, 0.0
      %v697 = vmax.f32 %v645, 0.0
      %v698 = vmax.f32 %v647, 0.0
      %v699 = vmax.f32 %v650, 0.0
      %v700 = vmax.f32 %v652, 0.0
      %v701 = vmax.f32 %v655, 0.0
      %v702 = vmax.f32 %v657, 0.0
      %v703 = vmax.f32 %v660, 0.0
      %v704 = vmax.f32 %v662, 0.0
      %v705 = vmax.f32 %v665, 0.0
      %v706 = vmax.f32 %v667, 0.0
      %v707 = vmax.f32 %v670, 0.0
      %v708 = vmax.f32 %v672, 0.0
      %v709 = vmax.f32 %v675, 0.0
      %v710 = vmax.f32 %v677, 0.0
      %v711 = vpack.c.bf16 %v679, %v679
      %v712 = vpack.c.bf16 %v680, %v680
      %v713 = vpack.c.bf16 %v681, %v681
      %v714 = vpack.c.bf16 %v682, %v682
      %v715 = vpack.c.bf16 %v683, %v683
      %v716 = vpack.c.bf16 %v684, %v684
      %v717 = vpack.c.bf16 %v685, %v685
      %v718 = vpack.c.bf16 %v686, %v686
      %v719 = vpack.c.bf16 %v687, %v687
      %v720 = vpack.c.bf16 %v688, %v688
      %v721 = vpack.c.bf16 %v689, %v689
      %v722 = vpack.c.bf16 %v690, %v690
      %v723 = vpack.c.bf16 %v691, %v691
      %v724 = vpack.c.bf16 %v692, %v692
      %v725 = vpack.c.bf16 %v693, %v693
      %v726 = vpack.c.bf16 %v694, %v694
      %v727 = vpack.c.bf16 %v695, %v695
      %v728 = vpack.c.bf16 %v696, %v696
      %v729 = vpack.c.bf16 %v697, %v697
      %v730 = vpack.c.bf16 %v698, %v698
      %v731 = vpack.c.bf16 %v699, %v699
      %v732 = vpack.c.bf16 %v700, %v700
      %v733 = vpack.c.bf16 %v701, %v701
      %v734 = vpack.c.bf16 %v702, %v702
      %v735 = vpack.c.bf16 %v703, %v703
      %v736 = vpack.c.bf16 %v704, %v704
      %v737 = vpack.c.bf16 %v705, %v705
      %v738 = vpack.c.bf16 %v706, %v706
      %v739 = vpack.c.bf16 %v707, %v707
      %v740 = vpack.c.bf16 %v708, %v708
      %v741 = vpack.c.bf16 %v709, %v709
      %v742 = vpack.c.bf16 %v710, %v710
      %vm743 = vcmask 257024
      %744 = vst.msk [vmem:[%s175] sm:$0xf] %vm743, %v711
      %745 = vst.msk [vmem:[%s175 + $0x4] sm:$0xf] %vm743, %v712
      %746 = vst.msk [vmem:[%s175 + $0x8] sm:$0xf] %vm743, %v713
      %747 = vst.msk [vmem:[%s175 + $0xc] sm:$0xf] %vm743, %v714
      %748 = vst.msk [vmem:[%s175 + $0x10] sm:$0xf] %vm743, %v715
      %749 = vst.msk [vmem:[%s175 + $0x14] sm:$0xf] %vm743, %v716
      %750 = vst.msk [vmem:[%s175 + $0x18] sm:$0xf] %vm743, %v717
      %751 = vst.msk [vmem:[%s175 + $0x1c] sm:$0xf] %vm743, %v718
      %752 = vst.msk [vmem:[%s175 + $0x20] sm:$0xf] %vm743, %v719
      %753 = vst.msk [vmem:[%s175 + $0x24] sm:$0xf] %vm743, %v720
      %754 = vst.msk [vmem:[%s175 + $0x28] sm:$0xf] %vm743, %v721
      %755 = vst.msk [vmem:[%s175 + $0x2c] sm:$0xf] %vm743, %v722
      %756 = vst.msk [vmem:[%s175 + $0x30] sm:$0xf] %vm743, %v723
      %757 = vst.msk [vmem:[%s175 + $0x34] sm:$0xf] %vm743, %v724
      %758 = vst.msk [vmem:[%s175 + $0x38] sm:$0xf] %vm743, %v725
      %759 = vst.msk [vmem:[%s175 + $0x3c] sm:$0xf] %vm743, %v726
      %760 = vst.msk [vmem:[%s175 + $0x40] sm:$0xf] %vm743, %v727
      %761 = vst.msk [vmem:[%s175 + $0x44] sm:$0xf] %vm743, %v728
      %762 = vst.msk [vmem:[%s175 + $0x48] sm:$0xf] %vm743, %v729
      %763 = vst.msk [vmem:[%s175 + $0x4c] sm:$0xf] %vm743, %v730
      %764 = vst.msk [vmem:[%s175 + $0x50] sm:$0xf] %vm743, %v731
      %765 = vst.msk [vmem:[%s175 + $0x54] sm:$0xf] %vm743, %v732
      %766 = vst.msk [vmem:[%s175 + $0x58] sm:$0xf] %vm743, %v733
      %767 = vst.msk [vmem:[%s175 + $0x5c] sm:$0xf] %vm743, %v734
      %768 = vst.msk [vmem:[%s175 + $0x60] sm:$0xf] %vm743, %v735
      %769 = vst.msk [vmem:[%s175 + $0x64] sm:$0xf] %vm743, %v736
      %770 = vst.msk [vmem:[%s175 + $0x68] sm:$0xf] %vm743, %v737
      %771 = vst.msk [vmem:[%s175 + $0x6c] sm:$0xf] %vm743, %v738
      %772 = vst.msk [vmem:[%s175 + $0x70] sm:$0xf] %vm743, %v739
      %773 = vst.msk [vmem:[%s175 + $0x74] sm:$0xf] %vm743, %v740
      %774 = vst.msk [vmem:[%s175 + $0x78] sm:$0xf] %vm743, %v741
      %775 = vst.msk [vmem:[%s175 + $0x7c] sm:$0xf] %vm743, %v742
      %s776 = smul.u32 32, %s14
      %p777 = scmp.lt.s32.totalorder %s776, 351
      %s778 = scalar_select %p777, %s776, 351
      %s779 = smul.addr %s778, 4
      %s780 = scalar_lea.vmem %s3, %s779
      // Predicated region
      $region33: #{cnn_base_forward.4} parent=31 // pred_check
        %p781 = pneg %p100
      $region34: #{cnn_base_forward.4} parent=31 // pred_check_branch
        %783 = sbr.rel (%p781) target = $region36
      $region35: #{cnn_base_forward.4} parent=31 // pred_region
        %s784 = smul.u32 32, %s14
      $region36: #{cnn_base_forward.4} parent=31 // pred_fallthru
        _
    $region32: #{cnn_base_forward.4} parent=5 // pred_fallthru
      _
    %p785 = scmp.le.s32.totalorder 2, %s9
    // Predicated region
    $region37: #{cnn_base_forward.4} parent=5 // pred_check
      %p786 = pneg %p785
    $region38: #{cnn_base_forward.4} parent=5 // pred_check_branch
      %788 = sbr.rel (%p786) target = $region40
    $region39: #{cnn_base_forward.4} parent=5 // pred_region
      %s789 = ssub.s32 %s9, 2
      // Predicated region
      $region41: #{cnn_base_forward.4} parent=39 // pred_check
        %p790 = pneg %p106
      $region42: #{cnn_base_forward.4} parent=39 // pred_check_branch
        %792 = sbr.rel (%p790) target = $region44
      $region43: #{cnn_base_forward.4} parent=39 // pred_region
        %s793 = smul.u32 32, %s15
        %p794 = scmp.lt.s32.totalorder %s793, 351
        %s795 = scalar_select %p794, %s793, 351
        %s796 = smul.addr %s795, 4
        %s797 = scalar_lea.vmem %s3, %s796
      $region44: #{cnn_base_forward.4} parent=39 // pred_fallthru
        _
    $region40: #{cnn_base_forward.4} parent=5 // pred_fallthru
      _
  $region6: #{cnn_base_forward.4} parent=0 // loop_footer
    %s13 = sadd.s32 1, %s9
  $region7: #{cnn_base_forward.4} parent=0 // loop_footer_branch
    %8 = sbr.rel target = $region3
  $region8: #{cnn_base_forward.4} parent=0 // loop_exit
    _

// kernel: cnn_base_forward.5
$region0: #{cnn_base_forward.5}
  #allocation0 [shape = 'u32[]', space=smem, size = 0x4, offset = 0x4, fixed_abs, tag = 'smem constant byte address 0x4 - core index']
  #allocation1 [shape = 'u32[72,128]{1,0:T(1,128)}', space=vmem, size = 0x9000, scoped, tag = 'internal scratch']
  %s0 = inlined_call_operand.vmem [shape: bf16[768,512], index: 0, kind: input, shape index: {}]
  %s1 = inlined_call_operand.vmem [shape: bf16[512,64], index: 1, kind: input, shape index: {}]
  %s2 = inlined_call_operand.vmem [shape: f32[1,64], index: 2, kind: input, shape index: {}]
  %s3 = inlined_call_operand.vmem [shape: bf16[768,64], index: 3, kind: output, shape index: {}]
  %s4 = sld [smem:[#allocation0]]
  $region45: #{cnn_base_forward.5} parent=0
    _
  %s6 = ssub.s32 1, %s4
  %s7 = scalar_select 0, %s6, %s4
  loop: start=0, step=1, limit=5
  $region2: #{cnn_base_forward.5} parent=0 // loop_pre_header
    _
  $region3: #{cnn_base_forward.5} parent=0 // loop_header
    %s9 = sphi 0, %s13
    %p10 = scmp.ge.s32.totalorder %s9, 5
    %s19 = sphi 0, %s21
    %s22 = sphi 0, %s19
    %s23 = sphi 0, %s22
    %s39 = sphi 0, %s23
    %s43 = sphi 0, %s43
    %s45 = sphi 0, %s43
    %s46 = sphi 0, %s45
    %s60 = sphi 0, %s46
    %s64 = sphi 0, %s64
    %s66 = sphi 0, %s64
    %s67 = sphi 0, %s66
    %s81 = sphi 0, %s67
    %s87 = sphi 0, %s89
    %s90 = sphi 0, %s87
    %s91 = sphi 0, %s90
    %s107 = sphi 0, %s91
  $region4: #{cnn_base_forward.5} parent=0 // loop_header_branch
    %12 = sbr.rel (%p10) target = $region8
  $region5: #{cnn_base_forward.5} parent=0 // loop_body
    %s14 = ssub.s32 %s9, 1
    %s15 = ssub.s32 %s9, 2
    %s16 = sadd.s32 %s9, 1
    %s17 = ssub.s32 %s9, %s16
    %p18 = scmp.eq.s32.totalorder %s17, 0
    %s20 = sadd.s32 %s19, 1
    %s21 = scalar_select %p18, %s19, %s20
    %p24 = pneg %p18
    %p25 = scmp.eq.s32.totalorder %s9, 2
    %p26 = por %p24, %p25
    %p27 = scmp.ne.s32.totalorder %s19, %s22
    %p28 = scmp.eq.s32.totalorder %s9, 0
    %p29 = por %p27, %p28
    %p30 = scmp.ne.s32.totalorder %s19, %s22
    %p31 = scmp.eq.s32.totalorder %s14, 2
    %p32 = por %p30, %p31
    %p33 = scmp.ne.s32.totalorder %s22, %s23
    %p34 = scmp.eq.s32.totalorder %s14, 0
    %p35 = por %p33, %p34
    %p36 = scmp.ne.s32.totalorder %s22, %s23
    %p37 = scmp.eq.s32.totalorder %s15, 2
    %p38 = por %p36, %p37
    %p40 = scmp.ne.s32.totalorder %s23, %s39
    %p41 = scmp.eq.s32.totalorder %s15, 0
    %p42 = por %p40, %p41
    %s44 = sadd.s32 %s43, 1
    %p47 = scmp.eq.s32.totalorder %s9, 2
    %p48 = scmp.ne.s32.totalorder %s43, %s45
    %p49 = scmp.eq.s32.totalorder %s9, 0
    %p50 = por %p48, %p49
    %p51 = scmp.ne.s32.totalorder %s43, %s45
    %p52 = scmp.eq.s32.totalorder %s14, 2
    %p53 = por %p51, %p52
    %p54 = scmp.ne.s32.totalorder %s45, %s46
    %p55 = scmp.eq.s32.totalorder %s14, 0
    %p56 = por %p54, %p55
    %p57 = scmp.ne.s32.totalorder %s45, %s46
    %p58 = scmp.eq.s32.totalorder %s15, 2
    %p59 = por %p57, %p58
    %p61 = scmp.ne.s32.totalorder %s46, %s60
    %p62 = scmp.eq.s32.totalorder %s15, 0
    %p63 = por %p61, %p62
    %s65 = sadd.s32 %s64, 1
    %p68 = scmp.eq.s32.totalorder %s9, 2
    %p69 = scmp.ne.s32.totalorder %s64, %s66
    %p70 = scmp.eq.s32.totalorder %s9, 0
    %p71 = por %p69, %p70
    %p72 = scmp.ne.s32.totalorder %s64, %s66
    %p73 = scmp.eq.s32.totalorder %s14, 2
    %p74 = por %p72, %p73
    %p75 = scmp.ne.s32.totalorder %s66, %s67
    %p76 = scmp.eq.s32.totalorder %s14, 0
    %p77 = por %p75, %p76
    %p78 = scmp.ne.s32.totalorder %s66, %s67
    %p79 = scmp.eq.s32.totalorder %s15, 2
    %p80 = por %p78, %p79
    %p82 = scmp.ne.s32.totalorder %s67, %s81
    %p83 = scmp.eq.s32.totalorder %s15, 0
    %p84 = por %p82, %p83
    %s85 = ssub.s32 %s9, %s16
    %p86 = scmp.eq.s32.totalorder %s85, 0
    %s88 = sadd.s32 %s87, 1
    %s89 = scalar_select %p86, %s87, %s88
    %p92 = pneg %p86
    %p93 = scmp.eq.s32.totalorder %s9, 2
    %p94 = por %p92, %p93
    %p95 = scmp.ne.s32.totalorder %s87, %s90
    %p96 = scmp.eq.s32.totalorder %s9, 0
    %p97 = por %p95, %p96
    %p98 = scmp.ne.s32.totalorder %s87, %s90
    %p99 = scmp.eq.s32.totalorder %s14, 2
    %p100 = por %p98, %p99
    %p101 = scmp.ne.s32.totalorder %s90, %s91
    %p102 = scmp.eq.s32.totalorder %s14, 0
    %p103 = por %p101, %p102
    %p104 = scmp.ne.s32.totalorder %s90, %s91
    %p105 = scmp.eq.s32.totalorder %s15, 2
    %p106 = por %p104, %p105
    %p108 = scmp.ne.s32.totalorder %s91, %s107
    %p109 = scmp.eq.s32.totalorder %s15, 0
    %p110 = por %p108, %p109
    %p111 = scmp.le.s32.totalorder 1, %s9
    %p112 = scmp.lt.s32.totalorder %s9, 4
    %p113 = pnand %p111, %p112
    %p114 = pneg %p113
    // Predicated region
    $region9: #{cnn_base_forward.5} parent=5 // pred_check
      _
    $region10: #{cnn_base_forward.5} parent=5 // pred_check_branch
      %116 = sbr.rel (%p113) target = $region12
    $region11: #{cnn_base_forward.5} parent=5 // pred_region
      %s117 = ssub.s32 %s9, 1
      // Predicated region
      $region13: #{cnn_base_forward.5} parent=11 // pred_check
        %p118 = pneg %p56
      $region14: #{cnn_base_forward.5} parent=11 // pred_check_branch
        %120 = sbr.rel (%p118) target = $region16
      $region15: #{cnn_base_forward.5} parent=11 // pred_region
        _
      $region16: #{cnn_base_forward.5} parent=11 // pred_fallthru
        _
      // Predicated region
      $region17: #{cnn_base_forward.5} parent=11 // pred_check
        %p121 = pneg %p77
      $region18: #{cnn_base_forward.5} parent=11 // pred_check_branch
        %123 = sbr.rel (%p121) target = $region20
      $region19: #{cnn_base_forward.5} parent=11 // pred_region
        _
      $region20: #{cnn_base_forward.5} parent=11 // pred_fallthru
        _
    $region12: #{cnn_base_forward.5} parent=5 // pred_fallthru
      _
    %p124 = scmp.lt.s32.totalorder %s9, 3
    // Predicated region
    $region21: #{cnn_base_forward.5} parent=5 // pred_check
      %p125 = pneg %p124
    $region22: #{cnn_base_forward.5} parent=5 // pred_check_branch
      %127 = sbr.rel (%p125) target = $region24
    $region23: #{cnn_base_forward.5} parent=5 // pred_region
      // Predicated region
      $region25: #{cnn_base_forward.5} parent=23 // pred_check
        %p128 = pneg %p29
      $region26: #{cnn_base_forward.5} parent=23 // pred_check_branch
        %130 = sbr.rel (%p128) target = $region28
      $region27: #{cnn_base_forward.5} parent=23 // pred_region
        %s131 = smul.u32 32, %s9
        %p132 = scmp.lt.s32.totalorder %s131, 95
        %s133 = scalar_select %p132, %s131, 95
        %s134 = smul.addr %s133, 4
        %s135 = smul.addr %s134, 4
        %s136 = scalar_lea.vmem %s0, %s135
        %s137 = smul.u32 32, %s9
      $region28: #{cnn_base_forward.5} parent=23 // pred_fallthru
        _
    $region24: #{cnn_base_forward.5} parent=5 // pred_fallthru
      _
    %p138 = scmp.le.s32.totalorder 1, %s9
    %p139 = scmp.lt.s32.totalorder %s9, 4
    %p140 = pnand %p138, %p139
    %p141 = pneg %p140
    // Predicated region
    $region29: #{cnn_base_forward.5} parent=5 // pred_check
      _
    $region30: #{cnn_base_forward.5} parent=5 // pred_check_branch
      %143 = sbr.rel (%p140) target = $region32
    $region31: #{cnn_base_forward.5} parent=5 // pred_region
      %s144 = ssub.s32 %s9, 1
      %s145 = smul.u32 32, %s14
      %p146 = scmp.lt.s32.totalorder %s145, 95
      %s147 = scalar_select %p146, %s145, 95
      %s148 = smul.addr %s147, 4
      %s149 = smul.addr %s148, 4
      %s150 = scalar_lea.vmem %s0, %s149
      %p151 = pneg %p35
      %p152 = pneg %p32
      %p153 = pneg %p56
      %p154 = pneg %p53
      %p155 = pneg %p77
      %p156 = pneg %p74
      %p157 = pneg %p103
      %p158 = pneg %p100
      %s159 = smul.u32 32, %s14
      %p160 = scmp.lt.s32.totalorder %s159, 95
      %s161 = scalar_select %p160, %s159, 95
      %s162 = smul.addr %s161, 4
      %s163 = scalar_lea.vmem %s3, %s162
      %s164 = smul.u32 32, %s14
      %p165 = scmp.lt.s32.totalorder %s164, 95
      %s166 = scalar_select %p165, %s164, 95
      %s167 = smul.addr %s166, 4
      %s168 = smul.addr %s167, 4
      %s169 = scalar_lea.vmem %s0, %s168
      %s170 = smul.u32 32, %s14
      %s171 = smul.u32 32, %s14
      %p172 = scmp.lt.s32.totalorder %s171, 95
      %s173 = scalar_select %p172, %s171, 95
      %s174 = smul.addr %s173, 4
      %s175 = scalar_lea.vmem %s3, %s174
      %s176 = smul.u32 32, %s14
      %v177 = vld [vmem:[%s169] sm:$0xff]
      %v178 = vld [vmem:[%s169 + $0x8] sm:$0xff]
      %v179 = vld [vmem:[%s169 + $0x10] sm:$0xff]
      %v180 = vld [vmem:[%s169 + $0x18] sm:$0xff]
      %v181 = vld [vmem:[%s169 + $0x20] sm:$0xff]
      %v182 = vld [vmem:[%s169 + $0x28] sm:$0xff]
      %v183 = vld [vmem:[%s169 + $0x30] sm:$0xff]
      %v184 = vld [vmem:[%s169 + $0x38] sm:$0xff]
      %v185 = vld [vmem:[%s169 + $0x40] sm:$0xff]
      %v186 = vld [vmem:[%s169 + $0x48] sm:$0xff]
      %v187 = vld [vmem:[%s169 + $0x50] sm:$0xff]
      %v188 = vld [vmem:[%s169 + $0x58] sm:$0xff]
      %v189 = vld [vmem:[%s169 + $0x60] sm:$0xff]
      %v190 = vld [vmem:[%s169 + $0x68] sm:$0xff]
      %v191 = vld [vmem:[%s169 + $0x70] sm:$0xff]
      %v192 = vld [vmem:[%s169 + $0x78] sm:$0xff]
      %v193 = vld [vmem:[%s169 + $0x80] sm:$0xff]
      %v194 = vld [vmem:[%s169 + $0x88] sm:$0xff]
      %v195 = vld [vmem:[%s169 + $0x90] sm:$0xff]
      %v196 = vld [vmem:[%s169 + $0x98] sm:$0xff]
      %v197 = vld [vmem:[%s169 + $0xa0] sm:$0xff]
      %v198 = vld [vmem:[%s169 + $0xa8] sm:$0xff]
      %v199 = vld [vmem:[%s169 + $0xb0] sm:$0xff]
      %v200 = vld [vmem:[%s169 + $0xb8] sm:$0xff]
      %v201 = vld [vmem:[%s169 + $0xc0] sm:$0xff]
      %v202 = vld [vmem:[%s169 + $0xc8] sm:$0xff]
      %v203 = vld [vmem:[%s169 + $0xd0] sm:$0xff]
      %v204 = vld [vmem:[%s169 + $0xd8] sm:$0xff]
      %v205 = vld [vmem:[%s169 + $0xe0] sm:$0xff]
      %v206 = vld [vmem:[%s169 + $0xe8] sm:$0xff]
      %v207 = vld [vmem:[%s169 + $0xf0] sm:$0xff]
      %v208 = vld [vmem:[%s169 + $0xf8] sm:$0xff]
      %v209 = vld [vmem:[%s169 + $0x100] sm:$0xff]
      %v210 = vld [vmem:[%s169 + $0x108] sm:$0xff]
      %v211 = vld [vmem:[%s169 + $0x110] sm:$0xff]
      %v212 = vld [vmem:[%s169 + $0x118] sm:$0xff]
      %v213 = vld [vmem:[%s169 + $0x120] sm:$0xff]
      %v214 = vld [vmem:[%s169 + $0x128] sm:$0xff]
      %v215 = vld [vmem:[%s169 + $0x130] sm:$0xff]
      %v216 = vld [vmem:[%s169 + $0x138] sm:$0xff]
      %v217 = vld [vmem:[%s169 + $0x140] sm:$0xff]
      %v218 = vld [vmem:[%s169 + $0x148] sm:$0xff]
      %v219 = vld [vmem:[%s169 + $0x150] sm:$0xff]
      %v220 = vld [vmem:[%s169 + $0x158] sm:$0xff]
      %v221 = vld [vmem:[%s169 + $0x160] sm:$0xff]
      %v222 = vld [vmem:[%s169 + $0x168] sm:$0xff]
      %v223 = vld [vmem:[%s169 + $0x170] sm:$0xff]
      %v224 = vld [vmem:[%s169 + $0x178] sm:$0xff]
      %v225 = vld [vmem:[%s169 + $0x180] sm:$0xff]
      %v226 = vld [vmem:[%s169 + $0x188] sm:$0xff]
      %v227 = vld [vmem:[%s169 + $0x190] sm:$0xff]
      %v228 = vld [vmem:[%s169 + $0x198] sm:$0xff]
      %v229 = vld [vmem:[%s169 + $0x1a0] sm:$0xff]
      %v230 = vld [vmem:[%s169 + $0x1a8] sm:$0xff]
      %v231 = vld [vmem:[%s169 + $0x1b0] sm:$0xff]
      %v232 = vld [vmem:[%s169 + $0x1b8] sm:$0xff]
      %v233 = vld [vmem:[%s169 + $0x1c0] sm:$0xff]
      %v234 = vld [vmem:[%s169 + $0x1c8] sm:$0xff]
      %v235 = vld [vmem:[%s169 + $0x1d0] sm:$0xff]
      %v236 = vld [vmem:[%s169 + $0x1d8] sm:$0xff]
      %v237 = vld [vmem:[%s169 + $0x1e0] sm:$0xff]
      %v238 = vld [vmem:[%s169 + $0x1e8] sm:$0xff]
      %v239 = vld [vmem:[%s169 + $0x1f0] sm:$0xff]
      %v240 = vld [vmem:[%s169 + $0x1f8] sm:$0xff]
      %v241 = vld [vmem:[%s1] sm:$0xf]
      %v242 = vld [vmem:[%s1 + $0x4] sm:$0xf]
      %v243 = vld [vmem:[%s1 + $0x8] sm:$0xf]
      %v244 = vld [vmem:[%s1 + $0xc] sm:$0xf]
      %v245 = vld [vmem:[%s1 + $0x10] sm:$0xf]
      %v246 = vld [vmem:[%s1 + $0x14] sm:$0xf]
      %v247 = vld [vmem:[%s1 + $0x18] sm:$0xf]
      %v248 = vld [vmem:[%s1 + $0x1c] sm:$0xf]
      %v249 = vld [vmem:[%s1 + $0x20] sm:$0xf]
      %v250 = vld [vmem:[%s1 + $0x24] sm:$0xf]
      %v251 = vld [vmem:[%s1 + $0x28] sm:$0xf]
      %v252 = vld [vmem:[%s1 + $0x2c] sm:$0xf]
      %v253 = vld [vmem:[%s1 + $0x30] sm:$0xf]
      %v254 = vld [vmem:[%s1 + $0x34] sm:$0xf]
      %v255 = vld [vmem:[%s1 + $0x38] sm:$0xf]
      %v256 = vld [vmem:[%s1 + $0x3c] sm:$0xf]
      %v257 = vld [vmem:[%s1 + $0x40] sm:$0xf]
      %v258 = vld [vmem:[%s1 + $0x44] sm:$0xf]
      %v259 = vld [vmem:[%s1 + $0x48] sm:$0xf]
      %v260 = vld [vmem:[%s1 + $0x4c] sm:$0xf]
      %v261 = vld [vmem:[%s1 + $0x50] sm:$0xf]
      %v262 = vld [vmem:[%s1 + $0x54] sm:$0xf]
      %v263 = vld [vmem:[%s1 + $0x58] sm:$0xf]
      %v264 = vld [vmem:[%s1 + $0x5c] sm:$0xf]
      %v265 = vld [vmem:[%s1 + $0x60] sm:$0xf]
      %v266 = vld [vmem:[%s1 + $0x64] sm:$0xf]
      %v267 = vld [vmem:[%s1 + $0x68] sm:$0xf]
      %v268 = vld [vmem:[%s1 + $0x6c] sm:$0xf]
      %v269 = vld [vmem:[%s1 + $0x70] sm:$0xf]
      %v270 = vld [vmem:[%s1 + $0x74] sm:$0xf]
      %v271 = vld [vmem:[%s1 + $0x78] sm:$0xf]
      %v272 = vld [vmem:[%s1 + $0x7c] sm:$0xf]
      %v273 = vld [vmem:[%s1 + $0x80] sm:$0xf]
      %v274 = vld [vmem:[%s1 + $0x84] sm:$0xf]
      %v275 = vld [vmem:[%s1 + $0x88] sm:$0xf]
      %v276 = vld [vmem:[%s1 + $0x8c] sm:$0xf]
      %v277 = vld [vmem:[%s1 + $0x90] sm:$0xf]
      %v278 = vld [vmem:[%s1 + $0x94] sm:$0xf]
      %v279 = vld [vmem:[%s1 + $0x98] sm:$0xf]
      %v280 = vld [vmem:[%s1 + $0x9c] sm:$0xf]
      %v281 = vld [vmem:[%s1 + $0xa0] sm:$0xf]
      %v282 = vld [vmem:[%s1 + $0xa4] sm:$0xf]
      %v283 = vld [vmem:[%s1 + $0xa8] sm:$0xf]
      %v284 = vld [vmem:[%s1 + $0xac] sm:$0xf]
      %v285 = vld [vmem:[%s1 + $0xb0] sm:$0xf]
      %v286 = vld [vmem:[%s1 + $0xb4] sm:$0xf]
      %v287 = vld [vmem:[%s1 + $0xb8] sm:$0xf]
      %v288 = vld [vmem:[%s1 + $0xbc] sm:$0xf]
      %v289 = vld [vmem:[%s1 + $0xc0] sm:$0xf]
      %v290 = vld [vmem:[%s1 + $0xc4] sm:$0xf]
      %v291 = vld [vmem:[%s1 + $0xc8] sm:$0xf]
      %v292 = vld [vmem:[%s1 + $0xcc] sm:$0xf]
      %v293 = vld [vmem:[%s1 + $0xd0] sm:$0xf]
      %v294 = vld [vmem:[%s1 + $0xd4] sm:$0xf]
      %v295 = vld [vmem:[%s1 + $0xd8] sm:$0xf]
      %v296 = vld [vmem:[%s1 + $0xdc] sm:$0xf]
      %v297 = vld [vmem:[%s1 + $0xe0] sm:$0xf]
      %v298 = vld [vmem:[%s1 + $0xe4] sm:$0xf]
      %v299 = vld [vmem:[%s1 + $0xe8] sm:$0xf]
      %v300 = vld [vmem:[%s1 + $0xec] sm:$0xf]
      %v301 = vld [vmem:[%s1 + $0xf0] sm:$0xf]
      %v302 = vld [vmem:[%s1 + $0xf4] sm:$0xf]
      %v303 = vld [vmem:[%s1 + $0xf8] sm:$0xf]
      %v304 = vld [vmem:[%s1 + $0xfc] sm:$0xf]
      %v305 = vld [vmem:[%s2] sm:$0x1]
      %v307 = vperm.slane %v305, 0
      %v373 = vunpack.c.l.b16 %v177
      %v374 = vunpack.c.h.b16 %v177
      %v375 = vunpack.c.l.b16 %v178
      %v376 = vunpack.c.h.b16 %v178
      %v377 = vunpack.c.l.b16 %v179
      %v378 = vunpack.c.h.b16 %v179
      %v379 = vunpack.c.l.b16 %v180
      %v380 = vunpack.c.h.b16 %v180
      %v381 = vunpack.c.l.b16 %v181
      %v382 = vunpack.c.h.b16 %v181
      %v383 = vunpack.c.l.b16 %v182
      %v384 = vunpack.c.h.b16 %v182
      %v385 = vunpack.c.l.b16 %v183
      %v386 = vunpack.c.h.b16 %v183
      %v387 = vunpack.c.l.b16 %v184
      %v388 = vunpack.c.h.b16 %v184
      %v389 = vunpack.c.l.b16 %v185
      %v390 = vunpack.c.h.b16 %v185
      %v391 = vunpack.c.l.b16 %v186
      %v392 = vunpack.c.h.b16 %v186
      %v393 = vunpack.c.l.b16 %v187
      %v394 = vunpack.c.h.b16 %v187
      %v395 = vunpack.c.l.b16 %v188
      %v396 = vunpack.c.h.b16 %v188
      %v397 = vunpack.c.l.b16 %v189
      %v398 = vunpack.c.h.b16 %v189
      %v399 = vunpack.c.l.b16 %v190
      %v400 = vunpack.c.h.b16 %v190
      %v401 = vunpack.c.l.b16 %v191
      %v402 = vunpack.c.h.b16 %v191
      %v403 = vunpack.c.l.b16 %v192
      %v404 = vunpack.c.h.b16 %v192
      %v405 = vunpack.c.l.b16 %v193
      %v406 = vunpack.c.h.b16 %v193
      %v407 = vunpack.c.l.b16 %v194
      %v408 = vunpack.c.h.b16 %v194
      %v409 = vunpack.c.l.b16 %v195
      %v410 = vunpack.c.h.b16 %v195
      %v411 = vunpack.c.l.b16 %v196
      %v412 = vunpack.c.h.b16 %v196
      %v413 = vunpack.c.l.b16 %v197
      %v414 = vunpack.c.h.b16 %v197
      %v415 = vunpack.c.l.b16 %v198
      %v416 = vunpack.c.h.b16 %v198
      %v417 = vunpack.c.l.b16 %v199
      %v418 = vunpack.c.h.b16 %v199
      %v419 = vunpack.c.l.b16 %v200
      %v420 = vunpack.c.h.b16 %v200
      %v421 = vunpack.c.l.b16 %v201
      %v422 = vunpack.c.h.b16 %v201
      %v423 = vunpack.c.l.b16 %v202
      %v424 = vunpack.c.h.b16 %v202
      %v425 = vunpack.c.l.b16 %v203
      %v426 = vunpack.c.h.b16 %v203
      %v427 = vunpack.c.l.b16 %v204
      %v428 = vunpack.c.h.b16 %v204
      %v429 = vunpack.c.l.b16 %v205
      %v430 = vunpack.c.h.b16 %v205
      %v431 = vunpack.c.l.b16 %v206
      %v432 = vunpack.c.h.b16 %v206
      %v433 = vunpack.c.l.b16 %v207
      %v434 = vunpack.c.h.b16 %v207
      %v435 = vunpack.c.l.b16 %v208
      %v436 = vunpack.c.h.b16 %v208
      %v437 = vunpack.c.l.b16 %v209
      %v438 = vunpack.c.h.b16 %v209
      %v439 = vunpack.c.l.b16 %v210
      %v440 = vunpack.c.h.b16 %v210
      %v441 = vunpack.c.l.b16 %v211
      %v442 = vunpack.c.h.b16 %v211
      %v443 = vunpack.c.l.b16 %v212
      %v444 = vunpack.c.h.b16 %v212
      %v445 = vunpack.c.l.b16 %v213
      %v446 = vunpack.c.h.b16 %v213
      %v447 = vunpack.c.l.b16 %v214
      %v448 = vunpack.c.h.b16 %v214
      %v449 = vunpack.c.l.b16 %v215
      %v450 = vunpack.c.h.b16 %v215
      %v451 = vunpack.c.l.b16 %v216
      %v452 = vunpack.c.h.b16 %v216
      %v453 = vunpack.c.l.b16 %v217
      %v454 = vunpack.c.h.b16 %v217
      %v455 = vunpack.c.l.b16 %v218
      %v456 = vunpack.c.h.b16 %v218
      %v457 = vunpack.c.l.b16 %v219
      %v458 = vunpack.c.h.b16 %v219
      %v459 = vunpack.c.l.b16 %v220
      %v460 = vunpack.c.h.b16 %v220
      %v461 = vunpack.c.l.b16 %v221
      %v462 = vunpack.c.h.b16 %v221
      %v463 = vunpack.c.l.b16 %v222
      %v464 = vunpack.c.h.b16 %v222
      %v465 = vunpack.c.l.b16 %v223
      %v466 = vunpack.c.h.b16 %v223
      %v467 = vunpack.c.l.b16 %v224
      %v468 = vunpack.c.h.b16 %v224
      %v469 = vunpack.c.l.b16 %v225
      %v470 = vunpack.c.h.b16 %v225
      %v471 = vunpack.c.l.b16 %v226
      %v472 = vunpack.c.h.b16 %v226
      %v473 = vunpack.c.l.b16 %v227
      %v474 = vunpack.c.h.b16 %v227
      %v475 = vunpack.c.l.b16 %v228
      %v476 = vunpack.c.h.b16 %v228
      %v477 = vunpack.c.l.b16 %v229
      %v478 = vunpack.c.h.b16 %v229
      %v479 = vunpack.c.l.b16 %v230
      %v480 = vunpack.c.h.b16 %v230
      %v481 = vunpack.c.l.b16 %v231
      %v482 = vunpack.c.h.b16 %v231
      %v483 = vunpack.c.l.b16 %v232
      %v484 = vunpack.c.h.b16 %v232
      %v485 = vunpack.c.l.b16 %v233
      %v486 = vunpack.c.h.b16 %v233
      %v487 = vunpack.c.l.b16 %v234
      %v488 = vunpack.c.h.b16 %v234
      %v489 = vunpack.c.l.b16 %v235
      %v490 = vunpack.c.h.b16 %v235
      %v491 = vunpack.c.l.b16 %v236
      %v492 = vunpack.c.h.b16 %v236
      %v493 = vunpack.c.l.b16 %v237
      %v494 = vunpack.c.h.b16 %v237
      %v495 = vunpack.c.l.b16 %v238
      %v496 = vunpack.c.h.b16 %v238
      %v497 = vunpack.c.l.b16 %v239
      %v498 = vunpack.c.h.b16 %v239
      %v499 = vunpack.c.l.b16 %v240
      %v500 = vunpack.c.h.b16 %v240
      %v501 = vpack.c.b16 %v377, %v373
      %v502 = vpack.c.b16 %v378, %v374
      %v503 = vpack.c.b16 %v379, %v375
      %v504 = vpack.c.b16 %v380, %v376
      %v505 = vpack.c.b16 %v385, %v381
      %v506 = vpack.c.b16 %v386, %v382
      %v507 = vpack.c.b16 %v387, %v383
      %v508 = vpack.c.b16 %v388, %v384
      %v509 = vpack.c.b16 %v393, %v389
      %v510 = vpack.c.b16 %v394, %v390
      %v511 = vpack.c.b16 %v395, %v391
      %v512 = vpack.c.b16 %v396, %v392
      %v513 = vpack.c.b16 %v401, %v397
      %v514 = vpack.c.b16 %v402, %v398
      %v515 = vpack.c.b16 %v403, %v399
      %v516 = vpack.c.b16 %v404, %v400
      %v517 = vpack.c.b16 %v409, %v405
      %v518 = vpack.c.b16 %v410, %v406
      %v519 = vpack.c.b16 %v411, %v407
      %v520 = vpack.c.b16 %v412, %v408
      %v521 = vpack.c.b16 %v417, %v413
      %v522 = vpack.c.b16 %v418, %v414
      %v523 = vpack.c.b16 %v419, %v415
      %v524 = vpack.c.b16 %v420, %v416
      %v525 = vpack.c.b16 %v425, %v421
      %v526 = vpack.c.b16 %v426, %v422
      %v527 = vpack.c.b16 %v427, %v423
      %v528 = vpack.c.b16 %v428, %v424
      %v529 = vpack.c.b16 %v433, %v429
      %v530 = vpack.c.b16 %v434, %v430
      %v531 = vpack.c.b16 %v435, %v431
      %v532 = vpack.c.b16 %v436, %v432
      %v533 = vpack.c.b16 %v441, %v437
      %v534 = vpack.c.b16 %v442, %v438
      %v535 = vpack.c.b16 %v443, %v439
      %v536 = vpack.c.b16 %v444, %v440
      %v537 = vpack.c.b16 %v449, %v445
      %v538 = vpack.c.b16 %v450, %v446
      %v539 = vpack.c.b16 %v451, %v447
      %v540 = vpack.c.b16 %v452, %v448
      %v541 = vpack.c.b16 %v457, %v453
      %v542 = vpack.c.b16 %v458, %v454
      %v543 = vpack.c.b16 %v459, %v455
      %v544 = vpack.c.b16 %v460, %v456
      %v545 = vpack.c.b16 %v465, %v461
      %v546 = vpack.c.b16 %v466, %v462
      %v547 = vpack.c.b16 %v467, %v463
      %v548 = vpack.c.b16 %v468, %v464
      %v549 = vpack.c.b16 %v473, %v469
      %v550 = vpack.c.b16 %v474, %v470
      %v551 = vpack.c.b16 %v475, %v471
      %v552 = vpack.c.b16 %v476, %v472
      %v553 = vpack.c.b16 %v481, %v477
      %v554 = vpack.c.b16 %v482, %v478
      %v555 = vpack.c.b16 %v483, %v479
      %v556 = vpack.c.b16 %v484, %v480
      %v557 = vpack.c.b16 %v489, %v485
      %v558 = vpack.c.b16 %v490, %v486
      %v559 = vpack.c.b16 %v491, %v487
      %v560 = vpack.c.b16 %v492, %v488
      %v561 = vpack.c.b16 %v497, %v493
      %v562 = vpack.c.b16 %v498, %v494
      %v563 = vpack.c.b16 %v499, %v495
      %v564 = vpack.c.b16 %v500, %v496
      %v693 = vunpack.c.l.b16 %v241
      %v694 = vunpack.c.l.b16 %v242
      %v695 = vunpack.c.l.b16 %v243
      %v696 = vunpack.c.l.b16 %v244
      %v697 = vunpack.c.l.b16 %v245
      %v698 = vunpack.c.l.b16 %v246
      %v699 = vunpack.c.l.b16 %v247
      %v700 = vunpack.c.l.b16 %v248
      %v701 = vunpack.c.l.b16 %v249
      %v702 = vunpack.c.l.b16 %v250
      %v703 = vunpack.c.l.b16 %v251
      %v704 = vunpack.c.l.b16 %v252
      %v705 = vunpack.c.l.b16 %v253
      %v706 = vunpack.c.l.b16 %v254
      %v707 = vunpack.c.l.b16 %v255
      %v708 = vunpack.c.l.b16 %v256
      %v709 = vunpack.c.l.b16 %v257
      %v710 = vunpack.c.l.b16 %v258
      %v711 = vunpack.c.l.b16 %v259
      %v712 = vunpack.c.l.b16 %v260
      %v713 = vunpack.c.l.b16 %v261
      %v714 = vunpack.c.l.b16 %v262
      %v715 = vunpack.c.l.b16 %v263
      %v716 = vunpack.c.l.b16 %v264
      %v717 = vunpack.c.l.b16 %v265
      %v718 = vunpack.c.l.b16 %v266
      %v719 = vunpack.c.l.b16 %v267
      %v720 = vunpack.c.l.b16 %v268
      %v721 = vunpack.c.l.b16 %v269
      %v722 = vunpack.c.l.b16 %v270
      %v723 = vunpack.c.l.b16 %v271
      %v724 = vunpack.c.l.b16 %v272
      %v725 = vunpack.c.l.b16 %v273
      %v726 = vunpack.c.l.b16 %v274
      %v727 = vunpack.c.l.b16 %v275
      %v728 = vunpack.c.l.b16 %v276
      %v729 = vunpack.c.l.b16 %v277
      %v730 = vunpack.c.l.b16 %v278
      %v731 = vunpack.c.l.b16 %v279
      %v732 = vunpack.c.l.b16 %v280
      %v733 = vunpack.c.l.b16 %v281
      %v734 = vunpack.c.l.b16 %v282
      %v735 = vunpack.c.l.b16 %v283
      %v736 = vunpack.c.l.b16 %v284
      %v737 = vunpack.c.l.b16 %v285
      %v738 = vunpack.c.l.b16 %v286
      %v739 = vunpack.c.l.b16 %v287
      %v740 = vunpack.c.l.b16 %v288
      %v741 = vunpack.c.l.b16 %v289
      %v742 = vunpack.c.l.b16 %v290
      %v743 = vunpack.c.l.b16 %v291
      %v744 = vunpack.c.l.b16 %v292
      %v745 = vunpack.c.l.b16 %v293
      %v746 = vunpack.c.l.b16 %v294
      %v747 = vunpack.c.l.b16 %v295
      %v748 = vunpack.c.l.b16 %v296
      %v749 = vunpack.c.l.b16 %v297
      %v750 = vunpack.c.l.b16 %v298
      %v751 = vunpack.c.l.b16 %v299
      %v752 = vunpack.c.l.b16 %v300
      %v753 = vunpack.c.l.b16 %v301
      %v754 = vunpack.c.l.b16 %v302
      %v755 = vunpack.c.l.b16 %v303
      %v756 = vunpack.c.l.b16 %v304
      %v757 = vpack.c.b16 %v694, %v693
      %v758 = vpack.c.b16 %v696, %v695
      %v759 = vpack.c.b16 %v698, %v697
      %v760 = vpack.c.b16 %v700, %v699
      %v761 = vpack.c.b16 %v702, %v701
      %v762 = vpack.c.b16 %v704, %v703
      %v763 = vpack.c.b16 %v706, %v705
      %v764 = vpack.c.b16 %v708, %v707
      %v765 = vpack.c.b16 %v710, %v709
      %v766 = vpack.c.b16 %v712, %v711
      %v767 = vpack.c.b16 %v714, %v713
      %v768 = vpack.c.b16 %v716, %v715
      %v769 = vpack.c.b16 %v718, %v717
      %v770 = vpack.c.b16 %v720, %v719
      %v771 = vpack.c.b16 %v722, %v721
      %v772 = vpack.c.b16 %v724, %v723
      %v773 = vpack.c.b16 %v726, %v725
      %v774 = vpack.c.b16 %v728, %v727
      %v775 = vpack.c.b16 %v730, %v729
      %v776 = vpack.c.b16 %v732, %v731
      %v777 = vpack.c.b16 %v734, %v733
      %v778 = vpack.c.b16 %v736, %v735
      %v779 = vpack.c.b16 %v738, %v737
      %v780 = vpack.c.b16 %v740, %v739
      %v781 = vpack.c.b16 %v742, %v741
      %v782 = vpack.c.b16 %v744, %v743
      %v783 = vpack.c.b16 %v746, %v745
      %v784 = vpack.c.b16 %v748, %v747
      %v785 = vpack.c.b16 %v750, %v749
      %v786 = vpack.c.b16 %v752, %v751
      %v787 = vpack.c.b16 %v754, %v753
      %v788 = vpack.c.b16 %v756, %v755
      %821 = vmatpush.bf16.msra.mxu0 %v764
      %822 = vmatpush.bf16.msra.mxu0 %v763
      %823 = vmatpush.bf16.msra.mxu0 %v762
      %824 = vmatpush.bf16.msra.mxu0 %v761
      %825 = vmatpush.bf16.msra.mxu0 %v760
      %826 = vmatpush.bf16.msra.mxu0 %v759
      %827 = vmatpush.bf16.msra.mxu0 %v758
      %828 = vmatpush.bf16.msra.mxu0 %v757
      %829 = vmatmul.bf16.gmra.mxu0 %v501
      %v830 = vpop.f32.mrf.mxu0
      %v831 = vadd.f32 %v307, %v830
      %v832 = vpop.f32.mrf.mxu0
      %v833 = vadd.f32 %v307, %v832
      %834 = vmatmul.bf16.gmra.mxu0 %v505
      %v835 = vpop.f32.mrf.mxu0
      %v836 = vadd.f32 %v307, %v835
      %v837 = vpop.f32.mrf.mxu0
      %v838 = vadd.f32 %v307, %v837
      %839 = vmatmul.bf16.gmra.mxu0 %v509
      %v840 = vpop.f32.mrf.mxu0
      %v841 = vadd.f32 %v307, %v840
      %v842 = vpop.f32.mrf.mxu0
      %v843 = vadd.f32 %v307, %v842
      %844 = vmatmul.bf16.gmra.mxu0 %v513
      %v845 = vpop.f32.mrf.mxu0
      %v846 = vadd.f32 %v307, %v845
      %v847 = vpop.f32.mrf.mxu0
      %v848 = vadd.f32 %v307, %v847
      %849 = vmatmul.bf16.gmra.mxu0 %v517
      %v850 = vpop.f32.mrf.mxu0
      %v851 = vadd.f32 %v307, %v850
      %v852 = vpop.f32.mrf.mxu0
      %v853 = vadd.f32 %v307, %v852
      %854 = vmatmul.bf16.gmra.mxu0 %v521
      %v855 = vpop.f32.mrf.mxu0
      %v856 = vadd.f32 %v307, %v855
      %v857 = vpop.f32.mrf.mxu0
      %v858 = vadd.f32 %v307, %v857
      %859 = vmatmul.bf16.gmra.mxu0 %v525
      %v860 = vpop.f32.mrf.mxu0
      %v861 = vadd.f32 %v307, %v860
      %v862 = vpop.f32.mrf.mxu0
      %v863 = vadd.f32 %v307, %v862
      %864 = vmatmul.bf16.gmra.mxu0 %v529
      %v865 = vpop.f32.mrf.mxu0
      %v866 = vadd.f32 %v307, %v865
      %v867 = vpop.f32.mrf.mxu0
      %v868 = vadd.f32 %v307, %v867
      %869 = vmatmul.bf16.gmra.mxu0 %v533
      %v870 = vpop.f32.mrf.mxu0
      %v871 = vadd.f32 %v307, %v870
      %v872 = vpop.f32.mrf.mxu0
      %v873 = vadd.f32 %v307, %v872
      %874 = vmatmul.bf16.gmra.mxu0 %v537
      %v875 = vpop.f32.mrf.mxu0
      %v876 = vadd.f32 %v307, %v875
      %v877 = vpop.f32.mrf.mxu0
      %v878 = vadd.f32 %v307, %v877
      %879 = vmatmul.bf16.gmra.mxu0 %v541
      %v880 = vpop.f32.mrf.mxu0
      %v881 = vadd.f32 %v307, %v880
      %v882 = vpop.f32.mrf.mxu0
      %v883 = vadd.f32 %v307, %v882
      %884 = vmatmul.bf16.gmra.mxu0 %v545
      %v885 = vpop.f32.mrf.mxu0
      %v886 = vadd.f32 %v307, %v885
      %v887 = vpop.f32.mrf.mxu0
      %v888 = vadd.f32 %v307, %v887
      %889 = vmatmul.bf16.gmra.mxu0 %v549
      %v890 = vpop.f32.mrf.mxu0
      %v891 = vadd.f32 %v307, %v890
      %v892 = vpop.f32.mrf.mxu0
      %v893 = vadd.f32 %v307, %v892
      %894 = vmatmul.bf16.gmra.mxu0 %v553
      %v895 = vpop.f32.mrf.mxu0
      %v896 = vadd.f32 %v307, %v895
      %v897 = vpop.f32.mrf.mxu0
      %v898 = vadd.f32 %v307, %v897
      %899 = vmatmul.bf16.gmra.mxu0 %v557
      %v900 = vpop.f32.mrf.mxu0
      %v901 = vadd.f32 %v307, %v900
      %v902 = vpop.f32.mrf.mxu0
      %v903 = vadd.f32 %v307, %v902
      %904 = vmatmul.bf16.gmra.mxu0 %v561
      %v905 = vpop.f32.mrf.mxu0
      %v906 = vadd.f32 %v307, %v905
      %v907 = vpop.f32.mrf.mxu0
      %v908 = vadd.f32 %v307, %v907
      %909 = vdwg.mxu0
      %910 = vmatpush.bf16.msra.mxu0 %v772
      %911 = vmatpush.bf16.msra.mxu0 %v771
      %912 = vmatpush.bf16.msra.mxu0 %v770
      %913 = vmatpush.bf16.msra.mxu0 %v769
      %914 = vmatpush.bf16.msra.mxu0 %v768
      %915 = vmatpush.bf16.msra.mxu0 %v767
      %916 = vmatpush.bf16.msra.mxu0 %v766
      %917 = vmatpush.bf16.msra.mxu0 %v765
      %918 = vmatmul.bf16.gmra.mxu0 %v502
      %v919 = vpop.f32.mrf.mxu0
      %v920 = vadd.f32 %v831, %v919
      %v921 = vpop.f32.mrf.mxu0
      %v922 = vadd.f32 %v833, %v921
      %923 = vmatmul.bf16.gmra.mxu0 %v506
      %v924 = vpop.f32.mrf.mxu0
      %v925 = vadd.f32 %v836, %v924
      %v926 = vpop.f32.mrf.mxu0
      %v927 = vadd.f32 %v838, %v926
      %928 = vmatmul.bf16.gmra.mxu0 %v510
      %v929 = vpop.f32.mrf.mxu0
      %v930 = vadd.f32 %v841, %v929
      %v931 = vpop.f32.mrf.mxu0
      %v932 = vadd.f32 %v843, %v931
      %933 = vmatmul.bf16.gmra.mxu0 %v514
      %v934 = vpop.f32.mrf.mxu0
      %v935 = vadd.f32 %v846, %v934
      %v936 = vpop.f32.mrf.mxu0
      %v937 = vadd.f32 %v848, %v936
      %938 = vmatmul.bf16.gmra.mxu0 %v518
      %v939 = vpop.f32.mrf.mxu0
      %v940 = vadd.f32 %v851, %v939
      %v941 = vpop.f32.mrf.mxu0
      %v942 = vadd.f32 %v853, %v941
      %943 = vmatmul.bf16.gmra.mxu0 %v522
      %v944 = vpop.f32.mrf.mxu0
      %v945 = vadd.f32 %v856, %v944
      %v946 = vpop.f32.mrf.mxu0
      %v947 = vadd.f32 %v858, %v946
      %948 = vmatmul.bf16.gmra.mxu0 %v526
      %v949 = vpop.f32.mrf.mxu0
      %v950 = vadd.f32 %v861, %v949
      %v951 = vpop.f32.mrf.mxu0
      %v952 = vadd.f32 %v863, %v951
      %953 = vmatmul.bf16.gmra.mxu0 %v530
      %v954 = vpop.f32.mrf.mxu0
      %v955 = vadd.f32 %v866, %v954
      %v956 = vpop.f32.mrf.mxu0
      %v957 = vadd.f32 %v868, %v956
      %958 = vmatmul.bf16.gmra.mxu0 %v534
      %v959 = vpop.f32.mrf.mxu0
      %v960 = vadd.f32 %v871, %v959
      %v961 = vpop.f32.mrf.mxu0
      %v962 = vadd.f32 %v873, %v961
      %963 = vmatmul.bf16.gmra.mxu0 %v538
      %v964 = vpop.f32.mrf.mxu0
      %v965 = vadd.f32 %v876, %v964
      %v966 = vpop.f32.mrf.mxu0
      %v967 = vadd.f32 %v878, %v966
      %968 = vmatmul.bf16.gmra.mxu0 %v542
      %v969 = vpop.f32.mrf.mxu0
      %v970 = vadd.f32 %v881, %v969
      %v971 = vpop.f32.mrf.mxu0
      %v972 = vadd.f32 %v883, %v971
      %973 = vmatmul.bf16.gmra.mxu0 %v546
      %v974 = vpop.f32.mrf.mxu0
      %v975 = vadd.f32 %v886, %v974
      %v976 = vpop.f32.mrf.mxu0
      %v977 = vadd.f32 %v888, %v976
      %978 = vmatmul.bf16.gmra.mxu0 %v550
      %v979 = vpop.f32.mrf.mxu0
      %v980 = vadd.f32 %v891, %v979
      %v981 = vpop.f32.mrf.mxu0
      %v982 = vadd.f32 %v893, %v981
      %983 = vmatmul.bf16.gmra.mxu0 %v554
      %v984 = vpop.f32.mrf.mxu0
      %v985 = vadd.f32 %v896, %v984
      %v986 = vpop.f32.mrf.mxu0
      %v987 = vadd.f32 %v898, %v986
      %988 = vmatmul.bf16.gmra.mxu0 %v558
      %v989 = vpop.f32.mrf.mxu0
      %v990 = vadd.f32 %v901, %v989
      %v991 = vpop.f32.mrf.mxu0
      %v992 = vadd.f32 %v903, %v991
      %993 = vmatmul.bf16.gmra.mxu0 %v562
      %v994 = vpop.f32.mrf.mxu0
      %v995 = vadd.f32 %v906, %v994
      %v996 = vpop.f32.mrf.mxu0
      %v997 = vadd.f32 %v908, %v996
      %998 = vdwg.mxu0
      %999 = vmatpush.bf16.msra.mxu0 %v780
      %1000 = vmatpush.bf16.msra.mxu0 %v779
      %1001 = vmatpush.bf16.msra.mxu0 %v778
      %1002 = vmatpush.bf16.msra.mxu0 %v777
      %1003 = vmatpush.bf16.msra.mxu0 %v776
      %1004 = vmatpush.bf16.msra.mxu0 %v775
      %1005 = vmatpush.bf16.msra.mxu0 %v774
      %1006 = vmatpush.bf16.msra.mxu0 %v773
      %1007 = vmatmul.bf16.gmra.mxu0 %v503
      %v1008 = vpop.f32.mrf.mxu0
      %v1009 = vadd.f32 %v920, %v1008
      %v1010 = vpop.f32.mrf.mxu0
      %v1011 = vadd.f32 %v922, %v1010
      %1012 = vmatmul.bf16.gmra.mxu0 %v507
      %v1013 = vpop.f32.mrf.mxu0
      %v1014 = vadd.f32 %v925, %v1013
      %v1015 = vpop.f32.mrf.mxu0
      %v1016 = vadd.f32 %v927, %v1015
      %1017 = vmatmul.bf16.gmra.mxu0 %v511
      %v1018 = vpop.f32.mrf.mxu0
      %v1019 = vadd.f32 %v930, %v1018
      %v1020 = vpop.f32.mrf.mxu0
      %v1021 = vadd.f32 %v932, %v1020
      %1022 = vmatmul.bf16.gmra.mxu0 %v515
      %v1023 = vpop.f32.mrf.mxu0
      %v1024 = vadd.f32 %v935, %v1023
      %v1025 = vpop.f32.mrf.mxu0
      %v1026 = vadd.f32 %v937, %v1025
      %1027 = vmatmul.bf16.gmra.mxu0 %v519
      %v1028 = vpop.f32.mrf.mxu0
      %v1029 = vadd.f32 %v940, %v1028
      %v1030 = vpop.f32.mrf.mxu0
      %v1031 = vadd.f32 %v942, %v1030
      %1032 = vmatmul.bf16.gmra.mxu0 %v523
      %v1033 = vpop.f32.mrf.mxu0
      %v1034 = vadd.f32 %v945, %v1033
      %v1035 = vpop.f32.mrf.mxu0
      %v1036 = vadd.f32 %v947, %v1035
      %1037 = vmatmul.bf16.gmra.mxu0 %v527
      %v1038 = vpop.f32.mrf.mxu0
      %v1039 = vadd.f32 %v950, %v1038
      %v1040 = vpop.f32.mrf.mxu0
      %v1041 = vadd.f32 %v952, %v1040
      %1042 = vmatmul.bf16.gmra.mxu0 %v531
      %v1043 = vpop.f32.mrf.mxu0
      %v1044 = vadd.f32 %v955, %v1043
      %v1045 = vpop.f32.mrf.mxu0
      %v1046 = vadd.f32 %v957, %v1045
      %1047 = vmatmul.bf16.gmra.mxu0 %v535
      %v1048 = vpop.f32.mrf.mxu0
      %v1049 = vadd.f32 %v960, %v1048
      %v1050 = vpop.f32.mrf.mxu0
      %v1051 = vadd.f32 %v962, %v1050
      %1052 = vmatmul.bf16.gmra.mxu0 %v539
      %v1053 = vpop.f32.mrf.mxu0
      %v1054 = vadd.f32 %v965, %v1053
      %v1055 = vpop.f32.mrf.mxu0
      %v1056 = vadd.f32 %v967, %v1055
      %1057 = vmatmul.bf16.gmra.mxu0 %v543
      %v1058 = vpop.f32.mrf.mxu0
      %v1059 = vadd.f32 %v970, %v1058
      %v1060 = vpop.f32.mrf.mxu0
      %v1061 = vadd.f32 %v972, %v1060
      %1062 = vmatmul.bf16.gmra.mxu0 %v547
      %v1063 = vpop.f32.mrf.mxu0
      %v1064 = vadd.f32 %v975, %v1063
      %v1065 = vpop.f32.mrf.mxu0
      %v1066 = vadd.f32 %v977, %v1065
      %1067 = vmatmul.bf16.gmra.mxu0 %v551
      %v1068 = vpop.f32.mrf.mxu0
      %v1069 = vadd.f32 %v980, %v1068
      %v1070 = vpop.f32.mrf.mxu0
      %v1071 = vadd.f32 %v982, %v1070
      %1072 = vmatmul.bf16.gmra.mxu0 %v555
      %v1073 = vpop.f32.mrf.mxu0
      %v1074 = vadd.f32 %v985, %v1073
      %v1075 = vpop.f32.mrf.mxu0
      %v1076 = vadd.f32 %v987, %v1075
      %1077 = vmatmul.bf16.gmra.mxu0 %v559
      %v1078 = vpop.f32.mrf.mxu0
      %v1079 = vadd.f32 %v990, %v1078
      %v1080 = vpop.f32.mrf.mxu0
      %v1081 = vadd.f32 %v992, %v1080
      %1082 = vmatmul.bf16.gmra.mxu0 %v563
      %v1083 = vpop.f32.mrf.mxu0
      %v1084 = vadd.f32 %v995, %v1083
      %v1085 = vpop.f32.mrf.mxu0
      %v1086 = vadd.f32 %v997, %v1085
      %1087 = vdwg.mxu0
      %1088 = vmatpush.bf16.msra.mxu0 %v788
      %1089 = vmatpush.bf16.msra.mxu0 %v787
      %1090 = vmatpush.bf16.msra.mxu0 %v786
      %1091 = vmatpush.bf16.msra.mxu0 %v785
      %1092 = vmatpush.bf16.msra.mxu0 %v784
      %1093 = vmatpush.bf16.msra.mxu0 %v783
      %1094 = vmatpush.bf16.msra.mxu0 %v782
      %1095 = vmatpush.bf16.msra.mxu0 %v781
      %1096 = vmatmul.bf16.gmra.mxu0 %v504
      %v1097 = vpop.f32.mrf.mxu0
      %v1098 = vadd.f32 %v1009, %v1097
      %v1099 = vpop.f32.mrf.mxu0
      %v1100 = vadd.f32 %v1011, %v1099
      %1101 = vmatmul.bf16.gmra.mxu0 %v508
      %v1102 = vpop.f32.mrf.mxu0
      %v1103 = vadd.f32 %v1014, %v1102
      %v1104 = vpop.f32.mrf.mxu0
      %v1105 = vadd.f32 %v1016, %v1104
      %1106 = vmatmul.bf16.gmra.mxu0 %v512
      %v1107 = vpop.f32.mrf.mxu0
      %v1108 = vadd.f32 %v1019, %v1107
      %v1109 = vpop.f32.mrf.mxu0
      %v1110 = vadd.f32 %v1021, %v1109
      %1111 = vmatmul.bf16.gmra.mxu0 %v516
      %v1112 = vpop.f32.mrf.mxu0
      %v1113 = vadd.f32 %v1024, %v1112
      %v1114 = vpop.f32.mrf.mxu0
      %v1115 = vadd.f32 %v1026, %v1114
      %1116 = vmatmul.bf16.gmra.mxu0 %v520
      %v1117 = vpop.f32.mrf.mxu0
      %v1118 = vadd.f32 %v1029, %v1117
      %v1119 = vpop.f32.mrf.mxu0
      %v1120 = vadd.f32 %v1031, %v1119
      %1121 = vmatmul.bf16.gmra.mxu0 %v524
      %v1122 = vpop.f32.mrf.mxu0
      %v1123 = vadd.f32 %v1034, %v1122
      %v1124 = vpop.f32.mrf.mxu0
      %v1125 = vadd.f32 %v1036, %v1124
      %1126 = vmatmul.bf16.gmra.mxu0 %v528
      %v1127 = vpop.f32.mrf.mxu0
      %v1128 = vadd.f32 %v1039, %v1127
      %v1129 = vpop.f32.mrf.mxu0
      %v1130 = vadd.f32 %v1041, %v1129
      %1131 = vmatmul.bf16.gmra.mxu0 %v532
      %v1132 = vpop.f32.mrf.mxu0
      %v1133 = vadd.f32 %v1044, %v1132
      %v1134 = vpop.f32.mrf.mxu0
      %v1135 = vadd.f32 %v1046, %v1134
      %1136 = vmatmul.bf16.gmra.mxu0 %v536
      %v1137 = vpop.f32.mrf.mxu0
      %v1138 = vadd.f32 %v1049, %v1137
      %v1139 = vpop.f32.mrf.mxu0
      %v1140 = vadd.f32 %v1051, %v1139
      %1141 = vmatmul.bf16.gmra.mxu0 %v540
      %v1142 = vpop.f32.mrf.mxu0
      %v1143 = vadd.f32 %v1054, %v1142
      %v1144 = vpop.f32.mrf.mxu0
      %v1145 = vadd.f32 %v1056, %v1144
      %1146 = vmatmul.bf16.gmra.mxu0 %v544
      %v1147 = vpop.f32.mrf.mxu0
      %v1148 = vadd.f32 %v1059, %v1147
      %v1149 = vpop.f32.mrf.mxu0
      %v1150 = vadd.f32 %v1061, %v1149
      %1151 = vmatmul.bf16.gmra.mxu0 %v548
      %v1152 = vpop.f32.mrf.mxu0
      %v1153 = vadd.f32 %v1064, %v1152
      %v1154 = vpop.f32.mrf.mxu0
      %v1155 = vadd.f32 %v1066, %v1154
      %1156 = vmatmul.bf16.gmra.mxu0 %v552
      %v1157 = vpop.f32.mrf.mxu0
      %v1158 = vadd.f32 %v1069, %v1157
      %v1159 = vpop.f32.mrf.mxu0
      %v1160 = vadd.f32 %v1071, %v1159
      %1161 = vmatmul.bf16.gmra.mxu0 %v556
      %v1162 = vpop.f32.mrf.mxu0
      %v1163 = vadd.f32 %v1074, %v1162
      %v1164 = vpop.f32.mrf.mxu0
      %v1165 = vadd.f32 %v1076, %v1164
      %1166 = vmatmul.bf16.gmra.mxu0 %v560
      %v1167 = vpop.f32.mrf.mxu0
      %v1168 = vadd.f32 %v1079, %v1167
      %v1169 = vpop.f32.mrf.mxu0
      %v1170 = vadd.f32 %v1081, %v1169
      %1171 = vmatmul.bf16.gmra.mxu0 %v564
      %v1172 = vpop.f32.mrf.mxu0
      %v1173 = vadd.f32 %v1084, %v1172
      %v1174 = vpop.f32.mrf.mxu0
      %v1175 = vadd.f32 %v1086, %v1174
      %1176 = vdwg.mxu0
      %v1177 = vmax.f32 %v1098, 0.0
      %v1178 = vmax.f32 %v1100, 0.0
      %v1179 = vmax.f32 %v1103, 0.0
      %v1180 = vmax.f32 %v1105, 0.0
      %v1181 = vmax.f32 %v1108, 0.0
      %v1182 = vmax.f32 %v1110, 0.0
      %v1183 = vmax.f32 %v1113, 0.0
      %v1184 = vmax.f32 %v1115, 0.0
      %v1185 = vmax.f32 %v1118, 0.0
      %v1186 = vmax.f32 %v1120, 0.0
      %v1187 = vmax.f32 %v1123, 0.0
      %v1188 = vmax.f32 %v1125, 0.0
      %v1189 = vmax.f32 %v1128, 0.0
      %v1190 = vmax.f32 %v1130, 0.0
      %v1191 = vmax.f32 %v1133, 0.0
      %v1192 = vmax.f32 %v1135, 0.0
      %v1193 = vmax.f32 %v1138, 0.0
      %v1194 = vmax.f32 %v1140, 0.0
      %v1195 = vmax.f32 %v1143, 0.0
      %v1196 = vmax.f32 %v1145, 0.0
      %v1197 = vmax.f32 %v1148, 0.0
      %v1198 = vmax.f32 %v1150, 0.0
      %v1199 = vmax.f32 %v1153, 0.0
      %v1200 = vmax.f32 %v1155, 0.0
      %v1201 = vmax.f32 %v1158, 0.0
      %v1202 = vmax.f32 %v1160, 0.0
      %v1203 = vmax.f32 %v1163, 0.0
      %v1204 = vmax.f32 %v1165, 0.0
      %v1205 = vmax.f32 %v1168, 0.0
      %v1206 = vmax.f32 %v1170, 0.0
      %v1207 = vmax.f32 %v1173, 0.0
      %v1208 = vmax.f32 %v1175, 0.0
      %v1209 = vpack.c.bf16 %v1177, %v1177
      %v1210 = vpack.c.bf16 %v1178, %v1178
      %v1211 = vpack.c.bf16 %v1179, %v1179
      %v1212 = vpack.c.bf16 %v1180, %v1180
      %v1213 = vpack.c.bf16 %v1181, %v1181
      %v1214 = vpack.c.bf16 %v1182, %v1182
      %v1215 = vpack.c.bf16 %v1183, %v1183
      %v1216 = vpack.c.bf16 %v1184, %v1184
      %v1217 = vpack.c.bf16 %v1185, %v1185
      %v1218 = vpack.c.bf16 %v1186, %v1186
      %v1219 = vpack.c.bf16 %v1187, %v1187
      %v1220 = vpack.c.bf16 %v1188, %v1188
      %v1221 = vpack.c.bf16 %v1189, %v1189
      %v1222 = vpack.c.bf16 %v1190, %v1190
      %v1223 = vpack.c.bf16 %v1191, %v1191
      %v1224 = vpack.c.bf16 %v1192, %v1192
      %v1225 = vpack.c.bf16 %v1193, %v1193
      %v1226 = vpack.c.bf16 %v1194, %v1194
      %v1227 = vpack.c.bf16 %v1195, %v1195
      %v1228 = vpack.c.bf16 %v1196, %v1196
      %v1229 = vpack.c.bf16 %v1197, %v1197
      %v1230 = vpack.c.bf16 %v1198, %v1198
      %v1231 = vpack.c.bf16 %v1199, %v1199
      %v1232 = vpack.c.bf16 %v1200, %v1200
      %v1233 = vpack.c.bf16 %v1201, %v1201
      %v1234 = vpack.c.bf16 %v1202, %v1202
      %v1235 = vpack.c.bf16 %v1203, %v1203
      %v1236 = vpack.c.bf16 %v1204, %v1204
      %v1237 = vpack.c.bf16 %v1205, %v1205
      %v1238 = vpack.c.bf16 %v1206, %v1206
      %v1239 = vpack.c.bf16 %v1207, %v1207
      %v1240 = vpack.c.bf16 %v1208, %v1208
      %vm1241 = vcmask 519168
      %1242 = vst.msk [vmem:[%s175] sm:$0xf] %vm1241, %v1209
      %1243 = vst.msk [vmem:[%s175 + $0x4] sm:$0xf] %vm1241, %v1210
      %1244 = vst.msk [vmem:[%s175 + $0x8] sm:$0xf] %vm1241, %v1211
      %1245 = vst.msk [vmem:[%s175 + $0xc] sm:$0xf] %vm1241, %v1212
      %1246 = vst.msk [vmem:[%s175 + $0x10] sm:$0xf] %vm1241, %v1213
      %1247 = vst.msk [vmem:[%s175 + $0x14] sm:$0xf] %vm1241, %v1214
      %1248 = vst.msk [vmem:[%s175 + $0x18] sm:$0xf] %vm1241, %v1215
      %1249 = vst.msk [vmem:[%s175 + $0x1c] sm:$0xf] %vm1241, %v1216
      %1250 = vst.msk [vmem:[%s175 + $0x20] sm:$0xf] %vm1241, %v1217
      %1251 = vst.msk [vmem:[%s175 + $0x24] sm:$0xf] %vm1241, %v1218
      %1252 = vst.msk [vmem:[%s175 + $0x28] sm:$0xf] %vm1241, %v1219
      %1253 = vst.msk [vmem:[%s175 + $0x2c] sm:$0xf] %vm1241, %v1220
      %1254 = vst.msk [vmem:[%s175 + $0x30] sm:$0xf] %vm1241, %v1221
      %1255 = vst.msk [vmem:[%s175 + $0x34] sm:$0xf] %vm1241, %v1222
      %1256 = vst.msk [vmem:[%s175 + $0x38] sm:$0xf] %vm1241, %v1223
      %1257 = vst.msk [vmem:[%s175 + $0x3c] sm:$0xf] %vm1241, %v1224
      %1258 = vst.msk [vmem:[%s175 + $0x40] sm:$0xf] %vm1241, %v1225
      %1259 = vst.msk [vmem:[%s175 + $0x44] sm:$0xf] %vm1241, %v1226
      %1260 = vst.msk [vmem:[%s175 + $0x48] sm:$0xf] %vm1241, %v1227
      %1261 = vst.msk [vmem:[%s175 + $0x4c] sm:$0xf] %vm1241, %v1228
      %1262 = vst.msk [vmem:[%s175 + $0x50] sm:$0xf] %vm1241, %v1229
      %1263 = vst.msk [vmem:[%s175 + $0x54] sm:$0xf] %vm1241, %v1230
      %1264 = vst.msk [vmem:[%s175 + $0x58] sm:$0xf] %vm1241, %v1231
      %1265 = vst.msk [vmem:[%s175 + $0x5c] sm:$0xf] %vm1241, %v1232
      %1266 = vst.msk [vmem:[%s175 + $0x60] sm:$0xf] %vm1241, %v1233
      %1267 = vst.msk [vmem:[%s175 + $0x64] sm:$0xf] %vm1241, %v1234
      %1268 = vst.msk [vmem:[%s175 + $0x68] sm:$0xf] %vm1241, %v1235
      %1269 = vst.msk [vmem:[%s175 + $0x6c] sm:$0xf] %vm1241, %v1236
      %1270 = vst.msk [vmem:[%s175 + $0x70] sm:$0xf] %vm1241, %v1237
      %1271 = vst.msk [vmem:[%s175 + $0x74] sm:$0xf] %vm1241, %v1238
      %1272 = vst.msk [vmem:[%s175 + $0x78] sm:$0xf] %vm1241, %v1239
      %1273 = vst.msk [vmem:[%s175 + $0x7c] sm:$0xf] %vm1241, %v1240
      %s1274 = smul.u32 32, %s14
      %p1275 = scmp.lt.s32.totalorder %s1274, 95
      %s1276 = scalar_select %p1275, %s1274, 95
      %s1277 = smul.addr %s1276, 4
      %s1278 = scalar_lea.vmem %s3, %s1277
      // Predicated region
      $region33: #{cnn_base_forward.5} parent=31 // pred_check
        %p1279 = pneg %p100
      $region34: #{cnn_base_forward.5} parent=31 // pred_check_branch
        %1281 = sbr.rel (%p1279) target = $region36
      $region35: #{cnn_base_forward.5} parent=31 // pred_region
        %s1282 = smul.u32 32, %s14
      $region36: #{cnn_base_forward.5} parent=31 // pred_fallthru
        _
    $region32: #{cnn_base_forward.5} parent=5 // pred_fallthru
      _
    %p1283 = scmp.le.s32.totalorder 2, %s9
    // Predicated region
    $region37: #{cnn_base_forward.5} parent=5 // pred_check
      %p1284 = pneg %p1283
    $region38: #{cnn_base_forward.5} parent=5 // pred_check_branch
      %1286 = sbr.rel (%p1284) target = $region40
    $region39: #{cnn_base_forward.5} parent=5 // pred_region
      %s1287 = ssub.s32 %s9, 2
      // Predicated region
      $region41: #{cnn_base_forward.5} parent=39 // pred_check
        %p1288 = pneg %p106
      $region42: #{cnn_base_forward.5} parent=39 // pred_check_branch
        %1290 = sbr.rel (%p1288) target = $region44
      $region43: #{cnn_base_forward.5} parent=39 // pred_region
        %s1291 = smul.u32 32, %s15
        %p1292 = scmp.lt.s32.totalorder %s1291, 95
        %s1293 = scalar_select %p1292, %s1291, 95
        %s1294 = smul.addr %s1293, 4
        %s1295 = scalar_lea.vmem %s3, %s1294
      $region44: #{cnn_base_forward.5} parent=39 // pred_fallthru
        _
    $region40: #{cnn_base_forward.5} parent=5 // pred_fallthru
      _
  $region6: #{cnn_base_forward.5} parent=0 // loop_footer
    %s13 = sadd.s32 1, %s9
  $region7: #{cnn_base_forward.5} parent=0 // loop_footer_branch
    %8 = sbr.rel target = $region3
  $region8: #{cnn_base_forward.5} parent=0 // loop_exit
    _

// kernel: cnn_base_forward.6
$region0: #{cnn_base_forward.6}
  #allocation0 [shape = 'u32[]', space=smem, size = 0x4, offset = 0x4, fixed_abs, tag = 'smem constant byte address 0x4 - core index']
  #allocation1 [shape = 'u32[72,128]{1,0:T(1,128)}', space=vmem, size = 0x9000, scoped, tag = 'internal scratch']
  %s0 = inlined_call_operand.vmem [shape: bf16[512,576], index: 0, kind: input, shape index: {}]
  %s1 = inlined_call_operand.vmem [shape: bf16[576,32], index: 1, kind: input, shape index: {}]
  %s2 = inlined_call_operand.vmem [shape: f32[1,32], index: 2, kind: input, shape index: {}]
  %s3 = inlined_call_operand.vmem [shape: bf16[512,32], index: 3, kind: output, shape index: {}]
  %s4 = sld [smem:[#allocation0]]
  $region45: #{cnn_base_forward.6} parent=0
    _
  %s6 = ssub.s32 1, %s4
  %s7 = scalar_select 0, %s6, %s4
  loop: start=0, step=1, limit=4
  $region2: #{cnn_base_forward.6} parent=0 // loop_pre_header
    _
  $region3: #{cnn_base_forward.6} parent=0 // loop_header
    %s9 = sphi 0, %s13
    %p10 = scmp.ge.s32.totalorder %s9, 4
    %s19 = sphi 0, %s21
    %s22 = sphi 0, %s19
    %s23 = sphi 0, %s22
    %s39 = sphi 0, %s23
    %s43 = sphi 0, %s43
    %s45 = sphi 0, %s43
    %s46 = sphi 0, %s45
    %s60 = sphi 0, %s46
    %s64 = sphi 0, %s64
    %s66 = sphi 0, %s64
    %s67 = sphi 0, %s66
    %s81 = sphi 0, %s67
    %s87 = sphi 0, %s89
    %s90 = sphi 0, %s87
    %s91 = sphi 0, %s90
    %s107 = sphi 0, %s91
  $region4: #{cnn_base_forward.6} parent=0 // loop_header_branch
    %12 = sbr.rel (%p10) target = $region8
  $region5: #{cnn_base_forward.6} parent=0 // loop_body
    %s14 = ssub.s32 %s9, 1
    %s15 = ssub.s32 %s9, 2
    %s16 = sadd.s32 %s9, 1
    %s17 = ssub.s32 %s9, %s16
    %p18 = scmp.eq.s32.totalorder %s17, 0
    %s20 = sadd.s32 %s19, 1
    %s21 = scalar_select %p18, %s19, %s20
    %p24 = pneg %p18
    %p25 = scmp.eq.s32.totalorder %s9, 1
    %p26 = por %p24, %p25
    %p27 = scmp.ne.s32.totalorder %s19, %s22
    %p28 = scmp.eq.s32.totalorder %s9, 0
    %p29 = por %p27, %p28
    %p30 = scmp.ne.s32.totalorder %s19, %s22
    %p31 = scmp.eq.s32.totalorder %s14, 1
    %p32 = por %p30, %p31
    %p33 = scmp.ne.s32.totalorder %s22, %s23
    %p34 = scmp.eq.s32.totalorder %s14, 0
    %p35 = por %p33, %p34
    %p36 = scmp.ne.s32.totalorder %s22, %s23
    %p37 = scmp.eq.s32.totalorder %s15, 1
    %p38 = por %p36, %p37
    %p40 = scmp.ne.s32.totalorder %s23, %s39
    %p41 = scmp.eq.s32.totalorder %s15, 0
    %p42 = por %p40, %p41
    %s44 = sadd.s32 %s43, 1
    %p47 = scmp.eq.s32.totalorder %s9, 1
    %p48 = scmp.ne.s32.totalorder %s43, %s45
    %p49 = scmp.eq.s32.totalorder %s9, 0
    %p50 = por %p48, %p49
    %p51 = scmp.ne.s32.totalorder %s43, %s45
    %p52 = scmp.eq.s32.totalorder %s14, 1
    %p53 = por %p51, %p52
    %p54 = scmp.ne.s32.totalorder %s45, %s46
    %p55 = scmp.eq.s32.totalorder %s14, 0
    %p56 = por %p54, %p55
    %p57 = scmp.ne.s32.totalorder %s45, %s46
    %p58 = scmp.eq.s32.totalorder %s15, 1
    %p59 = por %p57, %p58
    %p61 = scmp.ne.s32.totalorder %s46, %s60
    %p62 = scmp.eq.s32.totalorder %s15, 0
    %p63 = por %p61, %p62
    %s65 = sadd.s32 %s64, 1
    %p68 = scmp.eq.s32.totalorder %s9, 1
    %p69 = scmp.ne.s32.totalorder %s64, %s66
    %p70 = scmp.eq.s32.totalorder %s9, 0
    %p71 = por %p69, %p70
    %p72 = scmp.ne.s32.totalorder %s64, %s66
    %p73 = scmp.eq.s32.totalorder %s14, 1
    %p74 = por %p72, %p73
    %p75 = scmp.ne.s32.totalorder %s66, %s67
    %p76 = scmp.eq.s32.totalorder %s14, 0
    %p77 = por %p75, %p76
    %p78 = scmp.ne.s32.totalorder %s66, %s67
    %p79 = scmp.eq.s32.totalorder %s15, 1
    %p80 = por %p78, %p79
    %p82 = scmp.ne.s32.totalorder %s67, %s81
    %p83 = scmp.eq.s32.totalorder %s15, 0
    %p84 = por %p82, %p83
    %s85 = ssub.s32 %s9, %s16
    %p86 = scmp.eq.s32.totalorder %s85, 0
    %s88 = sadd.s32 %s87, 1
    %s89 = scalar_select %p86, %s87, %s88
    %p92 = pneg %p86
    %p93 = scmp.eq.s32.totalorder %s9, 1
    %p94 = por %p92, %p93
    %p95 = scmp.ne.s32.totalorder %s87, %s90
    %p96 = scmp.eq.s32.totalorder %s9, 0
    %p97 = por %p95, %p96
    %p98 = scmp.ne.s32.totalorder %s87, %s90
    %p99 = scmp.eq.s32.totalorder %s14, 1
    %p100 = por %p98, %p99
    %p101 = scmp.ne.s32.totalorder %s90, %s91
    %p102 = scmp.eq.s32.totalorder %s14, 0
    %p103 = por %p101, %p102
    %p104 = scmp.ne.s32.totalorder %s90, %s91
    %p105 = scmp.eq.s32.totalorder %s15, 1
    %p106 = por %p104, %p105
    %p108 = scmp.ne.s32.totalorder %s91, %s107
    %p109 = scmp.eq.s32.totalorder %s15, 0
    %p110 = por %p108, %p109
    %p111 = scmp.le.s32.totalorder 1, %s9
    %p112 = scmp.lt.s32.totalorder %s9, 3
    %p113 = pnand %p111, %p112
    %p114 = pneg %p113
    // Predicated region
    $region9: #{cnn_base_forward.6} parent=5 // pred_check
      _
    $region10: #{cnn_base_forward.6} parent=5 // pred_check_branch
      %116 = sbr.rel (%p113) target = $region12
    $region11: #{cnn_base_forward.6} parent=5 // pred_region
      %s117 = ssub.s32 %s9, 1
      // Predicated region
      $region13: #{cnn_base_forward.6} parent=11 // pred_check
        %p118 = pneg %p56
      $region14: #{cnn_base_forward.6} parent=11 // pred_check_branch
        %120 = sbr.rel (%p118) target = $region16
      $region15: #{cnn_base_forward.6} parent=11 // pred_region
        _
      $region16: #{cnn_base_forward.6} parent=11 // pred_fallthru
        _
      // Predicated region
      $region17: #{cnn_base_forward.6} parent=11 // pred_check
        %p121 = pneg %p77
      $region18: #{cnn_base_forward.6} parent=11 // pred_check_branch
        %123 = sbr.rel (%p121) target = $region20
      $region19: #{cnn_base_forward.6} parent=11 // pred_region
        _
      $region20: #{cnn_base_forward.6} parent=11 // pred_fallthru
        _
    $region12: #{cnn_base_forward.6} parent=5 // pred_fallthru
      _
    %p124 = scmp.lt.s32.totalorder %s9, 2
    // Predicated region
    $region21: #{cnn_base_forward.6} parent=5 // pred_check
      %p125 = pneg %p124
    $region22: #{cnn_base_forward.6} parent=5 // pred_check_branch
      %127 = sbr.rel (%p125) target = $region24
    $region23: #{cnn_base_forward.6} parent=5 // pred_region
      // Predicated region
      $region25: #{cnn_base_forward.6} parent=23 // pred_check
        %p128 = pneg %p29
      $region26: #{cnn_base_forward.6} parent=23 // pred_check_branch
        %130 = sbr.rel (%p128) target = $region28
      $region27: #{cnn_base_forward.6} parent=23 // pred_region
        %s131 = smul.u32 32, %s9
        %p132 = scmp.lt.s32.totalorder %s131, 63
        %s133 = scalar_select %p132, %s131, 63
        %s134 = smul.addr %s133, 5
        %s135 = smul.addr %s134, 4
        %s136 = scalar_lea.vmem %s0, %s135
        %s137 = smul.u32 32, %s9
      $region28: #{cnn_base_forward.6} parent=23 // pred_fallthru
        _
    $region24: #{cnn_base_forward.6} parent=5 // pred_fallthru
      _
    %p138 = scmp.le.s32.totalorder 1, %s9
    %p139 = scmp.lt.s32.totalorder %s9, 3
    %p140 = pnand %p138, %p139
    %p141 = pneg %p140
    // Predicated region
    $region29: #{cnn_base_forward.6} parent=5 // pred_check
      _
    $region30: #{cnn_base_forward.6} parent=5 // pred_check_branch
      %143 = sbr.rel (%p140) target = $region32
    $region31: #{cnn_base_forward.6} parent=5 // pred_region
      %s144 = ssub.s32 %s9, 1
      %s145 = smul.u32 32, %s14
      %p146 = scmp.lt.s32.totalorder %s145, 63
      %s147 = scalar_select %p146, %s145, 63
      %s148 = smul.addr %s147, 5
      %s149 = smul.addr %s148, 4
      %s150 = scalar_lea.vmem %s0, %s149
      %p151 = pneg %p35
      %p152 = pneg %p32
      %p153 = pneg %p56
      %p154 = pneg %p53
      %p155 = pneg %p77
      %p156 = pneg %p74
      %p157 = pneg %p103
      %p158 = pneg %p100
      %s159 = smul.u32 32, %s14
      %p160 = scmp.lt.s32.totalorder %s159, 63
      %s161 = scalar_select %p160, %s159, 63
      %s162 = smul.addr %s161, 4
      %s163 = scalar_lea.vmem %s3, %s162
      %s164 = smul.u32 32, %s14
      %p165 = scmp.lt.s32.totalorder %s164, 63
      %s166 = scalar_select %p165, %s164, 63
      %s167 = smul.addr %s166, 5
      %s168 = smul.addr %s167, 4
      %s169 = scalar_lea.vmem %s0, %s168
      %s170 = smul.u32 32, %s14
      %s171 = smul.u32 32, %s14
      %p172 = scmp.lt.s32.totalorder %s171, 63
      %s173 = scalar_select %p172, %s171, 63
      %s174 = smul.addr %s173, 4
      %s175 = scalar_lea.vmem %s3, %s174
      %s176 = smul.u32 32, %s14
      %v178 = vld [vmem:[%s169] sm:$0xff]
      %v179 = vld [vmem:[%s169 + $0x8] sm:$0xff]
      %v180 = vld [vmem:[%s169 + $0x10] sm:$0xf]
      %v181 = vld [vmem:[%s169 + $0x14] sm:$0xff]
      %v182 = vld [vmem:[%s169 + $0x1c] sm:$0xff]
      %v183 = vld [vmem:[%s169 + $0x24] sm:$0xf]
      %v184 = vld [vmem:[%s169 + $0x28] sm:$0xff]
      %v185 = vld [vmem:[%s169 + $0x30] sm:$0xff]
      %v186 = vld [vmem:[%s169 + $0x38] sm:$0xf]
      %v187 = vld [vmem:[%s169 + $0x3c] sm:$0xff]
      %v188 = vld [vmem:[%s169 + $0x44] sm:$0xff]
      %v189 = vld [vmem:[%s169 + $0x4c] sm:$0xf]
      %v190 = vld [vmem:[%s169 + $0x50] sm:$0xff]
      %v191 = vld [vmem:[%s169 + $0x58] sm:$0xff]
      %v192 = vld [vmem:[%s169 + $0x60] sm:$0xf]
      %v193 = vld [vmem:[%s169 + $0x64] sm:$0xff]
      %v194 = vld [vmem:[%s169 + $0x6c] sm:$0xff]
      %v195 = vld [vmem:[%s169 + $0x74] sm:$0xf]
      %v196 = vld [vmem:[%s169 + $0x78] sm:$0xff]
      %v197 = vld [vmem:[%s169 + $0x80] sm:$0xff]
      %v198 = vld [vmem:[%s169 + $0x88] sm:$0xf]
      %v199 = vld [vmem:[%s169 + $0x8c] sm:$0xff]
      %v200 = vld [vmem:[%s169 + $0x94] sm:$0xff]
      %v201 = vld [vmem:[%s169 + $0x9c] sm:$0xf]
      %v202 = vld [vmem:[%s169 + $0xa0] sm:$0xff]
      %v203 = vld [vmem:[%s169 + $0xa8] sm:$0xff]
      %v204 = vld [vmem:[%s169 + $0xb0] sm:$0xf]
      %v205 = vld [vmem:[%s169 + $0xb4] sm:$0xff]
      %v206 = vld [vmem:[%s169 + $0xbc] sm:$0xff]
      %v207 = vld [vmem:[%s169 + $0xc4] sm:$0xf]
      %v208 = vld [vmem:[%s169 + $0xc8] sm:$0xff]
      %v209 = vld [vmem:[%s169 + $0xd0] sm:$0xff]
      %v210 = vld [vmem:[%s169 + $0xd8] sm:$0xf]
      %v211 = vld [vmem:[%s169 + $0xdc] sm:$0xff]
      %v212 = vld [vmem:[%s169 + $0xe4] sm:$0xff]
      %v213 = vld [vmem:[%s169 + $0xec] sm:$0xf]
      %v214 = vld [vmem:[%s169 + $0xf0] sm:$0xff]
      %v215 = vld [vmem:[%s169 + $0xf8] sm:$0xff]
      %v216 = vld [vmem:[%s169 + $0x100] sm:$0xf]
      %v217 = vld [vmem:[%s169 + $0x104] sm:$0xff]
      %v218 = vld [vmem:[%s169 + $0x10c] sm:$0xff]
      %v219 = vld [vmem:[%s169 + $0x114] sm:$0xf]
      %v220 = vld [vmem:[%s169 + $0x118] sm:$0xff]
      %v221 = vld [vmem:[%s169 + $0x120] sm:$0xff]
      %v222 = vld [vmem:[%s169 + $0x128] sm:$0xf]
      %v223 = vld [vmem:[%s169 + $0x12c] sm:$0xff]
      %v224 = vld [vmem:[%s169 + $0x134] sm:$0xff]
      %v225 = vld [vmem:[%s169 + $0x13c] sm:$0xf]
      %v226 = vld [vmem:[%s169 + $0x140] sm:$0xff]
      %v227 = vld [vmem:[%s169 + $0x148] sm:$0xff]
      %v228 = vld [vmem:[%s169 + $0x150] sm:$0xf]
      %v229 = vld [vmem:[%s169 + $0x154] sm:$0xff]
      %v230 = vld [vmem:[%s169 + $0x15c] sm:$0xff]
      %v231 = vld [vmem:[%s169 + $0x164] sm:$0xf]
      %v232 = vld [vmem:[%s169 + $0x168] sm:$0xff]
      %v233 = vld [vmem:[%s169 + $0x170] sm:$0xff]
      %v234 = vld [vmem:[%s169 + $0x178] sm:$0xf]
      %v235 = vld [vmem:[%s169 + $0x17c] sm:$0xff]
      %v236 = vld [vmem:[%s169 + $0x184] sm:$0xff]
      %v237 = vld [vmem:[%s169 + $0x18c] sm:$0xf]
      %v238 = vld [vmem:[%s169 + $0x190] sm:$0xff]
      %v239 = vld [vmem:[%s169 + $0x198] sm:$0xff]
      %v240 = vld [vmem:[%s169 + $0x1a0] sm:$0xf]
      %v241 = vld [vmem:[%s169 + $0x1a4] sm:$0xff]
      %v242 = vld [vmem:[%s169 + $0x1ac] sm:$0xff]
      %v243 = vld [vmem:[%s169 + $0x1b4] sm:$0xf]
      %v244 = vld [vmem:[%s169 + $0x1b8] sm:$0xff]
      %v245 = vld [vmem:[%s169 + $0x1c0] sm:$0xff]
      %v246 = vld [vmem:[%s169 + $0x1c8] sm:$0xf]
      %v247 = vld [vmem:[%s169 + $0x1cc] sm:$0xff]
      %v248 = vld [vmem:[%s169 + $0x1d4] sm:$0xff]
      %v249 = vld [vmem:[%s169 + $0x1dc] sm:$0xf]
      %v250 = vld [vmem:[%s169 + $0x1e0] sm:$0xff]
      %v251 = vld [vmem:[%s169 + $0x1e8] sm:$0xff]
      %v252 = vld [vmem:[%s169 + $0x1f0] sm:$0xf]
      %v253 = vld [vmem:[%s169 + $0x1f4] sm:$0xff]
      %v254 = vld [vmem:[%s169 + $0x1fc] sm:$0xff]
      %v255 = vld [vmem:[%s169 + $0x204] sm:$0xf]
      %v256 = vld [vmem:[%s169 + $0x208] sm:$0xff]
      %v257 = vld [vmem:[%s169 + $0x210] sm:$0xff]
      %v258 = vld [vmem:[%s169 + $0x218] sm:$0xf]
      %v259 = vld [vmem:[%s169 + $0x21c] sm:$0xff]
      %v260 = vld [vmem:[%s169 + $0x224] sm:$0xff]
      %v261 = vld [vmem:[%s169 + $0x22c] sm:$0xf]
      %v262 = vld [vmem:[%s169 + $0x230] sm:$0xff]
      %v263 = vld [vmem:[%s169 + $0x238] sm:$0xff]
      %v264 = vld [vmem:[%s169 + $0x240] sm:$0xf]
      %v265 = vld [vmem:[%s169 + $0x244] sm:$0xff]
      %v266 = vld [vmem:[%s169 + $0x24c] sm:$0xff]
      %v267 = vld [vmem:[%s169 + $0x254] sm:$0xf]
      %v268 = vld [vmem:[%s169 + $0x258] sm:$0xff]
      %v269 = vld [vmem:[%s169 + $0x260] sm:$0xff]
      %v270 = vld [vmem:[%s169 + $0x268] sm:$0xf]
      %v271 = vld [vmem:[%s169 + $0x26c] sm:$0xff]
      %v272 = vld [vmem:[%s169 + $0x274] sm:$0xff]
      %v273 = vld [vmem:[%s169 + $0x27c] sm:$0xf]
      %v274 = vld [vmem:[%s1] sm:$0xf]
      %v275 = vld [vmem:[%s1 + $0x4] sm:$0xf]
      %v276 = vld [vmem:[%s1 + $0x8] sm:$0xf]
      %v277 = vld [vmem:[%s1 + $0xc] sm:$0xf]
      %v278 = vld [vmem:[%s1 + $0x10] sm:$0xf]
      %v279 = vld [vmem:[%s1 + $0x14] sm:$0xf]
      %v280 = vld [vmem:[%s1 + $0x18] sm:$0xf]
      %v281 = vld [vmem:[%s1 + $0x1c] sm:$0xf]
      %v282 = vld [vmem:[%s1 + $0x20] sm:$0xf]
      %v283 = vld [vmem:[%s1 + $0x24] sm:$0xf]
      %v284 = vld [vmem:[%s1 + $0x28] sm:$0xf]
      %v285 = vld [vmem:[%s1 + $0x2c] sm:$0xf]
      %v286 = vld [vmem:[%s1 + $0x30] sm:$0xf]
      %v287 = vld [vmem:[%s1 + $0x34] sm:$0xf]
      %v288 = vld [vmem:[%s1 + $0x38] sm:$0xf]
      %v289 = vld [vmem:[%s1 + $0x3c] sm:$0xf]
      %v290 = vld [vmem:[%s1 + $0x40] sm:$0xf]
      %v291 = vld [vmem:[%s1 + $0x44] sm:$0xf]
      %v292 = vld [vmem:[%s1 + $0x48] sm:$0xf]
      %v293 = vld [vmem:[%s1 + $0x4c] sm:$0xf]
      %v294 = vld [vmem:[%s1 + $0x50] sm:$0xf]
      %v295 = vld [vmem:[%s1 + $0x54] sm:$0xf]
      %v296 = vld [vmem:[%s1 + $0x58] sm:$0xf]
      %v297 = vld [vmem:[%s1 + $0x5c] sm:$0xf]
      %v298 = vld [vmem:[%s1 + $0x60] sm:$0xf]
      %v299 = vld [vmem:[%s1 + $0x64] sm:$0xf]
      %v300 = vld [vmem:[%s1 + $0x68] sm:$0xf]
      %v301 = vld [vmem:[%s1 + $0x6c] sm:$0xf]
      %v302 = vld [vmem:[%s1 + $0x70] sm:$0xf]
      %v303 = vld [vmem:[%s1 + $0x74] sm:$0xf]
      %v304 = vld [vmem:[%s1 + $0x78] sm:$0xf]
      %v305 = vld [vmem:[%s1 + $0x7c] sm:$0xf]
      %v306 = vld [vmem:[%s1 + $0x80] sm:$0xf]
      %v307 = vld [vmem:[%s1 + $0x84] sm:$0xf]
      %v308 = vld [vmem:[%s1 + $0x88] sm:$0xf]
      %v309 = vld [vmem:[%s1 + $0x8c] sm:$0xf]
      %v310 = vld [vmem:[%s1 + $0x90] sm:$0xf]
      %v311 = vld [vmem:[%s1 + $0x94] sm:$0xf]
      %v312 = vld [vmem:[%s1 + $0x98] sm:$0xf]
      %v313 = vld [vmem:[%s1 + $0x9c] sm:$0xf]
      %v314 = vld [vmem:[%s1 + $0xa0] sm:$0xf]
      %v315 = vld [vmem:[%s1 + $0xa4] sm:$0xf]
      %v316 = vld [vmem:[%s1 + $0xa8] sm:$0xf]
      %v317 = vld [vmem:[%s1 + $0xac] sm:$0xf]
      %v318 = vld [vmem:[%s1 + $0xb0] sm:$0xf]
      %v319 = vld [vmem:[%s1 + $0xb4] sm:$0xf]
      %v320 = vld [vmem:[%s1 + $0xb8] sm:$0xf]
      %v321 = vld [vmem:[%s1 + $0xbc] sm:$0xf]
      %v322 = vld [vmem:[%s1 + $0xc0] sm:$0xf]
      %v323 = vld [vmem:[%s1 + $0xc4] sm:$0xf]
      %v324 = vld [vmem:[%s1 + $0xc8] sm:$0xf]
      %v325 = vld [vmem:[%s1 + $0xcc] sm:$0xf]
      %v326 = vld [vmem:[%s1 + $0xd0] sm:$0xf]
      %v327 = vld [vmem:[%s1 + $0xd4] sm:$0xf]
      %v328 = vld [vmem:[%s1 + $0xd8] sm:$0xf]
      %v329 = vld [vmem:[%s1 + $0xdc] sm:$0xf]
      %v330 = vld [vmem:[%s1 + $0xe0] sm:$0xf]
      %v331 = vld [vmem:[%s1 + $0xe4] sm:$0xf]
      %v332 = vld [vmem:[%s1 + $0xe8] sm:$0xf]
      %v333 = vld [vmem:[%s1 + $0xec] sm:$0xf]
      %v334 = vld [vmem:[%s1 + $0xf0] sm:$0xf]
      %v335 = vld [vmem:[%s1 + $0xf4] sm:$0xf]
      %v336 = vld [vmem:[%s1 + $0xf8] sm:$0xf]
      %v337 = vld [vmem:[%s1 + $0xfc] sm:$0xf]
      %v338 = vld [vmem:[%s1 + $0x100] sm:$0xf]
      %v339 = vld [vmem:[%s1 + $0x104] sm:$0xf]
      %v340 = vld [vmem:[%s1 + $0x108] sm:$0xf]
      %v341 = vld [vmem:[%s1 + $0x10c] sm:$0xf]
      %v342 = vld [vmem:[%s1 + $0x110] sm:$0xf]
      %v343 = vld [vmem:[%s1 + $0x114] sm:$0xf]
      %v344 = vld [vmem:[%s1 + $0x118] sm:$0xf]
      %v345 = vld [vmem:[%s1 + $0x11c] sm:$0xf]
      %v346 = vld [vmem:[%s2] sm:$0x1]
      %v348 = vperm.slane %v346, 0
      %v446 = vunpack.c.l.b16 %v178
      %v447 = vunpack.c.h.b16 %v178
      %v448 = vunpack.c.l.b16 %v179
      %v449 = vunpack.c.h.b16 %v179
      %v450 = vunpack.c.l.b16 %v180
      %v451 = vunpack.c.l.b16 %v181
      %v452 = vunpack.c.h.b16 %v181
      %v453 = vunpack.c.l.b16 %v182
      %v454 = vunpack.c.h.b16 %v182
      %v455 = vunpack.c.l.b16 %v183
      %v456 = vunpack.c.l.b16 %v184
      %v457 = vunpack.c.h.b16 %v184
      %v458 = vunpack.c.l.b16 %v185
      %v459 = vunpack.c.h.b16 %v185
      %v460 = vunpack.c.l.b16 %v186
      %v461 = vunpack.c.l.b16 %v187
      %v462 = vunpack.c.h.b16 %v187
      %v463 = vunpack.c.l.b16 %v188
      %v464 = vunpack.c.h.b16 %v188
      %v465 = vunpack.c.l.b16 %v189
      %v466 = vunpack.c.l.b16 %v190
      %v467 = vunpack.c.h.b16 %v190
      %v468 = vunpack.c.l.b16 %v191
      %v469 = vunpack.c.h.b16 %v191
      %v470 = vunpack.c.l.b16 %v192
      %v471 = vunpack.c.l.b16 %v193
      %v472 = vunpack.c.h.b16 %v193
      %v473 = vunpack.c.l.b16 %v194
      %v474 = vunpack.c.h.b16 %v194
      %v475 = vunpack.c.l.b16 %v195
      %v476 = vunpack.c.l.b16 %v196
      %v477 = vunpack.c.h.b16 %v196
      %v478 = vunpack.c.l.b16 %v197
      %v479 = vunpack.c.h.b16 %v197
      %v480 = vunpack.c.l.b16 %v198
      %v481 = vunpack.c.l.b16 %v199
      %v482 = vunpack.c.h.b16 %v199
      %v483 = vunpack.c.l.b16 %v200
      %v484 = vunpack.c.h.b16 %v200
      %v485 = vunpack.c.l.b16 %v201
      %v486 = vunpack.c.l.b16 %v202
      %v487 = vunpack.c.h.b16 %v202
      %v488 = vunpack.c.l.b16 %v203
      %v489 = vunpack.c.h.b16 %v203
      %v490 = vunpack.c.l.b16 %v204
      %v491 = vunpack.c.l.b16 %v205
      %v492 = vunpack.c.h.b16 %v205
      %v493 = vunpack.c.l.b16 %v206
      %v494 = vunpack.c.h.b16 %v206
      %v495 = vunpack.c.l.b16 %v207
      %v496 = vunpack.c.l.b16 %v208
      %v497 = vunpack.c.h.b16 %v208
      %v498 = vunpack.c.l.b16 %v209
      %v499 = vunpack.c.h.b16 %v209
      %v500 = vunpack.c.l.b16 %v210
      %v501 = vunpack.c.l.b16 %v211
      %v502 = vunpack.c.h.b16 %v211
      %v503 = vunpack.c.l.b16 %v212
      %v504 = vunpack.c.h.b16 %v212
      %v505 = vunpack.c.l.b16 %v213
      %v506 = vunpack.c.l.b16 %v214
      %v507 = vunpack.c.h.b16 %v214
      %v508 = vunpack.c.l.b16 %v215
      %v509 = vunpack.c.h.b16 %v215
      %v510 = vunpack.c.l.b16 %v216
      %v511 = vunpack.c.l.b16 %v217
      %v512 = vunpack.c.h.b16 %v217
      %v513 = vunpack.c.l.b16 %v218
      %v514 = vunpack.c.h.b16 %v218
      %v515 = vunpack.c.l.b16 %v219
      %v516 = vunpack.c.l.b16 %v220
      %v517 = vunpack.c.h.b16 %v220
      %v518 = vunpack.c.l.b16 %v221
      %v519 = vunpack.c.h.b16 %v221
      %v520 = vunpack.c.l.b16 %v222
      %v521 = vunpack.c.l.b16 %v223
      %v522 = vunpack.c.h.b16 %v223
      %v523 = vunpack.c.l.b16 %v224
      %v524 = vunpack.c.h.b16 %v224
      %v525 = vunpack.c.l.b16 %v225
      %v526 = vunpack.c.l.b16 %v226
      %v527 = vunpack.c.h.b16 %v226
      %v528 = vunpack.c.l.b16 %v227
      %v529 = vunpack.c.h.b16 %v227
      %v530 = vunpack.c.l.b16 %v228
      %v531 = vunpack.c.l.b16 %v229
      %v532 = vunpack.c.h.b16 %v229
      %v533 = vunpack.c.l.b16 %v230
      %v534 = vunpack.c.h.b16 %v230
      %v535 = vunpack.c.l.b16 %v231
      %v536 = vunpack.c.l.b16 %v232
      %v537 = vunpack.c.h.b16 %v232
      %v538 = vunpack.c.l.b16 %v233
      %v539 = vunpack.c.h.b16 %v233
      %v540 = vunpack.c.l.b16 %v234
      %v541 = vunpack.c.l.b16 %v235
      %v542 = vunpack.c.h.b16 %v235
      %v543 = vunpack.c.l.b16 %v236
      %v544 = vunpack.c.h.b16 %v236
      %v545 = vunpack.c.l.b16 %v237
      %v546 = vunpack.c.l.b16 %v238
      %v547 = vunpack.c.h.b16 %v238
      %v548 = vunpack.c.l.b16 %v239
      %v549 = vunpack.c.h.b16 %v239
      %v550 = vunpack.c.l.b16 %v240
      %v551 = vunpack.c.l.b16 %v241
      %v552 = vunpack.c.h.b16 %v241
      %v553 = vunpack.c.l.b16 %v242
      %v554 = vunpack.c.h.b16 %v242
      %v555 = vunpack.c.l.b16 %v243
      %v556 = vunpack.c.l.b16 %v244
      %v557 = vunpack.c.h.b16 %v244
      %v558 = vunpack.c.l.b16 %v245
      %v559 = vunpack.c.h.b16 %v245
      %v560 = vunpack.c.l.b16 %v246
      %v561 = vunpack.c.l.b16 %v247
      %v562 = vunpack.c.h.b16 %v247
      %v563 = vunpack.c.l.b16 %v248
      %v564 = vunpack.c.h.b16 %v248
      %v565 = vunpack.c.l.b16 %v249
      %v566 = vunpack.c.l.b16 %v250
      %v567 = vunpack.c.h.b16 %v250
      %v568 = vunpack.c.l.b16 %v251
      %v569 = vunpack.c.h.b16 %v251
      %v570 = vunpack.c.l.b16 %v252
      %v571 = vunpack.c.l.b16 %v253
      %v572 = vunpack.c.h.b16 %v253
      %v573 = vunpack.c.l.b16 %v254
      %v574 = vunpack.c.h.b16 %v254
      %v575 = vunpack.c.l.b16 %v255
      %v576 = vunpack.c.l.b16 %v256
      %v577 = vunpack.c.h.b16 %v256
      %v578 = vunpack.c.l.b16 %v257
      %v579 = vunpack.c.h.b16 %v257
      %v580 = vunpack.c.l.b16 %v258
      %v581 = vunpack.c.l.b16 %v259
      %v582 = vunpack.c.h.b16 %v259
      %v583 = vunpack.c.l.b16 %v260
      %v584 = vunpack.c.h.b16 %v260
      %v585 = vunpack.c.l.b16 %v261
      %v586 = vunpack.c.l.b16 %v262
      %v587 = vunpack.c.h.b16 %v262
      %v588 = vunpack.c.l.b16 %v263
      %v589 = vunpack.c.h.b16 %v263
      %v590 = vunpack.c.l.b16 %v264
      %v591 = vunpack.c.l.b16 %v265
      %v592 = vunpack.c.h.b16 %v265
      %v593 = vunpack.c.l.b16 %v266
      %v594 = vunpack.c.h.b16 %v266
      %v595 = vunpack.c.l.b16 %v267
      %v596 = vunpack.c.l.b16 %v268
      %v597 = vunpack.c.h.b16 %v268
      %v598 = vunpack.c.l.b16 %v269
      %v599 = vunpack.c.h.b16 %v269
      %v600 = vunpack.c.l.b16 %v270
      %v601 = vunpack.c.l.b16 %v271
      %v602 = vunpack.c.h.b16 %v271
      %v603 = vunpack.c.l.b16 %v272
      %v604 = vunpack.c.h.b16 %v272
      %v605 = vunpack.c.l.b16 %v273
      %v606 = vpack.c.b16 %v451, %v446
      %v607 = vpack.c.b16 %v452, %v447
      %v608 = vpack.c.b16 %v453, %v448
      %v609 = vpack.c.b16 %v454, %v449
      %v610 = vpack.c.b16 %v455, %v450
      %v611 = vpack.c.b16 %v461, %v456
      %v612 = vpack.c.b16 %v462, %v457
      %v613 = vpack.c.b16 %v463, %v458
      %v614 = vpack.c.b16 %v464, %v459
      %v615 = vpack.c.b16 %v465, %v460
      %v616 = vpack.c.b16 %v471, %v466
      %v617 = vpack.c.b16 %v472, %v467
      %v618 = vpack.c.b16 %v473, %v468
      %v619 = vpack.c.b16 %v474, %v469
      %v620 = vpack.c.b16 %v475, %v470
      %v621 = vpack.c.b16 %v481, %v476
      %v622 = vpack.c.b16 %v482, %v477
      %v623 = vpack.c.b16 %v483, %v478
      %v624 = vpack.c.b16 %v484, %v479
      %v625 = vpack.c.b16 %v485, %v480
      %v626 = vpack.c.b16 %v491, %v486
      %v627 = vpack.c.b16 %v492, %v487
      %v628 = vpack.c.b16 %v493, %v488
      %v629 = vpack.c.b16 %v494, %v489
      %v630 = vpack.c.b16 %v495, %v490
      %v631 = vpack.c.b16 %v501, %v496
      %v632 = vpack.c.b16 %v502, %v497
      %v633 = vpack.c.b16 %v503, %v498
      %v634 = vpack.c.b16 %v504, %v499
      %v635 = vpack.c.b16 %v505, %v500
      %v636 = vpack.c.b16 %v511, %v506
      %v637 = vpack.c.b16 %v512, %v507
      %v638 = vpack.c.b16 %v513, %v508
      %v639 = vpack.c.b16 %v514, %v509
      %v640 = vpack.c.b16 %v515, %v510
      %v641 = vpack.c.b16 %v521, %v516
      %v642 = vpack.c.b16 %v522, %v517
      %v643 = vpack.c.b16 %v523, %v518
      %v644 = vpack.c.b16 %v524, %v519
      %v645 = vpack.c.b16 %v525, %v520
      %v646 = vpack.c.b16 %v531, %v526
      %v647 = vpack.c.b16 %v532, %v527
      %v648 = vpack.c.b16 %v533, %v528
      %v649 = vpack.c.b16 %v534, %v529
      %v650 = vpack.c.b16 %v535, %v530
      %v651 = vpack.c.b16 %v541, %v536
      %v652 = vpack.c.b16 %v542, %v537
      %v653 = vpack.c.b16 %v543, %v538
      %v654 = vpack.c.b16 %v544, %v539
      %v655 = vpack.c.b16 %v545, %v540
      %v656 = vpack.c.b16 %v551, %v546
      %v657 = vpack.c.b16 %v552, %v547
      %v658 = vpack.c.b16 %v553, %v548
      %v659 = vpack.c.b16 %v554, %v549
      %v660 = vpack.c.b16 %v555, %v550
      %v661 = vpack.c.b16 %v561, %v556
      %v662 = vpack.c.b16 %v562, %v557
      %v663 = vpack.c.b16 %v563, %v558
      %v664 = vpack.c.b16 %v564, %v559
      %v665 = vpack.c.b16 %v565, %v560
      %v666 = vpack.c.b16 %v571, %v566
      %v667 = vpack.c.b16 %v572, %v567
      %v668 = vpack.c.b16 %v573, %v568
      %v669 = vpack.c.b16 %v574, %v569
      %v670 = vpack.c.b16 %v575, %v570
      %v671 = vpack.c.b16 %v581, %v576
      %v672 = vpack.c.b16 %v582, %v577
      %v673 = vpack.c.b16 %v583, %v578
      %v674 = vpack.c.b16 %v584, %v579
      %v675 = vpack.c.b16 %v585, %v580
      %v676 = vpack.c.b16 %v591, %v586
      %v677 = vpack.c.b16 %v592, %v587
      %v678 = vpack.c.b16 %v593, %v588
      %v679 = vpack.c.b16 %v594, %v589
      %v680 = vpack.c.b16 %v595, %v590
      %v681 = vpack.c.b16 %v601, %v596
      %v682 = vpack.c.b16 %v602, %v597
      %v683 = vpack.c.b16 %v603, %v598
      %v684 = vpack.c.b16 %v604, %v599
      %v685 = vpack.c.b16 %v605, %v600
      %v822 = vunpack.c.l.b16 %v274
      %v823 = vunpack.c.l.b16 %v275
      %v824 = vunpack.c.l.b16 %v276
      %v825 = vunpack.c.l.b16 %v277
      %v826 = vunpack.c.l.b16 %v278
      %v827 = vunpack.c.l.b16 %v279
      %v828 = vunpack.c.l.b16 %v280
      %v829 = vunpack.c.l.b16 %v281
      %v830 = vunpack.c.l.b16 %v282
      %v831 = vunpack.c.l.b16 %v283
      %v832 = vunpack.c.l.b16 %v284
      %v833 = vunpack.c.l.b16 %v285
      %v834 = vunpack.c.l.b16 %v286
      %v835 = vunpack.c.l.b16 %v287
      %v836 = vunpack.c.l.b16 %v288
      %v837 = vunpack.c.l.b16 %v289
      %v838 = vunpack.c.l.b16 %v290
      %v839 = vunpack.c.l.b16 %v291
      %v840 = vunpack.c.l.b16 %v292
      %v841 = vunpack.c.l.b16 %v293
      %v842 = vunpack.c.l.b16 %v294
      %v843 = vunpack.c.l.b16 %v295
      %v844 = vunpack.c.l.b16 %v296
      %v845 = vunpack.c.l.b16 %v297
      %v846 = vunpack.c.l.b16 %v298
      %v847 = vunpack.c.l.b16 %v299
      %v848 = vunpack.c.l.b16 %v300
      %v849 = vunpack.c.l.b16 %v301
      %v850 = vunpack.c.l.b16 %v302
      %v851 = vunpack.c.l.b16 %v303
      %v852 = vunpack.c.l.b16 %v304
      %v853 = vunpack.c.l.b16 %v305
      %v854 = vunpack.c.l.b16 %v306
      %v855 = vunpack.c.l.b16 %v307
      %v856 = vunpack.c.l.b16 %v308
      %v857 = vunpack.c.l.b16 %v309
      %v858 = vunpack.c.l.b16 %v310
      %v859 = vunpack.c.l.b16 %v311
      %v860 = vunpack.c.l.b16 %v312
      %v861 = vunpack.c.l.b16 %v313
      %v862 = vunpack.c.l.b16 %v314
      %v863 = vunpack.c.l.b16 %v315
      %v864 = vunpack.c.l.b16 %v316
      %v865 = vunpack.c.l.b16 %v317
      %v866 = vunpack.c.l.b16 %v318
      %v867 = vunpack.c.l.b16 %v319
      %v868 = vunpack.c.l.b16 %v320
      %v869 = vunpack.c.l.b16 %v321
      %v870 = vunpack.c.l.b16 %v322
      %v871 = vunpack.c.l.b16 %v323
      %v872 = vunpack.c.l.b16 %v324
      %v873 = vunpack.c.l.b16 %v325
      %v874 = vunpack.c.l.b16 %v326
      %v875 = vunpack.c.l.b16 %v327
      %v876 = vunpack.c.l.b16 %v328
      %v877 = vunpack.c.l.b16 %v329
      %v878 = vunpack.c.l.b16 %v330
      %v879 = vunpack.c.l.b16 %v331
      %v880 = vunpack.c.l.b16 %v332
      %v881 = vunpack.c.l.b16 %v333
      %v882 = vunpack.c.l.b16 %v334
      %v883 = vunpack.c.l.b16 %v335
      %v884 = vunpack.c.l.b16 %v336
      %v885 = vunpack.c.l.b16 %v337
      %v886 = vunpack.c.l.b16 %v338
      %v887 = vunpack.c.l.b16 %v339
      %v888 = vunpack.c.l.b16 %v340
      %v889 = vunpack.c.l.b16 %v341
      %v890 = vunpack.c.l.b16 %v342
      %v891 = vunpack.c.l.b16 %v343
      %v892 = vunpack.c.l.b16 %v344
      %v893 = vunpack.c.l.b16 %v345
      %v894 = vpack.c.b16 %v823, %v822
      %v895 = vpack.c.b16 %v825, %v824
      %v896 = vpack.c.b16 %v827, %v826
      %v897 = vpack.c.b16 %v829, %v828
      %v898 = vpack.c.b16 %v831, %v830
      %v899 = vpack.c.b16 %v833, %v832
      %v900 = vpack.c.b16 %v835, %v834
      %v901 = vpack.c.b16 %v837, %v836
      %v902 = vpack.c.b16 %v839, %v838
      %v903 = vpack.c.b16 %v841, %v840
      %v904 = vpack.c.b16 %v843, %v842
      %v905 = vpack.c.b16 %v845, %v844
      %v906 = vpack.c.b16 %v847, %v846
      %v907 = vpack.c.b16 %v849, %v848
      %v908 = vpack.c.b16 %v851, %v850
      %v909 = vpack.c.b16 %v853, %v852
      %v910 = vpack.c.b16 %v855, %v854
      %v911 = vpack.c.b16 %v857, %v856
      %v912 = vpack.c.b16 %v859, %v858
      %v913 = vpack.c.b16 %v861, %v860
      %v914 = vpack.c.b16 %v863, %v862
      %v915 = vpack.c.b16 %v865, %v864
      %v916 = vpack.c.b16 %v867, %v866
      %v917 = vpack.c.b16 %v869, %v868
      %v918 = vpack.c.b16 %v871, %v870
      %v919 = vpack.c.b16 %v873, %v872
      %v920 = vpack.c.b16 %v875, %v874
      %v921 = vpack.c.b16 %v877, %v876
      %v922 = vpack.c.b16 %v879, %v878
      %v923 = vpack.c.b16 %v881, %v880
      %v924 = vpack.c.b16 %v883, %v882
      %v925 = vpack.c.b16 %v885, %v884
      %v926 = vpack.c.b16 %v887, %v886
      %v927 = vpack.c.b16 %v889, %v888
      %v928 = vpack.c.b16 %v891, %v890
      %v929 = vpack.c.b16 %v893, %v892
      %vm966 = vcmask 523264
      %v968 = vsel %vm966, %v610, 0
      %v971 = vsel %vm966, %v615, 0
      %v974 = vsel %vm966, %v620, 0
      %v977 = vsel %vm966, %v625, 0
      %v980 = vsel %vm966, %v630, 0
      %v983 = vsel %vm966, %v635, 0
      %v986 = vsel %vm966, %v640, 0
      %v989 = vsel %vm966, %v645, 0
      %v992 = vsel %vm966, %v650, 0
      %v995 = vsel %vm966, %v655, 0
      %v998 = vsel %vm966, %v660, 0
      %v1001 = vsel %vm966, %v665, 0
      %v1004 = vsel %vm966, %v670, 0
      %v1007 = vsel %vm966, %v675, 0
      %v1010 = vsel %vm966, %v680, 0
      %v1013 = vsel %vm966, %v685, 0
      %1015 = vmatpush.bf16.msra.mxu0 %v901
      %1016 = vmatpush.bf16.msra.mxu0 %v900
      %1017 = vmatpush.bf16.msra.mxu0 %v899
      %1018 = vmatpush.bf16.msra.mxu0 %v898
      %1019 = vmatpush.bf16.msra.mxu0 %v897
      %1020 = vmatpush.bf16.msra.mxu0 %v896
      %1021 = vmatpush.bf16.msra.mxu0 %v895
      %1022 = vmatpush.bf16.msra.mxu0 %v894
      %1023 = vmatmul.bf16.gmra.mxu0 %v606
      %v1024 = vpop.f32.mrf.mxu0
      %v1025 = vadd.f32 %v348, %v1024
      %v1026 = vpop.f32.mrf.mxu0
      %v1027 = vadd.f32 %v348, %v1026
      %1028 = vmatmul.bf16.gmra.mxu0 %v611
      %v1029 = vpop.f32.mrf.mxu0
      %v1030 = vadd.f32 %v348, %v1029
      %v1031 = vpop.f32.mrf.mxu0
      %v1032 = vadd.f32 %v348, %v1031
      %1033 = vmatmul.bf16.gmra.mxu0 %v616
      %v1034 = vpop.f32.mrf.mxu0
      %v1035 = vadd.f32 %v348, %v1034
      %v1036 = vpop.f32.mrf.mxu0
      %v1037 = vadd.f32 %v348, %v1036
      %1038 = vmatmul.bf16.gmra.mxu0 %v621
      %v1039 = vpop.f32.mrf.mxu0
      %v1040 = vadd.f32 %v348, %v1039
      %v1041 = vpop.f32.mrf.mxu0
      %v1042 = vadd.f32 %v348, %v1041
      %1043 = vmatmul.bf16.gmra.mxu0 %v626
      %v1044 = vpop.f32.mrf.mxu0
      %v1045 = vadd.f32 %v348, %v1044
      %v1046 = vpop.f32.mrf.mxu0
      %v1047 = vadd.f32 %v348, %v1046
      %1048 = vmatmul.bf16.gmra.mxu0 %v631
      %v1049 = vpop.f32.mrf.mxu0
      %v1050 = vadd.f32 %v348, %v1049
      %v1051 = vpop.f32.mrf.mxu0
      %v1052 = vadd.f32 %v348, %v1051
      %1053 = vmatmul.bf16.gmra.mxu0 %v636
      %v1054 = vpop.f32.mrf.mxu0
      %v1055 = vadd.f32 %v348, %v1054
      %v1056 = vpop.f32.mrf.mxu0
      %v1057 = vadd.f32 %v348, %v1056
      %1058 = vmatmul.bf16.gmra.mxu0 %v641
      %v1059 = vpop.f32.mrf.mxu0
      %v1060 = vadd.f32 %v348, %v1059
      %v1061 = vpop.f32.mrf.mxu0
      %v1062 = vadd.f32 %v348, %v1061
      %1063 = vmatmul.bf16.gmra.mxu0 %v646
      %v1064 = vpop.f32.mrf.mxu0
      %v1065 = vadd.f32 %v348, %v1064
      %v1066 = vpop.f32.mrf.mxu0
      %v1067 = vadd.f32 %v348, %v1066
      %1068 = vmatmul.bf16.gmra.mxu0 %v651
      %v1069 = vpop.f32.mrf.mxu0
      %v1070 = vadd.f32 %v348, %v1069
      %v1071 = vpop.f32.mrf.mxu0
      %v1072 = vadd.f32 %v348, %v1071
      %1073 = vmatmul.bf16.gmra.mxu0 %v656
      %v1074 = vpop.f32.mrf.mxu0
      %v1075 = vadd.f32 %v348, %v1074
      %v1076 = vpop.f32.mrf.mxu0
      %v1077 = vadd.f32 %v348, %v1076
      %1078 = vmatmul.bf16.gmra.mxu0 %v661
      %v1079 = vpop.f32.mrf.mxu0
      %v1080 = vadd.f32 %v348, %v1079
      %v1081 = vpop.f32.mrf.mxu0
      %v1082 = vadd.f32 %v348, %v1081
      %1083 = vmatmul.bf16.gmra.mxu0 %v666
      %v1084 = vpop.f32.mrf.mxu0
      %v1085 = vadd.f32 %v348, %v1084
      %v1086 = vpop.f32.mrf.mxu0
      %v1087 = vadd.f32 %v348, %v1086
      %1088 = vmatmul.bf16.gmra.mxu0 %v671
      %v1089 = vpop.f32.mrf.mxu0
      %v1090 = vadd.f32 %v348, %v1089
      %v1091 = vpop.f32.mrf.mxu0
      %v1092 = vadd.f32 %v348, %v1091
      %1093 = vmatmul.bf16.gmra.mxu0 %v676
      %v1094 = vpop.f32.mrf.mxu0
      %v1095 = vadd.f32 %v348, %v1094
      %v1096 = vpop.f32.mrf.mxu0
      %v1097 = vadd.f32 %v348, %v1096
      %1098 = vmatmul.bf16.gmra.mxu0 %v681
      %v1099 = vpop.f32.mrf.mxu0
      %v1100 = vadd.f32 %v348, %v1099
      %v1101 = vpop.f32.mrf.mxu0
      %v1102 = vadd.f32 %v348, %v1101
      %1103 = vdwg.mxu0
      %1104 = vmatpush.bf16.msra.mxu0 %v909
      %1105 = vmatpush.bf16.msra.mxu0 %v908
      %1106 = vmatpush.bf16.msra.mxu0 %v907
      %1107 = vmatpush.bf16.msra.mxu0 %v906
      %1108 = vmatpush.bf16.msra.mxu0 %v905
      %1109 = vmatpush.bf16.msra.mxu0 %v904
      %1110 = vmatpush.bf16.msra.mxu0 %v903
      %1111 = vmatpush.bf16.msra.mxu0 %v902
      %1112 = vmatmul.bf16.gmra.mxu0 %v607
      %v1113 = vpop.f32.mrf.mxu0
      %v1114 = vadd.f32 %v1025, %v1113
      %v1115 = vpop.f32.mrf.mxu0
      %v1116 = vadd.f32 %v1027, %v1115
      %1117 = vmatmul.bf16.gmra.mxu0 %v612
      %v1118 = vpop.f32.mrf.mxu0
      %v1119 = vadd.f32 %v1030, %v1118
      %v1120 = vpop.f32.mrf.mxu0
      %v1121 = vadd.f32 %v1032, %v1120
      %1122 = vmatmul.bf16.gmra.mxu0 %v617
      %v1123 = vpop.f32.mrf.mxu0
      %v1124 = vadd.f32 %v1035, %v1123
      %v1125 = vpop.f32.mrf.mxu0
      %v1126 = vadd.f32 %v1037, %v1125
      %1127 = vmatmul.bf16.gmra.mxu0 %v622
      %v1128 = vpop.f32.mrf.mxu0
      %v1129 = vadd.f32 %v1040, %v1128
      %v1130 = vpop.f32.mrf.mxu0
      %v1131 = vadd.f32 %v1042, %v1130
      %1132 = vmatmul.bf16.gmra.mxu0 %v627
      %v1133 = vpop.f32.mrf.mxu0
      %v1134 = vadd.f32 %v1045, %v1133
      %v1135 = vpop.f32.mrf.mxu0
      %v1136 = vadd.f32 %v1047, %v1135
      %1137 = vmatmul.bf16.gmra.mxu0 %v632
      %v1138 = vpop.f32.mrf.mxu0
      %v1139 = vadd.f32 %v1050, %v1138
      %v1140 = vpop.f32.mrf.mxu0
      %v1141 = vadd.f32 %v1052, %v1140
      %1142 = vmatmul.bf16.gmra.mxu0 %v637
      %v1143 = vpop.f32.mrf.mxu0
      %v1144 = vadd.f32 %v1055, %v1143
      %v1145 = vpop.f32.mrf.mxu0
      %v1146 = vadd.f32 %v1057, %v1145
      %1147 = vmatmul.bf16.gmra.mxu0 %v642
      %v1148 = vpop.f32.mrf.mxu0
      %v1149 = vadd.f32 %v1060, %v1148
      %v1150 = vpop.f32.mrf.mxu0
      %v1151 = vadd.f32 %v1062, %v1150
      %1152 = vmatmul.bf16.gmra.mxu0 %v647
      %v1153 = vpop.f32.mrf.mxu0
      %v1154 = vadd.f32 %v1065, %v1153
      %v1155 = vpop.f32.mrf.mxu0
      %v1156 = vadd.f32 %v1067, %v1155
      %1157 = vmatmul.bf16.gmra.mxu0 %v652
      %v1158 = vpop.f32.mrf.mxu0
      %v1159 = vadd.f32 %v1070, %v1158
      %v1160 = vpop.f32.mrf.mxu0
      %v1161 = vadd.f32 %v1072, %v1160
      %1162 = vmatmul.bf16.gmra.mxu0 %v657
      %v1163 = vpop.f32.mrf.mxu0
      %v1164 = vadd.f32 %v1075, %v1163
      %v1165 = vpop.f32.mrf.mxu0
      %v1166 = vadd.f32 %v1077, %v1165
      %1167 = vmatmul.bf16.gmra.mxu0 %v662
      %v1168 = vpop.f32.mrf.mxu0
      %v1169 = vadd.f32 %v1080, %v1168
      %v1170 = vpop.f32.mrf.mxu0
      %v1171 = vadd.f32 %v1082, %v1170
      %1172 = vmatmul.bf16.gmra.mxu0 %v667
      %v1173 = vpop.f32.mrf.mxu0
      %v1174 = vadd.f32 %v1085, %v1173
      %v1175 = vpop.f32.mrf.mxu0
      %v1176 = vadd.f32 %v1087, %v1175
      %1177 = vmatmul.bf16.gmra.mxu0 %v672
      %v1178 = vpop.f32.mrf.mxu0
      %v1179 = vadd.f32 %v1090, %v1178
      %v1180 = vpop.f32.mrf.mxu0
      %v1181 = vadd.f32 %v1092, %v1180
      %1182 = vmatmul.bf16.gmra.mxu0 %v677
      %v1183 = vpop.f32.mrf.mxu0
      %v1184 = vadd.f32 %v1095, %v1183
      %v1185 = vpop.f32.mrf.mxu0
      %v1186 = vadd.f32 %v1097, %v1185
      %1187 = vmatmul.bf16.gmra.mxu0 %v682
      %v1188 = vpop.f32.mrf.mxu0
      %v1189 = vadd.f32 %v1100, %v1188
      %v1190 = vpop.f32.mrf.mxu0
      %v1191 = vadd.f32 %v1102, %v1190
      %1192 = vdwg.mxu0
      %1193 = vmatpush.bf16.msra.mxu0 %v917
      %1194 = vmatpush.bf16.msra.mxu0 %v916
      %1195 = vmatpush.bf16.msra.mxu0 %v915
      %1196 = vmatpush.bf16.msra.mxu0 %v914
      %1197 = vmatpush.bf16.msra.mxu0 %v913
      %1198 = vmatpush.bf16.msra.mxu0 %v912
      %1199 = vmatpush.bf16.msra.mxu0 %v911
      %1200 = vmatpush.bf16.msra.mxu0 %v910
      %1201 = vmatmul.bf16.gmra.mxu0 %v608
      %v1202 = vpop.f32.mrf.mxu0
      %v1203 = vadd.f32 %v1114, %v1202
      %v1204 = vpop.f32.mrf.mxu0
      %v1205 = vadd.f32 %v1116, %v1204
      %1206 = vmatmul.bf16.gmra.mxu0 %v613
      %v1207 = vpop.f32.mrf.mxu0
      %v1208 = vadd.f32 %v1119, %v1207
      %v1209 = vpop.f32.mrf.mxu0
      %v1210 = vadd.f32 %v1121, %v1209
      %1211 = vmatmul.bf16.gmra.mxu0 %v618
      %v1212 = vpop.f32.mrf.mxu0
      %v1213 = vadd.f32 %v1124, %v1212
      %v1214 = vpop.f32.mrf.mxu0
      %v1215 = vadd.f32 %v1126, %v1214
      %1216 = vmatmul.bf16.gmra.mxu0 %v623
      %v1217 = vpop.f32.mrf.mxu0
      %v1218 = vadd.f32 %v1129, %v1217
      %v1219 = vpop.f32.mrf.mxu0
      %v1220 = vadd.f32 %v1131, %v1219
      %1221 = vmatmul.bf16.gmra.mxu0 %v628
      %v1222 = vpop.f32.mrf.mxu0
      %v1223 = vadd.f32 %v1134, %v1222
      %v1224 = vpop.f32.mrf.mxu0
      %v1225 = vadd.f32 %v1136, %v1224
      %1226 = vmatmul.bf16.gmra.mxu0 %v633
      %v1227 = vpop.f32.mrf.mxu0
      %v1228 = vadd.f32 %v1139, %v1227
      %v1229 = vpop.f32.mrf.mxu0
      %v1230 = vadd.f32 %v1141, %v1229
      %1231 = vmatmul.bf16.gmra.mxu0 %v638
      %v1232 = vpop.f32.mrf.mxu0
      %v1233 = vadd.f32 %v1144, %v1232
      %v1234 = vpop.f32.mrf.mxu0
      %v1235 = vadd.f32 %v1146, %v1234
      %1236 = vmatmul.bf16.gmra.mxu0 %v643
      %v1237 = vpop.f32.mrf.mxu0
      %v1238 = vadd.f32 %v1149, %v1237
      %v1239 = vpop.f32.mrf.mxu0
      %v1240 = vadd.f32 %v1151, %v1239
      %1241 = vmatmul.bf16.gmra.mxu0 %v648
      %v1242 = vpop.f32.mrf.mxu0
      %v1243 = vadd.f32 %v1154, %v1242
      %v1244 = vpop.f32.mrf.mxu0
      %v1245 = vadd.f32 %v1156, %v1244
      %1246 = vmatmul.bf16.gmra.mxu0 %v653
      %v1247 = vpop.f32.mrf.mxu0
      %v1248 = vadd.f32 %v1159, %v1247
      %v1249 = vpop.f32.mrf.mxu0
      %v1250 = vadd.f32 %v1161, %v1249
      %1251 = vmatmul.bf16.gmra.mxu0 %v658
      %v1252 = vpop.f32.mrf.mxu0
      %v1253 = vadd.f32 %v1164, %v1252
      %v1254 = vpop.f32.mrf.mxu0
      %v1255 = vadd.f32 %v1166, %v1254
      %1256 = vmatmul.bf16.gmra.mxu0 %v663
      %v1257 = vpop.f32.mrf.mxu0
      %v1258 = vadd.f32 %v1169, %v1257
      %v1259 = vpop.f32.mrf.mxu0
      %v1260 = vadd.f32 %v1171, %v1259
      %1261 = vmatmul.bf16.gmra.mxu0 %v668
      %v1262 = vpop.f32.mrf.mxu0
      %v1263 = vadd.f32 %v1174, %v1262
      %v1264 = vpop.f32.mrf.mxu0
      %v1265 = vadd.f32 %v1176, %v1264
      %1266 = vmatmul.bf16.gmra.mxu0 %v673
      %v1267 = vpop.f32.mrf.mxu0
      %v1268 = vadd.f32 %v1179, %v1267
      %v1269 = vpop.f32.mrf.mxu0
      %v1270 = vadd.f32 %v1181, %v1269
      %1271 = vmatmul.bf16.gmra.mxu0 %v678
      %v1272 = vpop.f32.mrf.mxu0
      %v1273 = vadd.f32 %v1184, %v1272
      %v1274 = vpop.f32.mrf.mxu0
      %v1275 = vadd.f32 %v1186, %v1274
      %1276 = vmatmul.bf16.gmra.mxu0 %v683
      %v1277 = vpop.f32.mrf.mxu0
      %v1278 = vadd.f32 %v1189, %v1277
      %v1279 = vpop.f32.mrf.mxu0
      %v1280 = vadd.f32 %v1191, %v1279
      %1281 = vdwg.mxu0
      %1282 = vmatpush.bf16.msra.mxu0 %v925
      %1283 = vmatpush.bf16.msra.mxu0 %v924
      %1284 = vmatpush.bf16.msra.mxu0 %v923
      %1285 = vmatpush.bf16.msra.mxu0 %v922
      %1286 = vmatpush.bf16.msra.mxu0 %v921
      %1287 = vmatpush.bf16.msra.mxu0 %v920
      %1288 = vmatpush.bf16.msra.mxu0 %v919
      %1289 = vmatpush.bf16.msra.mxu0 %v918
      %1290 = vmatmul.bf16.gmra.mxu0 %v609
      %v1291 = vpop.f32.mrf.mxu0
      %v1292 = vadd.f32 %v1203, %v1291
      %v1293 = vpop.f32.mrf.mxu0
      %v1294 = vadd.f32 %v1205, %v1293
      %1295 = vmatmul.bf16.gmra.mxu0 %v614
      %v1296 = vpop.f32.mrf.mxu0
      %v1297 = vadd.f32 %v1208, %v1296
      %v1298 = vpop.f32.mrf.mxu0
      %v1299 = vadd.f32 %v1210, %v1298
      %1300 = vmatmul.bf16.gmra.mxu0 %v619
      %v1301 = vpop.f32.mrf.mxu0
      %v1302 = vadd.f32 %v1213, %v1301
      %v1303 = vpop.f32.mrf.mxu0
      %v1304 = vadd.f32 %v1215, %v1303
      %1305 = vmatmul.bf16.gmra.mxu0 %v624
      %v1306 = vpop.f32.mrf.mxu0
      %v1307 = vadd.f32 %v1218, %v1306
      %v1308 = vpop.f32.mrf.mxu0
      %v1309 = vadd.f32 %v1220, %v1308
      %1310 = vmatmul.bf16.gmra.mxu0 %v629
      %v1311 = vpop.f32.mrf.mxu0
      %v1312 = vadd.f32 %v1223, %v1311
      %v1313 = vpop.f32.mrf.mxu0
      %v1314 = vadd.f32 %v1225, %v1313
      %1315 = vmatmul.bf16.gmra.mxu0 %v634
      %v1316 = vpop.f32.mrf.mxu0
      %v1317 = vadd.f32 %v1228, %v1316
      %v1318 = vpop.f32.mrf.mxu0
      %v1319 = vadd.f32 %v1230, %v1318
      %1320 = vmatmul.bf16.gmra.mxu0 %v639
      %v1321 = vpop.f32.mrf.mxu0
      %v1322 = vadd.f32 %v1233, %v1321
      %v1323 = vpop.f32.mrf.mxu0
      %v1324 = vadd.f32 %v1235, %v1323
      %1325 = vmatmul.bf16.gmra.mxu0 %v644
      %v1326 = vpop.f32.mrf.mxu0
      %v1327 = vadd.f32 %v1238, %v1326
      %v1328 = vpop.f32.mrf.mxu0
      %v1329 = vadd.f32 %v1240, %v1328
      %1330 = vmatmul.bf16.gmra.mxu0 %v649
      %v1331 = vpop.f32.mrf.mxu0
      %v1332 = vadd.f32 %v1243, %v1331
      %v1333 = vpop.f32.mrf.mxu0
      %v1334 = vadd.f32 %v1245, %v1333
      %1335 = vmatmul.bf16.gmra.mxu0 %v654
      %v1336 = vpop.f32.mrf.mxu0
      %v1337 = vadd.f32 %v1248, %v1336
      %v1338 = vpop.f32.mrf.mxu0
      %v1339 = vadd.f32 %v1250, %v1338
      %1340 = vmatmul.bf16.gmra.mxu0 %v659
      %v1341 = vpop.f32.mrf.mxu0
      %v1342 = vadd.f32 %v1253, %v1341
      %v1343 = vpop.f32.mrf.mxu0
      %v1344 = vadd.f32 %v1255, %v1343
      %1345 = vmatmul.bf16.gmra.mxu0 %v664
      %v1346 = vpop.f32.mrf.mxu0
      %v1347 = vadd.f32 %v1258, %v1346
      %v1348 = vpop.f32.mrf.mxu0
      %v1349 = vadd.f32 %v1260, %v1348
      %1350 = vmatmul.bf16.gmra.mxu0 %v669
      %v1351 = vpop.f32.mrf.mxu0
      %v1352 = vadd.f32 %v1263, %v1351
      %v1353 = vpop.f32.mrf.mxu0
      %v1354 = vadd.f32 %v1265, %v1353
      %1355 = vmatmul.bf16.gmra.mxu0 %v674
      %v1356 = vpop.f32.mrf.mxu0
      %v1357 = vadd.f32 %v1268, %v1356
      %v1358 = vpop.f32.mrf.mxu0
      %v1359 = vadd.f32 %v1270, %v1358
      %1360 = vmatmul.bf16.gmra.mxu0 %v679
      %v1361 = vpop.f32.mrf.mxu0
      %v1362 = vadd.f32 %v1273, %v1361
      %v1363 = vpop.f32.mrf.mxu0
      %v1364 = vadd.f32 %v1275, %v1363
      %1365 = vmatmul.bf16.gmra.mxu0 %v684
      %v1366 = vpop.f32.mrf.mxu0
      %v1367 = vadd.f32 %v1278, %v1366
      %v1368 = vpop.f32.mrf.mxu0
      %v1369 = vadd.f32 %v1280, %v1368
      %1370 = vdwg.mxu0
      %1371 = vmatpush.bf16.msra.mxu0 0
      %1372 = vmatpush.bf16.msra.mxu0 0
      %1373 = vmatpush.bf16.msra.mxu0 0
      %1374 = vmatpush.bf16.msra.mxu0 0
      %1375 = vmatpush.bf16.msra.mxu0 %v929
      %1376 = vmatpush.bf16.msra.mxu0 %v928
      %1377 = vmatpush.bf16.msra.mxu0 %v927
      %1378 = vmatpush.bf16.msra.mxu0 %v926
      %1379 = vmatmul.bf16.gmra.mxu0 %v968
      %v1380 = vpop.f32.mrf.mxu0
      %v1381 = vadd.f32 %v1292, %v1380
      %v1382 = vpop.f32.mrf.mxu0
      %v1383 = vadd.f32 %v1294, %v1382
      %1384 = vmatmul.bf16.gmra.mxu0 %v971
      %v1385 = vpop.f32.mrf.mxu0
      %v1386 = vadd.f32 %v1297, %v1385
      %v1387 = vpop.f32.mrf.mxu0
      %v1388 = vadd.f32 %v1299, %v1387
      %1389 = vmatmul.bf16.gmra.mxu0 %v974
      %v1390 = vpop.f32.mrf.mxu0
      %v1391 = vadd.f32 %v1302, %v1390
      %v1392 = vpop.f32.mrf.mxu0
      %v1393 = vadd.f32 %v1304, %v1392
      %1394 = vmatmul.bf16.gmra.mxu0 %v977
      %v1395 = vpop.f32.mrf.mxu0
      %v1396 = vadd.f32 %v1307, %v1395
      %v1397 = vpop.f32.mrf.mxu0
      %v1398 = vadd.f32 %v1309, %v1397
      %1399 = vmatmul.bf16.gmra.mxu0 %v980
      %v1400 = vpop.f32.mrf.mxu0
      %v1401 = vadd.f32 %v1312, %v1400
      %v1402 = vpop.f32.mrf.mxu0
      %v1403 = vadd.f32 %v1314, %v1402
      %1404 = vmatmul.bf16.gmra.mxu0 %v983
      %v1405 = vpop.f32.mrf.mxu0
      %v1406 = vadd.f32 %v1317, %v1405
      %v1407 = vpop.f32.mrf.mxu0
      %v1408 = vadd.f32 %v1319, %v1407
      %1409 = vmatmul.bf16.gmra.mxu0 %v986
      %v1410 = vpop.f32.mrf.mxu0
      %v1411 = vadd.f32 %v1322, %v1410
      %v1412 = vpop.f32.mrf.mxu0
      %v1413 = vadd.f32 %v1324, %v1412
      %1414 = vmatmul.bf16.gmra.mxu0 %v989
      %v1415 = vpop.f32.mrf.mxu0
      %v1416 = vadd.f32 %v1327, %v1415
      %v1417 = vpop.f32.mrf.mxu0
      %v1418 = vadd.f32 %v1329, %v1417
      %1419 = vmatmul.bf16.gmra.mxu0 %v992
      %v1420 = vpop.f32.mrf.mxu0
      %v1421 = vadd.f32 %v1332, %v1420
      %v1422 = vpop.f32.mrf.mxu0
      %v1423 = vadd.f32 %v1334, %v1422
      %1424 = vmatmul.bf16.gmra.mxu0 %v995
      %v1425 = vpop.f32.mrf.mxu0
      %v1426 = vadd.f32 %v1337, %v1425
      %v1427 = vpop.f32.mrf.mxu0
      %v1428 = vadd.f32 %v1339, %v1427
      %1429 = vmatmul.bf16.gmra.mxu0 %v998
      %v1430 = vpop.f32.mrf.mxu0
      %v1431 = vadd.f32 %v1342, %v1430
      %v1432 = vpop.f32.mrf.mxu0
      %v1433 = vadd.f32 %v1344, %v1432
      %1434 = vmatmul.bf16.gmra.mxu0 %v1001
      %v1435 = vpop.f32.mrf.mxu0
      %v1436 = vadd.f32 %v1347, %v1435
      %v1437 = vpop.f32.mrf.mxu0
      %v1438 = vadd.f32 %v1349, %v1437
      %1439 = vmatmul.bf16.gmra.mxu0 %v1004
      %v1440 = vpop.f32.mrf.mxu0
      %v1441 = vadd.f32 %v1352, %v1440
      %v1442 = vpop.f32.mrf.mxu0
      %v1443 = vadd.f32 %v1354, %v1442
      %1444 = vmatmul.bf16.gmra.mxu0 %v1007
      %v1445 = vpop.f32.mrf.mxu0
      %v1446 = vadd.f32 %v1357, %v1445
      %v1447 = vpop.f32.mrf.mxu0
      %v1448 = vadd.f32 %v1359, %v1447
      %1449 = vmatmul.bf16.gmra.mxu0 %v1010
      %v1450 = vpop.f32.mrf.mxu0
      %v1451 = vadd.f32 %v1362, %v1450
      %v1452 = vpop.f32.mrf.mxu0
      %v1453 = vadd.f32 %v1364, %v1452
      %1454 = vmatmul.bf16.gmra.mxu0 %v1013
      %v1455 = vpop.f32.mrf.mxu0
      %v1456 = vadd.f32 %v1367, %v1455
      %v1457 = vpop.f32.mrf.mxu0
      %v1458 = vadd.f32 %v1369, %v1457
      %1459 = vdwg.mxu0
      %v1460 = vmax.f32 %v1381, 0.0
      %v1461 = vmax.f32 %v1383, 0.0
      %v1462 = vmax.f32 %v1386, 0.0
      %v1463 = vmax.f32 %v1388, 0.0
      %v1464 = vmax.f32 %v1391, 0.0
      %v1465 = vmax.f32 %v1393, 0.0
      %v1466 = vmax.f32 %v1396, 0.0
      %v1467 = vmax.f32 %v1398, 0.0
      %v1468 = vmax.f32 %v1401, 0.0
      %v1469 = vmax.f32 %v1403, 0.0
      %v1470 = vmax.f32 %v1406, 0.0
      %v1471 = vmax.f32 %v1408, 0.0
      %v1472 = vmax.f32 %v1411, 0.0
      %v1473 = vmax.f32 %v1413, 0.0
      %v1474 = vmax.f32 %v1416, 0.0
      %v1475 = vmax.f32 %v1418, 0.0
      %v1476 = vmax.f32 %v1421, 0.0
      %v1477 = vmax.f32 %v1423, 0.0
      %v1478 = vmax.f32 %v1426, 0.0
      %v1479 = vmax.f32 %v1428, 0.0
      %v1480 = vmax.f32 %v1431, 0.0
      %v1481 = vmax.f32 %v1433, 0.0
      %v1482 = vmax.f32 %v1436, 0.0
      %v1483 = vmax.f32 %v1438, 0.0
      %v1484 = vmax.f32 %v1441, 0.0
      %v1485 = vmax.f32 %v1443, 0.0
      %v1486 = vmax.f32 %v1446, 0.0
      %v1487 = vmax.f32 %v1448, 0.0
      %v1488 = vmax.f32 %v1451, 0.0
      %v1489 = vmax.f32 %v1453, 0.0
      %v1490 = vmax.f32 %v1456, 0.0
      %v1491 = vmax.f32 %v1458, 0.0
      %v1492 = vpack.c.bf16 %v1460, %v1460
      %v1493 = vpack.c.bf16 %v1461, %v1461
      %v1494 = vpack.c.bf16 %v1462, %v1462
      %v1495 = vpack.c.bf16 %v1463, %v1463
      %v1496 = vpack.c.bf16 %v1464, %v1464
      %v1497 = vpack.c.bf16 %v1465, %v1465
      %v1498 = vpack.c.bf16 %v1466, %v1466
      %v1499 = vpack.c.bf16 %v1467, %v1467
      %v1500 = vpack.c.bf16 %v1468, %v1468
      %v1501 = vpack.c.bf16 %v1469, %v1469
      %v1502 = vpack.c.bf16 %v1470, %v1470
      %v1503 = vpack.c.bf16 %v1471, %v1471
      %v1504 = vpack.c.bf16 %v1472, %v1472
      %v1505 = vpack.c.bf16 %v1473, %v1473
      %v1506 = vpack.c.bf16 %v1474, %v1474
      %v1507 = vpack.c.bf16 %v1475, %v1475
      %v1508 = vpack.c.bf16 %v1476, %v1476
      %v1509 = vpack.c.bf16 %v1477, %v1477
      %v1510 = vpack.c.bf16 %v1478, %v1478
      %v1511 = vpack.c.bf16 %v1479, %v1479
      %v1512 = vpack.c.bf16 %v1480, %v1480
      %v1513 = vpack.c.bf16 %v1481, %v1481
      %v1514 = vpack.c.bf16 %v1482, %v1482
      %v1515 = vpack.c.bf16 %v1483, %v1483
      %v1516 = vpack.c.bf16 %v1484, %v1484
      %v1517 = vpack.c.bf16 %v1485, %v1485
      %v1518 = vpack.c.bf16 %v1486, %v1486
      %v1519 = vpack.c.bf16 %v1487, %v1487
      %v1520 = vpack.c.bf16 %v1488, %v1488
      %v1521 = vpack.c.bf16 %v1489, %v1489
      %v1522 = vpack.c.bf16 %v1490, %v1490
      %v1523 = vpack.c.bf16 %v1491, %v1491
      %vm1524 = vcmask 257024
      %1525 = vst.msk [vmem:[%s175] sm:$0xf] %vm1524, %v1492
      %1526 = vst.msk [vmem:[%s175 + $0x4] sm:$0xf] %vm1524, %v1493
      %1527 = vst.msk [vmem:[%s175 + $0x8] sm:$0xf] %vm1524, %v1494
      %1528 = vst.msk [vmem:[%s175 + $0xc] sm:$0xf] %vm1524, %v1495
      %1529 = vst.msk [vmem:[%s175 + $0x10] sm:$0xf] %vm1524, %v1496
      %1530 = vst.msk [vmem:[%s175 + $0x14] sm:$0xf] %vm1524, %v1497
      %1531 = vst.msk [vmem:[%s175 + $0x18] sm:$0xf] %vm1524, %v1498
      %1532 = vst.msk [vmem:[%s175 + $0x1c] sm:$0xf] %vm1524, %v1499
      %1533 = vst.msk [vmem:[%s175 + $0x20] sm:$0xf] %vm1524, %v1500
      %1534 = vst.msk [vmem:[%s175 + $0x24] sm:$0xf] %vm1524, %v1501
      %1535 = vst.msk [vmem:[%s175 + $0x28] sm:$0xf] %vm1524, %v1502
      %1536 = vst.msk [vmem:[%s175 + $0x2c] sm:$0xf] %vm1524, %v1503
      %1537 = vst.msk [vmem:[%s175 + $0x30] sm:$0xf] %vm1524, %v1504
      %1538 = vst.msk [vmem:[%s175 + $0x34] sm:$0xf] %vm1524, %v1505
      %1539 = vst.msk [vmem:[%s175 + $0x38] sm:$0xf] %vm1524, %v1506
      %1540 = vst.msk [vmem:[%s175 + $0x3c] sm:$0xf] %vm1524, %v1507
      %1541 = vst.msk [vmem:[%s175 + $0x40] sm:$0xf] %vm1524, %v1508
      %1542 = vst.msk [vmem:[%s175 + $0x44] sm:$0xf] %vm1524, %v1509
      %1543 = vst.msk [vmem:[%s175 + $0x48] sm:$0xf] %vm1524, %v1510
      %1544 = vst.msk [vmem:[%s175 + $0x4c] sm:$0xf] %vm1524, %v1511
      %1545 = vst.msk [vmem:[%s175 + $0x50] sm:$0xf] %vm1524, %v1512
      %1546 = vst.msk [vmem:[%s175 + $0x54] sm:$0xf] %vm1524, %v1513
      %1547 = vst.msk [vmem:[%s175 + $0x58] sm:$0xf] %vm1524, %v1514
      %1548 = vst.msk [vmem:[%s175 + $0x5c] sm:$0xf] %vm1524, %v1515
      %1549 = vst.msk [vmem:[%s175 + $0x60] sm:$0xf] %vm1524, %v1516
      %1550 = vst.msk [vmem:[%s175 + $0x64] sm:$0xf] %vm1524, %v1517
      %1551 = vst.msk [vmem:[%s175 + $0x68] sm:$0xf] %vm1524, %v1518
      %1552 = vst.msk [vmem:[%s175 + $0x6c] sm:$0xf] %vm1524, %v1519
      %1553 = vst.msk [vmem:[%s175 + $0x70] sm:$0xf] %vm1524, %v1520
      %1554 = vst.msk [vmem:[%s175 + $0x74] sm:$0xf] %vm1524, %v1521
      %1555 = vst.msk [vmem:[%s175 + $0x78] sm:$0xf] %vm1524, %v1522
      %1556 = vst.msk [vmem:[%s175 + $0x7c] sm:$0xf] %vm1524, %v1523
      %s1557 = smul.u32 32, %s14
      %p1558 = scmp.lt.s32.totalorder %s1557, 63
      %s1559 = scalar_select %p1558, %s1557, 63
      %s1560 = smul.addr %s1559, 4
      %s1561 = scalar_lea.vmem %s3, %s1560
      // Predicated region
      $region33: #{cnn_base_forward.6} parent=31 // pred_check
        %p1562 = pneg %p100
      $region34: #{cnn_base_forward.6} parent=31 // pred_check_branch
        %1564 = sbr.rel (%p1562) target = $region36
      $region35: #{cnn_base_forward.6} parent=31 // pred_region
        %s1565 = smul.u32 32, %s14
      $region36: #{cnn_base_forward.6} parent=31 // pred_fallthru
        _
    $region32: #{cnn_base_forward.6} parent=5 // pred_fallthru
      _
    %p1566 = scmp.le.s32.totalorder 2, %s9
    // Predicated region
    $region37: #{cnn_base_forward.6} parent=5 // pred_check
      %p1567 = pneg %p1566
    $region38: #{cnn_base_forward.6} parent=5 // pred_check_branch
      %1569 = sbr.rel (%p1567) target = $region40
    $region39: #{cnn_base_forward.6} parent=5 // pred_region
      %s1570 = ssub.s32 %s9, 2
      // Predicated region
      $region41: #{cnn_base_forward.6} parent=39 // pred_check
        %p1571 = pneg %p106
      $region42: #{cnn_base_forward.6} parent=39 // pred_check_branch
        %1573 = sbr.rel (%p1571) target = $region44
      $region43: #{cnn_base_forward.6} parent=39 // pred_region
        %s1574 = smul.u32 32, %s15
        %p1575 = scmp.lt.s32.totalorder %s1574, 63
        %s1576 = scalar_select %p1575, %s1574, 63
        %s1577 = smul.addr %s1576, 4
        %s1578 = scalar_lea.vmem %s3, %s1577
      $region44: #{cnn_base_forward.6} parent=39 // pred_fallthru
        _
    $region40: #{cnn_base_forward.6} parent=5 // pred_fallthru
      _
  $region6: #{cnn_base_forward.6} parent=0 // loop_footer
    %s13 = sadd.s32 1, %s9
  $region7: #{cnn_base_forward.6} parent=0 // loop_footer_branch
    %8 = sbr.rel target = $region3
  $region8: #{cnn_base_forward.6} parent=0 // loop_exit
    _

// kernel: cnn_base_forward.7
$region0: #{cnn_base_forward.7}
  #allocation0 [shape = 'u32[]', space=smem, size = 0x4, offset = 0x4, fixed_abs, tag = 'smem constant byte address 0x4 - core index']
  #allocation1 [shape = 'u32[72,128]{1,0:T(1,128)}', space=vmem, size = 0x9000, scoped, tag = 'internal scratch']
  #allocation2 [shape = 'f32[16,256]{1,0:T(8,128)}', space=vmem, size = 0x4000, scoped, tag = 'scratch operand']
  %s0 = inlined_call_operand.vmem [shape: bf16[16,8192], index: 0, kind: input, shape index: {}]
  %s1 = inlined_call_operand.vmem [shape: bf16[8192,512], index: 1, kind: input, shape index: {}]
  %s2 = inlined_call_operand.vmem [shape: f32[1,512], index: 2, kind: input, shape index: {}]
  %s3 = inlined_call_operand.vmem [shape: bf16[512,128], index: 3, kind: input, shape index: {}]
  %s4 = inlined_call_operand.vmem [shape: f32[16,512], index: 4, kind: output, shape index: {0}]
  %s5 = inlined_call_operand.vmem [shape: f32[16,256], index: 5, kind: output, shape index: {1}]
  %6 = xla_tuple %s4, %s5
  %s7 = sld [smem:[#allocation0]]
  $region193: #{cnn_base_forward.7} parent=0
    _
  %s9 = ssub.s32 1, %s7
  %s10 = scalar_select 0, %s9, %s7
  $region1: #{cnn_base_forward.7} parent=0
    #allocation3 [shape = 'u8[131072]{0}', space=vmem, size = 0x20000, scoped, tag = 'input window, operand 0']
    #allocation4 [shape = 'u8[2097152]{0}', space=vmem, size = 0x200000, scoped, tag = 'input window, operand 1']
    #allocation5 [shape = 'u8[32768]{0}', space=vmem, size = 0x8000, scoped, tag = 'output window, operand 0']
    #allocation6 [shape = 'u8[16384]{0}', space=vmem, size = 0x4000, scoped, tag = 'output window, operand 1']
    loop: start=0, step=1, limit=10
    $region2: #{cnn_base_forward.7} parent=1 // loop_pre_header
      _
    $region3: #{cnn_base_forward.7} parent=1 // loop_header
      %s12 = sphi 0, %s16
      %p13 = scmp.ge.s32.totalorder %s12, 10
      %s19 = sphi 0, %s31
      %s20 = sphi 0, %s27
      %s21 = sphi 0, %s19
      %s22 = sphi 0, %s20
      %s23 = sphi 0, %s21
      %s24 = sphi 0, %s22
      %s34 = sphi 0, %s36
      %s37 = sphi 0, %s34
      %s38 = sphi 0, %s37
      %s54 = sphi 0, %s38
      %s62 = sphi 0, %s64
      %s65 = sphi 0, %s62
      %s66 = sphi 0, %s65
      %s82 = sphi 0, %s66
      %s88 = sphi 0, %s90
      %s91 = sphi 0, %s88
      %s92 = sphi 0, %s91
      %s108 = sphi 0, %s92
      %s114 = sphi 0, %s116
      %s117 = sphi 0, %s114
      %s118 = sphi 0, %s117
      %s134 = sphi 0, %s118
      %s140 = sphi 0, %s142
      %s143 = sphi 0, %s140
      %s144 = sphi 0, %s143
      %s160 = sphi 0, %s144
      %s166 = sphi 0, %s168
      %s169 = sphi 0, %s166
      %s170 = sphi 0, %s169
      %s186 = sphi 0, %s170
    $region4: #{cnn_base_forward.7} parent=1 // loop_header_branch
      %15 = sbr.rel (%p13) target = $region8
    $region5: #{cnn_base_forward.7} parent=1 // loop_body
      %s17 = ssub.s32 %s12, 1
      %s18 = ssub.s32 %s12, 2
      %s25 = sadd.s32 1, %s20
      %p26 = scmp.ge.s32.totalorder %s25, 4
      %s27 = scalar_select %p26, 0, %s25
      %s28 = sadd.s32 1, %s19
      %s29 = scalar_select %p26, %s28, %s19
      %p30 = scmp.ge.s32.totalorder %s29, 2
      %s31 = scalar_select %p30, 0, %s29
      %s32 = ssub.s32 %s20, %s27
      %p33 = scmp.eq.s32.totalorder %s32, 0
      %s35 = sadd.s32 %s34, 1
      %s36 = scalar_select %p33, %s34, %s35
      %p39 = pneg %p33
      %p40 = scmp.eq.s32.totalorder %s12, 7
      %p41 = por %p39, %p40
      %p42 = scmp.ne.s32.totalorder %s34, %s37
      %p43 = scmp.eq.s32.totalorder %s12, 0
      %p44 = por %p42, %p43
      %p45 = scmp.ne.s32.totalorder %s34, %s37
      %p46 = scmp.eq.s32.totalorder %s17, 7
      %p47 = por %p45, %p46
      %p48 = scmp.ne.s32.totalorder %s37, %s38
      %p49 = scmp.eq.s32.totalorder %s17, 0
      %p50 = por %p48, %p49
      %p51 = scmp.ne.s32.totalorder %s37, %s38
      %p52 = scmp.eq.s32.totalorder %s18, 7
      %p53 = por %p51, %p52
      %p55 = scmp.ne.s32.totalorder %s38, %s54
      %p56 = scmp.eq.s32.totalorder %s18, 0
      %p57 = por %p55, %p56
      %s58 = ssub.s32 %s20, %s27
      %s59 = ssub.s32 %s19, %s31
      %s60 = sor.u32 %s58, %s59
      %p61 = scmp.eq.s32.totalorder %s60, 0
      %s63 = sadd.s32 %s62, 1
      %s64 = scalar_select %p61, %s62, %s63
      %p67 = pneg %p61
      %p68 = scmp.eq.s32.totalorder %s12, 7
      %p69 = por %p67, %p68
      %p70 = scmp.ne.s32.totalorder %s62, %s65
      %p71 = scmp.eq.s32.totalorder %s12, 0
      %p72 = por %p70, %p71
      %p73 = scmp.ne.s32.totalorder %s62, %s65
      %p74 = scmp.eq.s32.totalorder %s17, 7
      %p75 = por %p73, %p74
      %p76 = scmp.ne.s32.totalorder %s65, %s66
      %p77 = scmp.eq.s32.totalorder %s17, 0
      %p78 = por %p76, %p77
      %p79 = scmp.ne.s32.totalorder %s65, %s66
      %p80 = scmp.eq.s32.totalorder %s18, 7
      %p81 = por %p79, %p80
      %p83 = scmp.ne.s32.totalorder %s66, %s82
      %p84 = scmp.eq.s32.totalorder %s18, 0
      %p85 = por %p83, %p84
      %s86 = ssub.s32 %s19, %s31
      %p87 = scmp.eq.s32.totalorder %s86, 0
      %s89 = sadd.s32 %s88, 1
      %s90 = scalar_select %p87, %s88, %s89
      %p93 = pneg %p87
      %p94 = scmp.eq.s32.totalorder %s12, 7
      %p95 = por %p93, %p94
      %p96 = scmp.ne.s32.totalorder %s88, %s91
      %p97 = scmp.eq.s32.totalorder %s12, 0
      %p98 = por %p96, %p97
      %p99 = scmp.ne.s32.totalorder %s88, %s91
      %p100 = scmp.eq.s32.totalorder %s17, 7
      %p101 = por %p99, %p100
      %p102 = scmp.ne.s32.totalorder %s91, %s92
      %p103 = scmp.eq.s32.totalorder %s17, 0
      %p104 = por %p102, %p103
      %p105 = scmp.ne.s32.totalorder %s91, %s92
      %p106 = scmp.eq.s32.totalorder %s18, 7
      %p107 = por %p105, %p106
      %p109 = scmp.ne.s32.totalorder %s92, %s108
      %p110 = scmp.eq.s32.totalorder %s18, 0
      %p111 = por %p109, %p110
      %s112 = ssub.s32 %s19, %s31
      %p113 = scmp.eq.s32.totalorder %s112, 0
      %s115 = sadd.s32 %s114, 1
      %s116 = scalar_select %p113, %s114, %s115
      %p119 = pneg %p113
      %p120 = scmp.eq.s32.totalorder %s12, 7
      %p121 = por %p119, %p120
      %p122 = scmp.ne.s32.totalorder %s114, %s117
      %p123 = scmp.eq.s32.totalorder %s12, 0
      %p124 = por %p122, %p123
      %p125 = scmp.ne.s32.totalorder %s114, %s117
      %p126 = scmp.eq.s32.totalorder %s17, 7
      %p127 = por %p125, %p126
      %p128 = scmp.ne.s32.totalorder %s117, %s118
      %p129 = scmp.eq.s32.totalorder %s17, 0
      %p130 = por %p128, %p129
      %p131 = scmp.ne.s32.totalorder %s117, %s118
      %p132 = scmp.eq.s32.totalorder %s18, 7
      %p133 = por %p131, %p132
      %p135 = scmp.ne.s32.totalorder %s118, %s134
      %p136 = scmp.eq.s32.totalorder %s18, 0
      %p137 = por %p135, %p136
      %s138 = ssub.s32 %s19, %s31
      %p139 = scmp.eq.s32.totalorder %s138, 0
      %s141 = sadd.s32 %s140, 1
      %s142 = scalar_select %p139, %s140, %s141
      %p145 = pneg %p139
      %p146 = scmp.eq.s32.totalorder %s12, 7
      %p147 = por %p145, %p146
      %p148 = scmp.ne.s32.totalorder %s140, %s143
      %p149 = scmp.eq.s32.totalorder %s12, 0
      %p150 = por %p148, %p149
      %p151 = scmp.ne.s32.totalorder %s140, %s143
      %p152 = scmp.eq.s32.totalorder %s17, 7
      %p153 = por %p151, %p152
      %p154 = scmp.ne.s32.totalorder %s143, %s144
      %p155 = scmp.eq.s32.totalorder %s17, 0
      %p156 = por %p154, %p155
      %p157 = scmp.ne.s32.totalorder %s143, %s144
      %p158 = scmp.eq.s32.totalorder %s18, 7
      %p159 = por %p157, %p158
      %p161 = scmp.ne.s32.totalorder %s144, %s160
      %p162 = scmp.eq.s32.totalorder %s18, 0
      %p163 = por %p161, %p162
      %s164 = ssub.s32 %s19, %s31
      %p165 = scmp.eq.s32.totalorder %s164, 0
      %s167 = sadd.s32 %s166, 1
      %s168 = scalar_select %p165, %s166, %s167
      %p171 = pneg %p165
      %p172 = scmp.eq.s32.totalorder %s12, 7
      %p173 = por %p171, %p172
      %p174 = scmp.ne.s32.totalorder %s166, %s169
      %p175 = scmp.eq.s32.totalorder %s12, 0
      %p176 = por %p174, %p175
      %p177 = scmp.ne.s32.totalorder %s166, %s169
      %p178 = scmp.eq.s32.totalorder %s17, 7
      %p179 = por %p177, %p178
      %p180 = scmp.ne.s32.totalorder %s169, %s170
      %p181 = scmp.eq.s32.totalorder %s17, 0
      %p182 = por %p180, %p181
      %p183 = scmp.ne.s32.totalorder %s169, %s170
      %p184 = scmp.eq.s32.totalorder %s18, 7
      %p185 = por %p183, %p184
      %p187 = scmp.ne.s32.totalorder %s170, %s186
      %p188 = scmp.eq.s32.totalorder %s18, 0
      %p189 = por %p187, %p188
      %p190 = scmp.le.s32.totalorder 1, %s12
      %p191 = scmp.lt.s32.totalorder %s12, 9
      %p192 = pnand %p190, %p191
      %p193 = pneg %p192
      // Predicated region
      $region9: #{cnn_base_forward.7} parent=5 // pred_check
        _
      $region10: #{cnn_base_forward.7} parent=5 // pred_check_branch
        %195 = sbr.rel (%p192) target = $region12
      $region11: #{cnn_base_forward.7} parent=5 // pred_region
        %s196 = ssub.s32 %s12, 1
      $region12: #{cnn_base_forward.7} parent=5 // pred_fallthru
        _
      %p197 = scmp.lt.s32.totalorder %s12, 8
      // Predicated region
      $region13: #{cnn_base_forward.7} parent=5 // pred_check
        %p198 = pneg %p197
      $region14: #{cnn_base_forward.7} parent=5 // pred_check_branch
        %200 = sbr.rel (%p198) target = $region16
      $region15: #{cnn_base_forward.7} parent=5 // pred_region
        // Predicated region
        $region17: #{cnn_base_forward.7} parent=15 // pred_check
          %p201 = pneg %p44
        $region18: #{cnn_base_forward.7} parent=15 // pred_check_branch
          %203 = sbr.rel (%p201) target = $region20
        $region19: #{cnn_base_forward.7} parent=15 // pred_region
          %s204 = sand.u32 %s34, 1
          %s205 = sand.u32 %s34, 1
          %s206 = smul.addr %s205, 128
          %s207 = scalar_lea.vmem [#allocation3], %s206
          %s208 = smul.u32 16, %s20
          %s209 = smul.addr %s208, 4
          %s210 = scalar_lea.vmem %s0, %s209
          // Predicated region
          $region21: #{cnn_base_forward.7} parent=19 // pred_check
            _
          $region22: #{cnn_base_forward.7} parent=19 // pred_check_branch
            %212 = sbr.rel (0) target = $region24
          $region23: #{cnn_base_forward.7} parent=19 // pred_region
            // Predicated region
            $region25: #{cnn_base_forward.7} parent=23 // pred_check
              _
            $region26: #{cnn_base_forward.7} parent=23 // pred_check_branch
              %214 = sbr.rel (0) target = $region28
            $region27: #{cnn_base_forward.7} parent=23 // pred_region
              loop: start=0, step=1, limit=1
              $region29: #{cnn_base_forward.7} parent=27 // loop_pre_header
                _
              $region30: #{cnn_base_forward.7} parent=27 // loop_header
                %s216 = sphi 0, %s220
                %p217 = scmp.ge.s32.totalorder %s216, 1
                %s221 = sphi %s210, %s210
                %s222 = sphi %s207, %s207
              $region31: #{cnn_base_forward.7} parent=27 // loop_header_branch
                %219 = sbr.rel (%p217) target = $region35
              $region32: #{cnn_base_forward.7} parent=27 // loop_body
                %v223 = vld [vmem:[%s221] sm:$0xff]
                %224 = vst [vmem:[%s222] sm:$0xff] %v223
                %v225 = vld [vmem:[%s221 + $0x8] sm:$0xff]
                %226 = vst [vmem:[%s222 + $0x8] sm:$0xff] %v225
                %v227 = vld [vmem:[%s221 + $0x10] sm:$0xff]
                %228 = vst [vmem:[%s222 + $0x10] sm:$0xff] %v227
                %v229 = vld [vmem:[%s221 + $0x18] sm:$0xff]
                %230 = vst [vmem:[%s222 + $0x18] sm:$0xff] %v229
                %v231 = vld [vmem:[%s221 + $0x20] sm:$0xff]
                %232 = vst [vmem:[%s222 + $0x20] sm:$0xff] %v231
                %v233 = vld [vmem:[%s221 + $0x28] sm:$0xff]
                %234 = vst [vmem:[%s222 + $0x28] sm:$0xff] %v233
                %v235 = vld [vmem:[%s221 + $0x30] sm:$0xff]
                %236 = vst [vmem:[%s222 + $0x30] sm:$0xff] %v235
                %v237 = vld [vmem:[%s221 + $0x38] sm:$0xff]
                %238 = vst [vmem:[%s222 + $0x38] sm:$0xff] %v237
                %v239 = vld [vmem:[%s221 + $0x100] sm:$0xff]
                %240 = vst [vmem:[%s222 + $0x40] sm:$0xff] %v239
                %v241 = vld [vmem:[%s221 + $0x108] sm:$0xff]
                %242 = vst [vmem:[%s222 + $0x48] sm:$0xff] %v241
                %v243 = vld [vmem:[%s221 + $0x110] sm:$0xff]
                %244 = vst [vmem:[%s222 + $0x50] sm:$0xff] %v243
                %v245 = vld [vmem:[%s221 + $0x118] sm:$0xff]
                %246 = vst [vmem:[%s222 + $0x58] sm:$0xff] %v245
                %v247 = vld [vmem:[%s221 + $0x120] sm:$0xff]
                %248 = vst [vmem:[%s222 + $0x60] sm:$0xff] %v247
                %v249 = vld [vmem:[%s221 + $0x128] sm:$0xff]
                %250 = vst [vmem:[%s222 + $0x68] sm:$0xff] %v249
                %v251 = vld [vmem:[%s221 + $0x130] sm:$0xff]
                %252 = vst [vmem:[%s222 + $0x70] sm:$0xff] %v251
                %v253 = vld [vmem:[%s221 + $0x138] sm:$0xff]
                %254 = vst [vmem:[%s222 + $0x78] sm:$0xff] %v253
              $region33: #{cnn_base_forward.7} parent=27 // loop_footer
                %s220 = sadd.s32 1, %s216
              $region34: #{cnn_base_forward.7} parent=27 // loop_footer_branch
                %215 = sbr.rel target = $region30
              $region35: #{cnn_base_forward.7} parent=27 // loop_exit
                _
            $region28: #{cnn_base_forward.7} parent=23 // pred_fallthru
              _
            // Predicated region
            $region36: #{cnn_base_forward.7} parent=23 // pred_check
              _
            $region37: #{cnn_base_forward.7} parent=23 // pred_check_branch
              %256 = sbr.rel target = $region39
            $region38: #{cnn_base_forward.7} parent=23 // pred_region
              _
            $region39: #{cnn_base_forward.7} parent=23 // pred_fallthru
              _
          $region24: #{cnn_base_forward.7} parent=19 // pred_fallthru
            _
          %257 = vnop
        $region20: #{cnn_base_forward.7} parent=15 // pred_fallthru
          _
        // Predicated region
        $region40: #{cnn_base_forward.7} parent=15 // pred_check
          %p258 = pneg %p72
        $region41: #{cnn_base_forward.7} parent=15 // pred_check_branch
          %260 = sbr.rel (%p258) target = $region43
        $region42: #{cnn_base_forward.7} parent=15 // pred_region
          %s261 = sand.u32 %s62, 1
          %s262 = sand.u32 %s62, 1
          %s263 = smul.addr %s262, 2048
          %s264 = scalar_lea.vmem [#allocation4], %s263
          %s265 = smul.u32 256, %s20
          %s266 = smul.u32 2, %s19
          %s267 = smul.addr %s265, 4
          %s268 = sadd.s32 %s266, %s267
          %s269 = smul.addr %s268, 4
          %s270 = scalar_lea.vmem %s1, %s269
          // Predicated region
          $region44: #{cnn_base_forward.7} parent=42 // pred_check
            _
          $region45: #{cnn_base_forward.7} parent=42 // pred_check_branch
            %272 = sbr.rel (0) target = $region47
          $region46: #{cnn_base_forward.7} parent=42 // pred_region
            // Predicated region
            $region48: #{cnn_base_forward.7} parent=46 // pred_check
              _
            $region49: #{cnn_base_forward.7} parent=46 // pred_check_branch
              %274 = sbr.rel (0) target = $region51
            $region50: #{cnn_base_forward.7} parent=46 // pred_region
              // Predicated region
              $region63: #{cnn_base_forward.7} parent=50 // pred_check
                _
              $region64: #{cnn_base_forward.7} parent=50 // pred_check_branch
                %800 = sbr.rel (0) target = $region66
              $region65: #{cnn_base_forward.7} parent=50 // pred_region
                loop: start=0, step=1, limit=1
                $region67: #{cnn_base_forward.7} parent=65 // loop_pre_header
                  _
                $region68: #{cnn_base_forward.7} parent=65 // loop_header
                  %s802 = sphi 0, %s806
                  %p803 = scmp.ge.s32.totalorder %s802, 1
                  %s807 = sphi 0, %s1324
                  %s808 = sphi %s270, %s1327
                  %s809 = sphi %s264, %s1328
                $region69: #{cnn_base_forward.7} parent=65 // loop_header_branch
                  %805 = sbr.rel (%p803) target = $region73
                $region70: #{cnn_base_forward.7} parent=65 // loop_body
                  %v810 = vld [vmem:[%s808] sm:$0xff]
                  %811 = vst [vmem:[%s809] sm:$0xff] %v810
                  %v812 = vld [vmem:[%s808 + $0x10] sm:$0xff]
                  %813 = vst [vmem:[%s809 + $0x8] sm:$0xff] %v812
                  %v814 = vld [vmem:[%s808 + $0x20] sm:$0xff]
                  %815 = vst [vmem:[%s809 + $0x10] sm:$0xff] %v814
                  %v816 = vld [vmem:[%s808 + $0x30] sm:$0xff]
                  %817 = vst [vmem:[%s809 + $0x18] sm:$0xff] %v816
                  %v818 = vld [vmem:[%s808 + $0x40] sm:$0xff]
                  %819 = vst [vmem:[%s809 + $0x20] sm:$0xff] %v818
                  %v820 = vld [vmem:[%s808 + $0x50] sm:$0xff]
                  %821 = vst [vmem:[%s809 + $0x28] sm:$0xff] %v820
                  %v822 = vld [vmem:[%s808 + $0x60] sm:$0xff]
                  %823 = vst [vmem:[%s809 + $0x30] sm:$0xff] %v822
                  %v824 = vld [vmem:[%s808 + $0x70] sm:$0xff]
                  %825 = vst [vmem:[%s809 + $0x38] sm:$0xff] %v824
                  %v826 = vld [vmem:[%s808 + $0x80] sm:$0xff]
                  %827 = vst [vmem:[%s809 + $0x40] sm:$0xff] %v826
                  %v828 = vld [vmem:[%s808 + $0x90] sm:$0xff]
                  %829 = vst [vmem:[%s809 + $0x48] sm:$0xff] %v828
                  %v830 = vld [vmem:[%s808 + $0xa0] sm:$0xff]
                  %831 = vst [vmem:[%s809 + $0x50] sm:$0xff] %v830
                  %v832 = vld [vmem:[%s808 + $0xb0] sm:$0xff]
                  %833 = vst [vmem:[%s809 + $0x58] sm:$0xff] %v832
                  %v834 = vld [vmem:[%s808 + $0xc0] sm:$0xff]
                  %835 = vst [vmem:[%s809 + $0x60] sm:$0xff] %v834
                  %v836 = vld [vmem:[%s808 + $0xd0] sm:$0xff]
                  %837 = vst [vmem:[%s809 + $0x68] sm:$0xff] %v836
                  %v838 = vld [vmem:[%s808 + $0xe0] sm:$0xff]
                  %839 = vst [vmem:[%s809 + $0x70] sm:$0xff] %v838
                  %v840 = vld [vmem:[%s808 + $0xf0] sm:$0xff]
                  %841 = vst [vmem:[%s809 + $0x78] sm:$0xff] %v840
                  %v842 = vld [vmem:[%s808 + $0x100] sm:$0xff]
                  %843 = vst [vmem:[%s809 + $0x80] sm:$0xff] %v842
                  %v844 = vld [vmem:[%s808 + $0x110] sm:$0xff]
                  %845 = vst [vmem:[%s809 + $0x88] sm:$0xff] %v844
                  %v846 = vld [vmem:[%s808 + $0x120] sm:$0xff]
                  %847 = vst [vmem:[%s809 + $0x90] sm:$0xff] %v846
                  %v848 = vld [vmem:[%s808 + $0x130] sm:$0xff]
                  %849 = vst [vmem:[%s809 + $0x98] sm:$0xff] %v848
                  %v850 = vld [vmem:[%s808 + $0x140] sm:$0xff]
                  %851 = vst [vmem:[%s809 + $0xa0] sm:$0xff] %v850
                  %v852 = vld [vmem:[%s808 + $0x150] sm:$0xff]
                  %853 = vst [vmem:[%s809 + $0xa8] sm:$0xff] %v852
                  %v854 = vld [vmem:[%s808 + $0x160] sm:$0xff]
                  %855 = vst [vmem:[%s809 + $0xb0] sm:$0xff] %v854
                  %v856 = vld [vmem:[%s808 + $0x170] sm:$0xff]
                  %857 = vst [vmem:[%s809 + $0xb8] sm:$0xff] %v856
                  %v858 = vld [vmem:[%s808 + $0x180] sm:$0xff]
                  %859 = vst [vmem:[%s809 + $0xc0] sm:$0xff] %v858
                  %v860 = vld [vmem:[%s808 + $0x190] sm:$0xff]
                  %861 = vst [vmem:[%s809 + $0xc8] sm:$0xff] %v860
                  %v862 = vld [vmem:[%s808 + $0x1a0] sm:$0xff]
                  %863 = vst [vmem:[%s809 + $0xd0] sm:$0xff] %v862
                  %v864 = vld [vmem:[%s808 + $0x1b0] sm:$0xff]
                  %865 = vst [vmem:[%s809 + $0xd8] sm:$0xff] %v864
                  %v866 = vld [vmem:[%s808 + $0x1c0] sm:$0xff]
                  %867 = vst [vmem:[%s809 + $0xe0] sm:$0xff] %v866
                  %v868 = vld [vmem:[%s808 + $0x1d0] sm:$0xff]
                  %869 = vst [vmem:[%s809 + $0xe8] sm:$0xff] %v868
                  %v870 = vld [vmem:[%s808 + $0x1e0] sm:$0xff]
                  %871 = vst [vmem:[%s809 + $0xf0] sm:$0xff] %v870
                  %v872 = vld [vmem:[%s808 + $0x1f0] sm:$0xff]
                  %873 = vst [vmem:[%s809 + $0xf8] sm:$0xff] %v872
                  %v874 = vld [vmem:[%s808 + $0x200] sm:$0xff]
                  %875 = vst [vmem:[%s809 + $0x100] sm:$0xff] %v874
                  %v876 = vld [vmem:[%s808 + $0x210] sm:$0xff]
                  %877 = vst [vmem:[%s809 + $0x108] sm:$0xff] %v876
                  %v878 = vld [vmem:[%s808 + $0x220] sm:$0xff]
                  %879 = vst [vmem:[%s809 + $0x110] sm:$0xff] %v878
                  %v880 = vld [vmem:[%s808 + $0x230] sm:$0xff]
                  %881 = vst [vmem:[%s809 + $0x118] sm:$0xff] %v880
                  %v882 = vld [vmem:[%s808 + $0x240] sm:$0xff]
                  %883 = vst [vmem:[%s809 + $0x120] sm:$0xff] %v882
                  %v884 = vld [vmem:[%s808 + $0x250] sm:$0xff]
                  %885 = vst [vmem:[%s809 + $0x128] sm:$0xff] %v884
                  %v886 = vld [vmem:[%s808 + $0x260] sm:$0xff]
                  %887 = vst [vmem:[%s809 + $0x130] sm:$0xff] %v886
                  %v888 = vld [vmem:[%s808 + $0x270] sm:$0xff]
                  %889 = vst [vmem:[%s809 + $0x138] sm:$0xff] %v888
                  %v890 = vld [vmem:[%s808 + $0x280] sm:$0xff]
                  %891 = vst [vmem:[%s809 + $0x140] sm:$0xff] %v890
                  %v892 = vld [vmem:[%s808 + $0x290] sm:$0xff]
                  %893 = vst [vmem:[%s809 + $0x148] sm:$0xff] %v892
                  %v894 = vld [vmem:[%s808 + $0x2a0] sm:$0xff]
                  %895 = vst [vmem:[%s809 + $0x150] sm:$0xff] %v894
                  %v896 = vld [vmem:[%s808 + $0x2b0] sm:$0xff]
                  %897 = vst [vmem:[%s809 + $0x158] sm:$0xff] %v896
                  %v898 = vld [vmem:[%s808 + $0x2c0] sm:$0xff]
                  %899 = vst [vmem:[%s809 + $0x160] sm:$0xff] %v898
                  %v900 = vld [vmem:[%s808 + $0x2d0] sm:$0xff]
                  %901 = vst [vmem:[%s809 + $0x168] sm:$0xff] %v900
                  %v902 = vld [vmem:[%s808 + $0x2e0] sm:$0xff]
                  %903 = vst [vmem:[%s809 + $0x170] sm:$0xff] %v902
                  %v904 = vld [vmem:[%s808 + $0x2f0] sm:$0xff]
                  %905 = vst [vmem:[%s809 + $0x178] sm:$0xff] %v904
                  %v906 = vld [vmem:[%s808 + $0x300] sm:$0xff]
                  %907 = vst [vmem:[%s809 + $0x180] sm:$0xff] %v906
                  %v908 = vld [vmem:[%s808 + $0x310] sm:$0xff]
                  %909 = vst [vmem:[%s809 + $0x188] sm:$0xff] %v908
                  %v910 = vld [vmem:[%s808 + $0x320] sm:$0xff]
                  %911 = vst [vmem:[%s809 + $0x190] sm:$0xff] %v910
                  %v912 = vld [vmem:[%s808 + $0x330] sm:$0xff]
                  %913 = vst [vmem:[%s809 + $0x198] sm:$0xff] %v912
                  %v914 = vld [vmem:[%s808 + $0x340] sm:$0xff]
                  %915 = vst [vmem:[%s809 + $0x1a0] sm:$0xff] %v914
                  %v916 = vld [vmem:[%s808 + $0x350] sm:$0xff]
                  %917 = vst [vmem:[%s809 + $0x1a8] sm:$0xff] %v916
                  %v918 = vld [vmem:[%s808 + $0x360] sm:$0xff]
                  %919 = vst [vmem:[%s809 + $0x1b0] sm:$0xff] %v918
                  %v920 = vld [vmem:[%s808 + $0x370] sm:$0xff]
                  %921 = vst [vmem:[%s809 + $0x1b8] sm:$0xff] %v920
                  %v922 = vld [vmem:[%s808 + $0x380] sm:$0xff]
                  %923 = vst [vmem:[%s809 + $0x1c0] sm:$0xff] %v922
                  %v924 = vld [vmem:[%s808 + $0x390] sm:$0xff]
                  %925 = vst [vmem:[%s809 + $0x1c8] sm:$0xff] %v924
                  %v926 = vld [vmem:[%s808 + $0x3a0] sm:$0xff]
                  %927 = vst [vmem:[%s809 + $0x1d0] sm:$0xff] %v926
                  %v928 = vld [vmem:[%s808 + $0x3b0] sm:$0xff]
                  %929 = vst [vmem:[%s809 + $0x1d8] sm:$0xff] %v928
                  %v930 = vld [vmem:[%s808 + $0x3c0] sm:$0xff]
                  %931 = vst [vmem:[%s809 + $0x1e0] sm:$0xff] %v930
                  %v932 = vld [vmem:[%s808 + $0x3d0] sm:$0xff]
                  %933 = vst [vmem:[%s809 + $0x1e8] sm:$0xff] %v932
                  %v934 = vld [vmem:[%s808 + $0x3e0] sm:$0xff]
                  %935 = vst [vmem:[%s809 + $0x1f0] sm:$0xff] %v934
                  %v936 = vld [vmem:[%s808 + $0x3f0] sm:$0xff]
                  %937 = vst [vmem:[%s809 + $0x1f8] sm:$0xff] %v936
                  %v938 = vld [vmem:[%s808 + $0x400] sm:$0xff]
                  %939 = vst [vmem:[%s809 + $0x200] sm:$0xff] %v938
                  %v940 = vld [vmem:[%s808 + $0x410] sm:$0xff]
                  %941 = vst [vmem:[%s809 + $0x208] sm:$0xff] %v940
                  %v942 = vld [vmem:[%s808 + $0x420] sm:$0xff]
                  %943 = vst [vmem:[%s809 + $0x210] sm:$0xff] %v942
                  %v944 = vld [vmem:[%s808 + $0x430] sm:$0xff]
                  %945 = vst [vmem:[%s809 + $0x218] sm:$0xff] %v944
                  %v946 = vld [vmem:[%s808 + $0x440] sm:$0xff]
                  %947 = vst [vmem:[%s809 + $0x220] sm:$0xff] %v946
                  %v948 = vld [vmem:[%s808 + $0x450] sm:$0xff]
                  %949 = vst [vmem:[%s809 + $0x228] sm:$0xff] %v948
                  %v950 = vld [vmem:[%s808 + $0x460] sm:$0xff]
                  %951 = vst [vmem:[%s809 + $0x230] sm:$0xff] %v950
                  %v952 = vld [vmem:[%s808 + $0x470] sm:$0xff]
                  %953 = vst [vmem:[%s809 + $0x238] sm:$0xff] %v952
                  %v954 = vld [vmem:[%s808 + $0x480] sm:$0xff]
                  %955 = vst [vmem:[%s809 + $0x240] sm:$0xff] %v954
                  %v956 = vld [vmem:[%s808 + $0x490] sm:$0xff]
                  %957 = vst [vmem:[%s809 + $0x248] sm:$0xff] %v956
                  %v958 = vld [vmem:[%s808 + $0x4a0] sm:$0xff]
                  %959 = vst [vmem:[%s809 + $0x250] sm:$0xff] %v958
                  %v960 = vld [vmem:[%s808 + $0x4b0] sm:$0xff]
                  %961 = vst [vmem:[%s809 + $0x258] sm:$0xff] %v960
                  %v962 = vld [vmem:[%s808 + $0x4c0] sm:$0xff]
                  %963 = vst [vmem:[%s809 + $0x260] sm:$0xff] %v962
                  %v964 = vld [vmem:[%s808 + $0x4d0] sm:$0xff]
                  %965 = vst [vmem:[%s809 + $0x268] sm:$0xff] %v964
                  %v966 = vld [vmem:[%s808 + $0x4e0] sm:$0xff]
                  %967 = vst [vmem:[%s809 + $0x270] sm:$0xff] %v966
                  %v968 = vld [vmem:[%s808 + $0x4f0] sm:$0xff]
                  %969 = vst [vmem:[%s809 + $0x278] sm:$0xff] %v968
                  %v970 = vld [vmem:[%s808 + $0x500] sm:$0xff]
                  %971 = vst [vmem:[%s809 + $0x280] sm:$0xff] %v970
                  %v972 = vld [vmem:[%s808 + $0x510] sm:$0xff]
                  %973 = vst [vmem:[%s809 + $0x288] sm:$0xff] %v972
                  %v974 = vld [vmem:[%s808 + $0x520] sm:$0xff]
                  %975 = vst [vmem:[%s809 + $0x290] sm:$0xff] %v974
                  %v976 = vld [vmem:[%s808 + $0x530] sm:$0xff]
                  %977 = vst [vmem:[%s809 + $0x298] sm:$0xff] %v976
                  %v978 = vld [vmem:[%s808 + $0x540] sm:$0xff]
                  %979 = vst [vmem:[%s809 + $0x2a0] sm:$0xff] %v978
                  %v980 = vld [vmem:[%s808 + $0x550] sm:$0xff]
                  %981 = vst [vmem:[%s809 + $0x2a8] sm:$0xff] %v980
                  %v982 = vld [vmem:[%s808 + $0x560] sm:$0xff]
                  %983 = vst [vmem:[%s809 + $0x2b0] sm:$0xff] %v982
                  %v984 = vld [vmem:[%s808 + $0x570] sm:$0xff]
                  %985 = vst [vmem:[%s809 + $0x2b8] sm:$0xff] %v984
                  %v986 = vld [vmem:[%s808 + $0x580] sm:$0xff]
                  %987 = vst [vmem:[%s809 + $0x2c0] sm:$0xff] %v986
                  %v988 = vld [vmem:[%s808 + $0x590] sm:$0xff]
                  %989 = vst [vmem:[%s809 + $0x2c8] sm:$0xff] %v988
                  %v990 = vld [vmem:[%s808 + $0x5a0] sm:$0xff]
                  %991 = vst [vmem:[%s809 + $0x2d0] sm:$0xff] %v990
                  %v992 = vld [vmem:[%s808 + $0x5b0] sm:$0xff]
                  %993 = vst [vmem:[%s809 + $0x2d8] sm:$0xff] %v992
                  %v994 = vld [vmem:[%s808 + $0x5c0] sm:$0xff]
                  %995 = vst [vmem:[%s809 + $0x2e0] sm:$0xff] %v994
                  %v996 = vld [vmem:[%s808 + $0x5d0] sm:$0xff]
                  %997 = vst [vmem:[%s809 + $0x2e8] sm:$0xff] %v996
                  %v998 = vld [vmem:[%s808 + $0x5e0] sm:$0xff]
                  %999 = vst [vmem:[%s809 + $0x2f0] sm:$0xff] %v998
                  %v1000 = vld [vmem:[%s808 + $0x5f0] sm:$0xff]
                  %1001 = vst [vmem:[%s809 + $0x2f8] sm:$0xff] %v1000
                  %v1002 = vld [vmem:[%s808 + $0x600] sm:$0xff]
                  %1003 = vst [vmem:[%s809 + $0x300] sm:$0xff] %v1002
                  %v1004 = vld [vmem:[%s808 + $0x610] sm:$0xff]
                  %1005 = vst [vmem:[%s809 + $0x308] sm:$0xff] %v1004
                  %v1006 = vld [vmem:[%s808 + $0x620] sm:$0xff]
                  %1007 = vst [vmem:[%s809 + $0x310] sm:$0xff] %v1006
                  %v1008 = vld [vmem:[%s808 + $0x630] sm:$0xff]
                  %1009 = vst [vmem:[%s809 + $0x318] sm:$0xff] %v1008
                  %v1010 = vld [vmem:[%s808 + $0x640] sm:$0xff]
                  %1011 = vst [vmem:[%s809 + $0x320] sm:$0xff] %v1010
                  %v1012 = vld [vmem:[%s808 + $0x650] sm:$0xff]
                  %1013 = vst [vmem:[%s809 + $0x328] sm:$0xff] %v1012
                  %v1014 = vld [vmem:[%s808 + $0x660] sm:$0xff]
                  %1015 = vst [vmem:[%s809 + $0x330] sm:$0xff] %v1014
                  %v1016 = vld [vmem:[%s808 + $0x670] sm:$0xff]
                  %1017 = vst [vmem:[%s809 + $0x338] sm:$0xff] %v1016
                  %v1018 = vld [vmem:[%s808 + $0x680] sm:$0xff]
                  %1019 = vst [vmem:[%s809 + $0x340] sm:$0xff] %v1018
                  %v1020 = vld [vmem:[%s808 + $0x690] sm:$0xff]
                  %1021 = vst [vmem:[%s809 + $0x348] sm:$0xff] %v1020
                  %v1022 = vld [vmem:[%s808 + $0x6a0] sm:$0xff]
                  %1023 = vst [vmem:[%s809 + $0x350] sm:$0xff] %v1022
                  %v1024 = vld [vmem:[%s808 + $0x6b0] sm:$0xff]
                  %1025 = vst [vmem:[%s809 + $0x358] sm:$0xff] %v1024
                  %v1026 = vld [vmem:[%s808 + $0x6c0] sm:$0xff]
                  %1027 = vst [vmem:[%s809 + $0x360] sm:$0xff] %v1026
                  %v1028 = vld [vmem:[%s808 + $0x6d0] sm:$0xff]
                  %1029 = vst [vmem:[%s809 + $0x368] sm:$0xff] %v1028
                  %v1030 = vld [vmem:[%s808 + $0x6e0] sm:$0xff]
                  %1031 = vst [vmem:[%s809 + $0x370] sm:$0xff] %v1030
                  %v1032 = vld [vmem:[%s808 + $0x6f0] sm:$0xff]
                  %1033 = vst [vmem:[%s809 + $0x378] sm:$0xff] %v1032
                  %v1034 = vld [vmem:[%s808 + $0x700] sm:$0xff]
                  %1035 = vst [vmem:[%s809 + $0x380] sm:$0xff] %v1034
                  %v1036 = vld [vmem:[%s808 + $0x710] sm:$0xff]
                  %1037 = vst [vmem:[%s809 + $0x388] sm:$0xff] %v1036
                  %v1038 = vld [vmem:[%s808 + $0x720] sm:$0xff]
                  %1039 = vst [vmem:[%s809 + $0x390] sm:$0xff] %v1038
                  %v1040 = vld [vmem:[%s808 + $0x730] sm:$0xff]
                  %1041 = vst [vmem:[%s809 + $0x398] sm:$0xff] %v1040
                  %v1042 = vld [vmem:[%s808 + $0x740] sm:$0xff]
                  %1043 = vst [vmem:[%s809 + $0x3a0] sm:$0xff] %v1042
                  %v1044 = vld [vmem:[%s808 + $0x750] sm:$0xff]
                  %1045 = vst [vmem:[%s809 + $0x3a8] sm:$0xff] %v1044
                  %v1046 = vld [vmem:[%s808 + $0x760] sm:$0xff]
                  %1047 = vst [vmem:[%s809 + $0x3b0] sm:$0xff] %v1046
                  %v1048 = vld [vmem:[%s808 + $0x770] sm:$0xff]
                  %1049 = vst [vmem:[%s809 + $0x3b8] sm:$0xff] %v1048
                  %v1050 = vld [vmem:[%s808 + $0x780] sm:$0xff]
                  %1051 = vst [vmem:[%s809 + $0x3c0] sm:$0xff] %v1050
                  %v1052 = vld [vmem:[%s808 + $0x790] sm:$0xff]
                  %1053 = vst [vmem:[%s809 + $0x3c8] sm:$0xff] %v1052
                  %v1054 = vld [vmem:[%s808 + $0x7a0] sm:$0xff]
                  %1055 = vst [vmem:[%s809 + $0x3d0] sm:$0xff] %v1054
                  %v1056 = vld [vmem:[%s808 + $0x7b0] sm:$0xff]
                  %1057 = vst [vmem:[%s809 + $0x3d8] sm:$0xff] %v1056
                  %v1058 = vld [vmem:[%s808 + $0x7c0] sm:$0xff]
                  %1059 = vst [vmem:[%s809 + $0x3e0] sm:$0xff] %v1058
                  %v1060 = vld [vmem:[%s808 + $0x7d0] sm:$0xff]
                  %1061 = vst [vmem:[%s809 + $0x3e8] sm:$0xff] %v1060
                  %v1062 = vld [vmem:[%s808 + $0x7e0] sm:$0xff]
                  %1063 = vst [vmem:[%s809 + $0x3f0] sm:$0xff] %v1062
                  %v1064 = vld [vmem:[%s808 + $0x7f0] sm:$0xff]
                  %1065 = vst [vmem:[%s809 + $0x3f8] sm:$0xff] %v1064
                  %v1066 = vld [vmem:[%s808 + $0x800] sm:$0xff]
                  %1067 = vst [vmem:[%s809 + $0x400] sm:$0xff] %v1066
                  %v1068 = vld [vmem:[%s808 + $0x810] sm:$0xff]
                  %1069 = vst [vmem:[%s809 + $0x408] sm:$0xff] %v1068
                  %v1070 = vld [vmem:[%s808 + $0x820] sm:$0xff]
                  %1071 = vst [vmem:[%s809 + $0x410] sm:$0xff] %v1070
                  %v1072 = vld [vmem:[%s808 + $0x830] sm:$0xff]
                  %1073 = vst [vmem:[%s809 + $0x418] sm:$0xff] %v1072
                  %v1074 = vld [vmem:[%s808 + $0x840] sm:$0xff]
                  %1075 = vst [vmem:[%s809 + $0x420] sm:$0xff] %v1074
                  %v1076 = vld [vmem:[%s808 + $0x850] sm:$0xff]
                  %1077 = vst [vmem:[%s809 + $0x428] sm:$0xff] %v1076
                  %v1078 = vld [vmem:[%s808 + $0x860] sm:$0xff]
                  %1079 = vst [vmem:[%s809 + $0x430] sm:$0xff] %v1078
                  %v1080 = vld [vmem:[%s808 + $0x870] sm:$0xff]
                  %1081 = vst [vmem:[%s809 + $0x438] sm:$0xff] %v1080
                  %v1082 = vld [vmem:[%s808 + $0x880] sm:$0xff]
                  %1083 = vst [vmem:[%s809 + $0x440] sm:$0xff] %v1082
                  %v1084 = vld [vmem:[%s808 + $0x890] sm:$0xff]
                  %1085 = vst [vmem:[%s809 + $0x448] sm:$0xff] %v1084
                  %v1086 = vld [vmem:[%s808 + $0x8a0] sm:$0xff]
                  %1087 = vst [vmem:[%s809 + $0x450] sm:$0xff] %v1086
                  %v1088 = vld [vmem:[%s808 + $0x8b0] sm:$0xff]
                  %1089 = vst [vmem:[%s809 + $0x458] sm:$0xff] %v1088
                  %v1090 = vld [vmem:[%s808 + $0x8c0] sm:$0xff]
                  %1091 = vst [vmem:[%s809 + $0x460] sm:$0xff] %v1090
                  %v1092 = vld [vmem:[%s808 + $0x8d0] sm:$0xff]
                  %1093 = vst [vmem:[%s809 + $0x468] sm:$0xff] %v1092
                  %v1094 = vld [vmem:[%s808 + $0x8e0] sm:$0xff]
                  %1095 = vst [vmem:[%s809 + $0x470] sm:$0xff] %v1094
                  %v1096 = vld [vmem:[%s808 + $0x8f0] sm:$0xff]
                  %1097 = vst [vmem:[%s809 + $0x478] sm:$0xff] %v1096
                  %v1098 = vld [vmem:[%s808 + $0x900] sm:$0xff]
                  %1099 = vst [vmem:[%s809 + $0x480] sm:$0xff] %v1098
                  %v1100 = vld [vmem:[%s808 + $0x910] sm:$0xff]
                  %1101 = vst [vmem:[%s809 + $0x488] sm:$0xff] %v1100
                  %v1102 = vld [vmem:[%s808 + $0x920] sm:$0xff]
                  %1103 = vst [vmem:[%s809 + $0x490] sm:$0xff] %v1102
                  %v1104 = vld [vmem:[%s808 + $0x930] sm:$0xff]
                  %1105 = vst [vmem:[%s809 + $0x498] sm:$0xff] %v1104
                  %v1106 = vld [vmem:[%s808 + $0x940] sm:$0xff]
                  %1107 = vst [vmem:[%s809 + $0x4a0] sm:$0xff] %v1106
                  %v1108 = vld [vmem:[%s808 + $0x950] sm:$0xff]
                  %1109 = vst [vmem:[%s809 + $0x4a8] sm:$0xff] %v1108
                  %v1110 = vld [vmem:[%s808 + $0x960] sm:$0xff]
                  %1111 = vst [vmem:[%s809 + $0x4b0] sm:$0xff] %v1110
                  %v1112 = vld [vmem:[%s808 + $0x970] sm:$0xff]
                  %1113 = vst [vmem:[%s809 + $0x4b8] sm:$0xff] %v1112
                  %v1114 = vld [vmem:[%s808 + $0x980] sm:$0xff]
                  %1115 = vst [vmem:[%s809 + $0x4c0] sm:$0xff] %v1114
                  %v1116 = vld [vmem:[%s808 + $0x990] sm:$0xff]
                  %1117 = vst [vmem:[%s809 + $0x4c8] sm:$0xff] %v1116
                  %v1118 = vld [vmem:[%s808 + $0x9a0] sm:$0xff]
                  %1119 = vst [vmem:[%s809 + $0x4d0] sm:$0xff] %v1118
                  %v1120 = vld [vmem:[%s808 + $0x9b0] sm:$0xff]
                  %1121 = vst [vmem:[%s809 + $0x4d8] sm:$0xff] %v1120
                  %v1122 = vld [vmem:[%s808 + $0x9c0] sm:$0xff]
                  %1123 = vst [vmem:[%s809 + $0x4e0] sm:$0xff] %v1122
                  %v1124 = vld [vmem:[%s808 + $0x9d0] sm:$0xff]
                  %1125 = vst [vmem:[%s809 + $0x4e8] sm:$0xff] %v1124
                  %v1126 = vld [vmem:[%s808 + $0x9e0] sm:$0xff]
                  %1127 = vst [vmem:[%s809 + $0x4f0] sm:$0xff] %v1126
                  %v1128 = vld [vmem:[%s808 + $0x9f0] sm:$0xff]
                  %1129 = vst [vmem:[%s809 + $0x4f8] sm:$0xff] %v1128
                  %v1130 = vld [vmem:[%s808 + $0xa00] sm:$0xff]
                  %1131 = vst [vmem:[%s809 + $0x500] sm:$0xff] %v1130
                  %v1132 = vld [vmem:[%s808 + $0xa10] sm:$0xff]
                  %1133 = vst [vmem:[%s809 + $0x508] sm:$0xff] %v1132
                  %v1134 = vld [vmem:[%s808 + $0xa20] sm:$0xff]
                  %1135 = vst [vmem:[%s809 + $0x510] sm:$0xff] %v1134
                  %v1136 = vld [vmem:[%s808 + $0xa30] sm:$0xff]
                  %1137 = vst [vmem:[%s809 + $0x518] sm:$0xff] %v1136
                  %v1138 = vld [vmem:[%s808 + $0xa40] sm:$0xff]
                  %1139 = vst [vmem:[%s809 + $0x520] sm:$0xff] %v1138
                  %v1140 = vld [vmem:[%s808 + $0xa50] sm:$0xff]
                  %1141 = vst [vmem:[%s809 + $0x528] sm:$0xff] %v1140
                  %v1142 = vld [vmem:[%s808 + $0xa60] sm:$0xff]
                  %1143 = vst [vmem:[%s809 + $0x530] sm:$0xff] %v1142
                  %v1144 = vld [vmem:[%s808 + $0xa70] sm:$0xff]
                  %1145 = vst [vmem:[%s809 + $0x538] sm:$0xff] %v1144
                  %v1146 = vld [vmem:[%s808 + $0xa80] sm:$0xff]
                  %1147 = vst [vmem:[%s809 + $0x540] sm:$0xff] %v1146
                  %v1148 = vld [vmem:[%s808 + $0xa90] sm:$0xff]
                  %1149 = vst [vmem:[%s809 + $0x548] sm:$0xff] %v1148
                  %v1150 = vld [vmem:[%s808 + $0xaa0] sm:$0xff]
                  %1151 = vst [vmem:[%s809 + $0x550] sm:$0xff] %v1150
                  %v1152 = vld [vmem:[%s808 + $0xab0] sm:$0xff]
                  %1153 = vst [vmem:[%s809 + $0x558] sm:$0xff] %v1152
                  %v1154 = vld [vmem:[%s808 + $0xac0] sm:$0xff]
                  %1155 = vst [vmem:[%s809 + $0x560] sm:$0xff] %v1154
                  %v1156 = vld [vmem:[%s808 + $0xad0] sm:$0xff]
                  %1157 = vst [vmem:[%s809 + $0x568] sm:$0xff] %v1156
                  %v1158 = vld [vmem:[%s808 + $0xae0] sm:$0xff]
                  %1159 = vst [vmem:[%s809 + $0x570] sm:$0xff] %v1158
                  %v1160 = vld [vmem:[%s808 + $0xaf0] sm:$0xff]
                  %1161 = vst [vmem:[%s809 + $0x578] sm:$0xff] %v1160
                  %v1162 = vld [vmem:[%s808 + $0xb00] sm:$0xff]
                  %1163 = vst [vmem:[%s809 + $0x580] sm:$0xff] %v1162
                  %v1164 = vld [vmem:[%s808 + $0xb10] sm:$0xff]
                  %1165 = vst [vmem:[%s809 + $0x588] sm:$0xff] %v1164
                  %v1166 = vld [vmem:[%s808 + $0xb20] sm:$0xff]
                  %1167 = vst [vmem:[%s809 + $0x590] sm:$0xff] %v1166
                  %v1168 = vld [vmem:[%s808 + $0xb30] sm:$0xff]
                  %1169 = vst [vmem:[%s809 + $0x598] sm:$0xff] %v1168
                  %v1170 = vld [vmem:[%s808 + $0xb40] sm:$0xff]
                  %1171 = vst [vmem:[%s809 + $0x5a0] sm:$0xff] %v1170
                  %v1172 = vld [vmem:[%s808 + $0xb50] sm:$0xff]
                  %1173 = vst [vmem:[%s809 + $0x5a8] sm:$0xff] %v1172
                  %v1174 = vld [vmem:[%s808 + $0xb60] sm:$0xff]
                  %1175 = vst [vmem:[%s809 + $0x5b0] sm:$0xff] %v1174
                  %v1176 = vld [vmem:[%s808 + $0xb70] sm:$0xff]
                  %1177 = vst [vmem:[%s809 + $0x5b8] sm:$0xff] %v1176
                  %v1178 = vld [vmem:[%s808 + $0xb80] sm:$0xff]
                  %1179 = vst [vmem:[%s809 + $0x5c0] sm:$0xff] %v1178
                  %v1180 = vld [vmem:[%s808 + $0xb90] sm:$0xff]
                  %1181 = vst [vmem:[%s809 + $0x5c8] sm:$0xff] %v1180
                  %v1182 = vld [vmem:[%s808 + $0xba0] sm:$0xff]
                  %1183 = vst [vmem:[%s809 + $0x5d0] sm:$0xff] %v1182
                  %v1184 = vld [vmem:[%s808 + $0xbb0] sm:$0xff]
                  %1185 = vst [vmem:[%s809 + $0x5d8] sm:$0xff] %v1184
                  %v1186 = vld [vmem:[%s808 + $0xbc0] sm:$0xff]
                  %1187 = vst [vmem:[%s809 + $0x5e0] sm:$0xff] %v1186
                  %v1188 = vld [vmem:[%s808 + $0xbd0] sm:$0xff]
                  %1189 = vst [vmem:[%s809 + $0x5e8] sm:$0xff] %v1188
                  %v1190 = vld [vmem:[%s808 + $0xbe0] sm:$0xff]
                  %1191 = vst [vmem:[%s809 + $0x5f0] sm:$0xff] %v1190
                  %v1192 = vld [vmem:[%s808 + $0xbf0] sm:$0xff]
                  %1193 = vst [vmem:[%s809 + $0x5f8] sm:$0xff] %v1192
                  %v1194 = vld [vmem:[%s808 + $0xc00] sm:$0xff]
                  %1195 = vst [vmem:[%s809 + $0x600] sm:$0xff] %v1194
                  %v1196 = vld [vmem:[%s808 + $0xc10] sm:$0xff]
                  %1197 = vst [vmem:[%s809 + $0x608] sm:$0xff] %v1196
                  %v1198 = vld [vmem:[%s808 + $0xc20] sm:$0xff]
                  %1199 = vst [vmem:[%s809 + $0x610] sm:$0xff] %v1198
                  %v1200 = vld [vmem:[%s808 + $0xc30] sm:$0xff]
                  %1201 = vst [vmem:[%s809 + $0x618] sm:$0xff] %v1200
                  %v1202 = vld [vmem:[%s808 + $0xc40] sm:$0xff]
                  %1203 = vst [vmem:[%s809 + $0x620] sm:$0xff] %v1202
                  %v1204 = vld [vmem:[%s808 + $0xc50] sm:$0xff]
                  %1205 = vst [vmem:[%s809 + $0x628] sm:$0xff] %v1204
                  %v1206 = vld [vmem:[%s808 + $0xc60] sm:$0xff]
                  %1207 = vst [vmem:[%s809 + $0x630] sm:$0xff] %v1206
                  %v1208 = vld [vmem:[%s808 + $0xc70] sm:$0xff]
                  %1209 = vst [vmem:[%s809 + $0x638] sm:$0xff] %v1208
                  %v1210 = vld [vmem:[%s808 + $0xc80] sm:$0xff]
                  %1211 = vst [vmem:[%s809 + $0x640] sm:$0xff] %v1210
                  %v1212 = vld [vmem:[%s808 + $0xc90] sm:$0xff]
                  %1213 = vst [vmem:[%s809 + $0x648] sm:$0xff] %v1212
                  %v1214 = vld [vmem:[%s808 + $0xca0] sm:$0xff]
                  %1215 = vst [vmem:[%s809 + $0x650] sm:$0xff] %v1214
                  %v1216 = vld [vmem:[%s808 + $0xcb0] sm:$0xff]
                  %1217 = vst [vmem:[%s809 + $0x658] sm:$0xff] %v1216
                  %v1218 = vld [vmem:[%s808 + $0xcc0] sm:$0xff]
                  %1219 = vst [vmem:[%s809 + $0x660] sm:$0xff] %v1218
                  %v1220 = vld [vmem:[%s808 + $0xcd0] sm:$0xff]
                  %1221 = vst [vmem:[%s809 + $0x668] sm:$0xff] %v1220
                  %v1222 = vld [vmem:[%s808 + $0xce0] sm:$0xff]
                  %1223 = vst [vmem:[%s809 + $0x670] sm:$0xff] %v1222
                  %v1224 = vld [vmem:[%s808 + $0xcf0] sm:$0xff]
                  %1225 = vst [vmem:[%s809 + $0x678] sm:$0xff] %v1224
                  %v1226 = vld [vmem:[%s808 + $0xd00] sm:$0xff]
                  %1227 = vst [vmem:[%s809 + $0x680] sm:$0xff] %v1226
                  %v1228 = vld [vmem:[%s808 + $0xd10] sm:$0xff]
                  %1229 = vst [vmem:[%s809 + $0x688] sm:$0xff] %v1228
                  %v1230 = vld [vmem:[%s808 + $0xd20] sm:$0xff]
                  %1231 = vst [vmem:[%s809 + $0x690] sm:$0xff] %v1230
                  %v1232 = vld [vmem:[%s808 + $0xd30] sm:$0xff]
                  %1233 = vst [vmem:[%s809 + $0x698] sm:$0xff] %v1232
                  %v1234 = vld [vmem:[%s808 + $0xd40] sm:$0xff]
                  %1235 = vst [vmem:[%s809 + $0x6a0] sm:$0xff] %v1234
                  %v1236 = vld [vmem:[%s808 + $0xd50] sm:$0xff]
                  %1237 = vst [vmem:[%s809 + $0x6a8] sm:$0xff] %v1236
                  %v1238 = vld [vmem:[%s808 + $0xd60] sm:$0xff]
                  %1239 = vst [vmem:[%s809 + $0x6b0] sm:$0xff] %v1238
                  %v1240 = vld [vmem:[%s808 + $0xd70] sm:$0xff]
                  %1241 = vst [vmem:[%s809 + $0x6b8] sm:$0xff] %v1240
                  %v1242 = vld [vmem:[%s808 + $0xd80] sm:$0xff]
                  %1243 = vst [vmem:[%s809 + $0x6c0] sm:$0xff] %v1242
                  %v1244 = vld [vmem:[%s808 + $0xd90] sm:$0xff]
                  %1245 = vst [vmem:[%s809 + $0x6c8] sm:$0xff] %v1244
                  %v1246 = vld [vmem:[%s808 + $0xda0] sm:$0xff]
                  %1247 = vst [vmem:[%s809 + $0x6d0] sm:$0xff] %v1246
                  %v1248 = vld [vmem:[%s808 + $0xdb0] sm:$0xff]
                  %1249 = vst [vmem:[%s809 + $0x6d8] sm:$0xff] %v1248
                  %v1250 = vld [vmem:[%s808 + $0xdc0] sm:$0xff]
                  %1251 = vst [vmem:[%s809 + $0x6e0] sm:$0xff] %v1250
                  %v1252 = vld [vmem:[%s808 + $0xdd0] sm:$0xff]
                  %1253 = vst [vmem:[%s809 + $0x6e8] sm:$0xff] %v1252
                  %v1254 = vld [vmem:[%s808 + $0xde0] sm:$0xff]
                  %1255 = vst [vmem:[%s809 + $0x6f0] sm:$0xff] %v1254
                  %v1256 = vld [vmem:[%s808 + $0xdf0] sm:$0xff]
                  %1257 = vst [vmem:[%s809 + $0x6f8] sm:$0xff] %v1256
                  %v1258 = vld [vmem:[%s808 + $0xe00] sm:$0xff]
                  %1259 = vst [vmem:[%s809 + $0x700] sm:$0xff] %v1258
                  %v1260 = vld [vmem:[%s808 + $0xe10] sm:$0xff]
                  %1261 = vst [vmem:[%s809 + $0x708] sm:$0xff] %v1260
                  %v1262 = vld [vmem:[%s808 + $0xe20] sm:$0xff]
                  %1263 = vst [vmem:[%s809 + $0x710] sm:$0xff] %v1262
                  %v1264 = vld [vmem:[%s808 + $0xe30] sm:$0xff]
                  %1265 = vst [vmem:[%s809 + $0x718] sm:$0xff] %v1264
                  %v1266 = vld [vmem:[%s808 + $0xe40] sm:$0xff]
                  %1267 = vst [vmem:[%s809 + $0x720] sm:$0xff] %v1266
                  %v1268 = vld [vmem:[%s808 + $0xe50] sm:$0xff]
                  %1269 = vst [vmem:[%s809 + $0x728] sm:$0xff] %v1268
                  %v1270 = vld [vmem:[%s808 + $0xe60] sm:$0xff]
                  %1271 = vst [vmem:[%s809 + $0x730] sm:$0xff] %v1270
                  %v1272 = vld [vmem:[%s808 + $0xe70] sm:$0xff]
                  %1273 = vst [vmem:[%s809 + $0x738] sm:$0xff] %v1272
                  %v1274 = vld [vmem:[%s808 + $0xe80] sm:$0xff]
                  %1275 = vst [vmem:[%s809 + $0x740] sm:$0xff] %v1274
                  %v1276 = vld [vmem:[%s808 + $0xe90] sm:$0xff]
                  %1277 = vst [vmem:[%s809 + $0x748] sm:$0xff] %v1276
                  %v1278 = vld [vmem:[%s808 + $0xea0] sm:$0xff]
                  %1279 = vst [vmem:[%s809 + $0x750] sm:$0xff] %v1278
                  %v1280 = vld [vmem:[%s808 + $0xeb0] sm:$0xff]
                  %1281 = vst [vmem:[%s809 + $0x758] sm:$0xff] %v1280
                  %v1282 = vld [vmem:[%s808 + $0xec0] sm:$0xff]
                  %1283 = vst [vmem:[%s809 + $0x760] sm:$0xff] %v1282
                  %v1284 = vld [vmem:[%s808 + $0xed0] sm:$0xff]
                  %1285 = vst [vmem:[%s809 + $0x768] sm:$0xff] %v1284
                  %v1286 = vld [vmem:[%s808 + $0xee0] sm:$0xff]
                  %1287 = vst [vmem:[%s809 + $0x770] sm:$0xff] %v1286
                  %v1288 = vld [vmem:[%s808 + $0xef0] sm:$0xff]
                  %1289 = vst [vmem:[%s809 + $0x778] sm:$0xff] %v1288
                  %v1290 = vld [vmem:[%s808 + $0xf00] sm:$0xff]
                  %1291 = vst [vmem:[%s809 + $0x780] sm:$0xff] %v1290
                  %v1292 = vld [vmem:[%s808 + $0xf10] sm:$0xff]
                  %1293 = vst [vmem:[%s809 + $0x788] sm:$0xff] %v1292
                  %v1294 = vld [vmem:[%s808 + $0xf20] sm:$0xff]
                  %1295 = vst [vmem:[%s809 + $0x790] sm:$0xff] %v1294
                  %v1296 = vld [vmem:[%s808 + $0xf30] sm:$0xff]
                  %1297 = vst [vmem:[%s809 + $0x798] sm:$0xff] %v1296
                  %v1298 = vld [vmem:[%s808 + $0xf40] sm:$0xff]
                  %1299 = vst [vmem:[%s809 + $0x7a0] sm:$0xff] %v1298
                  %v1300 = vld [vmem:[%s808 + $0xf50] sm:$0xff]
                  %1301 = vst [vmem:[%s809 + $0x7a8] sm:$0xff] %v1300
                  %v1302 = vld [vmem:[%s808 + $0xf60] sm:$0xff]
                  %1303 = vst [vmem:[%s809 + $0x7b0] sm:$0xff] %v1302
                  %v1304 = vld [vmem:[%s808 + $0xf70] sm:$0xff]
                  %1305 = vst [vmem:[%s809 + $0x7b8] sm:$0xff] %v1304
                  %v1306 = vld [vmem:[%s808 + $0xf80] sm:$0xff]
                  %1307 = vst [vmem:[%s809 + $0x7c0] sm:$0xff] %v1306
                  %v1308 = vld [vmem:[%s808 + $0xf90] sm:$0xff]
                  %1309 = vst [vmem:[%s809 + $0x7c8] sm:$0xff] %v1308
                  %v1310 = vld [vmem:[%s808 + $0xfa0] sm:$0xff]
                  %1311 = vst [vmem:[%s809 + $0x7d0] sm:$0xff] %v1310
                  %v1312 = vld [vmem:[%s808 + $0xfb0] sm:$0xff]
                  %1313 = vst [vmem:[%s809 + $0x7d8] sm:$0xff] %v1312
                  %v1314 = vld [vmem:[%s808 + $0xfc0] sm:$0xff]
                  %1315 = vst [vmem:[%s809 + $0x7e0] sm:$0xff] %v1314
                  %v1316 = vld [vmem:[%s808 + $0xfd0] sm:$0xff]
                  %1317 = vst [vmem:[%s809 + $0x7e8] sm:$0xff] %v1316
                  %v1318 = vld [vmem:[%s808 + $0xfe0] sm:$0xff]
                  %1319 = vst [vmem:[%s809 + $0x7f0] sm:$0xff] %v1318
                  %v1320 = vld [vmem:[%s808 + $0xff0] sm:$0xff]
                  %1321 = vst [vmem:[%s809 + $0x7f8] sm:$0xff] %v1320
                  %s1322 = sadd.s32 1, %s807
                  %p1323 = scmp.ge.s32.totalorder %s1322, 1
                  %s1324 = scalar_select %p1323, 0, %s1322
                  %s1325 = smul.u32 %s1324, 8
                  %s1326 = smul.u32 %s1324, 8
                  %s1327 = scalar_lea.vmem %s270, %s1325
                  %s1328 = scalar_lea.vmem %s264, %s1326 [#allocation4]
                $region71: #{cnn_base_forward.7} parent=65 // loop_footer
                  %s806 = sadd.s32 1, %s802
                $region72: #{cnn_base_forward.7} parent=65 // loop_footer_branch
                  %801 = sbr.rel target = $region68
                $region73: #{cnn_base_forward.7} parent=65 // loop_exit
                  _
              $region66: #{cnn_base_forward.7} parent=50 // pred_fallthru
                _
              // Predicated region
              $region74: #{cnn_base_forward.7} parent=50 // pred_check
                _
              $region75: #{cnn_base_forward.7} parent=50 // pred_check_branch
                %1330 = sbr.rel target = $region77
              $region76: #{cnn_base_forward.7} parent=50 // pred_region
                %s1331 = scalar_lea.vmem %s270, 8
                %s1332 = scalar_lea.vmem %s264, 8 [#allocation4]
                loop: start=0, step=1, limit=1
                $region78: #{cnn_base_forward.7} parent=76 // loop_pre_header
                  _
                $region79: #{cnn_base_forward.7} parent=76 // loop_header
                  %s1334 = sphi 0, %s1338
                  %p1335 = scmp.ge.s32.totalorder %s1334, 1
                  %s1339 = sphi 0, %s1856
                  %s1340 = sphi %s270, %s1859
                  %s1341 = sphi %s264, %s1860
                $region80: #{cnn_base_forward.7} parent=76 // loop_header_branch
                  %1337 = sbr.rel (%p1335) target = $region84
                $region81: #{cnn_base_forward.7} parent=76 // loop_body
                  %v1342 = vld [vmem:[%s1340] sm:$0xff]
                  %1343 = vst [vmem:[%s1341] sm:$0xff] %v1342
                  %v1344 = vld [vmem:[%s1340 + $0x10] sm:$0xff]
                  %1345 = vst [vmem:[%s1341 + $0x8] sm:$0xff] %v1344
                  %v1346 = vld [vmem:[%s1340 + $0x20] sm:$0xff]
                  %1347 = vst [vmem:[%s1341 + $0x10] sm:$0xff] %v1346
                  %v1348 = vld [vmem:[%s1340 + $0x30] sm:$0xff]
                  %1349 = vst [vmem:[%s1341 + $0x18] sm:$0xff] %v1348
                  %v1350 = vld [vmem:[%s1340 + $0x40] sm:$0xff]
                  %1351 = vst [vmem:[%s1341 + $0x20] sm:$0xff] %v1350
                  %v1352 = vld [vmem:[%s1340 + $0x50] sm:$0xff]
                  %1353 = vst [vmem:[%s1341 + $0x28] sm:$0xff] %v1352
                  %v1354 = vld [vmem:[%s1340 + $0x60] sm:$0xff]
                  %1355 = vst [vmem:[%s1341 + $0x30] sm:$0xff] %v1354
                  %v1356 = vld [vmem:[%s1340 + $0x70] sm:$0xff]
                  %1357 = vst [vmem:[%s1341 + $0x38] sm:$0xff] %v1356
                  %v1358 = vld [vmem:[%s1340 + $0x80] sm:$0xff]
                  %1359 = vst [vmem:[%s1341 + $0x40] sm:$0xff] %v1358
                  %v1360 = vld [vmem:[%s1340 + $0x90] sm:$0xff]
                  %1361 = vst [vmem:[%s1341 + $0x48] sm:$0xff] %v1360
                  %v1362 = vld [vmem:[%s1340 + $0xa0] sm:$0xff]
                  %1363 = vst [vmem:[%s1341 + $0x50] sm:$0xff] %v1362
                  %v1364 = vld [vmem:[%s1340 + $0xb0] sm:$0xff]
                  %1365 = vst [vmem:[%s1341 + $0x58] sm:$0xff] %v1364
                  %v1366 = vld [vmem:[%s1340 + $0xc0] sm:$0xff]
                  %1367 = vst [vmem:[%s1341 + $0x60] sm:$0xff] %v1366
                  %v1368 = vld [vmem:[%s1340 + $0xd0] sm:$0xff]
                  %1369 = vst [vmem:[%s1341 + $0x68] sm:$0xff] %v1368
                  %v1370 = vld [vmem:[%s1340 + $0xe0] sm:$0xff]
                  %1371 = vst [vmem:[%s1341 + $0x70] sm:$0xff] %v1370
                  %v1372 = vld [vmem:[%s1340 + $0xf0] sm:$0xff]
                  %1373 = vst [vmem:[%s1341 + $0x78] sm:$0xff] %v1372
                  %v1374 = vld [vmem:[%s1340 + $0x100] sm:$0xff]
                  %1375 = vst [vmem:[%s1341 + $0x80] sm:$0xff] %v1374
                  %v1376 = vld [vmem:[%s1340 + $0x110] sm:$0xff]
                  %1377 = vst [vmem:[%s1341 + $0x88] sm:$0xff] %v1376
                  %v1378 = vld [vmem:[%s1340 + $0x120] sm:$0xff]
                  %1379 = vst [vmem:[%s1341 + $0x90] sm:$0xff] %v1378
                  %v1380 = vld [vmem:[%s1340 + $0x130] sm:$0xff]
                  %1381 = vst [vmem:[%s1341 + $0x98] sm:$0xff] %v1380
                  %v1382 = vld [vmem:[%s1340 + $0x140] sm:$0xff]
                  %1383 = vst [vmem:[%s1341 + $0xa0] sm:$0xff] %v1382
                  %v1384 = vld [vmem:[%s1340 + $0x150] sm:$0xff]
                  %1385 = vst [vmem:[%s1341 + $0xa8] sm:$0xff] %v1384
                  %v1386 = vld [vmem:[%s1340 + $0x160] sm:$0xff]
                  %1387 = vst [vmem:[%s1341 + $0xb0] sm:$0xff] %v1386
                  %v1388 = vld [vmem:[%s1340 + $0x170] sm:$0xff]
                  %1389 = vst [vmem:[%s1341 + $0xb8] sm:$0xff] %v1388
                  %v1390 = vld [vmem:[%s1340 + $0x180] sm:$0xff]
                  %1391 = vst [vmem:[%s1341 + $0xc0] sm:$0xff] %v1390
                  %v1392 = vld [vmem:[%s1340 + $0x190] sm:$0xff]
                  %1393 = vst [vmem:[%s1341 + $0xc8] sm:$0xff] %v1392
                  %v1394 = vld [vmem:[%s1340 + $0x1a0] sm:$0xff]
                  %1395 = vst [vmem:[%s1341 + $0xd0] sm:$0xff] %v1394
                  %v1396 = vld [vmem:[%s1340 + $0x1b0] sm:$0xff]
                  %1397 = vst [vmem:[%s1341 + $0xd8] sm:$0xff] %v1396
                  %v1398 = vld [vmem:[%s1340 + $0x1c0] sm:$0xff]
                  %1399 = vst [vmem:[%s1341 + $0xe0] sm:$0xff] %v1398
                  %v1400 = vld [vmem:[%s1340 + $0x1d0] sm:$0xff]
                  %1401 = vst [vmem:[%s1341 + $0xe8] sm:$0xff] %v1400
                  %v1402 = vld [vmem:[%s1340 + $0x1e0] sm:$0xff]
                  %1403 = vst [vmem:[%s1341 + $0xf0] sm:$0xff] %v1402
                  %v1404 = vld [vmem:[%s1340 + $0x1f0] sm:$0xff]
                  %1405 = vst [vmem:[%s1341 + $0xf8] sm:$0xff] %v1404
                  %v1406 = vld [vmem:[%s1340 + $0x200] sm:$0xff]
                  %1407 = vst [vmem:[%s1341 + $0x100] sm:$0xff] %v1406
                  %v1408 = vld [vmem:[%s1340 + $0x210] sm:$0xff]
                  %1409 = vst [vmem:[%s1341 + $0x108] sm:$0xff] %v1408
                  %v1410 = vld [vmem:[%s1340 + $0x220] sm:$0xff]
                  %1411 = vst [vmem:[%s1341 + $0x110] sm:$0xff] %v1410
                  %v1412 = vld [vmem:[%s1340 + $0x230] sm:$0xff]
                  %1413 = vst [vmem:[%s1341 + $0x118] sm:$0xff] %v1412
                  %v1414 = vld [vmem:[%s1340 + $0x240] sm:$0xff]
                  %1415 = vst [vmem:[%s1341 + $0x120] sm:$0xff] %v1414
                  %v1416 = vld [vmem:[%s1340 + $0x250] sm:$0xff]
                  %1417 = vst [vmem:[%s1341 + $0x128] sm:$0xff] %v1416
                  %v1418 = vld [vmem:[%s1340 + $0x260] sm:$0xff]
                  %1419 = vst [vmem:[%s1341 + $0x130] sm:$0xff] %v1418
                  %v1420 = vld [vmem:[%s1340 + $0x270] sm:$0xff]
                  %1421 = vst [vmem:[%s1341 + $0x138] sm:$0xff] %v1420
                  %v1422 = vld [vmem:[%s1340 + $0x280] sm:$0xff]
                  %1423 = vst [vmem:[%s1341 + $0x140] sm:$0xff] %v1422
                  %v1424 = vld [vmem:[%s1340 + $0x290] sm:$0xff]
                  %1425 = vst [vmem:[%s1341 + $0x148] sm:$0xff] %v1424
                  %v1426 = vld [vmem:[%s1340 + $0x2a0] sm:$0xff]
                  %1427 = vst [vmem:[%s1341 + $0x150] sm:$0xff] %v1426
                  %v1428 = vld [vmem:[%s1340 + $0x2b0] sm:$0xff]
                  %1429 = vst [vmem:[%s1341 + $0x158] sm:$0xff] %v1428
                  %v1430 = vld [vmem:[%s1340 + $0x2c0] sm:$0xff]
                  %1431 = vst [vmem:[%s1341 + $0x160] sm:$0xff] %v1430
                  %v1432 = vld [vmem:[%s1340 + $0x2d0] sm:$0xff]
                  %1433 = vst [vmem:[%s1341 + $0x168] sm:$0xff] %v1432
                  %v1434 = vld [vmem:[%s1340 + $0x2e0] sm:$0xff]
                  %1435 = vst [vmem:[%s1341 + $0x170] sm:$0xff] %v1434
                  %v1436 = vld [vmem:[%s1340 + $0x2f0] sm:$0xff]
                  %1437 = vst [vmem:[%s1341 + $0x178] sm:$0xff] %v1436
                  %v1438 = vld [vmem:[%s1340 + $0x300] sm:$0xff]
                  %1439 = vst [vmem:[%s1341 + $0x180] sm:$0xff] %v1438
                  %v1440 = vld [vmem:[%s1340 + $0x310] sm:$0xff]
                  %1441 = vst [vmem:[%s1341 + $0x188] sm:$0xff] %v1440
                  %v1442 = vld [vmem:[%s1340 + $0x320] sm:$0xff]
                  %1443 = vst [vmem:[%s1341 + $0x190] sm:$0xff] %v1442
                  %v1444 = vld [vmem:[%s1340 + $0x330] sm:$0xff]
                  %1445 = vst [vmem:[%s1341 + $0x198] sm:$0xff] %v1444
                  %v1446 = vld [vmem:[%s1340 + $0x340] sm:$0xff]
                  %1447 = vst [vmem:[%s1341 + $0x1a0] sm:$0xff] %v1446
                  %v1448 = vld [vmem:[%s1340 + $0x350] sm:$0xff]
                  %1449 = vst [vmem:[%s1341 + $0x1a8] sm:$0xff] %v1448
                  %v1450 = vld [vmem:[%s1340 + $0x360] sm:$0xff]
                  %1451 = vst [vmem:[%s1341 + $0x1b0] sm:$0xff] %v1450
                  %v1452 = vld [vmem:[%s1340 + $0x370] sm:$0xff]
                  %1453 = vst [vmem:[%s1341 + $0x1b8] sm:$0xff] %v1452
                  %v1454 = vld [vmem:[%s1340 + $0x380] sm:$0xff]
                  %1455 = vst [vmem:[%s1341 + $0x1c0] sm:$0xff] %v1454
                  %v1456 = vld [vmem:[%s1340 + $0x390] sm:$0xff]
                  %1457 = vst [vmem:[%s1341 + $0x1c8] sm:$0xff] %v1456
                  %v1458 = vld [vmem:[%s1340 + $0x3a0] sm:$0xff]
                  %1459 = vst [vmem:[%s1341 + $0x1d0] sm:$0xff] %v1458
                  %v1460 = vld [vmem:[%s1340 + $0x3b0] sm:$0xff]
                  %1461 = vst [vmem:[%s1341 + $0x1d8] sm:$0xff] %v1460
                  %v1462 = vld [vmem:[%s1340 + $0x3c0] sm:$0xff]
                  %1463 = vst [vmem:[%s1341 + $0x1e0] sm:$0xff] %v1462
                  %v1464 = vld [vmem:[%s1340 + $0x3d0] sm:$0xff]
                  %1465 = vst [vmem:[%s1341 + $0x1e8] sm:$0xff] %v1464
                  %v1466 = vld [vmem:[%s1340 + $0x3e0] sm:$0xff]
                  %1467 = vst [vmem:[%s1341 + $0x1f0] sm:$0xff] %v1466
                  %v1468 = vld [vmem:[%s1340 + $0x3f0] sm:$0xff]
                  %1469 = vst [vmem:[%s1341 + $0x1f8] sm:$0xff] %v1468
                  %v1470 = vld [vmem:[%s1340 + $0x400] sm:$0xff]
                  %1471 = vst [vmem:[%s1341 + $0x200] sm:$0xff] %v1470
                  %v1472 = vld [vmem:[%s1340 + $0x410] sm:$0xff]
                  %1473 = vst [vmem:[%s1341 + $0x208] sm:$0xff] %v1472
                  %v1474 = vld [vmem:[%s1340 + $0x420] sm:$0xff]
                  %1475 = vst [vmem:[%s1341 + $0x210] sm:$0xff] %v1474
                  %v1476 = vld [vmem:[%s1340 + $0x430] sm:$0xff]
                  %1477 = vst [vmem:[%s1341 + $0x218] sm:$0xff] %v1476
                  %v1478 = vld [vmem:[%s1340 + $0x440] sm:$0xff]
                  %1479 = vst [vmem:[%s1341 + $0x220] sm:$0xff] %v1478
                  %v1480 = vld [vmem:[%s1340 + $0x450] sm:$0xff]
                  %1481 = vst [vmem:[%s1341 + $0x228] sm:$0xff] %v1480
                  %v1482 = vld [vmem:[%s1340 + $0x460] sm:$0xff]
                  %1483 = vst [vmem:[%s1341 + $0x230] sm:$0xff] %v1482
                  %v1484 = vld [vmem:[%s1340 + $0x470] sm:$0xff]
                  %1485 = vst [vmem:[%s1341 + $0x238] sm:$0xff] %v1484
                  %v1486 = vld [vmem:[%s1340 + $0x480] sm:$0xff]
                  %1487 = vst [vmem:[%s1341 + $0x240] sm:$0xff] %v1486
                  %v1488 = vld [vmem:[%s1340 + $0x490] sm:$0xff]
                  %1489 = vst [vmem:[%s1341 + $0x248] sm:$0xff] %v1488
                  %v1490 = vld [vmem:[%s1340 + $0x4a0] sm:$0xff]
                  %1491 = vst [vmem:[%s1341 + $0x250] sm:$0xff] %v1490
                  %v1492 = vld [vmem:[%s1340 + $0x4b0] sm:$0xff]
                  %1493 = vst [vmem:[%s1341 + $0x258] sm:$0xff] %v1492
                  %v1494 = vld [vmem:[%s1340 + $0x4c0] sm:$0xff]
                  %1495 = vst [vmem:[%s1341 + $0x260] sm:$0xff] %v1494
                  %v1496 = vld [vmem:[%s1340 + $0x4d0] sm:$0xff]
                  %1497 = vst [vmem:[%s1341 + $0x268] sm:$0xff] %v1496
                  %v1498 = vld [vmem:[%s1340 + $0x4e0] sm:$0xff]
                  %1499 = vst [vmem:[%s1341 + $0x270] sm:$0xff] %v1498
                  %v1500 = vld [vmem:[%s1340 + $0x4f0] sm:$0xff]
                  %1501 = vst [vmem:[%s1341 + $0x278] sm:$0xff] %v1500
                  %v1502 = vld [vmem:[%s1340 + $0x500] sm:$0xff]
                  %1503 = vst [vmem:[%s1341 + $0x280] sm:$0xff] %v1502
                  %v1504 = vld [vmem:[%s1340 + $0x510] sm:$0xff]
                  %1505 = vst [vmem:[%s1341 + $0x288] sm:$0xff] %v1504
                  %v1506 = vld [vmem:[%s1340 + $0x520] sm:$0xff]
                  %1507 = vst [vmem:[%s1341 + $0x290] sm:$0xff] %v1506
                  %v1508 = vld [vmem:[%s1340 + $0x530] sm:$0xff]
                  %1509 = vst [vmem:[%s1341 + $0x298] sm:$0xff] %v1508
                  %v1510 = vld [vmem:[%s1340 + $0x540] sm:$0xff]
                  %1511 = vst [vmem:[%s1341 + $0x2a0] sm:$0xff] %v1510
                  %v1512 = vld [vmem:[%s1340 + $0x550] sm:$0xff]
                  %1513 = vst [vmem:[%s1341 + $0x2a8] sm:$0xff] %v1512
                  %v1514 = vld [vmem:[%s1340 + $0x560] sm:$0xff]
                  %1515 = vst [vmem:[%s1341 + $0x2b0] sm:$0xff] %v1514
                  %v1516 = vld [vmem:[%s1340 + $0x570] sm:$0xff]
                  %1517 = vst [vmem:[%s1341 + $0x2b8] sm:$0xff] %v1516
                  %v1518 = vld [vmem:[%s1340 + $0x580] sm:$0xff]
                  %1519 = vst [vmem:[%s1341 + $0x2c0] sm:$0xff] %v1518
                  %v1520 = vld [vmem:[%s1340 + $0x590] sm:$0xff]
                  %1521 = vst [vmem:[%s1341 + $0x2c8] sm:$0xff] %v1520
                  %v1522 = vld [vmem:[%s1340 + $0x5a0] sm:$0xff]
                  %1523 = vst [vmem:[%s1341 + $0x2d0] sm:$0xff] %v1522
                  %v1524 = vld [vmem:[%s1340 + $0x5b0] sm:$0xff]
                  %1525 = vst [vmem:[%s1341 + $0x2d8] sm:$0xff] %v1524
                  %v1526 = vld [vmem:[%s1340 + $0x5c0] sm:$0xff]
                  %1527 = vst [vmem:[%s1341 + $0x2e0] sm:$0xff] %v1526
                  %v1528 = vld [vmem:[%s1340 + $0x5d0] sm:$0xff]
                  %1529 = vst [vmem:[%s1341 + $0x2e8] sm:$0xff] %v1528
                  %v1530 = vld [vmem:[%s1340 + $0x5e0] sm:$0xff]
                  %1531 = vst [vmem:[%s1341 + $0x2f0] sm:$0xff] %v1530
                  %v1532 = vld [vmem:[%s1340 + $0x5f0] sm:$0xff]
                  %1533 = vst [vmem:[%s1341 + $0x2f8] sm:$0xff] %v1532
                  %v1534 = vld [vmem:[%s1340 + $0x600] sm:$0xff]
                  %1535 = vst [vmem:[%s1341 + $0x300] sm:$0xff] %v1534
                  %v1536 = vld [vmem:[%s1340 + $0x610] sm:$0xff]
                  %1537 = vst [vmem:[%s1341 + $0x308] sm:$0xff] %v1536
                  %v1538 = vld [vmem:[%s1340 + $0x620] sm:$0xff]
                  %1539 = vst [vmem:[%s1341 + $0x310] sm:$0xff] %v1538
                  %v1540 = vld [vmem:[%s1340 + $0x630] sm:$0xff]
                  %1541 = vst [vmem:[%s1341 + $0x318] sm:$0xff] %v1540
                  %v1542 = vld [vmem:[%s1340 + $0x640] sm:$0xff]
                  %1543 = vst [vmem:[%s1341 + $0x320] sm:$0xff] %v1542
                  %v1544 = vld [vmem:[%s1340 + $0x650] sm:$0xff]
                  %1545 = vst [vmem:[%s1341 + $0x328] sm:$0xff] %v1544
                  %v1546 = vld [vmem:[%s1340 + $0x660] sm:$0xff]
                  %1547 = vst [vmem:[%s1341 + $0x330] sm:$0xff] %v1546
                  %v1548 = vld [vmem:[%s1340 + $0x670] sm:$0xff]
                  %1549 = vst [vmem:[%s1341 + $0x338] sm:$0xff] %v1548
                  %v1550 = vld [vmem:[%s1340 + $0x680] sm:$0xff]
                  %1551 = vst [vmem:[%s1341 + $0x340] sm:$0xff] %v1550
                  %v1552 = vld [vmem:[%s1340 + $0x690] sm:$0xff]
                  %1553 = vst [vmem:[%s1341 + $0x348] sm:$0xff] %v1552
                  %v1554 = vld [vmem:[%s1340 + $0x6a0] sm:$0xff]
                  %1555 = vst [vmem:[%s1341 + $0x350] sm:$0xff] %v1554
                  %v1556 = vld [vmem:[%s1340 + $0x6b0] sm:$0xff]
                  %1557 = vst [vmem:[%s1341 + $0x358] sm:$0xff] %v1556
                  %v1558 = vld [vmem:[%s1340 + $0x6c0] sm:$0xff]
                  %1559 = vst [vmem:[%s1341 + $0x360] sm:$0xff] %v1558
                  %v1560 = vld [vmem:[%s1340 + $0x6d0] sm:$0xff]
                  %1561 = vst [vmem:[%s1341 + $0x368] sm:$0xff] %v1560
                  %v1562 = vld [vmem:[%s1340 + $0x6e0] sm:$0xff]
                  %1563 = vst [vmem:[%s1341 + $0x370] sm:$0xff] %v1562
                  %v1564 = vld [vmem:[%s1340 + $0x6f0] sm:$0xff]
                  %1565 = vst [vmem:[%s1341 + $0x378] sm:$0xff] %v1564
                  %v1566 = vld [vmem:[%s1340 + $0x700] sm:$0xff]
                  %1567 = vst [vmem:[%s1341 + $0x380] sm:$0xff] %v1566
                  %v1568 = vld [vmem:[%s1340 + $0x710] sm:$0xff]
                  %1569 = vst [vmem:[%s1341 + $0x388] sm:$0xff] %v1568
                  %v1570 = vld [vmem:[%s1340 + $0x720] sm:$0xff]
                  %1571 = vst [vmem:[%s1341 + $0x390] sm:$0xff] %v1570
                  %v1572 = vld [vmem:[%s1340 + $0x730] sm:$0xff]
                  %1573 = vst [vmem:[%s1341 + $0x398] sm:$0xff] %v1572
                  %v1574 = vld [vmem:[%s1340 + $0x740] sm:$0xff]
                  %1575 = vst [vmem:[%s1341 + $0x3a0] sm:$0xff] %v1574
                  %v1576 = vld [vmem:[%s1340 + $0x750] sm:$0xff]
                  %1577 = vst [vmem:[%s1341 + $0x3a8] sm:$0xff] %v1576
                  %v1578 = vld [vmem:[%s1340 + $0x760] sm:$0xff]
                  %1579 = vst [vmem:[%s1341 + $0x3b0] sm:$0xff] %v1578
                  %v1580 = vld [vmem:[%s1340 + $0x770] sm:$0xff]
                  %1581 = vst [vmem:[%s1341 + $0x3b8] sm:$0xff] %v1580
                  %v1582 = vld [vmem:[%s1340 + $0x780] sm:$0xff]
                  %1583 = vst [vmem:[%s1341 + $0x3c0] sm:$0xff] %v1582
                  %v1584 = vld [vmem:[%s1340 + $0x790] sm:$0xff]
                  %1585 = vst [vmem:[%s1341 + $0x3c8] sm:$0xff] %v1584
                  %v1586 = vld [vmem:[%s1340 + $0x7a0] sm:$0xff]
                  %1587 = vst [vmem:[%s1341 + $0x3d0] sm:$0xff] %v1586
                  %v1588 = vld [vmem:[%s1340 + $0x7b0] sm:$0xff]
                  %1589 = vst [vmem:[%s1341 + $0x3d8] sm:$0xff] %v1588
                  %v1590 = vld [vmem:[%s1340 + $0x7c0] sm:$0xff]
                  %1591 = vst [vmem:[%s1341 + $0x3e0] sm:$0xff] %v1590
                  %v1592 = vld [vmem:[%s1340 + $0x7d0] sm:$0xff]
                  %1593 = vst [vmem:[%s1341 + $0x3e8] sm:$0xff] %v1592
                  %v1594 = vld [vmem:[%s1340 + $0x7e0] sm:$0xff]
                  %1595 = vst [vmem:[%s1341 + $0x3f0] sm:$0xff] %v1594
                  %v1596 = vld [vmem:[%s1340 + $0x7f0] sm:$0xff]
                  %1597 = vst [vmem:[%s1341 + $0x3f8] sm:$0xff] %v1596
                  %v1598 = vld [vmem:[%s1340 + $0x800] sm:$0xff]
                  %1599 = vst [vmem:[%s1341 + $0x400] sm:$0xff] %v1598
                  %v1600 = vld [vmem:[%s1340 + $0x810] sm:$0xff]
                  %1601 = vst [vmem:[%s1341 + $0x408] sm:$0xff] %v1600
                  %v1602 = vld [vmem:[%s1340 + $0x820] sm:$0xff]
                  %1603 = vst [vmem:[%s1341 + $0x410] sm:$0xff] %v1602
                  %v1604 = vld [vmem:[%s1340 + $0x830] sm:$0xff]
                  %1605 = vst [vmem:[%s1341 + $0x418] sm:$0xff] %v1604
                  %v1606 = vld [vmem:[%s1340 + $0x840] sm:$0xff]
                  %1607 = vst [vmem:[%s1341 + $0x420] sm:$0xff] %v1606
                  %v1608 = vld [vmem:[%s1340 + $0x850] sm:$0xff]
                  %1609 = vst [vmem:[%s1341 + $0x428] sm:$0xff] %v1608
                  %v1610 = vld [vmem:[%s1340 + $0x860] sm:$0xff]
                  %1611 = vst [vmem:[%s1341 + $0x430] sm:$0xff] %v1610
                  %v1612 = vld [vmem:[%s1340 + $0x870] sm:$0xff]
                  %1613 = vst [vmem:[%s1341 + $0x438] sm:$0xff] %v1612
                  %v1614 = vld [vmem:[%s1340 + $0x880] sm:$0xff]
                  %1615 = vst [vmem:[%s1341 + $0x440] sm:$0xff] %v1614
                  %v1616 = vld [vmem:[%s1340 + $0x890] sm:$0xff]
                  %1617 = vst [vmem:[%s1341 + $0x448] sm:$0xff] %v1616
                  %v1618 = vld [vmem:[%s1340 + $0x8a0] sm:$0xff]
                  %1619 = vst [vmem:[%s1341 + $0x450] sm:$0xff] %v1618
                  %v1620 = vld [vmem:[%s1340 + $0x8b0] sm:$0xff]
                  %1621 = vst [vmem:[%s1341 + $0x458] sm:$0xff] %v1620
                  %v1622 = vld [vmem:[%s1340 + $0x8c0] sm:$0xff]
                  %1623 = vst [vmem:[%s1341 + $0x460] sm:$0xff] %v1622
                  %v1624 = vld [vmem:[%s1340 + $0x8d0] sm:$0xff]
                  %1625 = vst [vmem:[%s1341 + $0x468] sm:$0xff] %v1624
                  %v1626 = vld [vmem:[%s1340 + $0x8e0] sm:$0xff]
                  %1627 = vst [vmem:[%s1341 + $0x470] sm:$0xff] %v1626
                  %v1628 = vld [vmem:[%s1340 + $0x8f0] sm:$0xff]
                  %1629 = vst [vmem:[%s1341 + $0x478] sm:$0xff] %v1628
                  %v1630 = vld [vmem:[%s1340 + $0x900] sm:$0xff]
                  %1631 = vst [vmem:[%s1341 + $0x480] sm:$0xff] %v1630
                  %v1632 = vld [vmem:[%s1340 + $0x910] sm:$0xff]
                  %1633 = vst [vmem:[%s1341 + $0x488] sm:$0xff] %v1632
                  %v1634 = vld [vmem:[%s1340 + $0x920] sm:$0xff]
                  %1635 = vst [vmem:[%s1341 + $0x490] sm:$0xff] %v1634
                  %v1636 = vld [vmem:[%s1340 + $0x930] sm:$0xff]
                  %1637 = vst [vmem:[%s1341 + $0x498] sm:$0xff] %v1636
                  %v1638 = vld [vmem:[%s1340 + $0x940] sm:$0xff]
                  %1639 = vst [vmem:[%s1341 + $0x4a0] sm:$0xff] %v1638
                  %v1640 = vld [vmem:[%s1340 + $0x950] sm:$0xff]
                  %1641 = vst [vmem:[%s1341 + $0x4a8] sm:$0xff] %v1640
                  %v1642 = vld [vmem:[%s1340 + $0x960] sm:$0xff]
                  %1643 = vst [vmem:[%s1341 + $0x4b0] sm:$0xff] %v1642
                  %v1644 = vld [vmem:[%s1340 + $0x970] sm:$0xff]
                  %1645 = vst [vmem:[%s1341 + $0x4b8] sm:$0xff] %v1644
                  %v1646 = vld [vmem:[%s1340 + $0x980] sm:$0xff]
                  %1647 = vst [vmem:[%s1341 + $0x4c0] sm:$0xff] %v1646
                  %v1648 = vld [vmem:[%s1340 + $0x990] sm:$0xff]
                  %1649 = vst [vmem:[%s1341 + $0x4c8] sm:$0xff] %v1648
                  %v1650 = vld [vmem:[%s1340 + $0x9a0] sm:$0xff]
                  %1651 = vst [vmem:[%s1341 + $0x4d0] sm:$0xff] %v1650
                  %v1652 = vld [vmem:[%s1340 + $0x9b0] sm:$0xff]
                  %1653 = vst [vmem:[%s1341 + $0x4d8] sm:$0xff] %v1652
                  %v1654 = vld [vmem:[%s1340 + $0x9c0] sm:$0xff]
                  %1655 = vst [vmem:[%s1341 + $0x4e0] sm:$0xff] %v1654
                  %v1656 = vld [vmem:[%s1340 + $0x9d0] sm:$0xff]
                  %1657 = vst [vmem:[%s1341 + $0x4e8] sm:$0xff] %v1656
                  %v1658 = vld [vmem:[%s1340 + $0x9e0] sm:$0xff]
                  %1659 = vst [vmem:[%s1341 + $0x4f0] sm:$0xff] %v1658
                  %v1660 = vld [vmem:[%s1340 + $0x9f0] sm:$0xff]
                  %1661 = vst [vmem:[%s1341 + $0x4f8] sm:$0xff] %v1660
                  %v1662 = vld [vmem:[%s1340 + $0xa00] sm:$0xff]
                  %1663 = vst [vmem:[%s1341 + $0x500] sm:$0xff] %v1662
                  %v1664 = vld [vmem:[%s1340 + $0xa10] sm:$0xff]
                  %1665 = vst [vmem:[%s1341 + $0x508] sm:$0xff] %v1664
                  %v1666 = vld [vmem:[%s1340 + $0xa20] sm:$0xff]
                  %1667 = vst [vmem:[%s1341 + $0x510] sm:$0xff] %v1666
                  %v1668 = vld [vmem:[%s1340 + $0xa30] sm:$0xff]
                  %1669 = vst [vmem:[%s1341 + $0x518] sm:$0xff] %v1668
                  %v1670 = vld [vmem:[%s1340 + $0xa40] sm:$0xff]
                  %1671 = vst [vmem:[%s1341 + $0x520] sm:$0xff] %v1670
                  %v1672 = vld [vmem:[%s1340 + $0xa50] sm:$0xff]
                  %1673 = vst [vmem:[%s1341 + $0x528] sm:$0xff] %v1672
                  %v1674 = vld [vmem:[%s1340 + $0xa60] sm:$0xff]
                  %1675 = vst [vmem:[%s1341 + $0x530] sm:$0xff] %v1674
                  %v1676 = vld [vmem:[%s1340 + $0xa70] sm:$0xff]
                  %1677 = vst [vmem:[%s1341 + $0x538] sm:$0xff] %v1676
                  %v1678 = vld [vmem:[%s1340 + $0xa80] sm:$0xff]
                  %1679 = vst [vmem:[%s1341 + $0x540] sm:$0xff] %v1678
                  %v1680 = vld [vmem:[%s1340 + $0xa90] sm:$0xff]
                  %1681 = vst [vmem:[%s1341 + $0x548] sm:$0xff] %v1680
                  %v1682 = vld [vmem:[%s1340 + $0xaa0] sm:$0xff]
                  %1683 = vst [vmem:[%s1341 + $0x550] sm:$0xff] %v1682
                  %v1684 = vld [vmem:[%s1340 + $0xab0] sm:$0xff]
                  %1685 = vst [vmem:[%s1341 + $0x558] sm:$0xff] %v1684
                  %v1686 = vld [vmem:[%s1340 + $0xac0] sm:$0xff]
                  %1687 = vst [vmem:[%s1341 + $0x560] sm:$0xff] %v1686
                  %v1688 = vld [vmem:[%s1340 + $0xad0] sm:$0xff]
                  %1689 = vst [vmem:[%s1341 + $0x568] sm:$0xff] %v1688
                  %v1690 = vld [vmem:[%s1340 + $0xae0] sm:$0xff]
                  %1691 = vst [vmem:[%s1341 + $0x570] sm:$0xff] %v1690
                  %v1692 = vld [vmem:[%s1340 + $0xaf0] sm:$0xff]
                  %1693 = vst [vmem:[%s1341 + $0x578] sm:$0xff] %v1692
                  %v1694 = vld [vmem:[%s1340 + $0xb00] sm:$0xff]
                  %1695 = vst [vmem:[%s1341 + $0x580] sm:$0xff] %v1694
                  %v1696 = vld [vmem:[%s1340 + $0xb10] sm:$0xff]
                  %1697 = vst [vmem:[%s1341 + $0x588] sm:$0xff] %v1696
                  %v1698 = vld [vmem:[%s1340 + $0xb20] sm:$0xff]
                  %1699 = vst [vmem:[%s1341 + $0x590] sm:$0xff] %v1698
                  %v1700 = vld [vmem:[%s1340 + $0xb30] sm:$0xff]
                  %1701 = vst [vmem:[%s1341 + $0x598] sm:$0xff] %v1700
                  %v1702 = vld [vmem:[%s1340 + $0xb40] sm:$0xff]
                  %1703 = vst [vmem:[%s1341 + $0x5a0] sm:$0xff] %v1702
                  %v1704 = vld [vmem:[%s1340 + $0xb50] sm:$0xff]
                  %1705 = vst [vmem:[%s1341 + $0x5a8] sm:$0xff] %v1704
                  %v1706 = vld [vmem:[%s1340 + $0xb60] sm:$0xff]
                  %1707 = vst [vmem:[%s1341 + $0x5b0] sm:$0xff] %v1706
                  %v1708 = vld [vmem:[%s1340 + $0xb70] sm:$0xff]
                  %1709 = vst [vmem:[%s1341 + $0x5b8] sm:$0xff] %v1708
                  %v1710 = vld [vmem:[%s1340 + $0xb80] sm:$0xff]
                  %1711 = vst [vmem:[%s1341 + $0x5c0] sm:$0xff] %v1710
                  %v1712 = vld [vmem:[%s1340 + $0xb90] sm:$0xff]
                  %1713 = vst [vmem:[%s1341 + $0x5c8] sm:$0xff] %v1712
                  %v1714 = vld [vmem:[%s1340 + $0xba0] sm:$0xff]
                  %1715 = vst [vmem:[%s1341 + $0x5d0] sm:$0xff] %v1714
                  %v1716 = vld [vmem:[%s1340 + $0xbb0] sm:$0xff]
                  %1717 = vst [vmem:[%s1341 + $0x5d8] sm:$0xff] %v1716
                  %v1718 = vld [vmem:[%s1340 + $0xbc0] sm:$0xff]
                  %1719 = vst [vmem:[%s1341 + $0x5e0] sm:$0xff] %v1718
                  %v1720 = vld [vmem:[%s1340 + $0xbd0] sm:$0xff]
                  %1721 = vst [vmem:[%s1341 + $0x5e8] sm:$0xff] %v1720
                  %v1722 = vld [vmem:[%s1340 + $0xbe0] sm:$0xff]
                  %1723 = vst [vmem:[%s1341 + $0x5f0] sm:$0xff] %v1722
                  %v1724 = vld [vmem:[%s1340 + $0xbf0] sm:$0xff]
                  %1725 = vst [vmem:[%s1341 + $0x5f8] sm:$0xff] %v1724
                  %v1726 = vld [vmem:[%s1340 + $0xc00] sm:$0xff]
                  %1727 = vst [vmem:[%s1341 + $0x600] sm:$0xff] %v1726
                  %v1728 = vld [vmem:[%s1340 + $0xc10] sm:$0xff]
                  %1729 = vst [vmem:[%s1341 + $0x608] sm:$0xff] %v1728
                  %v1730 = vld [vmem:[%s1340 + $0xc20] sm:$0xff]
                  %1731 = vst [vmem:[%s1341 + $0x610] sm:$0xff] %v1730
                  %v1732 = vld [vmem:[%s1340 + $0xc30] sm:$0xff]
                  %1733 = vst [vmem:[%s1341 + $0x618] sm:$0xff] %v1732
                  %v1734 = vld [vmem:[%s1340 + $0xc40] sm:$0xff]
                  %1735 = vst [vmem:[%s1341 + $0x620] sm:$0xff] %v1734
                  %v1736 = vld [vmem:[%s1340 + $0xc50] sm:$0xff]
                  %1737 = vst [vmem:[%s1341 + $0x628] sm:$0xff] %v1736
                  %v1738 = vld [vmem:[%s1340 + $0xc60] sm:$0xff]
                  %1739 = vst [vmem:[%s1341 + $0x630] sm:$0xff] %v1738
                  %v1740 = vld [vmem:[%s1340 + $0xc70] sm:$0xff]
                  %1741 = vst [vmem:[%s1341 + $0x638] sm:$0xff] %v1740
                  %v1742 = vld [vmem:[%s1340 + $0xc80] sm:$0xff]
                  %1743 = vst [vmem:[%s1341 + $0x640] sm:$0xff] %v1742
                  %v1744 = vld [vmem:[%s1340 + $0xc90] sm:$0xff]
                  %1745 = vst [vmem:[%s1341 + $0x648] sm:$0xff] %v1744
                  %v1746 = vld [vmem:[%s1340 + $0xca0] sm:$0xff]
                  %1747 = vst [vmem:[%s1341 + $0x650] sm:$0xff] %v1746
                  %v1748 = vld [vmem:[%s1340 + $0xcb0] sm:$0xff]
                  %1749 = vst [vmem:[%s1341 + $0x658] sm:$0xff] %v1748
                  %v1750 = vld [vmem:[%s1340 + $0xcc0] sm:$0xff]
                  %1751 = vst [vmem:[%s1341 + $0x660] sm:$0xff] %v1750
                  %v1752 = vld [vmem:[%s1340 + $0xcd0] sm:$0xff]
                  %1753 = vst [vmem:[%s1341 + $0x668] sm:$0xff] %v1752
                  %v1754 = vld [vmem:[%s1340 + $0xce0] sm:$0xff]
                  %1755 = vst [vmem:[%s1341 + $0x670] sm:$0xff] %v1754
                  %v1756 = vld [vmem:[%s1340 + $0xcf0] sm:$0xff]
                  %1757 = vst [vmem:[%s1341 + $0x678] sm:$0xff] %v1756
                  %v1758 = vld [vmem:[%s1340 + $0xd00] sm:$0xff]
                  %1759 = vst [vmem:[%s1341 + $0x680] sm:$0xff] %v1758
                  %v1760 = vld [vmem:[%s1340 + $0xd10] sm:$0xff]
                  %1761 = vst [vmem:[%s1341 + $0x688] sm:$0xff] %v1760
                  %v1762 = vld [vmem:[%s1340 + $0xd20] sm:$0xff]
                  %1763 = vst [vmem:[%s1341 + $0x690] sm:$0xff] %v1762
                  %v1764 = vld [vmem:[%s1340 + $0xd30] sm:$0xff]
                  %1765 = vst [vmem:[%s1341 + $0x698] sm:$0xff] %v1764
                  %v1766 = vld [vmem:[%s1340 + $0xd40] sm:$0xff]
                  %1767 = vst [vmem:[%s1341 + $0x6a0] sm:$0xff] %v1766
                  %v1768 = vld [vmem:[%s1340 + $0xd50] sm:$0xff]
                  %1769 = vst [vmem:[%s1341 + $0x6a8] sm:$0xff] %v1768
                  %v1770 = vld [vmem:[%s1340 + $0xd60] sm:$0xff]
                  %1771 = vst [vmem:[%s1341 + $0x6b0] sm:$0xff] %v1770
                  %v1772 = vld [vmem:[%s1340 + $0xd70] sm:$0xff]
                  %1773 = vst [vmem:[%s1341 + $0x6b8] sm:$0xff] %v1772
                  %v1774 = vld [vmem:[%s1340 + $0xd80] sm:$0xff]
                  %1775 = vst [vmem:[%s1341 + $0x6c0] sm:$0xff] %v1774
                  %v1776 = vld [vmem:[%s1340 + $0xd90] sm:$0xff]
                  %1777 = vst [vmem:[%s1341 + $0x6c8] sm:$0xff] %v1776
                  %v1778 = vld [vmem:[%s1340 + $0xda0] sm:$0xff]
                  %1779 = vst [vmem:[%s1341 + $0x6d0] sm:$0xff] %v1778
                  %v1780 = vld [vmem:[%s1340 + $0xdb0] sm:$0xff]
                  %1781 = vst [vmem:[%s1341 + $0x6d8] sm:$0xff] %v1780
                  %v1782 = vld [vmem:[%s1340 + $0xdc0] sm:$0xff]
                  %1783 = vst [vmem:[%s1341 + $0x6e0] sm:$0xff] %v1782
                  %v1784 = vld [vmem:[%s1340 + $0xdd0] sm:$0xff]
                  %1785 = vst [vmem:[%s1341 + $0x6e8] sm:$0xff] %v1784
                  %v1786 = vld [vmem:[%s1340 + $0xde0] sm:$0xff]
                  %1787 = vst [vmem:[%s1341 + $0x6f0] sm:$0xff] %v1786
                  %v1788 = vld [vmem:[%s1340 + $0xdf0] sm:$0xff]
                  %1789 = vst [vmem:[%s1341 + $0x6f8] sm:$0xff] %v1788
                  %v1790 = vld [vmem:[%s1340 + $0xe00] sm:$0xff]
                  %1791 = vst [vmem:[%s1341 + $0x700] sm:$0xff] %v1790
                  %v1792 = vld [vmem:[%s1340 + $0xe10] sm:$0xff]
                  %1793 = vst [vmem:[%s1341 + $0x708] sm:$0xff] %v1792
                  %v1794 = vld [vmem:[%s1340 + $0xe20] sm:$0xff]
                  %1795 = vst [vmem:[%s1341 + $0x710] sm:$0xff] %v1794
                  %v1796 = vld [vmem:[%s1340 + $0xe30] sm:$0xff]
                  %1797 = vst [vmem:[%s1341 + $0x718] sm:$0xff] %v1796
                  %v1798 = vld [vmem:[%s1340 + $0xe40] sm:$0xff]
                  %1799 = vst [vmem:[%s1341 + $0x720] sm:$0xff] %v1798
                  %v1800 = vld [vmem:[%s1340 + $0xe50] sm:$0xff]
                  %1801 = vst [vmem:[%s1341 + $0x728] sm:$0xff] %v1800
                  %v1802 = vld [vmem:[%s1340 + $0xe60] sm:$0xff]
                  %1803 = vst [vmem:[%s1341 + $0x730] sm:$0xff] %v1802
                  %v1804 = vld [vmem:[%s1340 + $0xe70] sm:$0xff]
                  %1805 = vst [vmem:[%s1341 + $0x738] sm:$0xff] %v1804
                  %v1806 = vld [vmem:[%s1340 + $0xe80] sm:$0xff]
                  %1807 = vst [vmem:[%s1341 + $0x740] sm:$0xff] %v1806
                  %v1808 = vld [vmem:[%s1340 + $0xe90] sm:$0xff]
                  %1809 = vst [vmem:[%s1341 + $0x748] sm:$0xff] %v1808
                  %v1810 = vld [vmem:[%s1340 + $0xea0] sm:$0xff]
                  %1811 = vst [vmem:[%s1341 + $0x750] sm:$0xff] %v1810
                  %v1812 = vld [vmem:[%s1340 + $0xeb0] sm:$0xff]
                  %1813 = vst [vmem:[%s1341 + $0x758] sm:$0xff] %v1812
                  %v1814 = vld [vmem:[%s1340 + $0xec0] sm:$0xff]
                  %1815 = vst [vmem:[%s1341 + $0x760] sm:$0xff] %v1814
                  %v1816 = vld [vmem:[%s1340 + $0xed0] sm:$0xff]
                  %1817 = vst [vmem:[%s1341 + $0x768] sm:$0xff] %v1816
                  %v1818 = vld [vmem:[%s1340 + $0xee0] sm:$0xff]
                  %1819 = vst [vmem:[%s1341 + $0x770] sm:$0xff] %v1818
                  %v1820 = vld [vmem:[%s1340 + $0xef0] sm:$0xff]
                  %1821 = vst [vmem:[%s1341 + $0x778] sm:$0xff] %v1820
                  %v1822 = vld [vmem:[%s1340 + $0xf00] sm:$0xff]
                  %1823 = vst [vmem:[%s1341 + $0x780] sm:$0xff] %v1822
                  %v1824 = vld [vmem:[%s1340 + $0xf10] sm:$0xff]
                  %1825 = vst [vmem:[%s1341 + $0x788] sm:$0xff] %v1824
                  %v1826 = vld [vmem:[%s1340 + $0xf20] sm:$0xff]
                  %1827 = vst [vmem:[%s1341 + $0x790] sm:$0xff] %v1826
                  %v1828 = vld [vmem:[%s1340 + $0xf30] sm:$0xff]
                  %1829 = vst [vmem:[%s1341 + $0x798] sm:$0xff] %v1828
                  %v1830 = vld [vmem:[%s1340 + $0xf40] sm:$0xff]
                  %1831 = vst [vmem:[%s1341 + $0x7a0] sm:$0xff] %v1830
                  %v1832 = vld [vmem:[%s1340 + $0xf50] sm:$0xff]
                  %1833 = vst [vmem:[%s1341 + $0x7a8] sm:$0xff] %v1832
                  %v1834 = vld [vmem:[%s1340 + $0xf60] sm:$0xff]
                  %1835 = vst [vmem:[%s1341 + $0x7b0] sm:$0xff] %v1834
                  %v1836 = vld [vmem:[%s1340 + $0xf70] sm:$0xff]
                  %1837 = vst [vmem:[%s1341 + $0x7b8] sm:$0xff] %v1836
                  %v1838 = vld [vmem:[%s1340 + $0xf80] sm:$0xff]
                  %1839 = vst [vmem:[%s1341 + $0x7c0] sm:$0xff] %v1838
                  %v1840 = vld [vmem:[%s1340 + $0xf90] sm:$0xff]
                  %1841 = vst [vmem:[%s1341 + $0x7c8] sm:$0xff] %v1840
                  %v1842 = vld [vmem:[%s1340 + $0xfa0] sm:$0xff]
                  %1843 = vst [vmem:[%s1341 + $0x7d0] sm:$0xff] %v1842
                  %v1844 = vld [vmem:[%s1340 + $0xfb0] sm:$0xff]
                  %1845 = vst [vmem:[%s1341 + $0x7d8] sm:$0xff] %v1844
                  %v1846 = vld [vmem:[%s1340 + $0xfc0] sm:$0xff]
                  %1847 = vst [vmem:[%s1341 + $0x7e0] sm:$0xff] %v1846
                  %v1848 = vld [vmem:[%s1340 + $0xfd0] sm:$0xff]
                  %1849 = vst [vmem:[%s1341 + $0x7e8] sm:$0xff] %v1848
                  %v1850 = vld [vmem:[%s1340 + $0xfe0] sm:$0xff]
                  %1851 = vst [vmem:[%s1341 + $0x7f0] sm:$0xff] %v1850
                  %v1852 = vld [vmem:[%s1340 + $0xff0] sm:$0xff]
                  %1853 = vst [vmem:[%s1341 + $0x7f8] sm:$0xff] %v1852
                  %s1854 = sadd.s32 1, %s1339
                  %p1855 = scmp.ge.s32.totalorder %s1854, 1
                  %s1856 = scalar_select %p1855, 0, %s1854
                  %s1857 = smul.u32 %s1856, 8
                  %s1858 = smul.u32 %s1856, 8
                  %s1859 = scalar_lea.vmem %s270, %s1857
                  %s1860 = scalar_lea.vmem %s264, %s1858 [#allocation4]
                $region82: #{cnn_base_forward.7} parent=76 // loop_footer
                  %s1338 = sadd.s32 1, %s1334
                $region83: #{cnn_base_forward.7} parent=76 // loop_footer_branch
                  %1333 = sbr.rel target = $region79
                $region84: #{cnn_base_forward.7} parent=76 // loop_exit
                  _
                %s1862 = ssub.s32 1, 1
                loop: start=0, step=1, limit=1
                $region85: #{cnn_base_forward.7} parent=76 // loop_pre_header
                  _
                $region86: #{cnn_base_forward.7} parent=76 // loop_header
                  %s1864 = sphi 0, %s1868
                  %p1865 = scmp.ge.s32.totalorder %s1864, 1
                  %s1869 = sphi %s1331, %s1331
                  %s1870 = sphi %s1332, %s1332
                $region87: #{cnn_base_forward.7} parent=76 // loop_header_branch
                  %1867 = sbr.rel (%p1865) target = $region91
                $region88: #{cnn_base_forward.7} parent=76 // loop_body
                  %v1871 = vld [vmem:[%s1869] sm:%s1862]
                  %1872 = vst [vmem:[%s1870] sm:%s1862] %v1871
                  %v1873 = vld [vmem:[%s1869 + $0x10] sm:%s1862]
                  %1874 = vst [vmem:[%s1870 + $0x8] sm:%s1862] %v1873
                  %v1875 = vld [vmem:[%s1869 + $0x20] sm:%s1862]
                  %1876 = vst [vmem:[%s1870 + $0x10] sm:%s1862] %v1875
                  %v1877 = vld [vmem:[%s1869 + $0x30] sm:%s1862]
                  %1878 = vst [vmem:[%s1870 + $0x18] sm:%s1862] %v1877
                  %v1879 = vld [vmem:[%s1869 + $0x40] sm:%s1862]
                  %1880 = vst [vmem:[%s1870 + $0x20] sm:%s1862] %v1879
                  %v1881 = vld [vmem:[%s1869 + $0x50] sm:%s1862]
                  %1882 = vst [vmem:[%s1870 + $0x28] sm:%s1862] %v1881
                  %v1883 = vld [vmem:[%s1869 + $0x60] sm:%s1862]
                  %1884 = vst [vmem:[%s1870 + $0x30] sm:%s1862] %v1883
                  %v1885 = vld [vmem:[%s1869 + $0x70] sm:%s1862]
                  %1886 = vst [vmem:[%s1870 + $0x38] sm:%s1862] %v1885
                  %v1887 = vld [vmem:[%s1869 + $0x80] sm:%s1862]
                  %1888 = vst [vmem:[%s1870 + $0x40] sm:%s1862] %v1887
                  %v1889 = vld [vmem:[%s1869 + $0x90] sm:%s1862]
                  %1890 = vst [vmem:[%s1870 + $0x48] sm:%s1862] %v1889
                  %v1891 = vld [vmem:[%s1869 + $0xa0] sm:%s1862]
                  %1892 = vst [vmem:[%s1870 + $0x50] sm:%s1862] %v1891
                  %v1893 = vld [vmem:[%s1869 + $0xb0] sm:%s1862]
                  %1894 = vst [vmem:[%s1870 + $0x58] sm:%s1862] %v1893
                  %v1895 = vld [vmem:[%s1869 + $0xc0] sm:%s1862]
                  %1896 = vst [vmem:[%s1870 + $0x60] sm:%s1862] %v1895
                  %v1897 = vld [vmem:[%s1869 + $0xd0] sm:%s1862]
                  %1898 = vst [vmem:[%s1870 + $0x68] sm:%s1862] %v1897
                  %v1899 = vld [vmem:[%s1869 + $0xe0] sm:%s1862]
                  %1900 = vst [vmem:[%s1870 + $0x70] sm:%s1862] %v1899
                  %v1901 = vld [vmem:[%s1869 + $0xf0] sm:%s1862]
                  %1902 = vst [vmem:[%s1870 + $0x78] sm:%s1862] %v1901
                  %v1903 = vld [vmem:[%s1869 + $0x100] sm:%s1862]
                  %1904 = vst [vmem:[%s1870 + $0x80] sm:%s1862] %v1903
                  %v1905 = vld [vmem:[%s1869 + $0x110] sm:%s1862]
                  %1906 = vst [vmem:[%s1870 + $0x88] sm:%s1862] %v1905
                  %v1907 = vld [vmem:[%s1869 + $0x120] sm:%s1862]
                  %1908 = vst [vmem:[%s1870 + $0x90] sm:%s1862] %v1907
                  %v1909 = vld [vmem:[%s1869 + $0x130] sm:%s1862]
                  %1910 = vst [vmem:[%s1870 + $0x98] sm:%s1862] %v1909
                  %v1911 = vld [vmem:[%s1869 + $0x140] sm:%s1862]
                  %1912 = vst [vmem:[%s1870 + $0xa0] sm:%s1862] %v1911
                  %v1913 = vld [vmem:[%s1869 + $0x150] sm:%s1862]
                  %1914 = vst [vmem:[%s1870 + $0xa8] sm:%s1862] %v1913
                  %v1915 = vld [vmem:[%s1869 + $0x160] sm:%s1862]
                  %1916 = vst [vmem:[%s1870 + $0xb0] sm:%s1862] %v1915
                  %v1917 = vld [vmem:[%s1869 + $0x170] sm:%s1862]
                  %1918 = vst [vmem:[%s1870 + $0xb8] sm:%s1862] %v1917
                  %v1919 = vld [vmem:[%s1869 + $0x180] sm:%s1862]
                  %1920 = vst [vmem:[%s1870 + $0xc0] sm:%s1862] %v1919
                  %v1921 = vld [vmem:[%s1869 + $0x190] sm:%s1862]
                  %1922 = vst [vmem:[%s1870 + $0xc8] sm:%s1862] %v1921
                  %v1923 = vld [vmem:[%s1869 + $0x1a0] sm:%s1862]
                  %1924 = vst [vmem:[%s1870 + $0xd0] sm:%s1862] %v1923
                  %v1925 = vld [vmem:[%s1869 + $0x1b0] sm:%s1862]
                  %1926 = vst [vmem:[%s1870 + $0xd8] sm:%s1862] %v1925
                  %v1927 = vld [vmem:[%s1869 + $0x1c0] sm:%s1862]
                  %1928 = vst [vmem:[%s1870 + $0xe0] sm:%s1862] %v1927
                  %v1929 = vld [vmem:[%s1869 + $0x1d0] sm:%s1862]
                  %1930 = vst [vmem:[%s1870 + $0xe8] sm:%s1862] %v1929
                  %v1931 = vld [vmem:[%s1869 + $0x1e0] sm:%s1862]
                  %1932 = vst [vmem:[%s1870 + $0xf0] sm:%s1862] %v1931
                  %v1933 = vld [vmem:[%s1869 + $0x1f0] sm:%s1862]
                  %1934 = vst [vmem:[%s1870 + $0xf8] sm:%s1862] %v1933
                  %v1935 = vld [vmem:[%s1869 + $0x200] sm:%s1862]
                  %1936 = vst [vmem:[%s1870 + $0x100] sm:%s1862] %v1935
                  %v1937 = vld [vmem:[%s1869 + $0x210] sm:%s1862]
                  %1938 = vst [vmem:[%s1870 + $0x108] sm:%s1862] %v1937
                  %v1939 = vld [vmem:[%s1869 + $0x220] sm:%s1862]
                  %1940 = vst [vmem:[%s1870 + $0x110] sm:%s1862] %v1939
                  %v1941 = vld [vmem:[%s1869 + $0x230] sm:%s1862]
                  %1942 = vst [vmem:[%s1870 + $0x118] sm:%s1862] %v1941
                  %v1943 = vld [vmem:[%s1869 + $0x240] sm:%s1862]
                  %1944 = vst [vmem:[%s1870 + $0x120] sm:%s1862] %v1943
                  %v1945 = vld [vmem:[%s1869 + $0x250] sm:%s1862]
                  %1946 = vst [vmem:[%s1870 + $0x128] sm:%s1862] %v1945
                  %v1947 = vld [vmem:[%s1869 + $0x260] sm:%s1862]
                  %1948 = vst [vmem:[%s1870 + $0x130] sm:%s1862] %v1947
                  %v1949 = vld [vmem:[%s1869 + $0x270] sm:%s1862]
                  %1950 = vst [vmem:[%s1870 + $0x138] sm:%s1862] %v1949
                  %v1951 = vld [vmem:[%s1869 + $0x280] sm:%s1862]
                  %1952 = vst [vmem:[%s1870 + $0x140] sm:%s1862] %v1951
                  %v1953 = vld [vmem:[%s1869 + $0x290] sm:%s1862]
                  %1954 = vst [vmem:[%s1870 + $0x148] sm:%s1862] %v1953
                  %v1955 = vld [vmem:[%s1869 + $0x2a0] sm:%s1862]
                  %1956 = vst [vmem:[%s1870 + $0x150] sm:%s1862] %v1955
                  %v1957 = vld [vmem:[%s1869 + $0x2b0] sm:%s1862]
                  %1958 = vst [vmem:[%s1870 + $0x158] sm:%s1862] %v1957
                  %v1959 = vld [vmem:[%s1869 + $0x2c0] sm:%s1862]
                  %1960 = vst [vmem:[%s1870 + $0x160] sm:%s1862] %v1959
                  %v1961 = vld [vmem:[%s1869 + $0x2d0] sm:%s1862]
                  %1962 = vst [vmem:[%s1870 + $0x168] sm:%s1862] %v1961
                  %v1963 = vld [vmem:[%s1869 + $0x2e0] sm:%s1862]
                  %1964 = vst [vmem:[%s1870 + $0x170] sm:%s1862] %v1963
                  %v1965 = vld [vmem:[%s1869 + $0x2f0] sm:%s1862]
                  %1966 = vst [vmem:[%s1870 + $0x178] sm:%s1862] %v1965
                  %v1967 = vld [vmem:[%s1869 + $0x300] sm:%s1862]
                  %1968 = vst [vmem:[%s1870 + $0x180] sm:%s1862] %v1967
                  %v1969 = vld [vmem:[%s1869 + $0x310] sm:%s1862]
                  %1970 = vst [vmem:[%s1870 + $0x188] sm:%s1862] %v1969
                  %v1971 = vld [vmem:[%s1869 + $0x320] sm:%s1862]
                  %1972 = vst [vmem:[%s1870 + $0x190] sm:%s1862] %v1971
                  %v1973 = vld [vmem:[%s1869 + $0x330] sm:%s1862]
                  %1974 = vst [vmem:[%s1870 + $0x198] sm:%s1862] %v1973
                  %v1975 = vld [vmem:[%s1869 + $0x340] sm:%s1862]
                  %1976 = vst [vmem:[%s1870 + $0x1a0] sm:%s1862] %v1975
                  %v1977 = vld [vmem:[%s1869 + $0x350] sm:%s1862]
                  %1978 = vst [vmem:[%s1870 + $0x1a8] sm:%s1862] %v1977
                  %v1979 = vld [vmem:[%s1869 + $0x360] sm:%s1862]
                  %1980 = vst [vmem:[%s1870 + $0x1b0] sm:%s1862] %v1979
                  %v1981 = vld [vmem:[%s1869 + $0x370] sm:%s1862]
                  %1982 = vst [vmem:[%s1870 + $0x1b8] sm:%s1862] %v1981
                  %v1983 = vld [vmem:[%s1869 + $0x380] sm:%s1862]
                  %1984 = vst [vmem:[%s1870 + $0x1c0] sm:%s1862] %v1983
                  %v1985 = vld [vmem:[%s1869 + $0x390] sm:%s1862]
                  %1986 = vst [vmem:[%s1870 + $0x1c8] sm:%s1862] %v1985
                  %v1987 = vld [vmem:[%s1869 + $0x3a0] sm:%s1862]
                  %1988 = vst [vmem:[%s1870 + $0x1d0] sm:%s1862] %v1987
                  %v1989 = vld [vmem:[%s1869 + $0x3b0] sm:%s1862]
                  %1990 = vst [vmem:[%s1870 + $0x1d8] sm:%s1862] %v1989
                  %v1991 = vld [vmem:[%s1869 + $0x3c0] sm:%s1862]
                  %1992 = vst [vmem:[%s1870 + $0x1e0] sm:%s1862] %v1991
                  %v1993 = vld [vmem:[%s1869 + $0x3d0] sm:%s1862]
                  %1994 = vst [vmem:[%s1870 + $0x1e8] sm:%s1862] %v1993
                  %v1995 = vld [vmem:[%s1869 + $0x3e0] sm:%s1862]
                  %1996 = vst [vmem:[%s1870 + $0x1f0] sm:%s1862] %v1995
                  %v1997 = vld [vmem:[%s1869 + $0x3f0] sm:%s1862]
                  %1998 = vst [vmem:[%s1870 + $0x1f8] sm:%s1862] %v1997
                  %v1999 = vld [vmem:[%s1869 + $0x400] sm:%s1862]
                  %2000 = vst [vmem:[%s1870 + $0x200] sm:%s1862] %v1999
                  %v2001 = vld [vmem:[%s1869 + $0x410] sm:%s1862]
                  %2002 = vst [vmem:[%s1870 + $0x208] sm:%s1862] %v2001
                  %v2003 = vld [vmem:[%s1869 + $0x420] sm:%s1862]
                  %2004 = vst [vmem:[%s1870 + $0x210] sm:%s1862] %v2003
                  %v2005 = vld [vmem:[%s1869 + $0x430] sm:%s1862]
                  %2006 = vst [vmem:[%s1870 + $0x218] sm:%s1862] %v2005
                  %v2007 = vld [vmem:[%s1869 + $0x440] sm:%s1862]
                  %2008 = vst [vmem:[%s1870 + $0x220] sm:%s1862] %v2007
                  %v2009 = vld [vmem:[%s1869 + $0x450] sm:%s1862]
                  %2010 = vst [vmem:[%s1870 + $0x228] sm:%s1862] %v2009
                  %v2011 = vld [vmem:[%s1869 + $0x460] sm:%s1862]
                  %2012 = vst [vmem:[%s1870 + $0x230] sm:%s1862] %v2011
                  %v2013 = vld [vmem:[%s1869 + $0x470] sm:%s1862]
                  %2014 = vst [vmem:[%s1870 + $0x238] sm:%s1862] %v2013
                  %v2015 = vld [vmem:[%s1869 + $0x480] sm:%s1862]
                  %2016 = vst [vmem:[%s1870 + $0x240] sm:%s1862] %v2015
                  %v2017 = vld [vmem:[%s1869 + $0x490] sm:%s1862]
                  %2018 = vst [vmem:[%s1870 + $0x248] sm:%s1862] %v2017
                  %v2019 = vld [vmem:[%s1869 + $0x4a0] sm:%s1862]
                  %2020 = vst [vmem:[%s1870 + $0x250] sm:%s1862] %v2019
                  %v2021 = vld [vmem:[%s1869 + $0x4b0] sm:%s1862]
                  %2022 = vst [vmem:[%s1870 + $0x258] sm:%s1862] %v2021
                  %v2023 = vld [vmem:[%s1869 + $0x4c0] sm:%s1862]
                  %2024 = vst [vmem:[%s1870 + $0x260] sm:%s1862] %v2023
                  %v2025 = vld [vmem:[%s1869 + $0x4d0] sm:%s1862]
                  %2026 = vst [vmem:[%s1870 + $0x268] sm:%s1862] %v2025
                  %v2027 = vld [vmem:[%s1869 + $0x4e0] sm:%s1862]
                  %2028 = vst [vmem:[%s1870 + $0x270] sm:%s1862] %v2027
                  %v2029 = vld [vmem:[%s1869 + $0x4f0] sm:%s1862]
                  %2030 = vst [vmem:[%s1870 + $0x278] sm:%s1862] %v2029
                  %v2031 = vld [vmem:[%s1869 + $0x500] sm:%s1862]
                  %2032 = vst [vmem:[%s1870 + $0x280] sm:%s1862] %v2031
                  %v2033 = vld [vmem:[%s1869 + $0x510] sm:%s1862]
                  %2034 = vst [vmem:[%s1870 + $0x288] sm:%s1862] %v2033
                  %v2035 = vld [vmem:[%s1869 + $0x520] sm:%s1862]
                  %2036 = vst [vmem:[%s1870 + $0x290] sm:%s1862] %v2035
                  %v2037 = vld [vmem:[%s1869 + $0x530] sm:%s1862]
                  %2038 = vst [vmem:[%s1870 + $0x298] sm:%s1862] %v2037
                  %v2039 = vld [vmem:[%s1869 + $0x540] sm:%s1862]
                  %2040 = vst [vmem:[%s1870 + $0x2a0] sm:%s1862] %v2039
                  %v2041 = vld [vmem:[%s1869 + $0x550] sm:%s1862]
                  %2042 = vst [vmem:[%s1870 + $0x2a8] sm:%s1862] %v2041
                  %v2043 = vld [vmem:[%s1869 + $0x560] sm:%s1862]
                  %2044 = vst [vmem:[%s1870 + $0x2b0] sm:%s1862] %v2043
                  %v2045 = vld [vmem:[%s1869 + $0x570] sm:%s1862]
                  %2046 = vst [vmem:[%s1870 + $0x2b8] sm:%s1862] %v2045
                  %v2047 = vld [vmem:[%s1869 + $0x580] sm:%s1862]
                  %2048 = vst [vmem:[%s1870 + $0x2c0] sm:%s1862] %v2047
                  %v2049 = vld [vmem:[%s1869 + $0x590] sm:%s1862]
                  %2050 = vst [vmem:[%s1870 + $0x2c8] sm:%s1862] %v2049
                  %v2051 = vld [vmem:[%s1869 + $0x5a0] sm:%s1862]
                  %2052 = vst [vmem:[%s1870 + $0x2d0] sm:%s1862] %v2051
                  %v2053 = vld [vmem:[%s1869 + $0x5b0] sm:%s1862]
                  %2054 = vst [vmem:[%s1870 + $0x2d8] sm:%s1862] %v2053
                  %v2055 = vld [vmem:[%s1869 + $0x5c0] sm:%s1862]
                  %2056 = vst [vmem:[%s1870 + $0x2e0] sm:%s1862] %v2055
                  %v2057 = vld [vmem:[%s1869 + $0x5d0] sm:%s1862]
                  %2058 = vst [vmem:[%s1870 + $0x2e8] sm:%s1862] %v2057
                  %v2059 = vld [vmem:[%s1869 + $0x5e0] sm:%s1862]
                  %2060 = vst [vmem:[%s1870 + $0x2f0] sm:%s1862] %v2059
                  %v2061 = vld [vmem:[%s1869 + $0x5f0] sm:%s1862]
                  %2062 = vst [vmem:[%s1870 + $0x2f8] sm:%s1862] %v2061
                  %v2063 = vld [vmem:[%s1869 + $0x600] sm:%s1862]
                  %2064 = vst [vmem:[%s1870 + $0x300] sm:%s1862] %v2063
                  %v2065 = vld [vmem:[%s1869 + $0x610] sm:%s1862]
                  %2066 = vst [vmem:[%s1870 + $0x308] sm:%s1862] %v2065
                  %v2067 = vld [vmem:[%s1869 + $0x620] sm:%s1862]
                  %2068 = vst [vmem:[%s1870 + $0x310] sm:%s1862] %v2067
                  %v2069 = vld [vmem:[%s1869 + $0x630] sm:%s1862]
                  %2070 = vst [vmem:[%s1870 + $0x318] sm:%s1862] %v2069
                  %v2071 = vld [vmem:[%s1869 + $0x640] sm:%s1862]
                  %2072 = vst [vmem:[%s1870 + $0x320] sm:%s1862] %v2071
                  %v2073 = vld [vmem:[%s1869 + $0x650] sm:%s1862]
                  %2074 = vst [vmem:[%s1870 + $0x328] sm:%s1862] %v2073
                  %v2075 = vld [vmem:[%s1869 + $0x660] sm:%s1862]
                  %2076 = vst [vmem:[%s1870 + $0x330] sm:%s1862] %v2075
                  %v2077 = vld [vmem:[%s1869 + $0x670] sm:%s1862]
                  %2078 = vst [vmem:[%s1870 + $0x338] sm:%s1862] %v2077
                  %v2079 = vld [vmem:[%s1869 + $0x680] sm:%s1862]
                  %2080 = vst [vmem:[%s1870 + $0x340] sm:%s1862] %v2079
                  %v2081 = vld [vmem:[%s1869 + $0x690] sm:%s1862]
                  %2082 = vst [vmem:[%s1870 + $0x348] sm:%s1862] %v2081
                  %v2083 = vld [vmem:[%s1869 + $0x6a0] sm:%s1862]
                  %2084 = vst [vmem:[%s1870 + $0x350] sm:%s1862] %v2083
                  %v2085 = vld [vmem:[%s1869 + $0x6b0] sm:%s1862]
                  %2086 = vst [vmem:[%s1870 + $0x358] sm:%s1862] %v2085
                  %v2087 = vld [vmem:[%s1869 + $0x6c0] sm:%s1862]
                  %2088 = vst [vmem:[%s1870 + $0x360] sm:%s1862] %v2087
                  %v2089 = vld [vmem:[%s1869 + $0x6d0] sm:%s1862]
                  %2090 = vst [vmem:[%s1870 + $0x368] sm:%s1862] %v2089
                  %v2091 = vld [vmem:[%s1869 + $0x6e0] sm:%s1862]
                  %2092 = vst [vmem:[%s1870 + $0x370] sm:%s1862] %v2091
                  %v2093 = vld [vmem:[%s1869 + $0x6f0] sm:%s1862]
                  %2094 = vst [vmem:[%s1870 + $0x378] sm:%s1862] %v2093
                  %v2095 = vld [vmem:[%s1869 + $0x700] sm:%s1862]
                  %2096 = vst [vmem:[%s1870 + $0x380] sm:%s1862] %v2095
                  %v2097 = vld [vmem:[%s1869 + $0x710] sm:%s1862]
                  %2098 = vst [vmem:[%s1870 + $0x388] sm:%s1862] %v2097
                  %v2099 = vld [vmem:[%s1869 + $0x720] sm:%s1862]
                  %2100 = vst [vmem:[%s1870 + $0x390] sm:%s1862] %v2099
                  %v2101 = vld [vmem:[%s1869 + $0x730] sm:%s1862]
                  %2102 = vst [vmem:[%s1870 + $0x398] sm:%s1862] %v2101
                  %v2103 = vld [vmem:[%s1869 + $0x740] sm:%s1862]
                  %2104 = vst [vmem:[%s1870 + $0x3a0] sm:%s1862] %v2103
                  %v2105 = vld [vmem:[%s1869 + $0x750] sm:%s1862]
                  %2106 = vst [vmem:[%s1870 + $0x3a8] sm:%s1862] %v2105
                  %v2107 = vld [vmem:[%s1869 + $0x760] sm:%s1862]
                  %2108 = vst [vmem:[%s1870 + $0x3b0] sm:%s1862] %v2107
                  %v2109 = vld [vmem:[%s1869 + $0x770] sm:%s1862]
                  %2110 = vst [vmem:[%s1870 + $0x3b8] sm:%s1862] %v2109
                  %v2111 = vld [vmem:[%s1869 + $0x780] sm:%s1862]
                  %2112 = vst [vmem:[%s1870 + $0x3c0] sm:%s1862] %v2111
                  %v2113 = vld [vmem:[%s1869 + $0x790] sm:%s1862]
                  %2114 = vst [vmem:[%s1870 + $0x3c8] sm:%s1862] %v2113
                  %v2115 = vld [vmem:[%s1869 + $0x7a0] sm:%s1862]
                  %2116 = vst [vmem:[%s1870 + $0x3d0] sm:%s1862] %v2115
                  %v2117 = vld [vmem:[%s1869 + $0x7b0] sm:%s1862]
                  %2118 = vst [vmem:[%s1870 + $0x3d8] sm:%s1862] %v2117
                  %v2119 = vld [vmem:[%s1869 + $0x7c0] sm:%s1862]
                  %2120 = vst [vmem:[%s1870 + $0x3e0] sm:%s1862] %v2119
                  %v2121 = vld [vmem:[%s1869 + $0x7d0] sm:%s1862]
                  %2122 = vst [vmem:[%s1870 + $0x3e8] sm:%s1862] %v2121
                  %v2123 = vld [vmem:[%s1869 + $0x7e0] sm:%s1862]
                  %2124 = vst [vmem:[%s1870 + $0x3f0] sm:%s1862] %v2123
                  %v2125 = vld [vmem:[%s1869 + $0x7f0] sm:%s1862]
                  %2126 = vst [vmem:[%s1870 + $0x3f8] sm:%s1862] %v2125
                  %v2127 = vld [vmem:[%s1869 + $0x800] sm:%s1862]
                  %2128 = vst [vmem:[%s1870 + $0x400] sm:%s1862] %v2127
                  %v2129 = vld [vmem:[%s1869 + $0x810] sm:%s1862]
                  %2130 = vst [vmem:[%s1870 + $0x408] sm:%s1862] %v2129
                  %v2131 = vld [vmem:[%s1869 + $0x820] sm:%s1862]
                  %2132 = vst [vmem:[%s1870 + $0x410] sm:%s1862] %v2131
                  %v2133 = vld [vmem:[%s1869 + $0x830] sm:%s1862]
                  %2134 = vst [vmem:[%s1870 + $0x418] sm:%s1862] %v2133
                  %v2135 = vld [vmem:[%s1869 + $0x840] sm:%s1862]
                  %2136 = vst [vmem:[%s1870 + $0x420] sm:%s1862] %v2135
                  %v2137 = vld [vmem:[%s1869 + $0x850] sm:%s1862]
                  %2138 = vst [vmem:[%s1870 + $0x428] sm:%s1862] %v2137
                  %v2139 = vld [vmem:[%s1869 + $0x860] sm:%s1862]
                  %2140 = vst [vmem:[%s1870 + $0x430] sm:%s1862] %v2139
                  %v2141 = vld [vmem:[%s1869 + $0x870] sm:%s1862]
                  %2142 = vst [vmem:[%s1870 + $0x438] sm:%s1862] %v2141
                  %v2143 = vld [vmem:[%s1869 + $0x880] sm:%s1862]
                  %2144 = vst [vmem:[%s1870 + $0x440] sm:%s1862] %v2143
                  %v2145 = vld [vmem:[%s1869 + $0x890] sm:%s1862]
                  %2146 = vst [vmem:[%s1870 + $0x448] sm:%s1862] %v2145
                  %v2147 = vld [vmem:[%s1869 + $0x8a0] sm:%s1862]
                  %2148 = vst [vmem:[%s1870 + $0x450] sm:%s1862] %v2147
                  %v2149 = vld [vmem:[%s1869 + $0x8b0] sm:%s1862]
                  %2150 = vst [vmem:[%s1870 + $0x458] sm:%s1862] %v2149
                  %v2151 = vld [vmem:[%s1869 + $0x8c0] sm:%s1862]
                  %2152 = vst [vmem:[%s1870 + $0x460] sm:%s1862] %v2151
                  %v2153 = vld [vmem:[%s1869 + $0x8d0] sm:%s1862]
                  %2154 = vst [vmem:[%s1870 + $0x468] sm:%s1862] %v2153
                  %v2155 = vld [vmem:[%s1869 + $0x8e0] sm:%s1862]
                  %2156 = vst [vmem:[%s1870 + $0x470] sm:%s1862] %v2155
                  %v2157 = vld [vmem:[%s1869 + $0x8f0] sm:%s1862]
                  %2158 = vst [vmem:[%s1870 + $0x478] sm:%s1862] %v2157
                  %v2159 = vld [vmem:[%s1869 + $0x900] sm:%s1862]
                  %2160 = vst [vmem:[%s1870 + $0x480] sm:%s1862] %v2159
                  %v2161 = vld [vmem:[%s1869 + $0x910] sm:%s1862]
                  %2162 = vst [vmem:[%s1870 + $0x488] sm:%s1862] %v2161
                  %v2163 = vld [vmem:[%s1869 + $0x920] sm:%s1862]
                  %2164 = vst [vmem:[%s1870 + $0x490] sm:%s1862] %v2163
                  %v2165 = vld [vmem:[%s1869 + $0x930] sm:%s1862]
                  %2166 = vst [vmem:[%s1870 + $0x498] sm:%s1862] %v2165
                  %v2167 = vld [vmem:[%s1869 + $0x940] sm:%s1862]
                  %2168 = vst [vmem:[%s1870 + $0x4a0] sm:%s1862] %v2167
                  %v2169 = vld [vmem:[%s1869 + $0x950] sm:%s1862]
                  %2170 = vst [vmem:[%s1870 + $0x4a8] sm:%s1862] %v2169
                  %v2171 = vld [vmem:[%s1869 + $0x960] sm:%s1862]
                  %2172 = vst [vmem:[%s1870 + $0x4b0] sm:%s1862] %v2171
                  %v2173 = vld [vmem:[%s1869 + $0x970] sm:%s1862]
                  %2174 = vst [vmem:[%s1870 + $0x4b8] sm:%s1862] %v2173
                  %v2175 = vld [vmem:[%s1869 + $0x980] sm:%s1862]
                  %2176 = vst [vmem:[%s1870 + $0x4c0] sm:%s1862] %v2175
                  %v2177 = vld [vmem:[%s1869 + $0x990] sm:%s1862]
                  %2178 = vst [vmem:[%s1870 + $0x4c8] sm:%s1862] %v2177
                  %v2179 = vld [vmem:[%s1869 + $0x9a0] sm:%s1862]
                  %2180 = vst [vmem:[%s1870 + $0x4d0] sm:%s1862] %v2179
                  %v2181 = vld [vmem:[%s1869 + $0x9b0] sm:%s1862]
                  %2182 = vst [vmem:[%s1870 + $0x4d8] sm:%s1862] %v2181
                  %v2183 = vld [vmem:[%s1869 + $0x9c0] sm:%s1862]
                  %2184 = vst [vmem:[%s1870 + $0x4e0] sm:%s1862] %v2183
                  %v2185 = vld [vmem:[%s1869 + $0x9d0] sm:%s1862]
                  %2186 = vst [vmem:[%s1870 + $0x4e8] sm:%s1862] %v2185
                  %v2187 = vld [vmem:[%s1869 + $0x9e0] sm:%s1862]
                  %2188 = vst [vmem:[%s1870 + $0x4f0] sm:%s1862] %v2187
                  %v2189 = vld [vmem:[%s1869 + $0x9f0] sm:%s1862]
                  %2190 = vst [vmem:[%s1870 + $0x4f8] sm:%s1862] %v2189
                  %v2191 = vld [vmem:[%s1869 + $0xa00] sm:%s1862]
                  %2192 = vst [vmem:[%s1870 + $0x500] sm:%s1862] %v2191
                  %v2193 = vld [vmem:[%s1869 + $0xa10] sm:%s1862]
                  %2194 = vst [vmem:[%s1870 + $0x508] sm:%s1862] %v2193
                  %v2195 = vld [vmem:[%s1869 + $0xa20] sm:%s1862]
                  %2196 = vst [vmem:[%s1870 + $0x510] sm:%s1862] %v2195
                  %v2197 = vld [vmem:[%s1869 + $0xa30] sm:%s1862]
                  %2198 = vst [vmem:[%s1870 + $0x518] sm:%s1862] %v2197
                  %v2199 = vld [vmem:[%s1869 + $0xa40] sm:%s1862]
                  %2200 = vst [vmem:[%s1870 + $0x520] sm:%s1862] %v2199
                  %v2201 = vld [vmem:[%s1869 + $0xa50] sm:%s1862]
                  %2202 = vst [vmem:[%s1870 + $0x528] sm:%s1862] %v2201
                  %v2203 = vld [vmem:[%s1869 + $0xa60] sm:%s1862]
                  %2204 = vst [vmem:[%s1870 + $0x530] sm:%s1862] %v2203
                  %v2205 = vld [vmem:[%s1869 + $0xa70] sm:%s1862]
                  %2206 = vst [vmem:[%s1870 + $0x538] sm:%s1862] %v2205
                  %v2207 = vld [vmem:[%s1869 + $0xa80] sm:%s1862]
                  %2208 = vst [vmem:[%s1870 + $0x540] sm:%s1862] %v2207
                  %v2209 = vld [vmem:[%s1869 + $0xa90] sm:%s1862]
                  %2210 = vst [vmem:[%s1870 + $0x548] sm:%s1862] %v2209
                  %v2211 = vld [vmem:[%s1869 + $0xaa0] sm:%s1862]
                  %2212 = vst [vmem:[%s1870 + $0x550] sm:%s1862] %v2211
                  %v2213 = vld [vmem:[%s1869 + $0xab0] sm:%s1862]
                  %2214 = vst [vmem:[%s1870 + $0x558] sm:%s1862] %v2213
                  %v2215 = vld [vmem:[%s1869 + $0xac0] sm:%s1862]
                  %2216 = vst [vmem:[%s1870 + $0x560] sm:%s1862] %v2215
                  %v2217 = vld [vmem:[%s1869 + $0xad0] sm:%s1862]
                  %2218 = vst [vmem:[%s1870 + $0x568] sm:%s1862] %v2217
                  %v2219 = vld [vmem:[%s1869 + $0xae0] sm:%s1862]
                  %2220 = vst [vmem:[%s1870 + $0x570] sm:%s1862] %v2219
                  %v2221 = vld [vmem:[%s1869 + $0xaf0] sm:%s1862]
                  %2222 = vst [vmem:[%s1870 + $0x578] sm:%s1862] %v2221
                  %v2223 = vld [vmem:[%s1869 + $0xb00] sm:%s1862]
                  %2224 = vst [vmem:[%s1870 + $0x580] sm:%s1862] %v2223
                  %v2225 = vld [vmem:[%s1869 + $0xb10] sm:%s1862]
                  %2226 = vst [vmem:[%s1870 + $0x588] sm:%s1862] %v2225
                  %v2227 = vld [vmem:[%s1869 + $0xb20] sm:%s1862]
                  %2228 = vst [vmem:[%s1870 + $0x590] sm:%s1862] %v2227
                  %v2229 = vld [vmem:[%s1869 + $0xb30] sm:%s1862]
                  %2230 = vst [vmem:[%s1870 + $0x598] sm:%s1862] %v2229
                  %v2231 = vld [vmem:[%s1869 + $0xb40] sm:%s1862]
                  %2232 = vst [vmem:[%s1870 + $0x5a0] sm:%s1862] %v2231
                  %v2233 = vld [vmem:[%s1869 + $0xb50] sm:%s1862]
                  %2234 = vst [vmem:[%s1870 + $0x5a8] sm:%s1862] %v2233
                  %v2235 = vld [vmem:[%s1869 + $0xb60] sm:%s1862]
                  %2236 = vst [vmem:[%s1870 + $0x5b0] sm:%s1862] %v2235
                  %v2237 = vld [vmem:[%s1869 + $0xb70] sm:%s1862]
                  %2238 = vst [vmem:[%s1870 + $0x5b8] sm:%s1862] %v2237
                  %v2239 = vld [vmem:[%s1869 + $0xb80] sm:%s1862]
                  %2240 = vst [vmem:[%s1870 + $0x5c0] sm:%s1862] %v2239
                  %v2241 = vld [vmem:[%s1869 + $0xb90] sm:%s1862]
                  %2242 = vst [vmem:[%s1870 + $0x5c8] sm:%s1862] %v2241
                  %v2243 = vld [vmem:[%s1869 + $0xba0] sm:%s1862]
                  %2244 = vst [vmem:[%s1870 + $0x5d0] sm:%s1862] %v2243
                  %v2245 = vld [vmem:[%s1869 + $0xbb0] sm:%s1862]
                  %2246 = vst [vmem:[%s1870 + $0x5d8] sm:%s1862] %v2245
                  %v2247 = vld [vmem:[%s1869 + $0xbc0] sm:%s1862]
                  %2248 = vst [vmem:[%s1870 + $0x5e0] sm:%s1862] %v2247
                  %v2249 = vld [vmem:[%s1869 + $0xbd0] sm:%s1862]
                  %2250 = vst [vmem:[%s1870 + $0x5e8] sm:%s1862] %v2249
                  %v2251 = vld [vmem:[%s1869 + $0xbe0] sm:%s1862]
                  %2252 = vst [vmem:[%s1870 + $0x5f0] sm:%s1862] %v2251
                  %v2253 = vld [vmem:[%s1869 + $0xbf0] sm:%s1862]
                  %2254 = vst [vmem:[%s1870 + $0x5f8] sm:%s1862] %v2253
                  %v2255 = vld [vmem:[%s1869 + $0xc00] sm:%s1862]
                  %2256 = vst [vmem:[%s1870 + $0x600] sm:%s1862] %v2255
                  %v2257 = vld [vmem:[%s1869 + $0xc10] sm:%s1862]
                  %2258 = vst [vmem:[%s1870 + $0x608] sm:%s1862] %v2257
                  %v2259 = vld [vmem:[%s1869 + $0xc20] sm:%s1862]
                  %2260 = vst [vmem:[%s1870 + $0x610] sm:%s1862] %v2259
                  %v2261 = vld [vmem:[%s1869 + $0xc30] sm:%s1862]
                  %2262 = vst [vmem:[%s1870 + $0x618] sm:%s1862] %v2261
                  %v2263 = vld [vmem:[%s1869 + $0xc40] sm:%s1862]
                  %2264 = vst [vmem:[%s1870 + $0x620] sm:%s1862] %v2263
                  %v2265 = vld [vmem:[%s1869 + $0xc50] sm:%s1862]
                  %2266 = vst [vmem:[%s1870 + $0x628] sm:%s1862] %v2265
                  %v2267 = vld [vmem:[%s1869 + $0xc60] sm:%s1862]
                  %2268 = vst [vmem:[%s1870 + $0x630] sm:%s1862] %v2267
                  %v2269 = vld [vmem:[%s1869 + $0xc70] sm:%s1862]
                  %2270 = vst [vmem:[%s1870 + $0x638] sm:%s1862] %v2269
                  %v2271 = vld [vmem:[%s1869 + $0xc80] sm:%s1862]
                  %2272 = vst [vmem:[%s1870 + $0x640] sm:%s1862] %v2271
                  %v2273 = vld [vmem:[%s1869 + $0xc90] sm:%s1862]
                  %2274 = vst [vmem:[%s1870 + $0x648] sm:%s1862] %v2273
                  %v2275 = vld [vmem:[%s1869 + $0xca0] sm:%s1862]
                  %2276 = vst [vmem:[%s1870 + $0x650] sm:%s1862] %v2275
                  %v2277 = vld [vmem:[%s1869 + $0xcb0] sm:%s1862]
                  %2278 = vst [vmem:[%s1870 + $0x658] sm:%s1862] %v2277
                  %v2279 = vld [vmem:[%s1869 + $0xcc0] sm:%s1862]
                  %2280 = vst [vmem:[%s1870 + $0x660] sm:%s1862] %v2279
                  %v2281 = vld [vmem:[%s1869 + $0xcd0] sm:%s1862]
                  %2282 = vst [vmem:[%s1870 + $0x668] sm:%s1862] %v2281
                  %v2283 = vld [vmem:[%s1869 + $0xce0] sm:%s1862]
                  %2284 = vst [vmem:[%s1870 + $0x670] sm:%s1862] %v2283
                  %v2285 = vld [vmem:[%s1869 + $0xcf0] sm:%s1862]
                  %2286 = vst [vmem:[%s1870 + $0x678] sm:%s1862] %v2285
                  %v2287 = vld [vmem:[%s1869 + $0xd00] sm:%s1862]
                  %2288 = vst [vmem:[%s1870 + $0x680] sm:%s1862] %v2287
                  %v2289 = vld [vmem:[%s1869 + $0xd10] sm:%s1862]
                  %2290 = vst [vmem:[%s1870 + $0x688] sm:%s1862] %v2289
                  %v2291 = vld [vmem:[%s1869 + $0xd20] sm:%s1862]
                  %2292 = vst [vmem:[%s1870 + $0x690] sm:%s1862] %v2291
                  %v2293 = vld [vmem:[%s1869 + $0xd30] sm:%s1862]
                  %2294 = vst [vmem:[%s1870 + $0x698] sm:%s1862] %v2293
                  %v2295 = vld [vmem:[%s1869 + $0xd40] sm:%s1862]
                  %2296 = vst [vmem:[%s1870 + $0x6a0] sm:%s1862] %v2295
                  %v2297 = vld [vmem:[%s1869 + $0xd50] sm:%s1862]
                  %2298 = vst [vmem:[%s1870 + $0x6a8] sm:%s1862] %v2297
                  %v2299 = vld [vmem:[%s1869 + $0xd60] sm:%s1862]
                  %2300 = vst [vmem:[%s1870 + $0x6b0] sm:%s1862] %v2299
                  %v2301 = vld [vmem:[%s1869 + $0xd70] sm:%s1862]
                  %2302 = vst [vmem:[%s1870 + $0x6b8] sm:%s1862] %v2301
                  %v2303 = vld [vmem:[%s1869 + $0xd80] sm:%s1862]
                  %2304 = vst [vmem:[%s1870 + $0x6c0] sm:%s1862] %v2303
                  %v2305 = vld [vmem:[%s1869 + $0xd90] sm:%s1862]
                  %2306 = vst [vmem:[%s1870 + $0x6c8] sm:%s1862] %v2305
                  %v2307 = vld [vmem:[%s1869 + $0xda0] sm:%s1862]
                  %2308 = vst [vmem:[%s1870 + $0x6d0] sm:%s1862] %v2307
                  %v2309 = vld [vmem:[%s1869 + $0xdb0] sm:%s1862]
                  %2310 = vst [vmem:[%s1870 + $0x6d8] sm:%s1862] %v2309
                  %v2311 = vld [vmem:[%s1869 + $0xdc0] sm:%s1862]
                  %2312 = vst [vmem:[%s1870 + $0x6e0] sm:%s1862] %v2311
                  %v2313 = vld [vmem:[%s1869 + $0xdd0] sm:%s1862]
                  %2314 = vst [vmem:[%s1870 + $0x6e8] sm:%s1862] %v2313
                  %v2315 = vld [vmem:[%s1869 + $0xde0] sm:%s1862]
                  %2316 = vst [vmem:[%s1870 + $0x6f0] sm:%s1862] %v2315
                  %v2317 = vld [vmem:[%s1869 + $0xdf0] sm:%s1862]
                  %2318 = vst [vmem:[%s1870 + $0x6f8] sm:%s1862] %v2317
                  %v2319 = vld [vmem:[%s1869 + $0xe00] sm:%s1862]
                  %2320 = vst [vmem:[%s1870 + $0x700] sm:%s1862] %v2319
                  %v2321 = vld [vmem:[%s1869 + $0xe10] sm:%s1862]
                  %2322 = vst [vmem:[%s1870 + $0x708] sm:%s1862] %v2321
                  %v2323 = vld [vmem:[%s1869 + $0xe20] sm:%s1862]
                  %2324 = vst [vmem:[%s1870 + $0x710] sm:%s1862] %v2323
                  %v2325 = vld [vmem:[%s1869 + $0xe30] sm:%s1862]
                  %2326 = vst [vmem:[%s1870 + $0x718] sm:%s1862] %v2325
                  %v2327 = vld [vmem:[%s1869 + $0xe40] sm:%s1862]
                  %2328 = vst [vmem:[%s1870 + $0x720] sm:%s1862] %v2327
                  %v2329 = vld [vmem:[%s1869 + $0xe50] sm:%s1862]
                  %2330 = vst [vmem:[%s1870 + $0x728] sm:%s1862] %v2329
                  %v2331 = vld [vmem:[%s1869 + $0xe60] sm:%s1862]
                  %2332 = vst [vmem:[%s1870 + $0x730] sm:%s1862] %v2331
                  %v2333 = vld [vmem:[%s1869 + $0xe70] sm:%s1862]
                  %2334 = vst [vmem:[%s1870 + $0x738] sm:%s1862] %v2333
                  %v2335 = vld [vmem:[%s1869 + $0xe80] sm:%s1862]
                  %2336 = vst [vmem:[%s1870 + $0x740] sm:%s1862] %v2335
                  %v2337 = vld [vmem:[%s1869 + $0xe90] sm:%s1862]
                  %2338 = vst [vmem:[%s1870 + $0x748] sm:%s1862] %v2337
                  %v2339 = vld [vmem:[%s1869 + $0xea0] sm:%s1862]
                  %2340 = vst [vmem:[%s1870 + $0x750] sm:%s1862] %v2339
                  %v2341 = vld [vmem:[%s1869 + $0xeb0] sm:%s1862]
                  %2342 = vst [vmem:[%s1870 + $0x758] sm:%s1862] %v2341
                  %v2343 = vld [vmem:[%s1869 + $0xec0] sm:%s1862]
                  %2344 = vst [vmem:[%s1870 + $0x760] sm:%s1862] %v2343
                  %v2345 = vld [vmem:[%s1869 + $0xed0] sm:%s1862]
                  %2346 = vst [vmem:[%s1870 + $0x768] sm:%s1862] %v2345
                  %v2347 = vld [vmem:[%s1869 + $0xee0] sm:%s1862]
                  %2348 = vst [vmem:[%s1870 + $0x770] sm:%s1862] %v2347
                  %v2349 = vld [vmem:[%s1869 + $0xef0] sm:%s1862]
                  %2350 = vst [vmem:[%s1870 + $0x778] sm:%s1862] %v2349
                  %v2351 = vld [vmem:[%s1869 + $0xf00] sm:%s1862]
                  %2352 = vst [vmem:[%s1870 + $0x780] sm:%s1862] %v2351
                  %v2353 = vld [vmem:[%s1869 + $0xf10] sm:%s1862]
                  %2354 = vst [vmem:[%s1870 + $0x788] sm:%s1862] %v2353
                  %v2355 = vld [vmem:[%s1869 + $0xf20] sm:%s1862]
                  %2356 = vst [vmem:[%s1870 + $0x790] sm:%s1862] %v2355
                  %v2357 = vld [vmem:[%s1869 + $0xf30] sm:%s1862]
                  %2358 = vst [vmem:[%s1870 + $0x798] sm:%s1862] %v2357
                  %v2359 = vld [vmem:[%s1869 + $0xf40] sm:%s1862]
                  %2360 = vst [vmem:[%s1870 + $0x7a0] sm:%s1862] %v2359
                  %v2361 = vld [vmem:[%s1869 + $0xf50] sm:%s1862]
                  %2362 = vst [vmem:[%s1870 + $0x7a8] sm:%s1862] %v2361
                  %v2363 = vld [vmem:[%s1869 + $0xf60] sm:%s1862]
                  %2364 = vst [vmem:[%s1870 + $0x7b0] sm:%s1862] %v2363
                  %v2365 = vld [vmem:[%s1869 + $0xf70] sm:%s1862]
                  %2366 = vst [vmem:[%s1870 + $0x7b8] sm:%s1862] %v2365
                  %v2367 = vld [vmem:[%s1869 + $0xf80] sm:%s1862]
                  %2368 = vst [vmem:[%s1870 + $0x7c0] sm:%s1862] %v2367
                  %v2369 = vld [vmem:[%s1869 + $0xf90] sm:%s1862]
                  %2370 = vst [vmem:[%s1870 + $0x7c8] sm:%s1862] %v2369
                  %v2371 = vld [vmem:[%s1869 + $0xfa0] sm:%s1862]
                  %2372 = vst [vmem:[%s1870 + $0x7d0] sm:%s1862] %v2371
                  %v2373 = vld [vmem:[%s1869 + $0xfb0] sm:%s1862]
                  %2374 = vst [vmem:[%s1870 + $0x7d8] sm:%s1862] %v2373
                  %v2375 = vld [vmem:[%s1869 + $0xfc0] sm:%s1862]
                  %2376 = vst [vmem:[%s1870 + $0x7e0] sm:%s1862] %v2375
                  %v2377 = vld [vmem:[%s1869 + $0xfd0] sm:%s1862]
                  %2378 = vst [vmem:[%s1870 + $0x7e8] sm:%s1862] %v2377
                  %v2379 = vld [vmem:[%s1869 + $0xfe0] sm:%s1862]
                  %2380 = vst [vmem:[%s1870 + $0x7f0] sm:%s1862] %v2379
                  %v2381 = vld [vmem:[%s1869 + $0xff0] sm:%s1862]
                  %2382 = vst [vmem:[%s1870 + $0x7f8] sm:%s1862] %v2381
                $region89: #{cnn_base_forward.7} parent=76 // loop_footer
                  %s1868 = sadd.s32 1, %s1864
                $region90: #{cnn_base_forward.7} parent=76 // loop_footer_branch
                  %1863 = sbr.rel target = $region86
                $region91: #{cnn_base_forward.7} parent=76 // loop_exit
                  _
              $region77: #{cnn_base_forward.7} parent=50 // pred_fallthru
                _
            $region51: #{cnn_base_forward.7} parent=46 // pred_fallthru
              _
            // Predicated region
            $region52: #{cnn_base_forward.7} parent=46 // pred_check
              _
            $region53: #{cnn_base_forward.7} parent=46 // pred_check_branch
              %276 = sbr.rel target = $region55
            $region54: #{cnn_base_forward.7} parent=46 // pred_region
              %s278 = ssub.s32 256, 1
              loop: start=0, step=1, limit=1
              $region56: #{cnn_base_forward.7} parent=54 // loop_pre_header
                _
              $region57: #{cnn_base_forward.7} parent=54 // loop_header
                %s280 = sphi 0, %s284
                %p281 = scmp.ge.s32.totalorder %s280, 1
                %s285 = sphi %s270, %s270
                %s286 = sphi %s264, %s264
              $region58: #{cnn_base_forward.7} parent=54 // loop_header_branch
                %283 = sbr.rel (%p281) target = $region62
              $region59: #{cnn_base_forward.7} parent=54 // loop_body
                %v287 = vld [vmem:[%s285] sm:%s278]
                %288 = vst [vmem:[%s286] sm:%s278] %v287
                %v289 = vld [vmem:[%s285 + $0x10] sm:%s278]
                %290 = vst [vmem:[%s286 + $0x8] sm:%s278] %v289
                %v291 = vld [vmem:[%s285 + $0x20] sm:%s278]
                %292 = vst [vmem:[%s286 + $0x10] sm:%s278] %v291
                %v293 = vld [vmem:[%s285 + $0x30] sm:%s278]
                %294 = vst [vmem:[%s286 + $0x18] sm:%s278] %v293
                %v295 = vld [vmem:[%s285 + $0x40] sm:%s278]
                %296 = vst [vmem:[%s286 + $0x20] sm:%s278] %v295
                %v297 = vld [vmem:[%s285 + $0x50] sm:%s278]
                %298 = vst [vmem:[%s286 + $0x28] sm:%s278] %v297
                %v299 = vld [vmem:[%s285 + $0x60] sm:%s278]
                %300 = vst [vmem:[%s286 + $0x30] sm:%s278] %v299
                %v301 = vld [vmem:[%s285 + $0x70] sm:%s278]
                %302 = vst [vmem:[%s286 + $0x38] sm:%s278] %v301
                %v303 = vld [vmem:[%s285 + $0x80] sm:%s278]
                %304 = vst [vmem:[%s286 + $0x40] sm:%s278] %v303
                %v305 = vld [vmem:[%s285 + $0x90] sm:%s278]
                %306 = vst [vmem:[%s286 + $0x48] sm:%s278] %v305
                %v307 = vld [vmem:[%s285 + $0xa0] sm:%s278]
                %308 = vst [vmem:[%s286 + $0x50] sm:%s278] %v307
                %v309 = vld [vmem:[%s285 + $0xb0] sm:%s278]
                %310 = vst [vmem:[%s286 + $0x58] sm:%s278] %v309
                %v311 = vld [vmem:[%s285 + $0xc0] sm:%s278]
                %312 = vst [vmem:[%s286 + $0x60] sm:%s278] %v311
                %v313 = vld [vmem:[%s285 + $0xd0] sm:%s278]
                %314 = vst [vmem:[%s286 + $0x68] sm:%s278] %v313
                %v315 = vld [vmem:[%s285 + $0xe0] sm:%s278]
                %316 = vst [vmem:[%s286 + $0x70] sm:%s278] %v315
                %v317 = vld [vmem:[%s285 + $0xf0] sm:%s278]
                %318 = vst [vmem:[%s286 + $0x78] sm:%s278] %v317
                %v319 = vld [vmem:[%s285 + $0x100] sm:%s278]
                %320 = vst [vmem:[%s286 + $0x80] sm:%s278] %v319
                %v321 = vld [vmem:[%s285 + $0x110] sm:%s278]
                %322 = vst [vmem:[%s286 + $0x88] sm:%s278] %v321
                %v323 = vld [vmem:[%s285 + $0x120] sm:%s278]
                %324 = vst [vmem:[%s286 + $0x90] sm:%s278] %v323
                %v325 = vld [vmem:[%s285 + $0x130] sm:%s278]
                %326 = vst [vmem:[%s286 + $0x98] sm:%s278] %v325
                %v327 = vld [vmem:[%s285 + $0x140] sm:%s278]
                %328 = vst [vmem:[%s286 + $0xa0] sm:%s278] %v327
                %v329 = vld [vmem:[%s285 + $0x150] sm:%s278]
                %330 = vst [vmem:[%s286 + $0xa8] sm:%s278] %v329
                %v331 = vld [vmem:[%s285 + $0x160] sm:%s278]
                %332 = vst [vmem:[%s286 + $0xb0] sm:%s278] %v331
                %v333 = vld [vmem:[%s285 + $0x170] sm:%s278]
                %334 = vst [vmem:[%s286 + $0xb8] sm:%s278] %v333
                %v335 = vld [vmem:[%s285 + $0x180] sm:%s278]
                %336 = vst [vmem:[%s286 + $0xc0] sm:%s278] %v335
                %v337 = vld [vmem:[%s285 + $0x190] sm:%s278]
                %338 = vst [vmem:[%s286 + $0xc8] sm:%s278] %v337
                %v339 = vld [vmem:[%s285 + $0x1a0] sm:%s278]
                %340 = vst [vmem:[%s286 + $0xd0] sm:%s278] %v339
                %v341 = vld [vmem:[%s285 + $0x1b0] sm:%s278]
                %342 = vst [vmem:[%s286 + $0xd8] sm:%s278] %v341
                %v343 = vld [vmem:[%s285 + $0x1c0] sm:%s278]
                %344 = vst [vmem:[%s286 + $0xe0] sm:%s278] %v343
                %v345 = vld [vmem:[%s285 + $0x1d0] sm:%s278]
                %346 = vst [vmem:[%s286 + $0xe8] sm:%s278] %v345
                %v347 = vld [vmem:[%s285 + $0x1e0] sm:%s278]
                %348 = vst [vmem:[%s286 + $0xf0] sm:%s278] %v347
                %v349 = vld [vmem:[%s285 + $0x1f0] sm:%s278]
                %350 = vst [vmem:[%s286 + $0xf8] sm:%s278] %v349
                %v351 = vld [vmem:[%s285 + $0x200] sm:%s278]
                %352 = vst [vmem:[%s286 + $0x100] sm:%s278] %v351
                %v353 = vld [vmem:[%s285 + $0x210] sm:%s278]
                %354 = vst [vmem:[%s286 + $0x108] sm:%s278] %v353
                %v355 = vld [vmem:[%s285 + $0x220] sm:%s278]
                %356 = vst [vmem:[%s286 + $0x110] sm:%s278] %v355
                %v357 = vld [vmem:[%s285 + $0x230] sm:%s278]
                %358 = vst [vmem:[%s286 + $0x118] sm:%s278] %v357
                %v359 = vld [vmem:[%s285 + $0x240] sm:%s278]
                %360 = vst [vmem:[%s286 + $0x120] sm:%s278] %v359
                %v361 = vld [vmem:[%s285 + $0x250] sm:%s278]
                %362 = vst [vmem:[%s286 + $0x128] sm:%s278] %v361
                %v363 = vld [vmem:[%s285 + $0x260] sm:%s278]
                %364 = vst [vmem:[%s286 + $0x130] sm:%s278] %v363
                %v365 = vld [vmem:[%s285 + $0x270] sm:%s278]
                %366 = vst [vmem:[%s286 + $0x138] sm:%s278] %v365
                %v367 = vld [vmem:[%s285 + $0x280] sm:%s278]
                %368 = vst [vmem:[%s286 + $0x140] sm:%s278] %v367
                %v369 = vld [vmem:[%s285 + $0x290] sm:%s278]
                %370 = vst [vmem:[%s286 + $0x148] sm:%s278] %v369
                %v371 = vld [vmem:[%s285 + $0x2a0] sm:%s278]
                %372 = vst [vmem:[%s286 + $0x150] sm:%s278] %v371
                %v373 = vld [vmem:[%s285 + $0x2b0] sm:%s278]
                %374 = vst [vmem:[%s286 + $0x158] sm:%s278] %v373
                %v375 = vld [vmem:[%s285 + $0x2c0] sm:%s278]
                %376 = vst [vmem:[%s286 + $0x160] sm:%s278] %v375
                %v377 = vld [vmem:[%s285 + $0x2d0] sm:%s278]
                %378 = vst [vmem:[%s286 + $0x168] sm:%s278] %v377
                %v379 = vld [vmem:[%s285 + $0x2e0] sm:%s278]
                %380 = vst [vmem:[%s286 + $0x170] sm:%s278] %v379
                %v381 = vld [vmem:[%s285 + $0x2f0] sm:%s278]
                %382 = vst [vmem:[%s286 + $0x178] sm:%s278] %v381
                %v383 = vld [vmem:[%s285 + $0x300] sm:%s278]
                %384 = vst [vmem:[%s286 + $0x180] sm:%s278] %v383
                %v385 = vld [vmem:[%s285 + $0x310] sm:%s278]
                %386 = vst [vmem:[%s286 + $0x188] sm:%s278] %v385
                %v387 = vld [vmem:[%s285 + $0x320] sm:%s278]
                %388 = vst [vmem:[%s286 + $0x190] sm:%s278] %v387
                %v389 = vld [vmem:[%s285 + $0x330] sm:%s278]
                %390 = vst [vmem:[%s286 + $0x198] sm:%s278] %v389
                %v391 = vld [vmem:[%s285 + $0x340] sm:%s278]
                %392 = vst [vmem:[%s286 + $0x1a0] sm:%s278] %v391
                %v393 = vld [vmem:[%s285 + $0x350] sm:%s278]
                %394 = vst [vmem:[%s286 + $0x1a8] sm:%s278] %v393
                %v395 = vld [vmem:[%s285 + $0x360] sm:%s278]
                %396 = vst [vmem:[%s286 + $0x1b0] sm:%s278] %v395
                %v397 = vld [vmem:[%s285 + $0x370] sm:%s278]
                %398 = vst [vmem:[%s286 + $0x1b8] sm:%s278] %v397
                %v399 = vld [vmem:[%s285 + $0x380] sm:%s278]
                %400 = vst [vmem:[%s286 + $0x1c0] sm:%s278] %v399
                %v401 = vld [vmem:[%s285 + $0x390] sm:%s278]
                %402 = vst [vmem:[%s286 + $0x1c8] sm:%s278] %v401
                %v403 = vld [vmem:[%s285 + $0x3a0] sm:%s278]
                %404 = vst [vmem:[%s286 + $0x1d0] sm:%s278] %v403
                %v405 = vld [vmem:[%s285 + $0x3b0] sm:%s278]
                %406 = vst [vmem:[%s286 + $0x1d8] sm:%s278] %v405
                %v407 = vld [vmem:[%s285 + $0x3c0] sm:%s278]
                %408 = vst [vmem:[%s286 + $0x1e0] sm:%s278] %v407
                %v409 = vld [vmem:[%s285 + $0x3d0] sm:%s278]
                %410 = vst [vmem:[%s286 + $0x1e8] sm:%s278] %v409
                %v411 = vld [vmem:[%s285 + $0x3e0] sm:%s278]
                %412 = vst [vmem:[%s286 + $0x1f0] sm:%s278] %v411
                %v413 = vld [vmem:[%s285 + $0x3f0] sm:%s278]
                %414 = vst [vmem:[%s286 + $0x1f8] sm:%s278] %v413
                %v415 = vld [vmem:[%s285 + $0x400] sm:%s278]
                %416 = vst [vmem:[%s286 + $0x200] sm:%s278] %v415
                %v417 = vld [vmem:[%s285 + $0x410] sm:%s278]
                %418 = vst [vmem:[%s286 + $0x208] sm:%s278] %v417
                %v419 = vld [vmem:[%s285 + $0x420] sm:%s278]
                %420 = vst [vmem:[%s286 + $0x210] sm:%s278] %v419
                %v421 = vld [vmem:[%s285 + $0x430] sm:%s278]
                %422 = vst [vmem:[%s286 + $0x218] sm:%s278] %v421
                %v423 = vld [vmem:[%s285 + $0x440] sm:%s278]
                %424 = vst [vmem:[%s286 + $0x220] sm:%s278] %v423
                %v425 = vld [vmem:[%s285 + $0x450] sm:%s278]
                %426 = vst [vmem:[%s286 + $0x228] sm:%s278] %v425
                %v427 = vld [vmem:[%s285 + $0x460] sm:%s278]
                %428 = vst [vmem:[%s286 + $0x230] sm:%s278] %v427
                %v429 = vld [vmem:[%s285 + $0x470] sm:%s278]
                %430 = vst [vmem:[%s286 + $0x238] sm:%s278] %v429
                %v431 = vld [vmem:[%s285 + $0x480] sm:%s278]
                %432 = vst [vmem:[%s286 + $0x240] sm:%s278] %v431
                %v433 = vld [vmem:[%s285 + $0x490] sm:%s278]
                %434 = vst [vmem:[%s286 + $0x248] sm:%s278] %v433
                %v435 = vld [vmem:[%s285 + $0x4a0] sm:%s278]
                %436 = vst [vmem:[%s286 + $0x250] sm:%s278] %v435
                %v437 = vld [vmem:[%s285 + $0x4b0] sm:%s278]
                %438 = vst [vmem:[%s286 + $0x258] sm:%s278] %v437
                %v439 = vld [vmem:[%s285 + $0x4c0] sm:%s278]
                %440 = vst [vmem:[%s286 + $0x260] sm:%s278] %v439
                %v441 = vld [vmem:[%s285 + $0x4d0] sm:%s278]
                %442 = vst [vmem:[%s286 + $0x268] sm:%s278] %v441
                %v443 = vld [vmem:[%s285 + $0x4e0] sm:%s278]
                %444 = vst [vmem:[%s286 + $0x270] sm:%s278] %v443
                %v445 = vld [vmem:[%s285 + $0x4f0] sm:%s278]
                %446 = vst [vmem:[%s286 + $0x278] sm:%s278] %v445
                %v447 = vld [vmem:[%s285 + $0x500] sm:%s278]
                %448 = vst [vmem:[%s286 + $0x280] sm:%s278] %v447
                %v449 = vld [vmem:[%s285 + $0x510] sm:%s278]
                %450 = vst [vmem:[%s286 + $0x288] sm:%s278] %v449
                %v451 = vld [vmem:[%s285 + $0x520] sm:%s278]
                %452 = vst [vmem:[%s286 + $0x290] sm:%s278] %v451
                %v453 = vld [vmem:[%s285 + $0x530] sm:%s278]
                %454 = vst [vmem:[%s286 + $0x298] sm:%s278] %v453
                %v455 = vld [vmem:[%s285 + $0x540] sm:%s278]
                %456 = vst [vmem:[%s286 + $0x2a0] sm:%s278] %v455
                %v457 = vld [vmem:[%s285 + $0x550] sm:%s278]
                %458 = vst [vmem:[%s286 + $0x2a8] sm:%s278] %v457
                %v459 = vld [vmem:[%s285 + $0x560] sm:%s278]
                %460 = vst [vmem:[%s286 + $0x2b0] sm:%s278] %v459
                %v461 = vld [vmem:[%s285 + $0x570] sm:%s278]
                %462 = vst [vmem:[%s286 + $0x2b8] sm:%s278] %v461
                %v463 = vld [vmem:[%s285 + $0x580] sm:%s278]
                %464 = vst [vmem:[%s286 + $0x2c0] sm:%s278] %v463
                %v465 = vld [vmem:[%s285 + $0x590] sm:%s278]
                %466 = vst [vmem:[%s286 + $0x2c8] sm:%s278] %v465
                %v467 = vld [vmem:[%s285 + $0x5a0] sm:%s278]
                %468 = vst [vmem:[%s286 + $0x2d0] sm:%s278] %v467
                %v469 = vld [vmem:[%s285 + $0x5b0] sm:%s278]
                %470 = vst [vmem:[%s286 + $0x2d8] sm:%s278] %v469
                %v471 = vld [vmem:[%s285 + $0x5c0] sm:%s278]
                %472 = vst [vmem:[%s286 + $0x2e0] sm:%s278] %v471
                %v473 = vld [vmem:[%s285 + $0x5d0] sm:%s278]
                %474 = vst [vmem:[%s286 + $0x2e8] sm:%s278] %v473
                %v475 = vld [vmem:[%s285 + $0x5e0] sm:%s278]
                %476 = vst [vmem:[%s286 + $0x2f0] sm:%s278] %v475
                %v477 = vld [vmem:[%s285 + $0x5f0] sm:%s278]
                %478 = vst [vmem:[%s286 + $0x2f8] sm:%s278] %v477
                %v479 = vld [vmem:[%s285 + $0x600] sm:%s278]
                %480 = vst [vmem:[%s286 + $0x300] sm:%s278] %v479
                %v481 = vld [vmem:[%s285 + $0x610] sm:%s278]
                %482 = vst [vmem:[%s286 + $0x308] sm:%s278] %v481
                %v483 = vld [vmem:[%s285 + $0x620] sm:%s278]
                %484 = vst [vmem:[%s286 + $0x310] sm:%s278] %v483
                %v485 = vld [vmem:[%s285 + $0x630] sm:%s278]
                %486 = vst [vmem:[%s286 + $0x318] sm:%s278] %v485
                %v487 = vld [vmem:[%s285 + $0x640] sm:%s278]
                %488 = vst [vmem:[%s286 + $0x320] sm:%s278] %v487
                %v489 = vld [vmem:[%s285 + $0x650] sm:%s278]
                %490 = vst [vmem:[%s286 + $0x328] sm:%s278] %v489
                %v491 = vld [vmem:[%s285 + $0x660] sm:%s278]
                %492 = vst [vmem:[%s286 + $0x330] sm:%s278] %v491
                %v493 = vld [vmem:[%s285 + $0x670] sm:%s278]
                %494 = vst [vmem:[%s286 + $0x338] sm:%s278] %v493
                %v495 = vld [vmem:[%s285 + $0x680] sm:%s278]
                %496 = vst [vmem:[%s286 + $0x340] sm:%s278] %v495
                %v497 = vld [vmem:[%s285 + $0x690] sm:%s278]
                %498 = vst [vmem:[%s286 + $0x348] sm:%s278] %v497
                %v499 = vld [vmem:[%s285 + $0x6a0] sm:%s278]
                %500 = vst [vmem:[%s286 + $0x350] sm:%s278] %v499
                %v501 = vld [vmem:[%s285 + $0x6b0] sm:%s278]
                %502 = vst [vmem:[%s286 + $0x358] sm:%s278] %v501
                %v503 = vld [vmem:[%s285 + $0x6c0] sm:%s278]
                %504 = vst [vmem:[%s286 + $0x360] sm:%s278] %v503
                %v505 = vld [vmem:[%s285 + $0x6d0] sm:%s278]
                %506 = vst [vmem:[%s286 + $0x368] sm:%s278] %v505
                %v507 = vld [vmem:[%s285 + $0x6e0] sm:%s278]
                %508 = vst [vmem:[%s286 + $0x370] sm:%s278] %v507
                %v509 = vld [vmem:[%s285 + $0x6f0] sm:%s278]
                %510 = vst [vmem:[%s286 + $0x378] sm:%s278] %v509
                %v511 = vld [vmem:[%s285 + $0x700] sm:%s278]
                %512 = vst [vmem:[%s286 + $0x380] sm:%s278] %v511
                %v513 = vld [vmem:[%s285 + $0x710] sm:%s278]
                %514 = vst [vmem:[%s286 + $0x388] sm:%s278] %v513
                %v515 = vld [vmem:[%s285 + $0x720] sm:%s278]
                %516 = vst [vmem:[%s286 + $0x390] sm:%s278] %v515
                %v517 = vld [vmem:[%s285 + $0x730] sm:%s278]
                %518 = vst [vmem:[%s286 + $0x398] sm:%s278] %v517
                %v519 = vld [vmem:[%s285 + $0x740] sm:%s278]
                %520 = vst [vmem:[%s286 + $0x3a0] sm:%s278] %v519
                %v521 = vld [vmem:[%s285 + $0x750] sm:%s278]
                %522 = vst [vmem:[%s286 + $0x3a8] sm:%s278] %v521
                %v523 = vld [vmem:[%s285 + $0x760] sm:%s278]
                %524 = vst [vmem:[%s286 + $0x3b0] sm:%s278] %v523
                %v525 = vld [vmem:[%s285 + $0x770] sm:%s278]
                %526 = vst [vmem:[%s286 + $0x3b8] sm:%s278] %v525
                %v527 = vld [vmem:[%s285 + $0x780] sm:%s278]
                %528 = vst [vmem:[%s286 + $0x3c0] sm:%s278] %v527
                %v529 = vld [vmem:[%s285 + $0x790] sm:%s278]
                %530 = vst [vmem:[%s286 + $0x3c8] sm:%s278] %v529
                %v531 = vld [vmem:[%s285 + $0x7a0] sm:%s278]
                %532 = vst [vmem:[%s286 + $0x3d0] sm:%s278] %v531
                %v533 = vld [vmem:[%s285 + $0x7b0] sm:%s278]
                %534 = vst [vmem:[%s286 + $0x3d8] sm:%s278] %v533
                %v535 = vld [vmem:[%s285 + $0x7c0] sm:%s278]
                %536 = vst [vmem:[%s286 + $0x3e0] sm:%s278] %v535
                %v537 = vld [vmem:[%s285 + $0x7d0] sm:%s278]
                %538 = vst [vmem:[%s286 + $0x3e8] sm:%s278] %v537
                %v539 = vld [vmem:[%s285 + $0x7e0] sm:%s278]
                %540 = vst [vmem:[%s286 + $0x3f0] sm:%s278] %v539
                %v541 = vld [vmem:[%s285 + $0x7f0] sm:%s278]
                %542 = vst [vmem:[%s286 + $0x3f8] sm:%s278] %v541
                %v543 = vld [vmem:[%s285 + $0x800] sm:%s278]
                %544 = vst [vmem:[%s286 + $0x400] sm:%s278] %v543
                %v545 = vld [vmem:[%s285 + $0x810] sm:%s278]
                %546 = vst [vmem:[%s286 + $0x408] sm:%s278] %v545
                %v547 = vld [vmem:[%s285 + $0x820] sm:%s278]
                %548 = vst [vmem:[%s286 + $0x410] sm:%s278] %v547
                %v549 = vld [vmem:[%s285 + $0x830] sm:%s278]
                %550 = vst [vmem:[%s286 + $0x418] sm:%s278] %v549
                %v551 = vld [vmem:[%s285 + $0x840] sm:%s278]
                %552 = vst [vmem:[%s286 + $0x420] sm:%s278] %v551
                %v553 = vld [vmem:[%s285 + $0x850] sm:%s278]
                %554 = vst [vmem:[%s286 + $0x428] sm:%s278] %v553
                %v555 = vld [vmem:[%s285 + $0x860] sm:%s278]
                %556 = vst [vmem:[%s286 + $0x430] sm:%s278] %v555
                %v557 = vld [vmem:[%s285 + $0x870] sm:%s278]
                %558 = vst [vmem:[%s286 + $0x438] sm:%s278] %v557
                %v559 = vld [vmem:[%s285 + $0x880] sm:%s278]
                %560 = vst [vmem:[%s286 + $0x440] sm:%s278] %v559
                %v561 = vld [vmem:[%s285 + $0x890] sm:%s278]
                %562 = vst [vmem:[%s286 + $0x448] sm:%s278] %v561
                %v563 = vld [vmem:[%s285 + $0x8a0] sm:%s278]
                %564 = vst [vmem:[%s286 + $0x450] sm:%s278] %v563
                %v565 = vld [vmem:[%s285 + $0x8b0] sm:%s278]
                %566 = vst [vmem:[%s286 + $0x458] sm:%s278] %v565
                %v567 = vld [vmem:[%s285 + $0x8c0] sm:%s278]
                %568 = vst [vmem:[%s286 + $0x460] sm:%s278] %v567
                %v569 = vld [vmem:[%s285 + $0x8d0] sm:%s278]
                %570 = vst [vmem:[%s286 + $0x468] sm:%s278] %v569
                %v571 = vld [vmem:[%s285 + $0x8e0] sm:%s278]
                %572 = vst [vmem:[%s286 + $0x470] sm:%s278] %v571
                %v573 = vld [vmem:[%s285 + $0x8f0] sm:%s278]
                %574 = vst [vmem:[%s286 + $0x478] sm:%s278] %v573
                %v575 = vld [vmem:[%s285 + $0x900] sm:%s278]
                %576 = vst [vmem:[%s286 + $0x480] sm:%s278] %v575
                %v577 = vld [vmem:[%s285 + $0x910] sm:%s278]
                %578 = vst [vmem:[%s286 + $0x488] sm:%s278] %v577
                %v579 = vld [vmem:[%s285 + $0x920] sm:%s278]
                %580 = vst [vmem:[%s286 + $0x490] sm:%s278] %v579
                %v581 = vld [vmem:[%s285 + $0x930] sm:%s278]
                %582 = vst [vmem:[%s286 + $0x498] sm:%s278] %v581
                %v583 = vld [vmem:[%s285 + $0x940] sm:%s278]
                %584 = vst [vmem:[%s286 + $0x4a0] sm:%s278] %v583
                %v585 = vld [vmem:[%s285 + $0x950] sm:%s278]
                %586 = vst [vmem:[%s286 + $0x4a8] sm:%s278] %v585
                %v587 = vld [vmem:[%s285 + $0x960] sm:%s278]
                %588 = vst [vmem:[%s286 + $0x4b0] sm:%s278] %v587
                %v589 = vld [vmem:[%s285 + $0x970] sm:%s278]
                %590 = vst [vmem:[%s286 + $0x4b8] sm:%s278] %v589
                %v591 = vld [vmem:[%s285 + $0x980] sm:%s278]
                %592 = vst [vmem:[%s286 + $0x4c0] sm:%s278] %v591
                %v593 = vld [vmem:[%s285 + $0x990] sm:%s278]
                %594 = vst [vmem:[%s286 + $0x4c8] sm:%s278] %v593
                %v595 = vld [vmem:[%s285 + $0x9a0] sm:%s278]
                %596 = vst [vmem:[%s286 + $0x4d0] sm:%s278] %v595
                %v597 = vld [vmem:[%s285 + $0x9b0] sm:%s278]
                %598 = vst [vmem:[%s286 + $0x4d8] sm:%s278] %v597
                %v599 = vld [vmem:[%s285 + $0x9c0] sm:%s278]
                %600 = vst [vmem:[%s286 + $0x4e0] sm:%s278] %v599
                %v601 = vld [vmem:[%s285 + $0x9d0] sm:%s278]
                %602 = vst [vmem:[%s286 + $0x4e8] sm:%s278] %v601
                %v603 = vld [vmem:[%s285 + $0x9e0] sm:%s278]
                %604 = vst [vmem:[%s286 + $0x4f0] sm:%s278] %v603
                %v605 = vld [vmem:[%s285 + $0x9f0] sm:%s278]
                %606 = vst [vmem:[%s286 + $0x4f8] sm:%s278] %v605
                %v607 = vld [vmem:[%s285 + $0xa00] sm:%s278]
                %608 = vst [vmem:[%s286 + $0x500] sm:%s278] %v607
                %v609 = vld [vmem:[%s285 + $0xa10] sm:%s278]
                %610 = vst [vmem:[%s286 + $0x508] sm:%s278] %v609
                %v611 = vld [vmem:[%s285 + $0xa20] sm:%s278]
                %612 = vst [vmem:[%s286 + $0x510] sm:%s278] %v611
                %v613 = vld [vmem:[%s285 + $0xa30] sm:%s278]
                %614 = vst [vmem:[%s286 + $0x518] sm:%s278] %v613
                %v615 = vld [vmem:[%s285 + $0xa40] sm:%s278]
                %616 = vst [vmem:[%s286 + $0x520] sm:%s278] %v615
                %v617 = vld [vmem:[%s285 + $0xa50] sm:%s278]
                %618 = vst [vmem:[%s286 + $0x528] sm:%s278] %v617
                %v619 = vld [vmem:[%s285 + $0xa60] sm:%s278]
                %620 = vst [vmem:[%s286 + $0x530] sm:%s278] %v619
                %v621 = vld [vmem:[%s285 + $0xa70] sm:%s278]
                %622 = vst [vmem:[%s286 + $0x538] sm:%s278] %v621
                %v623 = vld [vmem:[%s285 + $0xa80] sm:%s278]
                %624 = vst [vmem:[%s286 + $0x540] sm:%s278] %v623
                %v625 = vld [vmem:[%s285 + $0xa90] sm:%s278]
                %626 = vst [vmem:[%s286 + $0x548] sm:%s278] %v625
                %v627 = vld [vmem:[%s285 + $0xaa0] sm:%s278]
                %628 = vst [vmem:[%s286 + $0x550] sm:%s278] %v627
                %v629 = vld [vmem:[%s285 + $0xab0] sm:%s278]
                %630 = vst [vmem:[%s286 + $0x558] sm:%s278] %v629
                %v631 = vld [vmem:[%s285 + $0xac0] sm:%s278]
                %632 = vst [vmem:[%s286 + $0x560] sm:%s278] %v631
                %v633 = vld [vmem:[%s285 + $0xad0] sm:%s278]
                %634 = vst [vmem:[%s286 + $0x568] sm:%s278] %v633
                %v635 = vld [vmem:[%s285 + $0xae0] sm:%s278]
                %636 = vst [vmem:[%s286 + $0x570] sm:%s278] %v635
                %v637 = vld [vmem:[%s285 + $0xaf0] sm:%s278]
                %638 = vst [vmem:[%s286 + $0x578] sm:%s278] %v637
                %v639 = vld [vmem:[%s285 + $0xb00] sm:%s278]
                %640 = vst [vmem:[%s286 + $0x580] sm:%s278] %v639
                %v641 = vld [vmem:[%s285 + $0xb10] sm:%s278]
                %642 = vst [vmem:[%s286 + $0x588] sm:%s278] %v641
                %v643 = vld [vmem:[%s285 + $0xb20] sm:%s278]
                %644 = vst [vmem:[%s286 + $0x590] sm:%s278] %v643
                %v645 = vld [vmem:[%s285 + $0xb30] sm:%s278]
                %646 = vst [vmem:[%s286 + $0x598] sm:%s278] %v645
                %v647 = vld [vmem:[%s285 + $0xb40] sm:%s278]
                %648 = vst [vmem:[%s286 + $0x5a0] sm:%s278] %v647
                %v649 = vld [vmem:[%s285 + $0xb50] sm:%s278]
                %650 = vst [vmem:[%s286 + $0x5a8] sm:%s278] %v649
                %v651 = vld [vmem:[%s285 + $0xb60] sm:%s278]
                %652 = vst [vmem:[%s286 + $0x5b0] sm:%s278] %v651
                %v653 = vld [vmem:[%s285 + $0xb70] sm:%s278]
                %654 = vst [vmem:[%s286 + $0x5b8] sm:%s278] %v653
                %v655 = vld [vmem:[%s285 + $0xb80] sm:%s278]
                %656 = vst [vmem:[%s286 + $0x5c0] sm:%s278] %v655
                %v657 = vld [vmem:[%s285 + $0xb90] sm:%s278]
                %658 = vst [vmem:[%s286 + $0x5c8] sm:%s278] %v657
                %v659 = vld [vmem:[%s285 + $0xba0] sm:%s278]
                %660 = vst [vmem:[%s286 + $0x5d0] sm:%s278] %v659
                %v661 = vld [vmem:[%s285 + $0xbb0] sm:%s278]
                %662 = vst [vmem:[%s286 + $0x5d8] sm:%s278] %v661
                %v663 = vld [vmem:[%s285 + $0xbc0] sm:%s278]
                %664 = vst [vmem:[%s286 + $0x5e0] sm:%s278] %v663
                %v665 = vld [vmem:[%s285 + $0xbd0] sm:%s278]
                %666 = vst [vmem:[%s286 + $0x5e8] sm:%s278] %v665
                %v667 = vld [vmem:[%s285 + $0xbe0] sm:%s278]
                %668 = vst [vmem:[%s286 + $0x5f0] sm:%s278] %v667
                %v669 = vld [vmem:[%s285 + $0xbf0] sm:%s278]
                %670 = vst [vmem:[%s286 + $0x5f8] sm:%s278] %v669
                %v671 = vld [vmem:[%s285 + $0xc00] sm:%s278]
                %672 = vst [vmem:[%s286 + $0x600] sm:%s278] %v671
                %v673 = vld [vmem:[%s285 + $0xc10] sm:%s278]
                %674 = vst [vmem:[%s286 + $0x608] sm:%s278] %v673
                %v675 = vld [vmem:[%s285 + $0xc20] sm:%s278]
                %676 = vst [vmem:[%s286 + $0x610] sm:%s278] %v675
                %v677 = vld [vmem:[%s285 + $0xc30] sm:%s278]
                %678 = vst [vmem:[%s286 + $0x618] sm:%s278] %v677
                %v679 = vld [vmem:[%s285 + $0xc40] sm:%s278]
                %680 = vst [vmem:[%s286 + $0x620] sm:%s278] %v679
                %v681 = vld [vmem:[%s285 + $0xc50] sm:%s278]
                %682 = vst [vmem:[%s286 + $0x628] sm:%s278] %v681
                %v683 = vld [vmem:[%s285 + $0xc60] sm:%s278]
                %684 = vst [vmem:[%s286 + $0x630] sm:%s278] %v683
                %v685 = vld [vmem:[%s285 + $0xc70] sm:%s278]
                %686 = vst [vmem:[%s286 + $0x638] sm:%s278] %v685
                %v687 = vld [vmem:[%s285 + $0xc80] sm:%s278]
                %688 = vst [vmem:[%s286 + $0x640] sm:%s278] %v687
                %v689 = vld [vmem:[%s285 + $0xc90] sm:%s278]
                %690 = vst [vmem:[%s286 + $0x648] sm:%s278] %v689
                %v691 = vld [vmem:[%s285 + $0xca0] sm:%s278]
                %692 = vst [vmem:[%s286 + $0x650] sm:%s278] %v691
                %v693 = vld [vmem:[%s285 + $0xcb0] sm:%s278]
                %694 = vst [vmem:[%s286 + $0x658] sm:%s278] %v693
                %v695 = vld [vmem:[%s285 + $0xcc0] sm:%s278]
                %696 = vst [vmem:[%s286 + $0x660] sm:%s278] %v695
                %v697 = vld [vmem:[%s285 + $0xcd0] sm:%s278]
                %698 = vst [vmem:[%s286 + $0x668] sm:%s278] %v697
                %v699 = vld [vmem:[%s285 + $0xce0] sm:%s278]
                %700 = vst [vmem:[%s286 + $0x670] sm:%s278] %v699
                %v701 = vld [vmem:[%s285 + $0xcf0] sm:%s278]
                %702 = vst [vmem:[%s286 + $0x678] sm:%s278] %v701
                %v703 = vld [vmem:[%s285 + $0xd00] sm:%s278]
                %704 = vst [vmem:[%s286 + $0x680] sm:%s278] %v703
                %v705 = vld [vmem:[%s285 + $0xd10] sm:%s278]
                %706 = vst [vmem:[%s286 + $0x688] sm:%s278] %v705
                %v707 = vld [vmem:[%s285 + $0xd20] sm:%s278]
                %708 = vst [vmem:[%s286 + $0x690] sm:%s278] %v707
                %v709 = vld [vmem:[%s285 + $0xd30] sm:%s278]
                %710 = vst [vmem:[%s286 + $0x698] sm:%s278] %v709
                %v711 = vld [vmem:[%s285 + $0xd40] sm:%s278]
                %712 = vst [vmem:[%s286 + $0x6a0] sm:%s278] %v711
                %v713 = vld [vmem:[%s285 + $0xd50] sm:%s278]
                %714 = vst [vmem:[%s286 + $0x6a8] sm:%s278] %v713
                %v715 = vld [vmem:[%s285 + $0xd60] sm:%s278]
                %716 = vst [vmem:[%s286 + $0x6b0] sm:%s278] %v715
                %v717 = vld [vmem:[%s285 + $0xd70] sm:%s278]
                %718 = vst [vmem:[%s286 + $0x6b8] sm:%s278] %v717
                %v719 = vld [vmem:[%s285 + $0xd80] sm:%s278]
                %720 = vst [vmem:[%s286 + $0x6c0] sm:%s278] %v719
                %v721 = vld [vmem:[%s285 + $0xd90] sm:%s278]
                %722 = vst [vmem:[%s286 + $0x6c8] sm:%s278] %v721
                %v723 = vld [vmem:[%s285 + $0xda0] sm:%s278]
                %724 = vst [vmem:[%s286 + $0x6d0] sm:%s278] %v723
                %v725 = vld [vmem:[%s285 + $0xdb0] sm:%s278]
                %726 = vst [vmem:[%s286 + $0x6d8] sm:%s278] %v725
                %v727 = vld [vmem:[%s285 + $0xdc0] sm:%s278]
                %728 = vst [vmem:[%s286 + $0x6e0] sm:%s278] %v727
                %v729 = vld [vmem:[%s285 + $0xdd0] sm:%s278]
                %730 = vst [vmem:[%s286 + $0x6e8] sm:%s278] %v729
                %v731 = vld [vmem:[%s285 + $0xde0] sm:%s278]
                %732 = vst [vmem:[%s286 + $0x6f0] sm:%s278] %v731
                %v733 = vld [vmem:[%s285 + $0xdf0] sm:%s278]
                %734 = vst [vmem:[%s286 + $0x6f8] sm:%s278] %v733
                %v735 = vld [vmem:[%s285 + $0xe00] sm:%s278]
                %736 = vst [vmem:[%s286 + $0x700] sm:%s278] %v735
                %v737 = vld [vmem:[%s285 + $0xe10] sm:%s278]
                %738 = vst [vmem:[%s286 + $0x708] sm:%s278] %v737
                %v739 = vld [vmem:[%s285 + $0xe20] sm:%s278]
                %740 = vst [vmem:[%s286 + $0x710] sm:%s278] %v739
                %v741 = vld [vmem:[%s285 + $0xe30] sm:%s278]
                %742 = vst [vmem:[%s286 + $0x718] sm:%s278] %v741
                %v743 = vld [vmem:[%s285 + $0xe40] sm:%s278]
                %744 = vst [vmem:[%s286 + $0x720] sm:%s278] %v743
                %v745 = vld [vmem:[%s285 + $0xe50] sm:%s278]
                %746 = vst [vmem:[%s286 + $0x728] sm:%s278] %v745
                %v747 = vld [vmem:[%s285 + $0xe60] sm:%s278]
                %748 = vst [vmem:[%s286 + $0x730] sm:%s278] %v747
                %v749 = vld [vmem:[%s285 + $0xe70] sm:%s278]
                %750 = vst [vmem:[%s286 + $0x738] sm:%s278] %v749
                %v751 = vld [vmem:[%s285 + $0xe80] sm:%s278]
                %752 = vst [vmem:[%s286 + $0x740] sm:%s278] %v751
                %v753 = vld [vmem:[%s285 + $0xe90] sm:%s278]
                %754 = vst [vmem:[%s286 + $0x748] sm:%s278] %v753
                %v755 = vld [vmem:[%s285 + $0xea0] sm:%s278]
                %756 = vst [vmem:[%s286 + $0x750] sm:%s278] %v755
                %v757 = vld [vmem:[%s285 + $0xeb0] sm:%s278]
                %758 = vst [vmem:[%s286 + $0x758] sm:%s278] %v757
                %v759 = vld [vmem:[%s285 + $0xec0] sm:%s278]
                %760 = vst [vmem:[%s286 + $0x760] sm:%s278] %v759
                %v761 = vld [vmem:[%s285 + $0xed0] sm:%s278]
                %762 = vst [vmem:[%s286 + $0x768] sm:%s278] %v761
                %v763 = vld [vmem:[%s285 + $0xee0] sm:%s278]
                %764 = vst [vmem:[%s286 + $0x770] sm:%s278] %v763
                %v765 = vld [vmem:[%s285 + $0xef0] sm:%s278]
                %766 = vst [vmem:[%s286 + $0x778] sm:%s278] %v765
                %v767 = vld [vmem:[%s285 + $0xf00] sm:%s278]
                %768 = vst [vmem:[%s286 + $0x780] sm:%s278] %v767
                %v769 = vld [vmem:[%s285 + $0xf10] sm:%s278]
                %770 = vst [vmem:[%s286 + $0x788] sm:%s278] %v769
                %v771 = vld [vmem:[%s285 + $0xf20] sm:%s278]
                %772 = vst [vmem:[%s286 + $0x790] sm:%s278] %v771
                %v773 = vld [vmem:[%s285 + $0xf30] sm:%s278]
                %774 = vst [vmem:[%s286 + $0x798] sm:%s278] %v773
                %v775 = vld [vmem:[%s285 + $0xf40] sm:%s278]
                %776 = vst [vmem:[%s286 + $0x7a0] sm:%s278] %v775
                %v777 = vld [vmem:[%s285 + $0xf50] sm:%s278]
                %778 = vst [vmem:[%s286 + $0x7a8] sm:%s278] %v777
                %v779 = vld [vmem:[%s285 + $0xf60] sm:%s278]
                %780 = vst [vmem:[%s286 + $0x7b0] sm:%s278] %v779
                %v781 = vld [vmem:[%s285 + $0xf70] sm:%s278]
                %782 = vst [vmem:[%s286 + $0x7b8] sm:%s278] %v781
                %v783 = vld [vmem:[%s285 + $0xf80] sm:%s278]
                %784 = vst [vmem:[%s286 + $0x7c0] sm:%s278] %v783
                %v785 = vld [vmem:[%s285 + $0xf90] sm:%s278]
                %786 = vst [vmem:[%s286 + $0x7c8] sm:%s278] %v785
                %v787 = vld [vmem:[%s285 + $0xfa0] sm:%s278]
                %788 = vst [vmem:[%s286 + $0x7d0] sm:%s278] %v787
                %v789 = vld [vmem:[%s285 + $0xfb0] sm:%s278]
                %790 = vst [vmem:[%s286 + $0x7d8] sm:%s278] %v789
                %v791 = vld [vmem:[%s285 + $0xfc0] sm:%s278]
                %792 = vst [vmem:[%s286 + $0x7e0] sm:%s278] %v791
                %v793 = vld [vmem:[%s285 + $0xfd0] sm:%s278]
                %794 = vst [vmem:[%s286 + $0x7e8] sm:%s278] %v793
                %v795 = vld [vmem:[%s285 + $0xfe0] sm:%s278]
                %796 = vst [vmem:[%s286 + $0x7f0] sm:%s278] %v795
                %v797 = vld [vmem:[%s285 + $0xff0] sm:%s278]
                %798 = vst [vmem:[%s286 + $0x7f8] sm:%s278] %v797
              $region60: #{cnn_base_forward.7} parent=54 // loop_footer
                %s284 = sadd.s32 1, %s280
              $region61: #{cnn_base_forward.7} parent=54 // loop_footer_branch
                %279 = sbr.rel target = $region57
              $region62: #{cnn_base_forward.7} parent=54 // loop_exit
                _
            $region55: #{cnn_base_forward.7} parent=46 // pred_fallthru
              _
          $region47: #{cnn_base_forward.7} parent=42 // pred_fallthru
            _
          %2383 = vnop
        $region43: #{cnn_base_forward.7} parent=15 // pred_fallthru
          _
        // Predicated region
        $region92: #{cnn_base_forward.7} parent=15 // pred_check
          %p2384 = pneg %p98
        $region93: #{cnn_base_forward.7} parent=15 // pred_check_branch
          %2386 = sbr.rel (%p2384) target = $region95
        $region94: #{cnn_base_forward.7} parent=15 // pred_region
          %s2387 = smul.u32 2, %s19
          %p2388 = scmp.lt.s32.totalorder %s2387, 3
          %s2389 = scalar_select %p2388, %s2387, 3
          %s2390 = scalar_lea.vmem %s2, %s2389
          %s2391 = smul.u32 2, %s19
        $region95: #{cnn_base_forward.7} parent=15 // pred_fallthru
          _
        // Predicated region
        $region96: #{cnn_base_forward.7} parent=15 // pred_check
          %p2392 = pneg %p124
        $region97: #{cnn_base_forward.7} parent=15 // pred_check_branch
          %2394 = sbr.rel (%p2392) target = $region99
        $region98: #{cnn_base_forward.7} parent=15 // pred_region
          %s2395 = smul.u32 32, %s19
          %p2396 = scmp.lt.s32.totalorder %s2395, 63
          %s2397 = scalar_select %p2396, %s2395, 63
          %s2398 = smul.addr %s2397, 4
          %s2399 = scalar_lea.vmem %s3, %s2398
          %s2400 = smul.u32 32, %s19
        $region99: #{cnn_base_forward.7} parent=15 // pred_fallthru
          _
      $region16: #{cnn_base_forward.7} parent=5 // pred_fallthru
        _
      %p2401 = scmp.le.s32.totalorder 1, %s12
      %p2402 = scmp.lt.s32.totalorder %s12, 9
      %p2403 = pnand %p2401, %p2402
      %p2404 = pneg %p2403
      // Predicated region
      $region100: #{cnn_base_forward.7} parent=5 // pred_check
        _
      $region101: #{cnn_base_forward.7} parent=5 // pred_check_branch
        %2406 = sbr.rel (%p2403) target = $region103
      $region102: #{cnn_base_forward.7} parent=5 // pred_region
        %s2407 = ssub.s32 %s12, 1
        %s2408 = sand.u32 %s37, 1
        %s2409 = sand.u32 %s37, 1
        %s2410 = smul.addr %s2409, 128
        %s2411 = scalar_lea.vmem [#allocation3], %s2410
        // Predicated region
        $region104: #{cnn_base_forward.7} parent=102 // pred_check
          %p2412 = pneg %p50
        $region105: #{cnn_base_forward.7} parent=102 // pred_check_branch
          %2414 = sbr.rel (%p2412) target = $region107
        $region106: #{cnn_base_forward.7} parent=102 // pred_region
          _
        $region107: #{cnn_base_forward.7} parent=102 // pred_fallthru
          _
        %s2415 = sand.u32 %s65, 1
        %s2416 = sand.u32 %s65, 1
        %s2417 = smul.addr %s2416, 2048
        %s2418 = scalar_lea.vmem [#allocation4], %s2417
        // Predicated region
        $region108: #{cnn_base_forward.7} parent=102 // pred_check
          %p2419 = pneg %p78
        $region109: #{cnn_base_forward.7} parent=102 // pred_check_branch
          %2421 = sbr.rel (%p2419) target = $region111
        $region110: #{cnn_base_forward.7} parent=102 // pred_region
          _
        $region111: #{cnn_base_forward.7} parent=102 // pred_fallthru
          _
        %s2422 = sand.u32 %s37, 1
        %s2423 = sand.u32 %s37, 1
        %s2424 = smul.addr %s2423, 128
        %s2425 = scalar_lea.vmem [#allocation3], %s2424
        %p2426 = pneg %p50
        %p2427 = pneg %p47
        %s2428 = sand.u32 %s65, 1
        %s2429 = sand.u32 %s65, 1
        %s2430 = smul.addr %s2429, 2048
        %s2431 = scalar_lea.vmem [#allocation4], %s2430
        %p2432 = pneg %p78
        %p2433 = pneg %p75
        %s2434 = smul.u32 2, %s21
        %p2435 = scmp.lt.s32.totalorder %s2434, 3
        %s2436 = scalar_select %p2435, %s2434, 3
        %s2437 = scalar_lea.vmem %s2, %s2436
        %p2438 = pneg %p104
        %p2439 = pneg %p101
        %s2440 = smul.u32 32, %s21
        %p2441 = scmp.lt.s32.totalorder %s2440, 63
        %s2442 = scalar_select %p2441, %s2440, 63
        %s2443 = smul.addr %s2442, 4
        %s2444 = scalar_lea.vmem %s3, %s2443
        %p2445 = pneg %p130
        %p2446 = pneg %p127
        %p2447 = pneg %p156
        %p2448 = pneg %p153
        %s2449 = sand.u32 %s143, 1
        %s2450 = sand.u32 %s143, 1
        %s2451 = smul.addr %s2450, 32
        %s2452 = scalar_lea.vmem [#allocation5], %s2451
        %p2453 = pneg %p182
        %p2454 = pneg %p179
        %s2455 = sand.u32 %s169, 1
        %s2456 = sand.u32 %s169, 1
        %s2457 = smul.addr %s2456, 16
        %s2458 = scalar_lea.vmem [#allocation6], %s2457
        %s2459 = smul.u32 16, %s22
        %s2460 = smul.u32 256, %s22
        %s2461 = smul.u32 2, %s21
        %s2462 = smul.u32 2, %s21
        %p2463 = scmp.lt.s32.totalorder %s2462, 3
        %s2464 = scalar_select %p2463, %s2462, 3
        %s2465 = scalar_lea.vmem %s2, %s2464
        %s2466 = smul.u32 2, %s21
        %s2467 = smul.u32 32, %s21
        %p2468 = scmp.lt.s32.totalorder %s2467, 63
        %s2469 = scalar_select %p2468, %s2467, 63
        %s2470 = smul.addr %s2469, 4
        %s2471 = scalar_lea.vmem %s3, %s2470
        %s2472 = smul.u32 32, %s21
        %s2473 = smul.u32 2, %s21
        %p2474 = scmp.eq.s32.totalorder %s22, 0
        // Predicated region
        $region112: #{cnn_base_forward.7} parent=102 // pred_check
          %p2475 = pneg %p2474
        $region113: #{cnn_base_forward.7} parent=102 // pred_check_branch
          %2477 = sbr.rel (%p2475) target = $region115
        $region114: #{cnn_base_forward.7} parent=102 // pred_region
          %2478 = vst [vmem:[#allocation2] sm:$0xff] 0.0
          %2479 = vst [vmem:[#allocation2 + $0x8] sm:$0xff] 0.0
          %2480 = vst [vmem:[#allocation2 + $0x10] sm:$0xff] 0.0
          %2481 = vst [vmem:[#allocation2 + $0x18] sm:$0xff] 0.0
        $region115: #{cnn_base_forward.7} parent=102 // pred_fallthru
          _
        %v2482 = vld [vmem:[#allocation2] sm:$0xff]
        %v2483 = vld [vmem:[#allocation2 + $0x8] sm:$0xff]
        %v2484 = vld [vmem:[#allocation2 + $0x10] sm:$0xff]
        %v2485 = vld [vmem:[#allocation2 + $0x18] sm:$0xff]
        %v2486 = vld [vmem:[%s2411] sm:$0xff]
        %v2487 = vld [vmem:[%s2411 + $0x8] sm:$0xff]
        %v2488 = vld [vmem:[%s2411 + $0x10] sm:$0xff]
        %v2489 = vld [vmem:[%s2411 + $0x18] sm:$0xff]
        %v2490 = vld [vmem:[%s2411 + $0x20] sm:$0xff]
        %v2491 = vld [vmem:[%s2411 + $0x28] sm:$0xff]
        %v2492 = vld [vmem:[%s2411 + $0x30] sm:$0xff]
        %v2493 = vld [vmem:[%s2411 + $0x38] sm:$0xff]
        %v2494 = vld [vmem:[%s2411 + $0x40] sm:$0xff]
        %v2495 = vld [vmem:[%s2411 + $0x48] sm:$0xff]
        %v2496 = vld [vmem:[%s2411 + $0x50] sm:$0xff]
        %v2497 = vld [vmem:[%s2411 + $0x58] sm:$0xff]
        %v2498 = vld [vmem:[%s2411 + $0x60] sm:$0xff]
        %v2499 = vld [vmem:[%s2411 + $0x68] sm:$0xff]
        %v2500 = vld [vmem:[%s2411 + $0x70] sm:$0xff]
        %v2501 = vld [vmem:[%s2411 + $0x78] sm:$0xff]
        %v2502 = vld [vmem:[%s2418] sm:$0xff]
        %v2503 = vld [vmem:[%s2418 + $0x8] sm:$0xff]
        %v2504 = vld [vmem:[%s2418 + $0x10] sm:$0xff]
        %v2505 = vld [vmem:[%s2418 + $0x18] sm:$0xff]
        %v2506 = vld [vmem:[%s2418 + $0x20] sm:$0xff]
        %v2507 = vld [vmem:[%s2418 + $0x28] sm:$0xff]
        %v2508 = vld [vmem:[%s2418 + $0x30] sm:$0xff]
        %v2509 = vld [vmem:[%s2418 + $0x38] sm:$0xff]
        %v2510 = vld [vmem:[%s2418 + $0x40] sm:$0xff]
        %v2511 = vld [vmem:[%s2418 + $0x48] sm:$0xff]
        %v2512 = vld [vmem:[%s2418 + $0x50] sm:$0xff]
        %v2513 = vld [vmem:[%s2418 + $0x58] sm:$0xff]
        %v2514 = vld [vmem:[%s2418 + $0x60] sm:$0xff]
        %v2515 = vld [vmem:[%s2418 + $0x68] sm:$0xff]
        %v2516 = vld [vmem:[%s2418 + $0x70] sm:$0xff]
        %v2517 = vld [vmem:[%s2418 + $0x78] sm:$0xff]
        %v2518 = vld [vmem:[%s2418 + $0x80] sm:$0xff]
        %v2519 = vld [vmem:[%s2418 + $0x88] sm:$0xff]
        %v2520 = vld [vmem:[%s2418 + $0x90] sm:$0xff]
        %v2521 = vld [vmem:[%s2418 + $0x98] sm:$0xff]
        %v2522 = vld [vmem:[%s2418 + $0xa0] sm:$0xff]
        %v2523 = vld [vmem:[%s2418 + $0xa8] sm:$0xff]
        %v2524 = vld [vmem:[%s2418 + $0xb0] sm:$0xff]
        %v2525 = vld [vmem:[%s2418 + $0xb8] sm:$0xff]
        %v2526 = vld [vmem:[%s2418 + $0xc0] sm:$0xff]
        %v2527 = vld [vmem:[%s2418 + $0xc8] sm:$0xff]
        %v2528 = vld [vmem:[%s2418 + $0xd0] sm:$0xff]
        %v2529 = vld [vmem:[%s2418 + $0xd8] sm:$0xff]
        %v2530 = vld [vmem:[%s2418 + $0xe0] sm:$0xff]
        %v2531 = vld [vmem:[%s2418 + $0xe8] sm:$0xff]
        %v2532 = vld [vmem:[%s2418 + $0xf0] sm:$0xff]
        %v2533 = vld [vmem:[%s2418 + $0xf8] sm:$0xff]
        %v2534 = vld [vmem:[%s2418 + $0x100] sm:$0xff]
        %v2535 = vld [vmem:[%s2418 + $0x108] sm:$0xff]
        %v2536 = vld [vmem:[%s2418 + $0x110] sm:$0xff]
        %v2537 = vld [vmem:[%s2418 + $0x118] sm:$0xff]
        %v2538 = vld [vmem:[%s2418 + $0x120] sm:$0xff]
        %v2539 = vld [vmem:[%s2418 + $0x128] sm:$0xff]
        %v2540 = vld [vmem:[%s2418 + $0x130] sm:$0xff]
        %v2541 = vld [vmem:[%s2418 + $0x138] sm:$0xff]
        %v2542 = vld [vmem:[%s2418 + $0x140] sm:$0xff]
        %v2543 = vld [vmem:[%s2418 + $0x148] sm:$0xff]
        %v2544 = vld [vmem:[%s2418 + $0x150] sm:$0xff]
        %v2545 = vld [vmem:[%s2418 + $0x158] sm:$0xff]
        %v2546 = vld [vmem:[%s2418 + $0x160] sm:$0xff]
        %v2547 = vld [vmem:[%s2418 + $0x168] sm:$0xff]
        %v2548 = vld [vmem:[%s2418 + $0x170] sm:$0xff]
        %v2549 = vld [vmem:[%s2418 + $0x178] sm:$0xff]
        %v2550 = vld [vmem:[%s2418 + $0x180] sm:$0xff]
        %v2551 = vld [vmem:[%s2418 + $0x188] sm:$0xff]
        %v2552 = vld [vmem:[%s2418 + $0x190] sm:$0xff]
        %v2553 = vld [vmem:[%s2418 + $0x198] sm:$0xff]
        %v2554 = vld [vmem:[%s2418 + $0x1a0] sm:$0xff]
        %v2555 = vld [vmem:[%s2418 + $0x1a8] sm:$0xff]
        %v2556 = vld [vmem:[%s2418 + $0x1b0] sm:$0xff]
        %v2557 = vld [vmem:[%s2418 + $0x1b8] sm:$0xff]
        %v2558 = vld [vmem:[%s2418 + $0x1c0] sm:$0xff]
        %v2559 = vld [vmem:[%s2418 + $0x1c8] sm:$0xff]
        %v2560 = vld [vmem:[%s2418 + $0x1d0] sm:$0xff]
        %v2561 = vld [vmem:[%s2418 + $0x1d8] sm:$0xff]
        %v2562 = vld [vmem:[%s2418 + $0x1e0] sm:$0xff]
        %v2563 = vld [vmem:[%s2418 + $0x1e8] sm:$0xff]
        %v2564 = vld [vmem:[%s2418 + $0x1f0] sm:$0xff]
        %v2565 = vld [vmem:[%s2418 + $0x1f8] sm:$0xff]
        %v2566 = vld [vmem:[%s2418 + $0x200] sm:$0xff]
        %v2567 = vld [vmem:[%s2418 + $0x208] sm:$0xff]
        %v2568 = vld [vmem:[%s2418 + $0x210] sm:$0xff]
        %v2569 = vld [vmem:[%s2418 + $0x218] sm:$0xff]
        %v2570 = vld [vmem:[%s2418 + $0x220] sm:$0xff]
        %v2571 = vld [vmem:[%s2418 + $0x228] sm:$0xff]
        %v2572 = vld [vmem:[%s2418 + $0x230] sm:$0xff]
        %v2573 = vld [vmem:[%s2418 + $0x238] sm:$0xff]
        %v2574 = vld [vmem:[%s2418 + $0x240] sm:$0xff]
        %v2575 = vld [vmem:[%s2418 + $0x248] sm:$0xff]
        %v2576 = vld [vmem:[%s2418 + $0x250] sm:$0xff]
        %v2577 = vld [vmem:[%s2418 + $0x258] sm:$0xff]
        %v2578 = vld [vmem:[%s2418 + $0x260] sm:$0xff]
        %v2579 = vld [vmem:[%s2418 + $0x268] sm:$0xff]
        %v2580 = vld [vmem:[%s2418 + $0x270] sm:$0xff]
        %v2581 = vld [vmem:[%s2418 + $0x278] sm:$0xff]
        %v2582 = vld [vmem:[%s2418 + $0x280] sm:$0xff]
        %v2583 = vld [vmem:[%s2418 + $0x288] sm:$0xff]
        %v2584 = vld [vmem:[%s2418 + $0x290] sm:$0xff]
        %v2585 = vld [vmem:[%s2418 + $0x298] sm:$0xff]
        %v2586 = vld [vmem:[%s2418 + $0x2a0] sm:$0xff]
        %v2587 = vld [vmem:[%s2418 + $0x2a8] sm:$0xff]
        %v2588 = vld [vmem:[%s2418 + $0x2b0] sm:$0xff]
        %v2589 = vld [vmem:[%s2418 + $0x2b8] sm:$0xff]
        %v2590 = vld [vmem:[%s2418 + $0x2c0] sm:$0xff]
        %v2591 = vld [vmem:[%s2418 + $0x2c8] sm:$0xff]
        %v2592 = vld [vmem:[%s2418 + $0x2d0] sm:$0xff]
        %v2593 = vld [vmem:[%s2418 + $0x2d8] sm:$0xff]
        %v2594 = vld [vmem:[%s2418 + $0x2e0] sm:$0xff]
        %v2595 = vld [vmem:[%s2418 + $0x2e8] sm:$0xff]
        %v2596 = vld [vmem:[%s2418 + $0x2f0] sm:$0xff]
        %v2597 = vld [vmem:[%s2418 + $0x2f8] sm:$0xff]
        %v2598 = vld [vmem:[%s2418 + $0x300] sm:$0xff]
        %v2599 = vld [vmem:[%s2418 + $0x308] sm:$0xff]
        %v2600 = vld [vmem:[%s2418 + $0x310] sm:$0xff]
        %v2601 = vld [vmem:[%s2418 + $0x318] sm:$0xff]
        %v2602 = vld [vmem:[%s2418 + $0x320] sm:$0xff]
        %v2603 = vld [vmem:[%s2418 + $0x328] sm:$0xff]
        %v2604 = vld [vmem:[%s2418 + $0x330] sm:$0xff]
        %v2605 = vld [vmem:[%s2418 + $0x338] sm:$0xff]
        %v2606 = vld [vmem:[%s2418 + $0x340] sm:$0xff]
        %v2607 = vld [vmem:[%s2418 + $0x348] sm:$0xff]
        %v2608 = vld [vmem:[%s2418 + $0x350] sm:$0xff]
        %v2609 = vld [vmem:[%s2418 + $0x358] sm:$0xff]
        %v2610 = vld [vmem:[%s2418 + $0x360] sm:$0xff]
        %v2611 = vld [vmem:[%s2418 + $0x368] sm:$0xff]
        %v2612 = vld [vmem:[%s2418 + $0x370] sm:$0xff]
        %v2613 = vld [vmem:[%s2418 + $0x378] sm:$0xff]
        %v2614 = vld [vmem:[%s2418 + $0x380] sm:$0xff]
        %v2615 = vld [vmem:[%s2418 + $0x388] sm:$0xff]
        %v2616 = vld [vmem:[%s2418 + $0x390] sm:$0xff]
        %v2617 = vld [vmem:[%s2418 + $0x398] sm:$0xff]
        %v2618 = vld [vmem:[%s2418 + $0x3a0] sm:$0xff]
        %v2619 = vld [vmem:[%s2418 + $0x3a8] sm:$0xff]
        %v2620 = vld [vmem:[%s2418 + $0x3b0] sm:$0xff]
        %v2621 = vld [vmem:[%s2418 + $0x3b8] sm:$0xff]
        %v2622 = vld [vmem:[%s2418 + $0x3c0] sm:$0xff]
        %v2623 = vld [vmem:[%s2418 + $0x3c8] sm:$0xff]
        %v2624 = vld [vmem:[%s2418 + $0x3d0] sm:$0xff]
        %v2625 = vld [vmem:[%s2418 + $0x3d8] sm:$0xff]
        %v2626 = vld [vmem:[%s2418 + $0x3e0] sm:$0xff]
        %v2627 = vld [vmem:[%s2418 + $0x3e8] sm:$0xff]
        %v2628 = vld [vmem:[%s2418 + $0x3f0] sm:$0xff]
        %v2629 = vld [vmem:[%s2418 + $0x3f8] sm:$0xff]
        %v2630 = vld [vmem:[%s2418 + $0x400] sm:$0xff]
        %v2631 = vld [vmem:[%s2418 + $0x408] sm:$0xff]
        %v2632 = vld [vmem:[%s2418 + $0x410] sm:$0xff]
        %v2633 = vld [vmem:[%s2418 + $0x418] sm:$0xff]
        %v2634 = vld [vmem:[%s2418 + $0x420] sm:$0xff]
        %v2635 = vld [vmem:[%s2418 + $0x428] sm:$0xff]
        %v2636 = vld [vmem:[%s2418 + $0x430] sm:$0xff]
        %v2637 = vld [vmem:[%s2418 + $0x438] sm:$0xff]
        %v2638 = vld [vmem:[%s2418 + $0x440] sm:$0xff]
        %v2639 = vld [vmem:[%s2418 + $0x448] sm:$0xff]
        %v2640 = vld [vmem:[%s2418 + $0x450] sm:$0xff]
        %v2641 = vld [vmem:[%s2418 + $0x458] sm:$0xff]
        %v2642 = vld [vmem:[%s2418 + $0x460] sm:$0xff]
        %v2643 = vld [vmem:[%s2418 + $0x468] sm:$0xff]
        %v2644 = vld [vmem:[%s2418 + $0x470] sm:$0xff]
        %v2645 = vld [vmem:[%s2418 + $0x478] sm:$0xff]
        %v2646 = vld [vmem:[%s2418 + $0x480] sm:$0xff]
        %v2647 = vld [vmem:[%s2418 + $0x488] sm:$0xff]
        %v2648 = vld [vmem:[%s2418 + $0x490] sm:$0xff]
        %v2649 = vld [vmem:[%s2418 + $0x498] sm:$0xff]
        %v2650 = vld [vmem:[%s2418 + $0x4a0] sm:$0xff]
        %v2651 = vld [vmem:[%s2418 + $0x4a8] sm:$0xff]
        %v2652 = vld [vmem:[%s2418 + $0x4b0] sm:$0xff]
        %v2653 = vld [vmem:[%s2418 + $0x4b8] sm:$0xff]
        %v2654 = vld [vmem:[%s2418 + $0x4c0] sm:$0xff]
        %v2655 = vld [vmem:[%s2418 + $0x4c8] sm:$0xff]
        %v2656 = vld [vmem:[%s2418 + $0x4d0] sm:$0xff]
        %v2657 = vld [vmem:[%s2418 + $0x4d8] sm:$0xff]
        %v2658 = vld [vmem:[%s2418 + $0x4e0] sm:$0xff]
        %v2659 = vld [vmem:[%s2418 + $0x4e8] sm:$0xff]
        %v2660 = vld [vmem:[%s2418 + $0x4f0] sm:$0xff]
        %v2661 = vld [vmem:[%s2418 + $0x4f8] sm:$0xff]
        %v2662 = vld [vmem:[%s2418 + $0x500] sm:$0xff]
        %v2663 = vld [vmem:[%s2418 + $0x508] sm:$0xff]
        %v2664 = vld [vmem:[%s2418 + $0x510] sm:$0xff]
        %v2665 = vld [vmem:[%s2418 + $0x518] sm:$0xff]
        %v2666 = vld [vmem:[%s2418 + $0x520] sm:$0xff]
        %v2667 = vld [vmem:[%s2418 + $0x528] sm:$0xff]
        %v2668 = vld [vmem:[%s2418 + $0x530] sm:$0xff]
        %v2669 = vld [vmem:[%s2418 + $0x538] sm:$0xff]
        %v2670 = vld [vmem:[%s2418 + $0x540] sm:$0xff]
        %v2671 = vld [vmem:[%s2418 + $0x548] sm:$0xff]
        %v2672 = vld [vmem:[%s2418 + $0x550] sm:$0xff]
        %v2673 = vld [vmem:[%s2418 + $0x558] sm:$0xff]
        %v2674 = vld [vmem:[%s2418 + $0x560] sm:$0xff]
        %v2675 = vld [vmem:[%s2418 + $0x568] sm:$0xff]
        %v2676 = vld [vmem:[%s2418 + $0x570] sm:$0xff]
        %v2677 = vld [vmem:[%s2418 + $0x578] sm:$0xff]
        %v2678 = vld [vmem:[%s2418 + $0x580] sm:$0xff]
        %v2679 = vld [vmem:[%s2418 + $0x588] sm:$0xff]
        %v2680 = vld [vmem:[%s2418 + $0x590] sm:$0xff]
        %v2681 = vld [vmem:[%s2418 + $0x598] sm:$0xff]
        %v2682 = vld [vmem:[%s2418 + $0x5a0] sm:$0xff]
        %v2683 = vld [vmem:[%s2418 + $0x5a8] sm:$0xff]
        %v2684 = vld [vmem:[%s2418 + $0x5b0] sm:$0xff]
        %v2685 = vld [vmem:[%s2418 + $0x5b8] sm:$0xff]
        %v2686 = vld [vmem:[%s2418 + $0x5c0] sm:$0xff]
        %v2687 = vld [vmem:[%s2418 + $0x5c8] sm:$0xff]
        %v2688 = vld [vmem:[%s2418 + $0x5d0] sm:$0xff]
        %v2689 = vld [vmem:[%s2418 + $0x5d8] sm:$0xff]
        %v2690 = vld [vmem:[%s2418 + $0x5e0] sm:$0xff]
        %v2691 = vld [vmem:[%s2418 + $0x5e8] sm:$0xff]
        %v2692 = vld [vmem:[%s2418 + $0x5f0] sm:$0xff]
        %v2693 = vld [vmem:[%s2418 + $0x5f8] sm:$0xff]
        %v2694 = vld [vmem:[%s2418 + $0x600] sm:$0xff]
        %v2695 = vld [vmem:[%s2418 + $0x608] sm:$0xff]
        %v2696 = vld [vmem:[%s2418 + $0x610] sm:$0xff]
        %v2697 = vld [vmem:[%s2418 + $0x618] sm:$0xff]
        %v2698 = vld [vmem:[%s2418 + $0x620] sm:$0xff]
        %v2699 = vld [vmem:[%s2418 + $0x628] sm:$0xff]
        %v2700 = vld [vmem:[%s2418 + $0x630] sm:$0xff]
        %v2701 = vld [vmem:[%s2418 + $0x638] sm:$0xff]
        %v2702 = vld [vmem:[%s2418 + $0x640] sm:$0xff]
        %v2703 = vld [vmem:[%s2418 + $0x648] sm:$0xff]
        %v2704 = vld [vmem:[%s2418 + $0x650] sm:$0xff]
        %v2705 = vld [vmem:[%s2418 + $0x658] sm:$0xff]
        %v2706 = vld [vmem:[%s2418 + $0x660] sm:$0xff]
        %v2707 = vld [vmem:[%s2418 + $0x668] sm:$0xff]
        %v2708 = vld [vmem:[%s2418 + $0x670] sm:$0xff]
        %v2709 = vld [vmem:[%s2418 + $0x678] sm:$0xff]
        %v2710 = vld [vmem:[%s2418 + $0x680] sm:$0xff]
        %v2711 = vld [vmem:[%s2418 + $0x688] sm:$0xff]
        %v2712 = vld [vmem:[%s2418 + $0x690] sm:$0xff]
        %v2713 = vld [vmem:[%s2418 + $0x698] sm:$0xff]
        %v2714 = vld [vmem:[%s2418 + $0x6a0] sm:$0xff]
        %v2715 = vld [vmem:[%s2418 + $0x6a8] sm:$0xff]
        %v2716 = vld [vmem:[%s2418 + $0x6b0] sm:$0xff]
        %v2717 = vld [vmem:[%s2418 + $0x6b8] sm:$0xff]
        %v2718 = vld [vmem:[%s2418 + $0x6c0] sm:$0xff]
        %v2719 = vld [vmem:[%s2418 + $0x6c8] sm:$0xff]
        %v2720 = vld [vmem:[%s2418 + $0x6d0] sm:$0xff]
        %v2721 = vld [vmem:[%s2418 + $0x6d8] sm:$0xff]
        %v2722 = vld [vmem:[%s2418 + $0x6e0] sm:$0xff]
        %v2723 = vld [vmem:[%s2418 + $0x6e8] sm:$0xff]
        %v2724 = vld [vmem:[%s2418 + $0x6f0] sm:$0xff]
        %v2725 = vld [vmem:[%s2418 + $0x6f8] sm:$0xff]
        %v2726 = vld [vmem:[%s2418 + $0x700] sm:$0xff]
        %v2727 = vld [vmem:[%s2418 + $0x708] sm:$0xff]
        %v2728 = vld [vmem:[%s2418 + $0x710] sm:$0xff]
        %v2729 = vld [vmem:[%s2418 + $0x718] sm:$0xff]
        %v2730 = vld [vmem:[%s2418 + $0x720] sm:$0xff]
        %v2731 = vld [vmem:[%s2418 + $0x728] sm:$0xff]
        %v2732 = vld [vmem:[%s2418 + $0x730] sm:$0xff]
        %v2733 = vld [vmem:[%s2418 + $0x738] sm:$0xff]
        %v2734 = vld [vmem:[%s2418 + $0x740] sm:$0xff]
        %v2735 = vld [vmem:[%s2418 + $0x748] sm:$0xff]
        %v2736 = vld [vmem:[%s2418 + $0x750] sm:$0xff]
        %v2737 = vld [vmem:[%s2418 + $0x758] sm:$0xff]
        %v2738 = vld [vmem:[%s2418 + $0x760] sm:$0xff]
        %v2739 = vld [vmem:[%s2418 + $0x768] sm:$0xff]
        %v2740 = vld [vmem:[%s2418 + $0x770] sm:$0xff]
        %v2741 = vld [vmem:[%s2418 + $0x778] sm:$0xff]
        %v2742 = vld [vmem:[%s2418 + $0x780] sm:$0xff]
        %v2743 = vld [vmem:[%s2418 + $0x788] sm:$0xff]
        %v2744 = vld [vmem:[%s2418 + $0x790] sm:$0xff]
        %v2745 = vld [vmem:[%s2418 + $0x798] sm:$0xff]
        %v2746 = vld [vmem:[%s2418 + $0x7a0] sm:$0xff]
        %v2747 = vld [vmem:[%s2418 + $0x7a8] sm:$0xff]
        %v2748 = vld [vmem:[%s2418 + $0x7b0] sm:$0xff]
        %v2749 = vld [vmem:[%s2418 + $0x7b8] sm:$0xff]
        %v2750 = vld [vmem:[%s2418 + $0x7c0] sm:$0xff]
        %v2751 = vld [vmem:[%s2418 + $0x7c8] sm:$0xff]
        %v2752 = vld [vmem:[%s2418 + $0x7d0] sm:$0xff]
        %v2753 = vld [vmem:[%s2418 + $0x7d8] sm:$0xff]
        %v2754 = vld [vmem:[%s2418 + $0x7e0] sm:$0xff]
        %v2755 = vld [vmem:[%s2418 + $0x7e8] sm:$0xff]
        %v2756 = vld [vmem:[%s2418 + $0x7f0] sm:$0xff]
        %v2757 = vld [vmem:[%s2418 + $0x7f8] sm:$0xff]
        %v2774 = vunpack.c.l.b16 %v2486
        %v2775 = vunpack.c.h.b16 %v2486
        %v2776 = vunpack.c.l.b16 %v2487
        %v2777 = vunpack.c.h.b16 %v2487
        %v2778 = vunpack.c.l.b16 %v2488
        %v2779 = vunpack.c.h.b16 %v2488
        %v2780 = vunpack.c.l.b16 %v2489
        %v2781 = vunpack.c.h.b16 %v2489
        %v2782 = vunpack.c.l.b16 %v2490
        %v2783 = vunpack.c.h.b16 %v2490
        %v2784 = vunpack.c.l.b16 %v2491
        %v2785 = vunpack.c.h.b16 %v2491
        %v2786 = vunpack.c.l.b16 %v2492
        %v2787 = vunpack.c.h.b16 %v2492
        %v2788 = vunpack.c.l.b16 %v2493
        %v2789 = vunpack.c.h.b16 %v2493
        %v2790 = vunpack.c.l.b16 %v2494
        %v2791 = vunpack.c.h.b16 %v2494
        %v2792 = vunpack.c.l.b16 %v2495
        %v2793 = vunpack.c.h.b16 %v2495
        %v2794 = vunpack.c.l.b16 %v2496
        %v2795 = vunpack.c.h.b16 %v2496
        %v2796 = vunpack.c.l.b16 %v2497
        %v2797 = vunpack.c.h.b16 %v2497
        %v2798 = vunpack.c.l.b16 %v2498
        %v2799 = vunpack.c.h.b16 %v2498
        %v2800 = vunpack.c.l.b16 %v2499
        %v2801 = vunpack.c.h.b16 %v2499
        %v2802 = vunpack.c.l.b16 %v2500
        %v2803 = vunpack.c.h.b16 %v2500
        %v2804 = vunpack.c.l.b16 %v2501
        %v2805 = vunpack.c.h.b16 %v2501
        %v2806 = vpack.c.b16 %v2790, %v2774
        %v2807 = vpack.c.b16 %v2791, %v2775
        %v2808 = vpack.c.b16 %v2792, %v2776
        %v2809 = vpack.c.b16 %v2793, %v2777
        %v2810 = vpack.c.b16 %v2794, %v2778
        %v2811 = vpack.c.b16 %v2795, %v2779
        %v2812 = vpack.c.b16 %v2796, %v2780
        %v2813 = vpack.c.b16 %v2797, %v2781
        %v2814 = vpack.c.b16 %v2798, %v2782
        %v2815 = vpack.c.b16 %v2799, %v2783
        %v2816 = vpack.c.b16 %v2800, %v2784
        %v2817 = vpack.c.b16 %v2801, %v2785
        %v2818 = vpack.c.b16 %v2802, %v2786
        %v2819 = vpack.c.b16 %v2803, %v2787
        %v2820 = vpack.c.b16 %v2804, %v2788
        %v2821 = vpack.c.b16 %v2805, %v2789
        %v3094 = vunpack.c.l.b16 %v2502
        %v3095 = vunpack.c.h.b16 %v2502
        %v3096 = vunpack.c.l.b16 %v2503
        %v3097 = vunpack.c.h.b16 %v2503
        %v3098 = vunpack.c.l.b16 %v2504
        %v3099 = vunpack.c.h.b16 %v2504
        %v3100 = vunpack.c.l.b16 %v2505
        %v3101 = vunpack.c.h.b16 %v2505
        %v3102 = vunpack.c.l.b16 %v2506
        %v3103 = vunpack.c.h.b16 %v2506
        %v3104 = vunpack.c.l.b16 %v2507
        %v3105 = vunpack.c.h.b16 %v2507
        %v3106 = vunpack.c.l.b16 %v2508
        %v3107 = vunpack.c.h.b16 %v2508
        %v3108 = vunpack.c.l.b16 %v2509
        %v3109 = vunpack.c.h.b16 %v2509
        %v3110 = vunpack.c.l.b16 %v2510
        %v3111 = vunpack.c.h.b16 %v2510
        %v3112 = vunpack.c.l.b16 %v2511
        %v3113 = vunpack.c.h.b16 %v2511
        %v3114 = vunpack.c.l.b16 %v2512
        %v3115 = vunpack.c.h.b16 %v2512
        %v3116 = vunpack.c.l.b16 %v2513
        %v3117 = vunpack.c.h.b16 %v2513
        %v3118 = vunpack.c.l.b16 %v2514
        %v3119 = vunpack.c.h.b16 %v2514
        %v3120 = vunpack.c.l.b16 %v2515
        %v3121 = vunpack.c.h.b16 %v2515
        %v3122 = vunpack.c.l.b16 %v2516
        %v3123 = vunpack.c.h.b16 %v2516
        %v3124 = vunpack.c.l.b16 %v2517
        %v3125 = vunpack.c.h.b16 %v2517
        %v3126 = vunpack.c.l.b16 %v2518
        %v3127 = vunpack.c.h.b16 %v2518
        %v3128 = vunpack.c.l.b16 %v2519
        %v3129 = vunpack.c.h.b16 %v2519
        %v3130 = vunpack.c.l.b16 %v2520
        %v3131 = vunpack.c.h.b16 %v2520
        %v3132 = vunpack.c.l.b16 %v2521
        %v3133 = vunpack.c.h.b16 %v2521
        %v3134 = vunpack.c.l.b16 %v2522
        %v3135 = vunpack.c.h.b16 %v2522
        %v3136 = vunpack.c.l.b16 %v2523
        %v3137 = vunpack.c.h.b16 %v2523
        %v3138 = vunpack.c.l.b16 %v2524
        %v3139 = vunpack.c.h.b16 %v2524
        %v3140 = vunpack.c.l.b16 %v2525
        %v3141 = vunpack.c.h.b16 %v2525
        %v3142 = vunpack.c.l.b16 %v2526
        %v3143 = vunpack.c.h.b16 %v2526
        %v3144 = vunpack.c.l.b16 %v2527
        %v3145 = vunpack.c.h.b16 %v2527
        %v3146 = vunpack.c.l.b16 %v2528
        %v3147 = vunpack.c.h.b16 %v2528
        %v3148 = vunpack.c.l.b16 %v2529
        %v3149 = vunpack.c.h.b16 %v2529
        %v3150 = vunpack.c.l.b16 %v2530
        %v3151 = vunpack.c.h.b16 %v2530
        %v3152 = vunpack.c.l.b16 %v2531
        %v3153 = vunpack.c.h.b16 %v2531
        %v3154 = vunpack.c.l.b16 %v2532
        %v3155 = vunpack.c.h.b16 %v2532
        %v3156 = vunpack.c.l.b16 %v2533
        %v3157 = vunpack.c.h.b16 %v2533
        %v3158 = vunpack.c.l.b16 %v2534
        %v3159 = vunpack.c.h.b16 %v2534
        %v3160 = vunpack.c.l.b16 %v2535
        %v3161 = vunpack.c.h.b16 %v2535
        %v3162 = vunpack.c.l.b16 %v2536
        %v3163 = vunpack.c.h.b16 %v2536
        %v3164 = vunpack.c.l.b16 %v2537
        %v3165 = vunpack.c.h.b16 %v2537
        %v3166 = vunpack.c.l.b16 %v2538
        %v3167 = vunpack.c.h.b16 %v2538
        %v3168 = vunpack.c.l.b16 %v2539
        %v3169 = vunpack.c.h.b16 %v2539
        %v3170 = vunpack.c.l.b16 %v2540
        %v3171 = vunpack.c.h.b16 %v2540
        %v3172 = vunpack.c.l.b16 %v2541
        %v3173 = vunpack.c.h.b16 %v2541
        %v3174 = vunpack.c.l.b16 %v2542
        %v3175 = vunpack.c.h.b16 %v2542
        %v3176 = vunpack.c.l.b16 %v2543
        %v3177 = vunpack.c.h.b16 %v2543
        %v3178 = vunpack.c.l.b16 %v2544
        %v3179 = vunpack.c.h.b16 %v2544
        %v3180 = vunpack.c.l.b16 %v2545
        %v3181 = vunpack.c.h.b16 %v2545
        %v3182 = vunpack.c.l.b16 %v2546
        %v3183 = vunpack.c.h.b16 %v2546
        %v3184 = vunpack.c.l.b16 %v2547
        %v3185 = vunpack.c.h.b16 %v2547
        %v3186 = vunpack.c.l.b16 %v2548
        %v3187 = vunpack.c.h.b16 %v2548
        %v3188 = vunpack.c.l.b16 %v2549
        %v3189 = vunpack.c.h.b16 %v2549
        %v3190 = vunpack.c.l.b16 %v2550
        %v3191 = vunpack.c.h.b16 %v2550
        %v3192 = vunpack.c.l.b16 %v2551
        %v3193 = vunpack.c.h.b16 %v2551
        %v3194 = vunpack.c.l.b16 %v2552
        %v3195 = vunpack.c.h.b16 %v2552
        %v3196 = vunpack.c.l.b16 %v2553
        %v3197 = vunpack.c.h.b16 %v2553
        %v3198 = vunpack.c.l.b16 %v2554
        %v3199 = vunpack.c.h.b16 %v2554
        %v3200 = vunpack.c.l.b16 %v2555
        %v3201 = vunpack.c.h.b16 %v2555
        %v3202 = vunpack.c.l.b16 %v2556
        %v3203 = vunpack.c.h.b16 %v2556
        %v3204 = vunpack.c.l.b16 %v2557
        %v3205 = vunpack.c.h.b16 %v2557
        %v3206 = vunpack.c.l.b16 %v2558
        %v3207 = vunpack.c.h.b16 %v2558
        %v3208 = vunpack.c.l.b16 %v2559
        %v3209 = vunpack.c.h.b16 %v2559
        %v3210 = vunpack.c.l.b16 %v2560
        %v3211 = vunpack.c.h.b16 %v2560
        %v3212 = vunpack.c.l.b16 %v2561
        %v3213 = vunpack.c.h.b16 %v2561
        %v3214 = vunpack.c.l.b16 %v2562
        %v3215 = vunpack.c.h.b16 %v2562
        %v3216 = vunpack.c.l.b16 %v2563
        %v3217 = vunpack.c.h.b16 %v2563
        %v3218 = vunpack.c.l.b16 %v2564
        %v3219 = vunpack.c.h.b16 %v2564
        %v3220 = vunpack.c.l.b16 %v2565
        %v3221 = vunpack.c.h.b16 %v2565
        %v3222 = vunpack.c.l.b16 %v2566
        %v3223 = vunpack.c.h.b16 %v2566
        %v3224 = vunpack.c.l.b16 %v2567
        %v3225 = vunpack.c.h.b16 %v2567
        %v3226 = vunpack.c.l.b16 %v2568
        %v3227 = vunpack.c.h.b16 %v2568
        %v3228 = vunpack.c.l.b16 %v2569
        %v3229 = vunpack.c.h.b16 %v2569
        %v3230 = vunpack.c.l.b16 %v2570
        %v3231 = vunpack.c.h.b16 %v2570
        %v3232 = vunpack.c.l.b16 %v2571
        %v3233 = vunpack.c.h.b16 %v2571
        %v3234 = vunpack.c.l.b16 %v2572
        %v3235 = vunpack.c.h.b16 %v2572
        %v3236 = vunpack.c.l.b16 %v2573
        %v3237 = vunpack.c.h.b16 %v2573
        %v3238 = vunpack.c.l.b16 %v2574
        %v3239 = vunpack.c.h.b16 %v2574
        %v3240 = vunpack.c.l.b16 %v2575
        %v3241 = vunpack.c.h.b16 %v2575
        %v3242 = vunpack.c.l.b16 %v2576
        %v3243 = vunpack.c.h.b16 %v2576
        %v3244 = vunpack.c.l.b16 %v2577
        %v3245 = vunpack.c.h.b16 %v2577
        %v3246 = vunpack.c.l.b16 %v2578
        %v3247 = vunpack.c.h.b16 %v2578
        %v3248 = vunpack.c.l.b16 %v2579
        %v3249 = vunpack.c.h.b16 %v2579
        %v3250 = vunpack.c.l.b16 %v2580
        %v3251 = vunpack.c.h.b16 %v2580
        %v3252 = vunpack.c.l.b16 %v2581
        %v3253 = vunpack.c.h.b16 %v2581
        %v3254 = vunpack.c.l.b16 %v2582
        %v3255 = vunpack.c.h.b16 %v2582
        %v3256 = vunpack.c.l.b16 %v2583
        %v3257 = vunpack.c.h.b16 %v2583
        %v3258 = vunpack.c.l.b16 %v2584
        %v3259 = vunpack.c.h.b16 %v2584
        %v3260 = vunpack.c.l.b16 %v2585
        %v3261 = vunpack.c.h.b16 %v2585
        %v3262 = vunpack.c.l.b16 %v2586
        %v3263 = vunpack.c.h.b16 %v2586
        %v3264 = vunpack.c.l.b16 %v2587
        %v3265 = vunpack.c.h.b16 %v2587
        %v3266 = vunpack.c.l.b16 %v2588
        %v3267 = vunpack.c.h.b16 %v2588
        %v3268 = vunpack.c.l.b16 %v2589
        %v3269 = vunpack.c.h.b16 %v2589
        %v3270 = vunpack.c.l.b16 %v2590
        %v3271 = vunpack.c.h.b16 %v2590
        %v3272 = vunpack.c.l.b16 %v2591
        %v3273 = vunpack.c.h.b16 %v2591
        %v3274 = vunpack.c.l.b16 %v2592
        %v3275 = vunpack.c.h.b16 %v2592
        %v3276 = vunpack.c.l.b16 %v2593
        %v3277 = vunpack.c.h.b16 %v2593
        %v3278 = vunpack.c.l.b16 %v2594
        %v3279 = vunpack.c.h.b16 %v2594
        %v3280 = vunpack.c.l.b16 %v2595
        %v3281 = vunpack.c.h.b16 %v2595
        %v3282 = vunpack.c.l.b16 %v2596
        %v3283 = vunpack.c.h.b16 %v2596
        %v3284 = vunpack.c.l.b16 %v2597
        %v3285 = vunpack.c.h.b16 %v2597
        %v3286 = vunpack.c.l.b16 %v2598
        %v3287 = vunpack.c.h.b16 %v2598
        %v3288 = vunpack.c.l.b16 %v2599
        %v3289 = vunpack.c.h.b16 %v2599
        %v3290 = vunpack.c.l.b16 %v2600
        %v3291 = vunpack.c.h.b16 %v2600
        %v3292 = vunpack.c.l.b16 %v2601
        %v3293 = vunpack.c.h.b16 %v2601
        %v3294 = vunpack.c.l.b16 %v2602
        %v3295 = vunpack.c.h.b16 %v2602
        %v3296 = vunpack.c.l.b16 %v2603
        %v3297 = vunpack.c.h.b16 %v2603
        %v3298 = vunpack.c.l.b16 %v2604
        %v3299 = vunpack.c.h.b16 %v2604
        %v3300 = vunpack.c.l.b16 %v2605
        %v3301 = vunpack.c.h.b16 %v2605
        %v3302 = vunpack.c.l.b16 %v2606
        %v3303 = vunpack.c.h.b16 %v2606
        %v3304 = vunpack.c.l.b16 %v2607
        %v3305 = vunpack.c.h.b16 %v2607
        %v3306 = vunpack.c.l.b16 %v2608
        %v3307 = vunpack.c.h.b16 %v2608
        %v3308 = vunpack.c.l.b16 %v2609
        %v3309 = vunpack.c.h.b16 %v2609
        %v3310 = vunpack.c.l.b16 %v2610
        %v3311 = vunpack.c.h.b16 %v2610
        %v3312 = vunpack.c.l.b16 %v2611
        %v3313 = vunpack.c.h.b16 %v2611
        %v3314 = vunpack.c.l.b16 %v2612
        %v3315 = vunpack.c.h.b16 %v2612
        %v3316 = vunpack.c.l.b16 %v2613
        %v3317 = vunpack.c.h.b16 %v2613
        %v3318 = vunpack.c.l.b16 %v2614
        %v3319 = vunpack.c.h.b16 %v2614
        %v3320 = vunpack.c.l.b16 %v2615
        %v3321 = vunpack.c.h.b16 %v2615
        %v3322 = vunpack.c.l.b16 %v2616
        %v3323 = vunpack.c.h.b16 %v2616
        %v3324 = vunpack.c.l.b16 %v2617
        %v3325 = vunpack.c.h.b16 %v2617
        %v3326 = vunpack.c.l.b16 %v2618
        %v3327 = vunpack.c.h.b16 %v2618
        %v3328 = vunpack.c.l.b16 %v2619
        %v3329 = vunpack.c.h.b16 %v2619
        %v3330 = vunpack.c.l.b16 %v2620
        %v3331 = vunpack.c.h.b16 %v2620
        %v3332 = vunpack.c.l.b16 %v2621
        %v3333 = vunpack.c.h.b16 %v2621
        %v3334 = vunpack.c.l.b16 %v2622
        %v3335 = vunpack.c.h.b16 %v2622
        %v3336 = vunpack.c.l.b16 %v2623
        %v3337 = vunpack.c.h.b16 %v2623
        %v3338 = vunpack.c.l.b16 %v2624
        %v3339 = vunpack.c.h.b16 %v2624
        %v3340 = vunpack.c.l.b16 %v2625
        %v3341 = vunpack.c.h.b16 %v2625
        %v3342 = vunpack.c.l.b16 %v2626
        %v3343 = vunpack.c.h.b16 %v2626
        %v3344 = vunpack.c.l.b16 %v2627
        %v3345 = vunpack.c.h.b16 %v2627
        %v3346 = vunpack.c.l.b16 %v2628
        %v3347 = vunpack.c.h.b16 %v2628
        %v3348 = vunpack.c.l.b16 %v2629
        %v3349 = vunpack.c.h.b16 %v2629
        %v3350 = vunpack.c.l.b16 %v2630
        %v3351 = vunpack.c.h.b16 %v2630
        %v3352 = vunpack.c.l.b16 %v2631
        %v3353 = vunpack.c.h.b16 %v2631
        %v3354 = vunpack.c.l.b16 %v2632
        %v3355 = vunpack.c.h.b16 %v2632
        %v3356 = vunpack.c.l.b16 %v2633
        %v3357 = vunpack.c.h.b16 %v2633
        %v3358 = vunpack.c.l.b16 %v2634
        %v3359 = vunpack.c.h.b16 %v2634
        %v3360 = vunpack.c.l.b16 %v2635
        %v3361 = vunpack.c.h.b16 %v2635
        %v3362 = vunpack.c.l.b16 %v2636
        %v3363 = vunpack.c.h.b16 %v2636
        %v3364 = vunpack.c.l.b16 %v2637
        %v3365 = vunpack.c.h.b16 %v2637
        %v3366 = vunpack.c.l.b16 %v2638
        %v3367 = vunpack.c.h.b16 %v2638
        %v3368 = vunpack.c.l.b16 %v2639
        %v3369 = vunpack.c.h.b16 %v2639
        %v3370 = vunpack.c.l.b16 %v2640
        %v3371 = vunpack.c.h.b16 %v2640
        %v3372 = vunpack.c.l.b16 %v2641
        %v3373 = vunpack.c.h.b16 %v2641
        %v3374 = vunpack.c.l.b16 %v2642
        %v3375 = vunpack.c.h.b16 %v2642
        %v3376 = vunpack.c.l.b16 %v2643
        %v3377 = vunpack.c.h.b16 %v2643
        %v3378 = vunpack.c.l.b16 %v2644
        %v3379 = vunpack.c.h.b16 %v2644
        %v3380 = vunpack.c.l.b16 %v2645
        %v3381 = vunpack.c.h.b16 %v2645
        %v3382 = vunpack.c.l.b16 %v2646
        %v3383 = vunpack.c.h.b16 %v2646
        %v3384 = vunpack.c.l.b16 %v2647
        %v3385 = vunpack.c.h.b16 %v2647
        %v3386 = vunpack.c.l.b16 %v2648
        %v3387 = vunpack.c.h.b16 %v2648
        %v3388 = vunpack.c.l.b16 %v2649
        %v3389 = vunpack.c.h.b16 %v2649
        %v3390 = vunpack.c.l.b16 %v2650
        %v3391 = vunpack.c.h.b16 %v2650
        %v3392 = vunpack.c.l.b16 %v2651
        %v3393 = vunpack.c.h.b16 %v2651
        %v3394 = vunpack.c.l.b16 %v2652
        %v3395 = vunpack.c.h.b16 %v2652
        %v3396 = vunpack.c.l.b16 %v2653
        %v3397 = vunpack.c.h.b16 %v2653
        %v3398 = vunpack.c.l.b16 %v2654
        %v3399 = vunpack.c.h.b16 %v2654
        %v3400 = vunpack.c.l.b16 %v2655
        %v3401 = vunpack.c.h.b16 %v2655
        %v3402 = vunpack.c.l.b16 %v2656
        %v3403 = vunpack.c.h.b16 %v2656
        %v3404 = vunpack.c.l.b16 %v2657
        %v3405 = vunpack.c.h.b16 %v2657
        %v3406 = vunpack.c.l.b16 %v2658
        %v3407 = vunpack.c.h.b16 %v2658
        %v3408 = vunpack.c.l.b16 %v2659
        %v3409 = vunpack.c.h.b16 %v2659
        %v3410 = vunpack.c.l.b16 %v2660
        %v3411 = vunpack.c.h.b16 %v2660
        %v3412 = vunpack.c.l.b16 %v2661
        %v3413 = vunpack.c.h.b16 %v2661
        %v3414 = vunpack.c.l.b16 %v2662
        %v3415 = vunpack.c.h.b16 %v2662
        %v3416 = vunpack.c.l.b16 %v2663
        %v3417 = vunpack.c.h.b16 %v2663
        %v3418 = vunpack.c.l.b16 %v2664
        %v3419 = vunpack.c.h.b16 %v2664
        %v3420 = vunpack.c.l.b16 %v2665
        %v3421 = vunpack.c.h.b16 %v2665
        %v3422 = vunpack.c.l.b16 %v2666
        %v3423 = vunpack.c.h.b16 %v2666
        %v3424 = vunpack.c.l.b16 %v2667
        %v3425 = vunpack.c.h.b16 %v2667
        %v3426 = vunpack.c.l.b16 %v2668
        %v3427 = vunpack.c.h.b16 %v2668
        %v3428 = vunpack.c.l.b16 %v2669
        %v3429 = vunpack.c.h.b16 %v2669
        %v3430 = vunpack.c.l.b16 %v2670
        %v3431 = vunpack.c.h.b16 %v2670
        %v3432 = vunpack.c.l.b16 %v2671
        %v3433 = vunpack.c.h.b16 %v2671
        %v3434 = vunpack.c.l.b16 %v2672
        %v3435 = vunpack.c.h.b16 %v2672
        %v3436 = vunpack.c.l.b16 %v2673
        %v3437 = vunpack.c.h.b16 %v2673
        %v3438 = vunpack.c.l.b16 %v2674
        %v3439 = vunpack.c.h.b16 %v2674
        %v3440 = vunpack.c.l.b16 %v2675
        %v3441 = vunpack.c.h.b16 %v2675
        %v3442 = vunpack.c.l.b16 %v2676
        %v3443 = vunpack.c.h.b16 %v2676
        %v3444 = vunpack.c.l.b16 %v2677
        %v3445 = vunpack.c.h.b16 %v2677
        %v3446 = vunpack.c.l.b16 %v2678
        %v3447 = vunpack.c.h.b16 %v2678
        %v3448 = vunpack.c.l.b16 %v2679
        %v3449 = vunpack.c.h.b16 %v2679
        %v3450 = vunpack.c.l.b16 %v2680
        %v3451 = vunpack.c.h.b16 %v2680
        %v3452 = vunpack.c.l.b16 %v2681
        %v3453 = vunpack.c.h.b16 %v2681
        %v3454 = vunpack.c.l.b16 %v2682
        %v3455 = vunpack.c.h.b16 %v2682
        %v3456 = vunpack.c.l.b16 %v2683
        %v3457 = vunpack.c.h.b16 %v2683
        %v3458 = vunpack.c.l.b16 %v2684
        %v3459 = vunpack.c.h.b16 %v2684
        %v3460 = vunpack.c.l.b16 %v2685
        %v3461 = vunpack.c.h.b16 %v2685
        %v3462 = vunpack.c.l.b16 %v2686
        %v3463 = vunpack.c.h.b16 %v2686
        %v3464 = vunpack.c.l.b16 %v2687
        %v3465 = vunpack.c.h.b16 %v2687
        %v3466 = vunpack.c.l.b16 %v2688
        %v3467 = vunpack.c.h.b16 %v2688
        %v3468 = vunpack.c.l.b16 %v2689
        %v3469 = vunpack.c.h.b16 %v2689
        %v3470 = vunpack.c.l.b16 %v2690
        %v3471 = vunpack.c.h.b16 %v2690
        %v3472 = vunpack.c.l.b16 %v2691
        %v3473 = vunpack.c.h.b16 %v2691
        %v3474 = vunpack.c.l.b16 %v2692
        %v3475 = vunpack.c.h.b16 %v2692
        %v3476 = vunpack.c.l.b16 %v2693
        %v3477 = vunpack.c.h.b16 %v2693
        %v3478 = vunpack.c.l.b16 %v2694
        %v3479 = vunpack.c.h.b16 %v2694
        %v3480 = vunpack.c.l.b16 %v2695
        %v3481 = vunpack.c.h.b16 %v2695
        %v3482 = vunpack.c.l.b16 %v2696
        %v3483 = vunpack.c.h.b16 %v2696
        %v3484 = vunpack.c.l.b16 %v2697
        %v3485 = vunpack.c.h.b16 %v2697
        %v3486 = vunpack.c.l.b16 %v2698
        %v3487 = vunpack.c.h.b16 %v2698
        %v3488 = vunpack.c.l.b16 %v2699
        %v3489 = vunpack.c.h.b16 %v2699
        %v3490 = vunpack.c.l.b16 %v2700
        %v3491 = vunpack.c.h.b16 %v2700
        %v3492 = vunpack.c.l.b16 %v2701
        %v3493 = vunpack.c.h.b16 %v2701
        %v3494 = vunpack.c.l.b16 %v2702
        %v3495 = vunpack.c.h.b16 %v2702
        %v3496 = vunpack.c.l.b16 %v2703
        %v3497 = vunpack.c.h.b16 %v2703
        %v3498 = vunpack.c.l.b16 %v2704
        %v3499 = vunpack.c.h.b16 %v2704
        %v3500 = vunpack.c.l.b16 %v2705
        %v3501 = vunpack.c.h.b16 %v2705
        %v3502 = vunpack.c.l.b16 %v2706
        %v3503 = vunpack.c.h.b16 %v2706
        %v3504 = vunpack.c.l.b16 %v2707
        %v3505 = vunpack.c.h.b16 %v2707
        %v3506 = vunpack.c.l.b16 %v2708
        %v3507 = vunpack.c.h.b16 %v2708
        %v3508 = vunpack.c.l.b16 %v2709
        %v3509 = vunpack.c.h.b16 %v2709
        %v3510 = vunpack.c.l.b16 %v2710
        %v3511 = vunpack.c.h.b16 %v2710
        %v3512 = vunpack.c.l.b16 %v2711
        %v3513 = vunpack.c.h.b16 %v2711
        %v3514 = vunpack.c.l.b16 %v2712
        %v3515 = vunpack.c.h.b16 %v2712
        %v3516 = vunpack.c.l.b16 %v2713
        %v3517 = vunpack.c.h.b16 %v2713
        %v3518 = vunpack.c.l.b16 %v2714
        %v3519 = vunpack.c.h.b16 %v2714
        %v3520 = vunpack.c.l.b16 %v2715
        %v3521 = vunpack.c.h.b16 %v2715
        %v3522 = vunpack.c.l.b16 %v2716
        %v3523 = vunpack.c.h.b16 %v2716
        %v3524 = vunpack.c.l.b16 %v2717
        %v3525 = vunpack.c.h.b16 %v2717
        %v3526 = vunpack.c.l.b16 %v2718
        %v3527 = vunpack.c.h.b16 %v2718
        %v3528 = vunpack.c.l.b16 %v2719
        %v3529 = vunpack.c.h.b16 %v2719
        %v3530 = vunpack.c.l.b16 %v2720
        %v3531 = vunpack.c.h.b16 %v2720
        %v3532 = vunpack.c.l.b16 %v2721
        %v3533 = vunpack.c.h.b16 %v2721
        %v3534 = vunpack.c.l.b16 %v2722
        %v3535 = vunpack.c.h.b16 %v2722
        %v3536 = vunpack.c.l.b16 %v2723
        %v3537 = vunpack.c.h.b16 %v2723
        %v3538 = vunpack.c.l.b16 %v2724
        %v3539 = vunpack.c.h.b16 %v2724
        %v3540 = vunpack.c.l.b16 %v2725
        %v3541 = vunpack.c.h.b16 %v2725
        %v3542 = vunpack.c.l.b16 %v2726
        %v3543 = vunpack.c.h.b16 %v2726
        %v3544 = vunpack.c.l.b16 %v2727
        %v3545 = vunpack.c.h.b16 %v2727
        %v3546 = vunpack.c.l.b16 %v2728
        %v3547 = vunpack.c.h.b16 %v2728
        %v3548 = vunpack.c.l.b16 %v2729
        %v3549 = vunpack.c.h.b16 %v2729
        %v3550 = vunpack.c.l.b16 %v2730
        %v3551 = vunpack.c.h.b16 %v2730
        %v3552 = vunpack.c.l.b16 %v2731
        %v3553 = vunpack.c.h.b16 %v2731
        %v3554 = vunpack.c.l.b16 %v2732
        %v3555 = vunpack.c.h.b16 %v2732
        %v3556 = vunpack.c.l.b16 %v2733
        %v3557 = vunpack.c.h.b16 %v2733
        %v3558 = vunpack.c.l.b16 %v2734
        %v3559 = vunpack.c.h.b16 %v2734
        %v3560 = vunpack.c.l.b16 %v2735
        %v3561 = vunpack.c.h.b16 %v2735
        %v3562 = vunpack.c.l.b16 %v2736
        %v3563 = vunpack.c.h.b16 %v2736
        %v3564 = vunpack.c.l.b16 %v2737
        %v3565 = vunpack.c.h.b16 %v2737
        %v3566 = vunpack.c.l.b16 %v2738
        %v3567 = vunpack.c.h.b16 %v2738
        %v3568 = vunpack.c.l.b16 %v2739
        %v3569 = vunpack.c.h.b16 %v2739
        %v3570 = vunpack.c.l.b16 %v2740
        %v3571 = vunpack.c.h.b16 %v2740
        %v3572 = vunpack.c.l.b16 %v2741
        %v3573 = vunpack.c.h.b16 %v2741
        %v3574 = vunpack.c.l.b16 %v2742
        %v3575 = vunpack.c.h.b16 %v2742
        %v3576 = vunpack.c.l.b16 %v2743
        %v3577 = vunpack.c.h.b16 %v2743
        %v3578 = vunpack.c.l.b16 %v2744
        %v3579 = vunpack.c.h.b16 %v2744
        %v3580 = vunpack.c.l.b16 %v2745
        %v3581 = vunpack.c.h.b16 %v2745
        %v3582 = vunpack.c.l.b16 %v2746
        %v3583 = vunpack.c.h.b16 %v2746
        %v3584 = vunpack.c.l.b16 %v2747
        %v3585 = vunpack.c.h.b16 %v2747
        %v3586 = vunpack.c.l.b16 %v2748
        %v3587 = vunpack.c.h.b16 %v2748
        %v3588 = vunpack.c.l.b16 %v2749
        %v3589 = vunpack.c.h.b16 %v2749
        %v3590 = vunpack.c.l.b16 %v2750
        %v3591 = vunpack.c.h.b16 %v2750
        %v3592 = vunpack.c.l.b16 %v2751
        %v3593 = vunpack.c.h.b16 %v2751
        %v3594 = vunpack.c.l.b16 %v2752
        %v3595 = vunpack.c.h.b16 %v2752
        %v3596 = vunpack.c.l.b16 %v2753
        %v3597 = vunpack.c.h.b16 %v2753
        %v3598 = vunpack.c.l.b16 %v2754
        %v3599 = vunpack.c.h.b16 %v2754
        %v3600 = vunpack.c.l.b16 %v2755
        %v3601 = vunpack.c.h.b16 %v2755
        %v3602 = vunpack.c.l.b16 %v2756
        %v3603 = vunpack.c.h.b16 %v2756
        %v3604 = vunpack.c.l.b16 %v2757
        %v3605 = vunpack.c.h.b16 %v2757
        %v3606 = vpack.c.b16 %v3096, %v3094
        %v3607 = vpack.c.b16 %v3097, %v3095
        %v3608 = vpack.c.b16 %v3100, %v3098
        %v3609 = vpack.c.b16 %v3101, %v3099
        %v3610 = vpack.c.b16 %v3104, %v3102
        %v3611 = vpack.c.b16 %v3105, %v3103
        %v3612 = vpack.c.b16 %v3108, %v3106
        %v3613 = vpack.c.b16 %v3109, %v3107
        %v3614 = vpack.c.b16 %v3112, %v3110
        %v3615 = vpack.c.b16 %v3113, %v3111
        %v3616 = vpack.c.b16 %v3116, %v3114
        %v3617 = vpack.c.b16 %v3117, %v3115
        %v3618 = vpack.c.b16 %v3120, %v3118
        %v3619 = vpack.c.b16 %v3121, %v3119
        %v3620 = vpack.c.b16 %v3124, %v3122
        %v3621 = vpack.c.b16 %v3125, %v3123
        %v3622 = vpack.c.b16 %v3128, %v3126
        %v3623 = vpack.c.b16 %v3129, %v3127
        %v3624 = vpack.c.b16 %v3132, %v3130
        %v3625 = vpack.c.b16 %v3133, %v3131
        %v3626 = vpack.c.b16 %v3136, %v3134
        %v3627 = vpack.c.b16 %v3137, %v3135
        %v3628 = vpack.c.b16 %v3140, %v3138
        %v3629 = vpack.c.b16 %v3141, %v3139
        %v3630 = vpack.c.b16 %v3144, %v3142
        %v3631 = vpack.c.b16 %v3145, %v3143
        %v3632 = vpack.c.b16 %v3148, %v3146
        %v3633 = vpack.c.b16 %v3149, %v3147
        %v3634 = vpack.c.b16 %v3152, %v3150
        %v3635 = vpack.c.b16 %v3153, %v3151
        %v3636 = vpack.c.b16 %v3156, %v3154
        %v3637 = vpack.c.b16 %v3157, %v3155
        %v3638 = vpack.c.b16 %v3160, %v3158
        %v3639 = vpack.c.b16 %v3161, %v3159
        %v3640 = vpack.c.b16 %v3164, %v3162
        %v3641 = vpack.c.b16 %v3165, %v3163
        %v3642 = vpack.c.b16 %v3168, %v3166
        %v3643 = vpack.c.b16 %v3169, %v3167
        %v3644 = vpack.c.b16 %v3172, %v3170
        %v3645 = vpack.c.b16 %v3173, %v3171
        %v3646 = vpack.c.b16 %v3176, %v3174
        %v3647 = vpack.c.b16 %v3177, %v3175
        %v3648 = vpack.c.b16 %v3180, %v3178
        %v3649 = vpack.c.b16 %v3181, %v3179
        %v3650 = vpack.c.b16 %v3184, %v3182
        %v3651 = vpack.c.b16 %v3185, %v3183
        %v3652 = vpack.c.b16 %v3188, %v3186
        %v3653 = vpack.c.b16 %v3189, %v3187
        %v3654 = vpack.c.b16 %v3192, %v3190
        %v3655 = vpack.c.b16 %v3193, %v3191
        %v3656 = vpack.c.b16 %v3196, %v3194
        %v3657 = vpack.c.b16 %v3197, %v3195
        %v3658 = vpack.c.b16 %v3200, %v3198
        %v3659 = vpack.c.b16 %v3201, %v3199
        %v3660 = vpack.c.b16 %v3204, %v3202
        %v3661 = vpack.c.b16 %v3205, %v3203
        %v3662 = vpack.c.b16 %v3208, %v3206
        %v3663 = vpack.c.b16 %v3209, %v3207
        %v3664 = vpack.c.b16 %v3212, %v3210
        %v3665 = vpack.c.b16 %v3213, %v3211
        %v3666 = vpack.c.b16 %v3216, %v3214
        %v3667 = vpack.c.b16 %v3217, %v3215
        %v3668 = vpack.c.b16 %v3220, %v3218
        %v3669 = vpack.c.b16 %v3221, %v3219
        %v3670 = vpack.c.b16 %v3224, %v3222
        %v3671 = vpack.c.b16 %v3225, %v3223
        %v3672 = vpack.c.b16 %v3228, %v3226
        %v3673 = vpack.c.b16 %v3229, %v3227
        %v3674 = vpack.c.b16 %v3232, %v3230
        %v3675 = vpack.c.b16 %v3233, %v3231
        %v3676 = vpack.c.b16 %v3236, %v3234
        %v3677 = vpack.c.b16 %v3237, %v3235
        %v3678 = vpack.c.b16 %v3240, %v3238
        %v3679 = vpack.c.b16 %v3241, %v3239
        %v3680 = vpack.c.b16 %v3244, %v3242
        %v3681 = vpack.c.b16 %v3245, %v3243
        %v3682 = vpack.c.b16 %v3248, %v3246
        %v3683 = vpack.c.b16 %v3249, %v3247
        %v3684 = vpack.c.b16 %v3252, %v3250
        %v3685 = vpack.c.b16 %v3253, %v3251
        %v3686 = vpack.c.b16 %v3256, %v3254
        %v3687 = vpack.c.b16 %v3257, %v3255
        %v3688 = vpack.c.b16 %v3260, %v3258
        %v3689 = vpack.c.b16 %v3261, %v3259
        %v3690 = vpack.c.b16 %v3264, %v3262
        %v3691 = vpack.c.b16 %v3265, %v3263
        %v3692 = vpack.c.b16 %v3268, %v3266
        %v3693 = vpack.c.b16 %v3269, %v3267
        %v3694 = vpack.c.b16 %v3272, %v3270
        %v3695 = vpack.c.b16 %v3273, %v3271
        %v3696 = vpack.c.b16 %v3276, %v3274
        %v3697 = vpack.c.b16 %v3277, %v3275
        %v3698 = vpack.c.b16 %v3280, %v3278
        %v3699 = vpack.c.b16 %v3281, %v3279
        %v3700 = vpack.c.b16 %v3284, %v3282
        %v3701 = vpack.c.b16 %v3285, %v3283
        %v3702 = vpack.c.b16 %v3288, %v3286
        %v3703 = vpack.c.b16 %v3289, %v3287
        %v3704 = vpack.c.b16 %v3292, %v3290
        %v3705 = vpack.c.b16 %v3293, %v3291
        %v3706 = vpack.c.b16 %v3296, %v3294
        %v3707 = vpack.c.b16 %v3297, %v3295
        %v3708 = vpack.c.b16 %v3300, %v3298
        %v3709 = vpack.c.b16 %v3301, %v3299
        %v3710 = vpack.c.b16 %v3304, %v3302
        %v3711 = vpack.c.b16 %v3305, %v3303
        %v3712 = vpack.c.b16 %v3308, %v3306
        %v3713 = vpack.c.b16 %v3309, %v3307
        %v3714 = vpack.c.b16 %v3312, %v3310
        %v3715 = vpack.c.b16 %v3313, %v3311
        %v3716 = vpack.c.b16 %v3316, %v3314
        %v3717 = vpack.c.b16 %v3317, %v3315
        %v3718 = vpack.c.b16 %v3320, %v3318
        %v3719 = vpack.c.b16 %v3321, %v3319
        %v3720 = vpack.c.b16 %v3324, %v3322
        %v3721 = vpack.c.b16 %v3325, %v3323
        %v3722 = vpack.c.b16 %v3328, %v3326
        %v3723 = vpack.c.b16 %v3329, %v3327
        %v3724 = vpack.c.b16 %v3332, %v3330
        %v3725 = vpack.c.b16 %v3333, %v3331
        %v3726 = vpack.c.b16 %v3336, %v3334
        %v3727 = vpack.c.b16 %v3337, %v3335
        %v3728 = vpack.c.b16 %v3340, %v3338
        %v3729 = vpack.c.b16 %v3341, %v3339
        %v3730 = vpack.c.b16 %v3344, %v3342
        %v3731 = vpack.c.b16 %v3345, %v3343
        %v3732 = vpack.c.b16 %v3348, %v3346
        %v3733 = vpack.c.b16 %v3349, %v3347
        %v3734 = vpack.c.b16 %v3352, %v3350
        %v3735 = vpack.c.b16 %v3353, %v3351
        %v3736 = vpack.c.b16 %v3356, %v3354
        %v3737 = vpack.c.b16 %v3357, %v3355
        %v3738 = vpack.c.b16 %v3360, %v3358
        %v3739 = vpack.c.b16 %v3361, %v3359
        %v3740 = vpack.c.b16 %v3364, %v3362
        %v3741 = vpack.c.b16 %v3365, %v3363
        %v3742 = vpack.c.b16 %v3368, %v3366
        %v3743 = vpack.c.b16 %v3369, %v3367
        %v3744 = vpack.c.b16 %v3372, %v3370
        %v3745 = vpack.c.b16 %v3373, %v3371
        %v3746 = vpack.c.b16 %v3376, %v3374
        %v3747 = vpack.c.b16 %v3377, %v3375
        %v3748 = vpack.c.b16 %v3380, %v3378
        %v3749 = vpack.c.b16 %v3381, %v3379
        %v3750 = vpack.c.b16 %v3384, %v3382
        %v3751 = vpack.c.b16 %v3385, %v3383
        %v3752 = vpack.c.b16 %v3388, %v3386
        %v3753 = vpack.c.b16 %v3389, %v3387
        %v3754 = vpack.c.b16 %v3392, %v3390
        %v3755 = vpack.c.b16 %v3393, %v3391
        %v3756 = vpack.c.b16 %v3396, %v3394
        %v3757 = vpack.c.b16 %v3397, %v3395
        %v3758 = vpack.c.b16 %v3400, %v3398
        %v3759 = vpack.c.b16 %v3401, %v3399
        %v3760 = vpack.c.b16 %v3404, %v3402
        %v3761 = vpack.c.b16 %v3405, %v3403
        %v3762 = vpack.c.b16 %v3408, %v3406
        %v3763 = vpack.c.b16 %v3409, %v3407
        %v3764 = vpack.c.b16 %v3412, %v3410
        %v3765 = vpack.c.b16 %v3413, %v3411
        %v3766 = vpack.c.b16 %v3416, %v3414
        %v3767 = vpack.c.b16 %v3417, %v3415
        %v3768 = vpack.c.b16 %v3420, %v3418
        %v3769 = vpack.c.b16 %v3421, %v3419
        %v3770 = vpack.c.b16 %v3424, %v3422
        %v3771 = vpack.c.b16 %v3425, %v3423
        %v3772 = vpack.c.b16 %v3428, %v3426
        %v3773 = vpack.c.b16 %v3429, %v3427
        %v3774 = vpack.c.b16 %v3432, %v3430
        %v3775 = vpack.c.b16 %v3433, %v3431
        %v3776 = vpack.c.b16 %v3436, %v3434
        %v3777 = vpack.c.b16 %v3437, %v3435
        %v3778 = vpack.c.b16 %v3440, %v3438
        %v3779 = vpack.c.b16 %v3441, %v3439
        %v3780 = vpack.c.b16 %v3444, %v3442
        %v3781 = vpack.c.b16 %v3445, %v3443
        %v3782 = vpack.c.b16 %v3448, %v3446
        %v3783 = vpack.c.b16 %v3449, %v3447
        %v3784 = vpack.c.b16 %v3452, %v3450
        %v3785 = vpack.c.b16 %v3453, %v3451
        %v3786 = vpack.c.b16 %v3456, %v3454
        %v3787 = vpack.c.b16 %v3457, %v3455
        %v3788 = vpack.c.b16 %v3460, %v3458
        %v3789 = vpack.c.b16 %v3461, %v3459
        %v3790 = vpack.c.b16 %v3464, %v3462
        %v3791 = vpack.c.b16 %v3465, %v3463
        %v3792 = vpack.c.b16 %v3468, %v3466
        %v3793 = vpack.c.b16 %v3469, %v3467
        %v3794 = vpack.c.b16 %v3472, %v3470
        %v3795 = vpack.c.b16 %v3473, %v3471
        %v3796 = vpack.c.b16 %v3476, %v3474
        %v3797 = vpack.c.b16 %v3477, %v3475
        %v3798 = vpack.c.b16 %v3480, %v3478
        %v3799 = vpack.c.b16 %v3481, %v3479
        %v3800 = vpack.c.b16 %v3484, %v3482
        %v3801 = vpack.c.b16 %v3485, %v3483
        %v3802 = vpack.c.b16 %v3488, %v3486
        %v3803 = vpack.c.b16 %v3489, %v3487
        %v3804 = vpack.c.b16 %v3492, %v3490
        %v3805 = vpack.c.b16 %v3493, %v3491
        %v3806 = vpack.c.b16 %v3496, %v3494
        %v3807 = vpack.c.b16 %v3497, %v3495
        %v3808 = vpack.c.b16 %v3500, %v3498
        %v3809 = vpack.c.b16 %v3501, %v3499
        %v3810 = vpack.c.b16 %v3504, %v3502
        %v3811 = vpack.c.b16 %v3505, %v3503
        %v3812 = vpack.c.b16 %v3508, %v3506
        %v3813 = vpack.c.b16 %v3509, %v3507
        %v3814 = vpack.c.b16 %v3512, %v3510
        %v3815 = vpack.c.b16 %v3513, %v3511
        %v3816 = vpack.c.b16 %v3516, %v3514
        %v3817 = vpack.c.b16 %v3517, %v3515
        %v3818 = vpack.c.b16 %v3520, %v3518
        %v3819 = vpack.c.b16 %v3521, %v3519
        %v3820 = vpack.c.b16 %v3524, %v3522
        %v3821 = vpack.c.b16 %v3525, %v3523
        %v3822 = vpack.c.b16 %v3528, %v3526
        %v3823 = vpack.c.b16 %v3529, %v3527
        %v3824 = vpack.c.b16 %v3532, %v3530
        %v3825 = vpack.c.b16 %v3533, %v3531
        %v3826 = vpack.c.b16 %v3536, %v3534
        %v3827 = vpack.c.b16 %v3537, %v3535
        %v3828 = vpack.c.b16 %v3540, %v3538
        %v3829 = vpack.c.b16 %v3541, %v3539
        %v3830 = vpack.c.b16 %v3544, %v3542
        %v3831 = vpack.c.b16 %v3545, %v3543
        %v3832 = vpack.c.b16 %v3548, %v3546
        %v3833 = vpack.c.b16 %v3549, %v3547
        %v3834 = vpack.c.b16 %v3552, %v3550
        %v3835 = vpack.c.b16 %v3553, %v3551
        %v3836 = vpack.c.b16 %v3556, %v3554
        %v3837 = vpack.c.b16 %v3557, %v3555
        %v3838 = vpack.c.b16 %v3560, %v3558
        %v3839 = vpack.c.b16 %v3561, %v3559
        %v3840 = vpack.c.b16 %v3564, %v3562
        %v3841 = vpack.c.b16 %v3565, %v3563
        %v3842 = vpack.c.b16 %v3568, %v3566
        %v3843 = vpack.c.b16 %v3569, %v3567
        %v3844 = vpack.c.b16 %v3572, %v3570
        %v3845 = vpack.c.b16 %v3573, %v3571
        %v3846 = vpack.c.b16 %v3576, %v3574
        %v3847 = vpack.c.b16 %v3577, %v3575
        %v3848 = vpack.c.b16 %v3580, %v3578
        %v3849 = vpack.c.b16 %v3581, %v3579
        %v3850 = vpack.c.b16 %v3584, %v3582
        %v3851 = vpack.c.b16 %v3585, %v3583
        %v3852 = vpack.c.b16 %v3588, %v3586
        %v3853 = vpack.c.b16 %v3589, %v3587
        %v3854 = vpack.c.b16 %v3592, %v3590
        %v3855 = vpack.c.b16 %v3593, %v3591
        %v3856 = vpack.c.b16 %v3596, %v3594
        %v3857 = vpack.c.b16 %v3597, %v3595
        %v3858 = vpack.c.b16 %v3600, %v3598
        %v3859 = vpack.c.b16 %v3601, %v3599
        %v3860 = vpack.c.b16 %v3604, %v3602
        %v3861 = vpack.c.b16 %v3605, %v3603
        %4118 = vmatpush.bf16.msra.mxu0 %v3620
        %4119 = vmatpush.bf16.msra.mxu0 %v3618
        %4120 = vmatpush.bf16.msra.mxu0 %v3616
        %4121 = vmatpush.bf16.msra.mxu0 %v3614
        %4122 = vmatpush.bf16.msra.mxu0 %v3612
        %4123 = vmatpush.bf16.msra.mxu0 %v3610
        %4124 = vmatpush.bf16.msra.mxu0 %v3608
        %4125 = vmatpush.bf16.msra.mxu0 %v3606
        %4126 = vmatmul.bf16.gmra.mxu0 %v2806
        %v4127 = vpop.f32.mrf.mxu0
        %v4128 = vadd.f32 0.0, %v4127
        %v4129 = vpop.f32.mrf.mxu0
        %v4130 = vadd.f32 0.0, %v4129
        %4131 = vdwg.mxu0
        %4132 = vmatpush.bf16.msra.mxu0 %v3636
        %4133 = vmatpush.bf16.msra.mxu0 %v3634
        %4134 = vmatpush.bf16.msra.mxu0 %v3632
        %4135 = vmatpush.bf16.msra.mxu0 %v3630
        %4136 = vmatpush.bf16.msra.mxu0 %v3628
        %4137 = vmatpush.bf16.msra.mxu0 %v3626
        %4138 = vmatpush.bf16.msra.mxu0 %v3624
        %4139 = vmatpush.bf16.msra.mxu0 %v3622
        %4140 = vmatmul.bf16.gmra.mxu0 %v2807
        %v4141 = vpop.f32.mrf.mxu0
        %v4142 = vadd.f32 %v4128, %v4141
        %v4143 = vpop.f32.mrf.mxu0
        %v4144 = vadd.f32 %v4130, %v4143
        %4145 = vdwg.mxu0
        %4146 = vmatpush.bf16.msra.mxu0 %v3652
        %4147 = vmatpush.bf16.msra.mxu0 %v3650
        %4148 = vmatpush.bf16.msra.mxu0 %v3648
        %4149 = vmatpush.bf16.msra.mxu0 %v3646
        %4150 = vmatpush.bf16.msra.mxu0 %v3644
        %4151 = vmatpush.bf16.msra.mxu0 %v3642
        %4152 = vmatpush.bf16.msra.mxu0 %v3640
        %4153 = vmatpush.bf16.msra.mxu0 %v3638
        %4154 = vmatmul.bf16.gmra.mxu0 %v2808
        %v4155 = vpop.f32.mrf.mxu0
        %v4156 = vadd.f32 %v4142, %v4155
        %v4157 = vpop.f32.mrf.mxu0
        %v4158 = vadd.f32 %v4144, %v4157
        %4159 = vdwg.mxu0
        %4160 = vmatpush.bf16.msra.mxu0 %v3668
        %4161 = vmatpush.bf16.msra.mxu0 %v3666
        %4162 = vmatpush.bf16.msra.mxu0 %v3664
        %4163 = vmatpush.bf16.msra.mxu0 %v3662
        %4164 = vmatpush.bf16.msra.mxu0 %v3660
        %4165 = vmatpush.bf16.msra.mxu0 %v3658
        %4166 = vmatpush.bf16.msra.mxu0 %v3656
        %4167 = vmatpush.bf16.msra.mxu0 %v3654
        %4168 = vmatmul.bf16.gmra.mxu0 %v2809
        %v4169 = vpop.f32.mrf.mxu0
        %v4170 = vadd.f32 %v4156, %v4169
        %v4171 = vpop.f32.mrf.mxu0
        %v4172 = vadd.f32 %v4158, %v4171
        %4173 = vdwg.mxu0
        %4174 = vmatpush.bf16.msra.mxu0 %v3684
        %4175 = vmatpush.bf16.msra.mxu0 %v3682
        %4176 = vmatpush.bf16.msra.mxu0 %v3680
        %4177 = vmatpush.bf16.msra.mxu0 %v3678
        %4178 = vmatpush.bf16.msra.mxu0 %v3676
        %4179 = vmatpush.bf16.msra.mxu0 %v3674
        %4180 = vmatpush.bf16.msra.mxu0 %v3672
        %4181 = vmatpush.bf16.msra.mxu0 %v3670
        %4182 = vmatmul.bf16.gmra.mxu0 %v2810
        %v4183 = vpop.f32.mrf.mxu0
        %v4184 = vadd.f32 %v4170, %v4183
        %v4185 = vpop.f32.mrf.mxu0
        %v4186 = vadd.f32 %v4172, %v4185
        %4187 = vdwg.mxu0
        %4188 = vmatpush.bf16.msra.mxu0 %v3700
        %4189 = vmatpush.bf16.msra.mxu0 %v3698
        %4190 = vmatpush.bf16.msra.mxu0 %v3696
        %4191 = vmatpush.bf16.msra.mxu0 %v3694
        %4192 = vmatpush.bf16.msra.mxu0 %v3692
        %4193 = vmatpush.bf16.msra.mxu0 %v3690
        %4194 = vmatpush.bf16.msra.mxu0 %v3688
        %4195 = vmatpush.bf16.msra.mxu0 %v3686
        %4196 = vmatmul.bf16.gmra.mxu0 %v2811
        %v4197 = vpop.f32.mrf.mxu0
        %v4198 = vadd.f32 %v4184, %v4197
        %v4199 = vpop.f32.mrf.mxu0
        %v4200 = vadd.f32 %v4186, %v4199
        %4201 = vdwg.mxu0
        %4202 = vmatpush.bf16.msra.mxu0 %v3716
        %4203 = vmatpush.bf16.msra.mxu0 %v3714
        %4204 = vmatpush.bf16.msra.mxu0 %v3712
        %4205 = vmatpush.bf16.msra.mxu0 %v3710
        %4206 = vmatpush.bf16.msra.mxu0 %v3708
        %4207 = vmatpush.bf16.msra.mxu0 %v3706
        %4208 = vmatpush.bf16.msra.mxu0 %v3704
        %4209 = vmatpush.bf16.msra.mxu0 %v3702
        %4210 = vmatmul.bf16.gmra.mxu0 %v2812
        %v4211 = vpop.f32.mrf.mxu0
        %v4212 = vadd.f32 %v4198, %v4211
        %v4213 = vpop.f32.mrf.mxu0
        %v4214 = vadd.f32 %v4200, %v4213
        %4215 = vdwg.mxu0
        %4216 = vmatpush.bf16.msra.mxu0 %v3732
        %4217 = vmatpush.bf16.msra.mxu0 %v3730
        %4218 = vmatpush.bf16.msra.mxu0 %v3728
        %4219 = vmatpush.bf16.msra.mxu0 %v3726
        %4220 = vmatpush.bf16.msra.mxu0 %v3724
        %4221 = vmatpush.bf16.msra.mxu0 %v3722
        %4222 = vmatpush.bf16.msra.mxu0 %v3720
        %4223 = vmatpush.bf16.msra.mxu0 %v3718
        %4224 = vmatmul.bf16.gmra.mxu0 %v2813
        %v4225 = vpop.f32.mrf.mxu0
        %v4226 = vadd.f32 %v4212, %v4225
        %v4227 = vpop.f32.mrf.mxu0
        %v4228 = vadd.f32 %v4214, %v4227
        %4229 = vdwg.mxu0
        %4230 = vmatpush.bf16.msra.mxu0 %v3748
        %4231 = vmatpush.bf16.msra.mxu0 %v3746
        %4232 = vmatpush.bf16.msra.mxu0 %v3744
        %4233 = vmatpush.bf16.msra.mxu0 %v3742
        %4234 = vmatpush.bf16.msra.mxu0 %v3740
        %4235 = vmatpush.bf16.msra.mxu0 %v3738
        %4236 = vmatpush.bf16.msra.mxu0 %v3736
        %4237 = vmatpush.bf16.msra.mxu0 %v3734
        %4238 = vmatmul.bf16.gmra.mxu0 %v2814
        %v4239 = vpop.f32.mrf.mxu0
        %v4240 = vadd.f32 %v4226, %v4239
        %v4241 = vpop.f32.mrf.mxu0
        %v4242 = vadd.f32 %v4228, %v4241
        %4243 = vdwg.mxu0
        %4244 = vmatpush.bf16.msra.mxu0 %v3764
        %4245 = vmatpush.bf16.msra.mxu0 %v3762
        %4246 = vmatpush.bf16.msra.mxu0 %v3760
        %4247 = vmatpush.bf16.msra.mxu0 %v3758
        %4248 = vmatpush.bf16.msra.mxu0 %v3756
        %4249 = vmatpush.bf16.msra.mxu0 %v3754
        %4250 = vmatpush.bf16.msra.mxu0 %v3752
        %4251 = vmatpush.bf16.msra.mxu0 %v3750
        %4252 = vmatmul.bf16.gmra.mxu0 %v2815
        %v4253 = vpop.f32.mrf.mxu0
        %v4254 = vadd.f32 %v4240, %v4253
        %v4255 = vpop.f32.mrf.mxu0
        %v4256 = vadd.f32 %v4242, %v4255
        %4257 = vdwg.mxu0
        %4258 = vmatpush.bf16.msra.mxu0 %v3780
        %4259 = vmatpush.bf16.msra.mxu0 %v3778
        %4260 = vmatpush.bf16.msra.mxu0 %v3776
        %4261 = vmatpush.bf16.msra.mxu0 %v3774
        %4262 = vmatpush.bf16.msra.mxu0 %v3772
        %4263 = vmatpush.bf16.msra.mxu0 %v3770
        %4264 = vmatpush.bf16.msra.mxu0 %v3768
        %4265 = vmatpush.bf16.msra.mxu0 %v3766
        %4266 = vmatmul.bf16.gmra.mxu0 %v2816
        %v4267 = vpop.f32.mrf.mxu0
        %v4268 = vadd.f32 %v4254, %v4267
        %v4269 = vpop.f32.mrf.mxu0
        %v4270 = vadd.f32 %v4256, %v4269
        %4271 = vdwg.mxu0
        %4272 = vmatpush.bf16.msra.mxu0 %v3796
        %4273 = vmatpush.bf16.msra.mxu0 %v3794
        %4274 = vmatpush.bf16.msra.mxu0 %v3792
        %4275 = vmatpush.bf16.msra.mxu0 %v3790
        %4276 = vmatpush.bf16.msra.mxu0 %v3788
        %4277 = vmatpush.bf16.msra.mxu0 %v3786
        %4278 = vmatpush.bf16.msra.mxu0 %v3784
        %4279 = vmatpush.bf16.msra.mxu0 %v3782
        %4280 = vmatmul.bf16.gmra.mxu0 %v2817
        %v4281 = vpop.f32.mrf.mxu0
        %v4282 = vadd.f32 %v4268, %v4281
        %v4283 = vpop.f32.mrf.mxu0
        %v4284 = vadd.f32 %v4270, %v4283
        %4285 = vdwg.mxu0
        %4286 = vmatpush.bf16.msra.mxu0 %v3812
        %4287 = vmatpush.bf16.msra.mxu0 %v3810
        %4288 = vmatpush.bf16.msra.mxu0 %v3808
        %4289 = vmatpush.bf16.msra.mxu0 %v3806
        %4290 = vmatpush.bf16.msra.mxu0 %v3804
        %4291 = vmatpush.bf16.msra.mxu0 %v3802
        %4292 = vmatpush.bf16.msra.mxu0 %v3800
        %4293 = vmatpush.bf16.msra.mxu0 %v3798
        %4294 = vmatmul.bf16.gmra.mxu0 %v2818
        %v4295 = vpop.f32.mrf.mxu0
        %v4296 = vadd.f32 %v4282, %v4295
        %v4297 = vpop.f32.mrf.mxu0
        %v4298 = vadd.f32 %v4284, %v4297
        %4299 = vdwg.mxu0
        %4300 = vmatpush.bf16.msra.mxu0 %v3828
        %4301 = vmatpush.bf16.msra.mxu0 %v3826
        %4302 = vmatpush.bf16.msra.mxu0 %v3824
        %4303 = vmatpush.bf16.msra.mxu0 %v3822
        %4304 = vmatpush.bf16.msra.mxu0 %v3820
        %4305 = vmatpush.bf16.msra.mxu0 %v3818
        %4306 = vmatpush.bf16.msra.mxu0 %v3816
        %4307 = vmatpush.bf16.msra.mxu0 %v3814
        %4308 = vmatmul.bf16.gmra.mxu0 %v2819
        %v4309 = vpop.f32.mrf.mxu0
        %v4310 = vadd.f32 %v4296, %v4309
        %v4311 = vpop.f32.mrf.mxu0
        %v4312 = vadd.f32 %v4298, %v4311
        %4313 = vdwg.mxu0
        %4314 = vmatpush.bf16.msra.mxu0 %v3844
        %4315 = vmatpush.bf16.msra.mxu0 %v3842
        %4316 = vmatpush.bf16.msra.mxu0 %v3840
        %4317 = vmatpush.bf16.msra.mxu0 %v3838
        %4318 = vmatpush.bf16.msra.mxu0 %v3836
        %4319 = vmatpush.bf16.msra.mxu0 %v3834
        %4320 = vmatpush.bf16.msra.mxu0 %v3832
        %4321 = vmatpush.bf16.msra.mxu0 %v3830
        %4322 = vmatmul.bf16.gmra.mxu0 %v2820
        %v4323 = vpop.f32.mrf.mxu0
        %v4324 = vadd.f32 %v4310, %v4323
        %v4325 = vpop.f32.mrf.mxu0
        %v4326 = vadd.f32 %v4312, %v4325
        %4327 = vdwg.mxu0
        %4328 = vmatpush.bf16.msra.mxu0 %v3860
        %4329 = vmatpush.bf16.msra.mxu0 %v3858
        %4330 = vmatpush.bf16.msra.mxu0 %v3856
        %4331 = vmatpush.bf16.msra.mxu0 %v3854
        %4332 = vmatpush.bf16.msra.mxu0 %v3852
        %4333 = vmatpush.bf16.msra.mxu0 %v3850
        %4334 = vmatpush.bf16.msra.mxu0 %v3848
        %4335 = vmatpush.bf16.msra.mxu0 %v3846
        %4336 = vmatmul.bf16.gmra.mxu0 %v2821
        %v4337 = vpop.f32.mrf.mxu0
        %v4338 = vadd.f32 %v4324, %v4337
        %v4339 = vpop.f32.mrf.mxu0
        %v4340 = vadd.f32 %v4326, %v4339
        %4341 = vdwg.mxu0
        %4342 = vmatpush.bf16.msra.mxu0 %v3621
        %4343 = vmatpush.bf16.msra.mxu0 %v3619
        %4344 = vmatpush.bf16.msra.mxu0 %v3617
        %4345 = vmatpush.bf16.msra.mxu0 %v3615
        %4346 = vmatpush.bf16.msra.mxu0 %v3613
        %4347 = vmatpush.bf16.msra.mxu0 %v3611
        %4348 = vmatpush.bf16.msra.mxu0 %v3609
        %4349 = vmatpush.bf16.msra.mxu0 %v3607
        %4350 = vmatmul.bf16.gmra.mxu0 %v2806
        %v4351 = vpop.f32.mrf.mxu0
        %v4352 = vadd.f32 0.0, %v4351
        %v4353 = vpop.f32.mrf.mxu0
        %v4354 = vadd.f32 0.0, %v4353
        %4355 = vdwg.mxu0
        %4356 = vmatpush.bf16.msra.mxu0 %v3637
        %4357 = vmatpush.bf16.msra.mxu0 %v3635
        %4358 = vmatpush.bf16.msra.mxu0 %v3633
        %4359 = vmatpush.bf16.msra.mxu0 %v3631
        %4360 = vmatpush.bf16.msra.mxu0 %v3629
        %4361 = vmatpush.bf16.msra.mxu0 %v3627
        %4362 = vmatpush.bf16.msra.mxu0 %v3625
        %4363 = vmatpush.bf16.msra.mxu0 %v3623
        %4364 = vmatmul.bf16.gmra.mxu0 %v2807
        %v4365 = vpop.f32.mrf.mxu0
        %v4366 = vadd.f32 %v4352, %v4365
        %v4367 = vpop.f32.mrf.mxu0
        %v4368 = vadd.f32 %v4354, %v4367
        %4369 = vdwg.mxu0
        %4370 = vmatpush.bf16.msra.mxu0 %v3653
        %4371 = vmatpush.bf16.msra.mxu0 %v3651
        %4372 = vmatpush.bf16.msra.mxu0 %v3649
        %4373 = vmatpush.bf16.msra.mxu0 %v3647
        %4374 = vmatpush.bf16.msra.mxu0 %v3645
        %4375 = vmatpush.bf16.msra.mxu0 %v3643
        %4376 = vmatpush.bf16.msra.mxu0 %v3641
        %4377 = vmatpush.bf16.msra.mxu0 %v3639
        %4378 = vmatmul.bf16.gmra.mxu0 %v2808
        %v4379 = vpop.f32.mrf.mxu0
        %v4380 = vadd.f32 %v4366, %v4379
        %v4381 = vpop.f32.mrf.mxu0
        %v4382 = vadd.f32 %v4368, %v4381
        %4383 = vdwg.mxu0
        %4384 = vmatpush.bf16.msra.mxu0 %v3669
        %4385 = vmatpush.bf16.msra.mxu0 %v3667
        %4386 = vmatpush.bf16.msra.mxu0 %v3665
        %4387 = vmatpush.bf16.msra.mxu0 %v3663
        %4388 = vmatpush.bf16.msra.mxu0 %v3661
        %4389 = vmatpush.bf16.msra.mxu0 %v3659
        %4390 = vmatpush.bf16.msra.mxu0 %v3657
        %4391 = vmatpush.bf16.msra.mxu0 %v3655
        %4392 = vmatmul.bf16.gmra.mxu0 %v2809
        %v4393 = vpop.f32.mrf.mxu0
        %v4394 = vadd.f32 %v4380, %v4393
        %v4395 = vpop.f32.mrf.mxu0
        %v4396 = vadd.f32 %v4382, %v4395
        %4397 = vdwg.mxu0
        %4398 = vmatpush.bf16.msra.mxu0 %v3685
        %4399 = vmatpush.bf16.msra.mxu0 %v3683
        %4400 = vmatpush.bf16.msra.mxu0 %v3681
        %4401 = vmatpush.bf16.msra.mxu0 %v3679
        %4402 = vmatpush.bf16.msra.mxu0 %v3677
        %4403 = vmatpush.bf16.msra.mxu0 %v3675
        %4404 = vmatpush.bf16.msra.mxu0 %v3673
        %4405 = vmatpush.bf16.msra.mxu0 %v3671
        %4406 = vmatmul.bf16.gmra.mxu0 %v2810
        %v4407 = vpop.f32.mrf.mxu0
        %v4408 = vadd.f32 %v4394, %v4407
        %v4409 = vpop.f32.mrf.mxu0
        %v4410 = vadd.f32 %v4396, %v4409
        %4411 = vdwg.mxu0
        %4412 = vmatpush.bf16.msra.mxu0 %v3701
        %4413 = vmatpush.bf16.msra.mxu0 %v3699
        %4414 = vmatpush.bf16.msra.mxu0 %v3697
        %4415 = vmatpush.bf16.msra.mxu0 %v3695
        %4416 = vmatpush.bf16.msra.mxu0 %v3693
        %4417 = vmatpush.bf16.msra.mxu0 %v3691
        %4418 = vmatpush.bf16.msra.mxu0 %v3689
        %4419 = vmatpush.bf16.msra.mxu0 %v3687
        %4420 = vmatmul.bf16.gmra.mxu0 %v2811
        %v4421 = vpop.f32.mrf.mxu0
        %v4422 = vadd.f32 %v4408, %v4421
        %v4423 = vpop.f32.mrf.mxu0
        %v4424 = vadd.f32 %v4410, %v4423
        %4425 = vdwg.mxu0
        %4426 = vmatpush.bf16.msra.mxu0 %v3717
        %4427 = vmatpush.bf16.msra.mxu0 %v3715
        %4428 = vmatpush.bf16.msra.mxu0 %v3713
        %4429 = vmatpush.bf16.msra.mxu0 %v3711
        %4430 = vmatpush.bf16.msra.mxu0 %v3709
        %4431 = vmatpush.bf16.msra.mxu0 %v3707
        %4432 = vmatpush.bf16.msra.mxu0 %v3705
        %4433 = vmatpush.bf16.msra.mxu0 %v3703
        %4434 = vmatmul.bf16.gmra.mxu0 %v2812
        %v4435 = vpop.f32.mrf.mxu0
        %v4436 = vadd.f32 %v4422, %v4435
        %v4437 = vpop.f32.mrf.mxu0
        %v4438 = vadd.f32 %v4424, %v4437
        %4439 = vdwg.mxu0
        %4440 = vmatpush.bf16.msra.mxu0 %v3733
        %4441 = vmatpush.bf16.msra.mxu0 %v3731
        %4442 = vmatpush.bf16.msra.mxu0 %v3729
        %4443 = vmatpush.bf16.msra.mxu0 %v3727
        %4444 = vmatpush.bf16.msra.mxu0 %v3725
        %4445 = vmatpush.bf16.msra.mxu0 %v3723
        %4446 = vmatpush.bf16.msra.mxu0 %v3721
        %4447 = vmatpush.bf16.msra.mxu0 %v3719
        %4448 = vmatmul.bf16.gmra.mxu0 %v2813
        %v4449 = vpop.f32.mrf.mxu0
        %v4450 = vadd.f32 %v4436, %v4449
        %v4451 = vpop.f32.mrf.mxu0
        %v4452 = vadd.f32 %v4438, %v4451
        %4453 = vdwg.mxu0
        %4454 = vmatpush.bf16.msra.mxu0 %v3749
        %4455 = vmatpush.bf16.msra.mxu0 %v3747
        %4456 = vmatpush.bf16.msra.mxu0 %v3745
        %4457 = vmatpush.bf16.msra.mxu0 %v3743
        %4458 = vmatpush.bf16.msra.mxu0 %v3741
        %4459 = vmatpush.bf16.msra.mxu0 %v3739
        %4460 = vmatpush.bf16.msra.mxu0 %v3737
        %4461 = vmatpush.bf16.msra.mxu0 %v3735
        %4462 = vmatmul.bf16.gmra.mxu0 %v2814
        %v4463 = vpop.f32.mrf.mxu0
        %v4464 = vadd.f32 %v4450, %v4463
        %v4465 = vpop.f32.mrf.mxu0
        %v4466 = vadd.f32 %v4452, %v4465
        %4467 = vdwg.mxu0
        %4468 = vmatpush.bf16.msra.mxu0 %v3765
        %4469 = vmatpush.bf16.msra.mxu0 %v3763
        %4470 = vmatpush.bf16.msra.mxu0 %v3761
        %4471 = vmatpush.bf16.msra.mxu0 %v3759
        %4472 = vmatpush.bf16.msra.mxu0 %v3757
        %4473 = vmatpush.bf16.msra.mxu0 %v3755
        %4474 = vmatpush.bf16.msra.mxu0 %v3753
        %4475 = vmatpush.bf16.msra.mxu0 %v3751
        %4476 = vmatmul.bf16.gmra.mxu0 %v2815
        %v4477 = vpop.f32.mrf.mxu0
        %v4478 = vadd.f32 %v4464, %v4477
        %v4479 = vpop.f32.mrf.mxu0
        %v4480 = vadd.f32 %v4466, %v4479
        %4481 = vdwg.mxu0
        %4482 = vmatpush.bf16.msra.mxu0 %v3781
        %4483 = vmatpush.bf16.msra.mxu0 %v3779
        %4484 = vmatpush.bf16.msra.mxu0 %v3777
        %4485 = vmatpush.bf16.msra.mxu0 %v3775
        %4486 = vmatpush.bf16.msra.mxu0 %v3773
        %4487 = vmatpush.bf16.msra.mxu0 %v3771
        %4488 = vmatpush.bf16.msra.mxu0 %v3769
        %4489 = vmatpush.bf16.msra.mxu0 %v3767
        %4490 = vmatmul.bf16.gmra.mxu0 %v2816
        %v4491 = vpop.f32.mrf.mxu0
        %v4492 = vadd.f32 %v4478, %v4491
        %v4493 = vpop.f32.mrf.mxu0
        %v4494 = vadd.f32 %v4480, %v4493
        %4495 = vdwg.mxu0
        %4496 = vmatpush.bf16.msra.mxu0 %v3797
        %4497 = vmatpush.bf16.msra.mxu0 %v3795
        %4498 = vmatpush.bf16.msra.mxu0 %v3793
        %4499 = vmatpush.bf16.msra.mxu0 %v3791
        %4500 = vmatpush.bf16.msra.mxu0 %v3789
        %4501 = vmatpush.bf16.msra.mxu0 %v3787
        %4502 = vmatpush.bf16.msra.mxu0 %v3785
        %4503 = vmatpush.bf16.msra.mxu0 %v3783
        %4504 = vmatmul.bf16.gmra.mxu0 %v2817
        %v4505 = vpop.f32.mrf.mxu0
        %v4506 = vadd.f32 %v4492, %v4505
        %v4507 = vpop.f32.mrf.mxu0
        %v4508 = vadd.f32 %v4494, %v4507
        %4509 = vdwg.mxu0
        %4510 = vmatpush.bf16.msra.mxu0 %v3813
        %4511 = vmatpush.bf16.msra.mxu0 %v3811
        %4512 = vmatpush.bf16.msra.mxu0 %v3809
        %4513 = vmatpush.bf16.msra.mxu0 %v3807
        %4514 = vmatpush.bf16.msra.mxu0 %v3805
        %4515 = vmatpush.bf16.msra.mxu0 %v3803
        %4516 = vmatpush.bf16.msra.mxu0 %v3801
        %4517 = vmatpush.bf16.msra.mxu0 %v3799
        %4518 = vmatmul.bf16.gmra.mxu0 %v2818
        %v4519 = vpop.f32.mrf.mxu0
        %v4520 = vadd.f32 %v4506, %v4519
        %v4521 = vpop.f32.mrf.mxu0
        %v4522 = vadd.f32 %v4508, %v4521
        %4523 = vdwg.mxu0
        %4524 = vmatpush.bf16.msra.mxu0 %v3829
        %4525 = vmatpush.bf16.msra.mxu0 %v3827
        %4526 = vmatpush.bf16.msra.mxu0 %v3825
        %4527 = vmatpush.bf16.msra.mxu0 %v3823
        %4528 = vmatpush.bf16.msra.mxu0 %v3821
        %4529 = vmatpush.bf16.msra.mxu0 %v3819
        %4530 = vmatpush.bf16.msra.mxu0 %v3817
        %4531 = vmatpush.bf16.msra.mxu0 %v3815
        %4532 = vmatmul.bf16.gmra.mxu0 %v2819
        %v4533 = vpop.f32.mrf.mxu0
        %v4534 = vadd.f32 %v4520, %v4533
        %v4535 = vpop.f32.mrf.mxu0
        %v4536 = vadd.f32 %v4522, %v4535
        %4537 = vdwg.mxu0
        %4538 = vmatpush.bf16.msra.mxu0 %v3845
        %4539 = vmatpush.bf16.msra.mxu0 %v3843
        %4540 = vmatpush.bf16.msra.mxu0 %v3841
        %4541 = vmatpush.bf16.msra.mxu0 %v3839
        %4542 = vmatpush.bf16.msra.mxu0 %v3837
        %4543 = vmatpush.bf16.msra.mxu0 %v3835
        %4544 = vmatpush.bf16.msra.mxu0 %v3833
        %4545 = vmatpush.bf16.msra.mxu0 %v3831
        %4546 = vmatmul.bf16.gmra.mxu0 %v2820
        %v4547 = vpop.f32.mrf.mxu0
        %v4548 = vadd.f32 %v4534, %v4547
        %v4549 = vpop.f32.mrf.mxu0
        %v4550 = vadd.f32 %v4536, %v4549
        %4551 = vdwg.mxu0
        %4552 = vmatpush.bf16.msra.mxu0 %v3861
        %4553 = vmatpush.bf16.msra.mxu0 %v3859
        %4554 = vmatpush.bf16.msra.mxu0 %v3857
        %4555 = vmatpush.bf16.msra.mxu0 %v3855
        %4556 = vmatpush.bf16.msra.mxu0 %v3853
        %4557 = vmatpush.bf16.msra.mxu0 %v3851
        %4558 = vmatpush.bf16.msra.mxu0 %v3849
        %4559 = vmatpush.bf16.msra.mxu0 %v3847
        %4560 = vmatmul.bf16.gmra.mxu0 %v2821
        %v4561 = vpop.f32.mrf.mxu0
        %v4562 = vadd.f32 %v4548, %v4561
        %v4563 = vpop.f32.mrf.mxu0
        %v4564 = vadd.f32 %v4550, %v4563
        %4565 = vdwg.mxu0
        %v4566 = vadd.f32 %v2482, %v4338
        %v4567 = vadd.f32 %v2483, %v4562
        %v4568 = vadd.f32 %v2484, %v4340
        %v4569 = vadd.f32 %v2485, %v4564
        %4570 = vst [vmem:[#allocation2] sm:$0xff] %v4566
        %4571 = vst [vmem:[#allocation2 + $0x8] sm:$0xff] %v4567
        %4572 = vst [vmem:[#allocation2 + $0x10] sm:$0xff] %v4568
        %4573 = vst [vmem:[#allocation2 + $0x18] sm:$0xff] %v4569
        %p4574 = scmp.eq.s32.totalorder %s22, 3
        // Predicated region
        $region116: #{cnn_base_forward.7} parent=102 // pred_check
          %p4575 = pneg %p4574
        $region117: #{cnn_base_forward.7} parent=102 // pred_check_branch
          %4577 = sbr.rel (%p4575) target = $region119
        $region118: #{cnn_base_forward.7} parent=102 // pred_region
          %v4578 = vld [vmem:[#allocation2] sm:$0xff]
          %v4579 = vld [vmem:[#allocation2 + $0x8] sm:$0xff]
          %v4580 = vld [vmem:[#allocation2 + $0x10] sm:$0xff]
          %v4581 = vld [vmem:[#allocation2 + $0x18] sm:$0xff]
          %v4582 = vld [vmem:[%s2465] sm:$0x3]
          %v4584 = vperm.slane %v4582, 0
          %v4585 = vperm.slane %v4582, 1
          %v4588 = vadd.f32 %v4578, %v4584
          %v4589 = vadd.f32 %v4579, %v4585
          %v4590 = vadd.f32 %v4580, %v4584
          %v4591 = vadd.f32 %v4581, %v4585
          %v4592 = vmax.f32 %v4588, 0.0
          %v4593 = vmax.f32 %v4589, 0.0
          %v4594 = vmax.f32 %v4590, 0.0
          %v4595 = vmax.f32 %v4591, 0.0
          %4596 = vst [vmem:[%s2452] sm:$0xff] %v4592
          %4597 = vst [vmem:[%s2452 + $0x8] sm:$0xff] %v4593
          %4598 = vst [vmem:[%s2452 + $0x10] sm:$0xff] %v4594
          %4599 = vst [vmem:[%s2452 + $0x18] sm:$0xff] %v4595
          %v4600 = vpack.c.bf16 %v4594, %v4592
          %v4601 = vpack.c.bf16 %v4595, %v4593
          %v4602 = vld [vmem:[%s2471] sm:$0xf]
          %v4603 = vld [vmem:[%s2471 + $0x4] sm:$0xf]
          %v4604 = vld [vmem:[%s2471 + $0x8] sm:$0xf]
          %v4605 = vld [vmem:[%s2471 + $0xc] sm:$0xf]
          %v4606 = vld [vmem:[%s2471 + $0x10] sm:$0xf]
          %v4607 = vld [vmem:[%s2471 + $0x14] sm:$0xf]
          %v4608 = vld [vmem:[%s2471 + $0x18] sm:$0xf]
          %v4609 = vld [vmem:[%s2471 + $0x1c] sm:$0xf]
          %v4610 = vld [vmem:[%s2471 + $0x20] sm:$0xf]
          %v4611 = vld [vmem:[%s2471 + $0x24] sm:$0xf]
          %v4612 = vld [vmem:[%s2471 + $0x28] sm:$0xf]
          %v4613 = vld [vmem:[%s2471 + $0x2c] sm:$0xf]
          %v4614 = vld [vmem:[%s2471 + $0x30] sm:$0xf]
          %v4615 = vld [vmem:[%s2471 + $0x34] sm:$0xf]
          %v4616 = vld [vmem:[%s2471 + $0x38] sm:$0xf]
          %v4617 = vld [vmem:[%s2471 + $0x3c] sm:$0xf]
          %v4618 = vld [vmem:[%s2471 + $0x40] sm:$0xf]
          %v4619 = vld [vmem:[%s2471 + $0x44] sm:$0xf]
          %v4620 = vld [vmem:[%s2471 + $0x48] sm:$0xf]
          %v4621 = vld [vmem:[%s2471 + $0x4c] sm:$0xf]
          %v4622 = vld [vmem:[%s2471 + $0x50] sm:$0xf]
          %v4623 = vld [vmem:[%s2471 + $0x54] sm:$0xf]
          %v4624 = vld [vmem:[%s2471 + $0x58] sm:$0xf]
          %v4625 = vld [vmem:[%s2471 + $0x5c] sm:$0xf]
          %v4626 = vld [vmem:[%s2471 + $0x60] sm:$0xf]
          %v4627 = vld [vmem:[%s2471 + $0x64] sm:$0xf]
          %v4628 = vld [vmem:[%s2471 + $0x68] sm:$0xf]
          %v4629 = vld [vmem:[%s2471 + $0x6c] sm:$0xf]
          %v4630 = vld [vmem:[%s2471 + $0x70] sm:$0xf]
          %v4631 = vld [vmem:[%s2471 + $0x74] sm:$0xf]
          %v4632 = vld [vmem:[%s2471 + $0x78] sm:$0xf]
          %v4633 = vld [vmem:[%s2471 + $0x7c] sm:$0xf]
          %v4666 = vunpack.c.l.b16 %v4602
          %v4667 = vunpack.c.l.b16 %v4603
          %v4668 = vunpack.c.l.b16 %v4604
          %v4669 = vunpack.c.l.b16 %v4605
          %v4670 = vunpack.c.l.b16 %v4606
          %v4671 = vunpack.c.l.b16 %v4607
          %v4672 = vunpack.c.l.b16 %v4608
          %v4673 = vunpack.c.l.b16 %v4609
          %v4674 = vunpack.c.l.b16 %v4610
          %v4675 = vunpack.c.l.b16 %v4611
          %v4676 = vunpack.c.l.b16 %v4612
          %v4677 = vunpack.c.l.b16 %v4613
          %v4678 = vunpack.c.l.b16 %v4614
          %v4679 = vunpack.c.l.b16 %v4615
          %v4680 = vunpack.c.l.b16 %v4616
          %v4681 = vunpack.c.l.b16 %v4617
          %v4682 = vunpack.c.l.b16 %v4618
          %v4683 = vunpack.c.l.b16 %v4619
          %v4684 = vunpack.c.l.b16 %v4620
          %v4685 = vunpack.c.l.b16 %v4621
          %v4686 = vunpack.c.l.b16 %v4622
          %v4687 = vunpack.c.l.b16 %v4623
          %v4688 = vunpack.c.l.b16 %v4624
          %v4689 = vunpack.c.l.b16 %v4625
          %v4690 = vunpack.c.l.b16 %v4626
          %v4691 = vunpack.c.l.b16 %v4627
          %v4692 = vunpack.c.l.b16 %v4628
          %v4693 = vunpack.c.l.b16 %v4629
          %v4694 = vunpack.c.l.b16 %v4630
          %v4695 = vunpack.c.l.b16 %v4631
          %v4696 = vunpack.c.l.b16 %v4632
          %v4697 = vunpack.c.l.b16 %v4633
          %v4698 = vpack.c.b16 %v4667, %v4666
          %v4699 = vpack.c.b16 %v4669, %v4668
          %v4700 = vpack.c.b16 %v4671, %v4670
          %v4701 = vpack.c.b16 %v4673, %v4672
          %v4702 = vpack.c.b16 %v4675, %v4674
          %v4703 = vpack.c.b16 %v4677, %v4676
          %v4704 = vpack.c.b16 %v4679, %v4678
          %v4705 = vpack.c.b16 %v4681, %v4680
          %v4706 = vpack.c.b16 %v4683, %v4682
          %v4707 = vpack.c.b16 %v4685, %v4684
          %v4708 = vpack.c.b16 %v4687, %v4686
          %v4709 = vpack.c.b16 %v4689, %v4688
          %v4710 = vpack.c.b16 %v4691, %v4690
          %v4711 = vpack.c.b16 %v4693, %v4692
          %v4712 = vpack.c.b16 %v4695, %v4694
          %v4713 = vpack.c.b16 %v4697, %v4696
          %4730 = vmatpush.bf16.msra.mxu0 %v4705
          %4731 = vmatpush.bf16.msra.mxu0 %v4704
          %4732 = vmatpush.bf16.msra.mxu0 %v4703
          %4733 = vmatpush.bf16.msra.mxu0 %v4702
          %4734 = vmatpush.bf16.msra.mxu0 %v4701
          %4735 = vmatpush.bf16.msra.mxu0 %v4700
          %4736 = vmatpush.bf16.msra.mxu0 %v4699
          %4737 = vmatpush.bf16.msra.mxu0 %v4698
          %4738 = vmatmul.bf16.gmra.mxu0 %v4600
          %v4739 = vpop.f32.mrf.mxu0
          %v4740 = vadd.f32 0.0, %v4739
          %v4741 = vpop.f32.mrf.mxu0
          %v4742 = vadd.f32 0.0, %v4741
          %4743 = vdwg.mxu0
          %4744 = vmatpush.bf16.msra.mxu0 %v4713
          %4745 = vmatpush.bf16.msra.mxu0 %v4712
          %4746 = vmatpush.bf16.msra.mxu0 %v4711
          %4747 = vmatpush.bf16.msra.mxu0 %v4710
          %4748 = vmatpush.bf16.msra.mxu0 %v4709
          %4749 = vmatpush.bf16.msra.mxu0 %v4708
          %4750 = vmatpush.bf16.msra.mxu0 %v4707
          %4751 = vmatpush.bf16.msra.mxu0 %v4706
          %4752 = vmatmul.bf16.gmra.mxu0 %v4601
          %v4753 = vpop.f32.mrf.mxu0
          %v4754 = vadd.f32 %v4740, %v4753
          %v4755 = vpop.f32.mrf.mxu0
          %v4756 = vadd.f32 %v4742, %v4755
          %4757 = vdwg.mxu0
          %4758 = vst [vmem:[%s2458] sm:$0xff] %v4754
          %4759 = vst [vmem:[%s2458 + $0x8] sm:$0xff] %v4756
        $region119: #{cnn_base_forward.7} parent=102 // pred_fallthru
          _
        %s4760 = sand.u32 %s143, 1
        %s4761 = sand.u32 %s143, 1
        %s4762 = smul.addr %s4761, 32
        %s4763 = scalar_lea.vmem [#allocation5], %s4762
        %s4764 = sand.u32 %s169, 1
        %s4765 = sand.u32 %s169, 1
        %s4766 = smul.addr %s4765, 16
        %s4767 = scalar_lea.vmem [#allocation6], %s4766
        // Predicated region
        $region120: #{cnn_base_forward.7} parent=102 // pred_check
          %p4768 = pneg %p153
        $region121: #{cnn_base_forward.7} parent=102 // pred_check_branch
          %4770 = sbr.rel (%p4768) target = $region123
        $region122: #{cnn_base_forward.7} parent=102 // pred_region
          %s4771 = smul.u32 2, %s21
          %s4772 = smul.addr %s4771, 8
          %s4773 = scalar_lea.vmem %s4, %s4772
          // Predicated region
          $region124: #{cnn_base_forward.7} parent=122 // pred_check
            _
          $region125: #{cnn_base_forward.7} parent=122 // pred_check_branch
            %4775 = sbr.rel (0) target = $region127
          $region126: #{cnn_base_forward.7} parent=122 // pred_region
            // Predicated region
            $region128: #{cnn_base_forward.7} parent=126 // pred_check
              _
            $region129: #{cnn_base_forward.7} parent=126 // pred_check_branch
              %4777 = sbr.rel (0) target = $region131
            $region130: #{cnn_base_forward.7} parent=126 // pred_region
              loop: start=0, step=1, limit=1
              $region132: #{cnn_base_forward.7} parent=130 // loop_pre_header
                _
              $region133: #{cnn_base_forward.7} parent=130 // loop_header
                %s4779 = sphi 0, %s4783
                %p4780 = scmp.ge.s32.totalorder %s4779, 1
                %s4784 = sphi %s4763, %s4763
                %s4785 = sphi %s4773, %s4773
              $region134: #{cnn_base_forward.7} parent=130 // loop_header_branch
                %4782 = sbr.rel (%p4780) target = $region138
              $region135: #{cnn_base_forward.7} parent=130 // loop_body
                %v4786 = vld [vmem:[%s4784] sm:$0xff]
                %4787 = vst [vmem:[%s4785] sm:$0xff] %v4786
                %v4788 = vld [vmem:[%s4784 + $0x8] sm:$0xff]
                %4789 = vst [vmem:[%s4785 + $0x8] sm:$0xff] %v4788
                %v4790 = vld [vmem:[%s4784 + $0x10] sm:$0xff]
                %4791 = vst [vmem:[%s4785 + $0x20] sm:$0xff] %v4790
                %v4792 = vld [vmem:[%s4784 + $0x18] sm:$0xff]
                %4793 = vst [vmem:[%s4785 + $0x28] sm:$0xff] %v4792
              $region136: #{cnn_base_forward.7} parent=130 // loop_footer
                %s4783 = sadd.s32 1, %s4779
              $region137: #{cnn_base_forward.7} parent=130 // loop_footer_branch
                %4778 = sbr.rel target = $region133
              $region138: #{cnn_base_forward.7} parent=130 // loop_exit
                _
            $region131: #{cnn_base_forward.7} parent=126 // pred_fallthru
              _
            // Predicated region
            $region139: #{cnn_base_forward.7} parent=126 // pred_check
              _
            $region140: #{cnn_base_forward.7} parent=126 // pred_check_branch
              %4795 = sbr.rel target = $region142
            $region141: #{cnn_base_forward.7} parent=126 // pred_region
              _
            $region142: #{cnn_base_forward.7} parent=126 // pred_fallthru
              _
          $region127: #{cnn_base_forward.7} parent=122 // pred_fallthru
            _
          %4796 = vnop
        $region123: #{cnn_base_forward.7} parent=102 // pred_fallthru
          _
        // Predicated region
        $region143: #{cnn_base_forward.7} parent=102 // pred_check
          %p4797 = pneg %p179
        $region144: #{cnn_base_forward.7} parent=102 // pred_check_branch
          %4799 = sbr.rel (%p4797) target = $region146
        $region145: #{cnn_base_forward.7} parent=102 // pred_region
          %s4800 = smul.addr %s21, 8
          %s4801 = scalar_lea.vmem %s5, %s4800
          // Predicated region
          $region147: #{cnn_base_forward.7} parent=145 // pred_check
            _
          $region148: #{cnn_base_forward.7} parent=145 // pred_check_branch
            %4803 = sbr.rel (0) target = $region150
          $region149: #{cnn_base_forward.7} parent=145 // pred_region
            // Predicated region
            $region151: #{cnn_base_forward.7} parent=149 // pred_check
              _
            $region152: #{cnn_base_forward.7} parent=149 // pred_check_branch
              %4805 = sbr.rel (0) target = $region154
            $region153: #{cnn_base_forward.7} parent=149 // pred_region
              // Predicated region
              $region166: #{cnn_base_forward.7} parent=153 // pred_check
                _
              $region167: #{cnn_base_forward.7} parent=153 // pred_check_branch
                %4823 = sbr.rel (0) target = $region169
              $region168: #{cnn_base_forward.7} parent=153 // pred_region
                loop: start=0, step=1, limit=1
                $region170: #{cnn_base_forward.7} parent=168 // loop_pre_header
                  _
                $region171: #{cnn_base_forward.7} parent=168 // loop_header
                  %s4825 = sphi 0, %s4829
                  %p4826 = scmp.ge.s32.totalorder %s4825, 1
                  %s4830 = sphi %s4767, %s4767
                  %s4831 = sphi %s4801, %s4801
                $region172: #{cnn_base_forward.7} parent=168 // loop_header_branch
                  %4828 = sbr.rel (%p4826) target = $region176
                $region173: #{cnn_base_forward.7} parent=168 // loop_body
                  %v4832 = vld [vmem:[%s4830] sm:$0xff]
                  %4833 = vst [vmem:[%s4831] sm:$0xff] %v4832
                  %v4834 = vld [vmem:[%s4830 + $0x8] sm:$0xff]
                  %4835 = vst [vmem:[%s4831 + $0x10] sm:$0xff] %v4834
                $region174: #{cnn_base_forward.7} parent=168 // loop_footer
                  %s4829 = sadd.s32 1, %s4825
                $region175: #{cnn_base_forward.7} parent=168 // loop_footer_branch
                  %4824 = sbr.rel target = $region171
                $region176: #{cnn_base_forward.7} parent=168 // loop_exit
                  _
              $region169: #{cnn_base_forward.7} parent=153 // pred_fallthru
                _
              // Predicated region
              $region177: #{cnn_base_forward.7} parent=153 // pred_check
                _
              $region178: #{cnn_base_forward.7} parent=153 // pred_check_branch
                %4837 = sbr.rel target = $region180
              $region179: #{cnn_base_forward.7} parent=153 // pred_region
                _
              $region180: #{cnn_base_forward.7} parent=153 // pred_fallthru
                _
            $region154: #{cnn_base_forward.7} parent=149 // pred_fallthru
              _
            // Predicated region
            $region155: #{cnn_base_forward.7} parent=149 // pred_check
              _
            $region156: #{cnn_base_forward.7} parent=149 // pred_check_branch
              %4807 = sbr.rel target = $region158
            $region157: #{cnn_base_forward.7} parent=149 // pred_region
              %s4809 = ssub.s32 256, 1
              loop: start=0, step=1, limit=1
              $region159: #{cnn_base_forward.7} parent=157 // loop_pre_header
                _
              $region160: #{cnn_base_forward.7} parent=157 // loop_header
                %s4811 = sphi 0, %s4815
                %p4812 = scmp.ge.s32.totalorder %s4811, 1
                %s4816 = sphi %s4767, %s4767
                %s4817 = sphi %s4801, %s4801
              $region161: #{cnn_base_forward.7} parent=157 // loop_header_branch
                %4814 = sbr.rel (%p4812) target = $region165
              $region162: #{cnn_base_forward.7} parent=157 // loop_body
                %v4818 = vld [vmem:[%s4816] sm:%s4809]
                %4819 = vst [vmem:[%s4817] sm:%s4809] %v4818
                %v4820 = vld [vmem:[%s4816 + $0x8] sm:%s4809]
                %4821 = vst [vmem:[%s4817 + $0x10] sm:%s4809] %v4820
              $region163: #{cnn_base_forward.7} parent=157 // loop_footer
                %s4815 = sadd.s32 1, %s4811
              $region164: #{cnn_base_forward.7} parent=157 // loop_footer_branch
                %4810 = sbr.rel target = $region160
              $region165: #{cnn_base_forward.7} parent=157 // loop_exit
                _
            $region158: #{cnn_base_forward.7} parent=149 // pred_fallthru
              _
          $region150: #{cnn_base_forward.7} parent=145 // pred_fallthru
            _
          %4838 = vnop
        $region146: #{cnn_base_forward.7} parent=102 // pred_fallthru
          _
      $region103: #{cnn_base_forward.7} parent=5 // pred_fallthru
        _
      %p4839 = scmp.le.s32.totalorder 2, %s12
      // Predicated region
      $region181: #{cnn_base_forward.7} parent=5 // pred_check
        %p4840 = pneg %p4839
      $region182: #{cnn_base_forward.7} parent=5 // pred_check_branch
        %4842 = sbr.rel (%p4840) target = $region184
      $region183: #{cnn_base_forward.7} parent=5 // pred_region
        %s4843 = ssub.s32 %s12, 2
        // Predicated region
        $region185: #{cnn_base_forward.7} parent=183 // pred_check
          %p4844 = pneg %p159
        $region186: #{cnn_base_forward.7} parent=183 // pred_check_branch
          %4846 = sbr.rel (%p4844) target = $region188
        $region187: #{cnn_base_forward.7} parent=183 // pred_region
          %s4847 = sand.u32 %s144, 1
          %s4848 = sand.u32 %s144, 1
          %s4849 = smul.addr %s4848, 32
          %s4850 = scalar_lea.vmem [#allocation5], %s4849
        $region188: #{cnn_base_forward.7} parent=183 // pred_fallthru
          _
        // Predicated region
        $region189: #{cnn_base_forward.7} parent=183 // pred_check
          %p4851 = pneg %p185
        $region190: #{cnn_base_forward.7} parent=183 // pred_check_branch
          %4853 = sbr.rel (%p4851) target = $region192
        $region191: #{cnn_base_forward.7} parent=183 // pred_region
          %s4854 = sand.u32 %s170, 1
          %s4855 = sand.u32 %s170, 1
          %s4856 = smul.addr %s4855, 16
          %s4857 = scalar_lea.vmem [#allocation6], %s4856
        $region192: #{cnn_base_forward.7} parent=183 // pred_fallthru
          _
      $region184: #{cnn_base_forward.7} parent=5 // pred_fallthru
        _
    $region6: #{cnn_base_forward.7} parent=1 // loop_footer
      %s16 = sadd.s32 1, %s12
    $region7: #{cnn_base_forward.7} parent=1 // loop_footer_branch
      %11 = sbr.rel target = $region3
    $region8: #{cnn_base_forward.7} parent=1 // loop_exit
      _

</llo_original>
